<compile_context>
chip_gen: v5e
topology: v5e:2x2
jax: 0.10.0
libtpu: 0.0.40
codegen_flags: <defaults>
</compile_context>

<pallas_src>
import functools
import math

import jax
import jax.numpy as jnp
from jax.experimental import pallas as pl
from jax.experimental.pallas import tpu as pltpu


# ----------------------------------------------------------------------------
# Helpers
# ----------------------------------------------------------------------------

def _pick_tile(total, target, align=8):
    """Largest divisor of `total` that is <= target and a multiple of `align`.

    Falls back to `total` (a single full block) when no such divisor exists.
    """
    if total <= target:
        return total
    cand = (target // align) * align
    while cand >= align:
        if total % cand == 0:
            return cand
        cand -= align
    return total


def _layernorm(x, gamma, beta, eps):
    mu = jnp.mean(x, axis=-1, keepdims=True)
    xc = x - mu
    var = jnp.mean(xc * xc, axis=-1, keepdims=True)
    return xc * jax.lax.rsqrt(var + eps) * gamma + beta


# ----------------------------------------------------------------------------
# Kernel 1 & 3: row-tiled fused linear projection  y = x @ W + b
# ----------------------------------------------------------------------------

def _linear_kernel(x_ref, w_ref, b_ref, o_ref, *, compute_dtype):
    x = x_ref[...].astype(compute_dtype)
    w = w_ref[...].astype(compute_dtype)
    y = jnp.dot(x, w, preferred_element_type=jnp.float32) + b_ref[...]
    o_ref[...] = y.astype(o_ref.dtype)


def pallas_linear(x2d, w, b, *, row_tile=128, compute_dtype=jnp.float32):
    rows, cin = x2d.shape
    cout = w.shape[1]
    rt = _pick_tile(rows, row_tile, align=8)
    grid = (rows // rt,)
    kernel = functools.partial(_linear_kernel, compute_dtype=compute_dtype)
    return pl.pallas_call(
        kernel,
        out_shape=jax.ShapeDtypeStruct((rows, cout), jnp.float32),
        grid_spec=pltpu.PrefetchScalarGridSpec(
            num_scalar_prefetch=0,
            grid=grid,
            in_specs=[pl.BlockSpec((rt, cin), lambda i: (i, 0)),
                      pl.BlockSpec((cin, cout), lambda i: (0, 0)),
                      pl.BlockSpec((1, cout), lambda i: (0, 0))],
            out_specs=pl.BlockSpec((rt, cout), lambda i: (i, 0)),
        ),
        compiler_params=pltpu.CompilerParams(
            dimension_semantics=("parallel",)),
    )(x2d, w, b.reshape(1, cout))


# ----------------------------------------------------------------------------
# Kernel 2: spatial attention + residual add + LayerNorm1
# ----------------------------------------------------------------------------

def _spatial_attn_ln_kernel(q_ref, k_ref, v_ref, xres_ref, g_ref, bt_ref,
                            x1_ref, attn_ref, *, scale, eps, compute_dtype):
    q = q_ref[...].astype(compute_dtype)             # (TB, N, Ck)
    k = k_ref[...].astype(compute_dtype)             # (TB, Ck, N)
    v = v_ref[...].astype(compute_dtype)             # (TB, C, N)
    s = jnp.einsum('bnc,bcm->bnm', q, k,
                   preferred_element_type=jnp.float32) * scale
    s = s - jnp.max(s, axis=-1, keepdims=True)
    e = jnp.exp(s)
    p = e * pl.reciprocal(jnp.sum(e, axis=-1, keepdims=True), approx=True)
    attn_ref[...] = p.astype(attn_ref.dtype)
    # out[b, n, c] = sum_m p[b, n, m] * v[b, c, m]  -> channel-last, lane-dense
    out = jnp.einsum('bnm,bcm->bnc', p.astype(compute_dtype), v,
                     preferred_element_type=jnp.float32)
    x = xres_ref[...] + out
    x1_ref[...] = _layernorm(x, g_ref[...], bt_ref[...], eps).astype(x1_ref.dtype)


def pallas_spatial_attn_ln(q, k, v, xres, gamma, beta, scale, *, eps=1e-5,
                           batch_tile=8, compute_dtype=jnp.float32):
    bt, n, ck = q.shape
    c = v.shape[1]
    tb = _pick_tile(bt, batch_tile, align=1)
    grid = (bt // tb,)
    kernel = functools.partial(_spatial_attn_ln_kernel, scale=scale, eps=eps,
                               compute_dtype=compute_dtype)
    return pl.pallas_call(
        kernel,
        out_shape=(jax.ShapeDtypeStruct((bt, n, c), jnp.float32),
                   jax.ShapeDtypeStruct((bt, n, n), jnp.float32)),
        grid_spec=pltpu.PrefetchScalarGridSpec(
            num_scalar_prefetch=0,
            grid=grid,
            in_specs=[pl.BlockSpec((tb, n, ck), lambda i: (i, 0, 0)),
                      pl.BlockSpec((tb, ck, n), lambda i: (i, 0, 0)),
                      pl.BlockSpec((tb, c, n), lambda i: (i, 0, 0)),
                      pl.BlockSpec((tb, n, c), lambda i: (i, 0, 0)),
                      pl.BlockSpec((1, c), lambda i: (0, 0)),
                      pl.BlockSpec((1, c), lambda i: (0, 0))],
            out_specs=[pl.BlockSpec((tb, n, c), lambda i: (i, 0, 0)),
                       pl.BlockSpec((tb, n, n), lambda i: (i, 0, 0))],
        ),
        compiler_params=pltpu.CompilerParams(
            dimension_semantics=("parallel",)),
    )(q, k, v, xres, gamma.reshape(1, c), beta.reshape(1, c))


# ----------------------------------------------------------------------------
# Kernel 4: temporal multi-head attention core (fused QKV slab in, heads
#           handled with static lane slices, per-head output stores)
# ----------------------------------------------------------------------------

def _temporal_attn_kernel(qkv_ref, o_ref, *, num_heads, head_dim, scale,
                          compute_dtype):
    c = num_heads * head_dim
    qkv = qkv_ref[...]                               # (TB, T, 3C)
    for h in range(num_heads):
        o0 = h * head_dim
        qh = qkv[:, :, o0:o0 + head_dim].astype(compute_dtype)
        kh = qkv[:, :, c + o0:c + o0 + head_dim].astype(compute_dtype)
        vh = qkv[:, :, 2 * c + o0:2 * c + o0 + head_dim].astype(compute_dtype)
        s = jnp.einsum('btd,bsd->bts', qh, kh,
                       preferred_element_type=jnp.float32) * scale
        s = s - jnp.max(s, axis=-1, keepdims=True)
        e = jnp.exp(s)
        p = e * pl.reciprocal(jnp.sum(e, axis=-1, keepdims=True), approx=True)
        oh = jnp.einsum('bts,bsd->btd', p.astype(compute_dtype), vh,
                        preferred_element_type=jnp.float32)
        o_ref[:, :, o0:o0 + head_dim] = oh.astype(o_ref.dtype)


def pallas_temporal_attn(qkv, num_heads, scale, *, batch_tile=16,
                         compute_dtype=jnp.float32):
    bn, t, c3 = qkv.shape
    c = c3 // 3
    dh = c // num_heads
    tb = _pick_tile(bn, batch_tile, align=1)
    grid = (bn // tb,)
    kernel = functools.partial(_temporal_attn_kernel, num_heads=num_heads,
                               head_dim=dh, scale=scale,
                               compute_dtype=compute_dtype)
    return pl.pallas_call(
        kernel,
        out_shape=jax.ShapeDtypeStruct((bn, t, c), jnp.float32),
        grid_spec=pltpu.PrefetchScalarGridSpec(
            num_scalar_prefetch=0,
            grid=grid,
            in_specs=[pl.BlockSpec((tb, t, c3), lambda i: (i, 0, 0))],
            out_specs=pl.BlockSpec((tb, t, c), lambda i: (i, 0, 0)),
        ),
        compiler_params=pltpu.CompilerParams(
            dimension_semantics=("parallel",)),
    )(qkv)


# ----------------------------------------------------------------------------
# Kernel 5: fc_out projection + residual + LayerNorm2 + FFN + residual
# ----------------------------------------------------------------------------

def _proj_ln_ffn_kernel(a_ref, r_ref, wo_ref, bo_ref, lnw_ref, lnb_ref,
                        w1_ref, b1_ref, w2_ref, b2_ref, o_ref, *,
                        eps, compute_dtype):
    a = a_ref[...].astype(compute_dtype)
    proj = jnp.dot(a, wo_ref[...].astype(compute_dtype),
                   preferred_element_type=jnp.float32) + bo_ref[...]
    x = r_ref[...] + proj                                     # residual #2
    x2 = _layernorm(x, lnw_ref[...], lnb_ref[...], eps)       # LayerNorm2
    h = jnp.dot(x2.astype(compute_dtype), w1_ref[...].astype(compute_dtype),
                preferred_element_type=jnp.float32) + b1_ref[...]
    h = jnp.maximum(h, 0.0)
    y = jnp.dot(h.astype(compute_dtype), w2_ref[...].astype(compute_dtype),
                preferred_element_type=jnp.float32) + b2_ref[...]
    o_ref[...] = (x2 + y).astype(o_ref.dtype)                 # residual #3


def pallas_proj_ln_ffn(a2d, r2d, wo, bo, lnw, lnb, w1, b1, w2, b2, *,
                       eps=1e-5, row_tile=128, compute_dtype=jnp.float32):
    rows, c = a2d.shape
    hid = w1.shape[1]
    rt = _pick_tile(rows, row_tile, align=8)
    grid = (rows // rt,)
    kernel = functools.partial(_proj_ln_ffn_kernel, eps=eps,
                               compute_dtype=compute_dtype)
    return pl.pallas_call(
        kernel,
        out_shape=jax.ShapeDtypeStruct((rows, c), jnp.float32),
        grid_spec=pltpu.PrefetchScalarGridSpec(
            num_scalar_prefetch=0,
            grid=grid,
            in_specs=[pl.BlockSpec((rt, c), lambda i: (i, 0)),
                      pl.BlockSpec((rt, c), lambda i: (i, 0)),
                      pl.BlockSpec((c, c), lambda i: (0, 0)),
                      pl.BlockSpec((1, c), lambda i: (0, 0)),
                      pl.BlockSpec((1, c), lambda i: (0, 0)),
                      pl.BlockSpec((1, c), lambda i: (0, 0)),
                      pl.BlockSpec((c, hid), lambda i: (0, 0)),
                      pl.BlockSpec((1, hid), lambda i: (0, 0)),
                      pl.BlockSpec((hid, c), lambda i: (0, 0)),
                      pl.BlockSpec((1, c), lambda i: (0, 0))],
            out_specs=pl.BlockSpec((rt, c), lambda i: (i, 0)),
        ),
        compiler_params=pltpu.CompilerParams(
            dimension_semantics=("parallel",)),
    )(a2d, r2d, wo, bo.reshape(1, c), lnw.reshape(1, c), lnb.reshape(1, c),
      w1, b1.reshape(1, hid), w2, b2.reshape(1, c))


# ----------------------------------------------------------------------------
# STGNNLayer forward (Pallas path)
# ----------------------------------------------------------------------------

def stgnn_layer_pallas(x, params, num_heads=4, compute_dtype=jnp.float32):
    """STGNNLayer.forward(x, static_adj=None) -> (out (B,C,N,T), attn (B,T,N,N))."""
    b, c, n, t = x.shape
    sp, tp = params['spatial'], params['temporal']
    ck = sp['wq'].shape[1]
    dh = c // num_heads

    # channel-last (B, T, N, C) slab: conv-1x1 input and residual #1.
    x_btnc = jnp.transpose(x, (0, 3, 2, 1))
    x2d = x_btnc.reshape(b * t * n, c)

    # ---- fused spatial Q/K/V projection (the three 1x1 convs) --------------
    w_qkv = jnp.concatenate([sp['wq'], sp['wk'], sp['wv']], axis=1)   # (C, 2Ck+C)
    b_qkv = jnp.concatenate([sp['bq'], sp['bk'], sp['bv']], axis=0)
    qkv = pallas_linear(x2d, w_qkv, b_qkv, compute_dtype=compute_dtype)
    qkv4 = qkv.reshape(b, t, n, 2 * ck + c)
    yq, yk, yv = qkv4[..., :ck], qkv4[..., ck:2 * ck], qkv4[..., 2 * ck:]

    # Faithful to torch: raw .reshape(B*T, -1, N) of the (B, out, T, N) conv
    # output (this interleaves the out/T axes exactly like the reference).
    q_raw = jnp.transpose(yq, (0, 3, 1, 2)).reshape(b * t, ck, n)
    k_raw = jnp.transpose(yk, (0, 3, 1, 2)).reshape(b * t, ck, n)
    v_raw = jnp.transpose(yv, (0, 3, 1, 2)).reshape(b * t, c, n)
    q_bmm = jnp.transpose(q_raw, (0, 2, 1))                     # (BT, N, Ck)

    # ---- spatial attention + residual + LayerNorm1 (fused) -----------------
    scale_s = 1.0 / math.sqrt(c)          # torch divides by sqrt(hidden_dim)
    x1, attn = pallas_spatial_attn_ln(
        q_bmm, k_raw, v_raw, x_btnc.reshape(b * t, n, c),
        params['ln1_w'], params['ln1_b'], scale_s, compute_dtype=compute_dtype)
    attention = attn.reshape(b, t, n, n)

    # ---- fused temporal Q/K/V projection ------------------------------------
    x1_bntc = jnp.transpose(x1.reshape(b, t, n, c), (0, 2, 1, 3))   # (B,N,T,C)
    w_t = jnp.concatenate([tp['wq'], tp['wk'], tp['wv']], axis=1)   # (C, 3C)
    b_t = jnp.concatenate([tp['bq'], tp['bk'], tp['bv']], axis=0)
    qkv_t = pallas_linear(x1_bntc.reshape(b * n * t, c), w_t, b_t,
                          compute_dtype=compute_dtype).reshape(b * n, t, 3 * c)

    # ---- temporal multi-head attention core ---------------------------------
    scale_t = 1.0 / math.sqrt(dh)
    attn_out = pallas_temporal_attn(qkv_t, num_heads, scale_t,
                                    compute_dtype=compute_dtype)    # (BN,T,C)

    # ---- fc_out + residual + LayerNorm2 + FFN + residual (fused) ------------
    y = pallas_proj_ln_ffn(
        attn_out.reshape(b * n * t, c), x1_bntc.reshape(b * n * t, c),
        tp['wo'], tp['bo'], params['ln2_w'], params['ln2_b'],
        params['ffn_w1'], params['ffn_b1'], params['ffn_w2'], params['ffn_b2'],
        compute_dtype=compute_dtype)

    out = jnp.transpose(y.reshape(b, n, t, c), (0, 3, 1, 2))        # (B,C,N,T)
    return out, attention


# ----------------------------------------------------------------------------
# Pure-JAX reference: direct transliteration of the PyTorch module
# ----------------------------------------------------------------------------

def stgnn_layer_reference(x, params, num_heads=4, eps=1e-5):
    b, c, n, t = x.shape
    sp, tp = params['spatial'], params['temporal']

    # SpatialAttention
    xp = jnp.transpose(x, (0, 1, 3, 2))                       # (B, C, T, N)

    def conv1x1(w, bias):
        return jnp.einsum('bctn,co->botn', xp, w) + bias[None, :, None, None]

    q4, k4, v4 = conv1x1(sp['wq'], sp['bq']), conv1x1(sp['wk'], sp['bk']), \
        conv1x1(sp['wv'], sp['bv'])
    query = jnp.transpose(q4.reshape(b * t, -1, n), (0, 2, 1))
    key = k4.reshape(b * t, -1, n)
    value = v4.reshape(b * t, -1, n)
    attention = jax.nn.softmax(
        jnp.einsum('bnc,bcm->bnm', query, key) / math.sqrt(c), axis=-1)
    out = jnp.einsum('bcm,bnm->bcn', value, attention)
    x_spatial = jnp.transpose(out.reshape(b, t, c, n), (0, 2, 3, 1))

    xx = x + x_spatial
    xx = jnp.transpose(xx, (0, 3, 2, 1))
    xx = _layernorm(xx, params['ln1_w'], params['ln1_b'], eps)
    xx = jnp.transpose(xx, (0, 3, 2, 1))
    residual = xx

    # TemporalAttention
    h, dh = num_heads, c // num_heads
    xt = jnp.transpose(xx, (0, 2, 3, 1))                      # (B, N, T, C)
    qt = (xt @ tp['wq'] + tp['bq']).reshape(b, n, t, h, dh)
    kt = (xt @ tp['wk'] + tp['bk']).reshape(b, n, t, h, dh)
    vt = (xt @ tp['wv'] + tp['bv']).reshape(b, n, t, h, dh)
    qt = jnp.transpose(qt, (0, 1, 3, 2, 4))
    kt = jnp.transpose(kt, (0, 1, 3, 2, 4))
    vt = jnp.transpose(vt, (0, 1, 3, 2, 4))
    sc = jnp.einsum('bnhtd,bnhsd->bnhts', qt, kt) / math.sqrt(dh)
    at = jax.nn.softmax(sc, axis=-1)
    ot = jnp.einsum('bnhts,bnhsd->bnhtd', at, vt)
    ot = jnp.transpose(ot, (0, 1, 3, 2, 4)).reshape(b, n, t, c)
    ot = ot @ tp['wo'] + tp['bo']
    x_temporal = jnp.transpose(ot, (0, 3, 1, 2))              # (B, C, N, T)

    xx = residual + x_temporal
    xx = jnp.transpose(xx, (0, 3, 2, 1))
    xx = _layernorm(xx, params['ln2_w'], params['ln2_b'], eps)
    residual = xx

    hid = jnp.maximum(xx @ params['ffn_w1'] + params['ffn_b1'], 0.0)
    x_ffn = hid @ params['ffn_w2'] + params['ffn_b2']
    xx = residual + x_ffn
    xx = jnp.transpose(xx, (0, 3, 2, 1))
    return xx, attention.reshape(b, t, n, n)


# ----------------------------------------------------------------------------
# Parameter init + demo
# ----------------------------------------------------------------------------

def init_params(key, hidden_dim):
    ck = hidden_dim // 8
    it = iter(jax.random.split(key, 24))

    def lin(fan_in, fan_out):
        w = jax.random.normal(next(it), (fan_in, fan_out),
                              jnp.float32) / math.sqrt(fan_in)
        b = 0.01 * jax.random.normal(next(it), (fan_out,), jnp.float32)
        return w, b

    swq, sbq = lin(hidden_dim, ck)
    swk, sbk = lin(hidden_dim, ck)
    swv, sbv = lin(hidden_dim, hidden_dim)
    twq, tbq = lin(hidden_dim, hidden_dim)
    twk, tbk = lin(hidden_dim, hidden_dim)
    twv, tbv = lin(hidden_dim, hidden_dim)
    two, tbo = lin(hidden_dim, hidden_dim)
    fw1, fb1 = lin(hidden_dim, hidden_dim * 4)
    fw2, fb2 = lin(hidden_dim * 4, hidden_dim)
    return {
        'spatial': dict(wq=swq, bq=sbq, wk=swk, bk=sbk, wv=swv, bv=sbv),
        'temporal': dict(wq=twq, bq=tbq, wk=twk, bk=tbk, wv=twv, bv=tbv,
                         wo=two, bo=tbo),
        'ln1_w': 1.0 + 0.1 * jax.random.normal(next(it), (hidden_dim,), jnp.float32),
        'ln1_b': 0.1 * jax.random.normal(next(it), (hidden_dim,), jnp.float32),
        'ln2_w': 1.0 + 0.1 * jax.random.normal(next(it), (hidden_dim,), jnp.float32),
        'ln2_b': 0.1 * jax.random.normal(next(it), (hidden_dim,), jnp.float32),
        'ffn_w1': fw1, 'ffn_b1': fb1, 'ffn_w2': fw2, 'ffn_b2': fb2,
    }


if __name__ == "__main__":
    key = jax.random.PRNGKey(0)
    k_x, k_p = jax.random.split(key)

    B, C, N, T = 2, 32, 16, 8           # batch, hidden_dim, nodes, time
    x = jax.random.normal(k_x, (B, C, N, T), dtype=jnp.float32)
    params = init_params(k_p, C)

    fwd = jax.jit(functools.partial(stgnn_layer_pallas, num_heads=4))
    ref = jax.jit(functools.partial(stgnn_layer_reference, num_heads=4))

    out, attn = jax.block_until_ready(fwd(x, params))
    ref_out, ref_attn = jax.block_until_ready(ref(x, params))

    assert out.shape == (B, C, N, T), out.shape
    assert attn.shape == (B, T, N, N), attn.shape
    assert bool(jnp.all(jnp.isfinite(out))) and bool(jnp.all(jnp.isfinite(attn)))
    assert jnp.allclose(attn, ref_attn, rtol=2e-2, atol=2e-2), \
        float(jnp.max(jnp.abs(attn - ref_attn)))
    assert jnp.allclose(out, ref_out, rtol=2e-2, atol=2e-2), \
        float(jnp.max(jnp.abs(out - ref_out)))

    # bf16 MXU-operand path (recommended on v6e / v7x): run + sanity check.
    fwd_bf16 = jax.jit(functools.partial(stgnn_layer_pallas, num_heads=4,
                                         compute_dtype=jnp.bfloat16))
    out_b, attn_b = jax.block_until_ready(fwd_bf16(x, params))
    assert out_b.shape == (B, C, N, T) and attn_b.shape == (B, T, N, N)
    assert bool(jnp.all(jnp.isfinite(out_b))) and bool(jnp.all(jnp.isfinite(attn_b)))

    print("KERNEL_OK")
</pallas_src>

<mosaic_0001>
module attributes {stable_mosaic.version = 11 : i64} {
  func.func @_spatial_attn_ln_kernel(%arg0: i32, %arg1: memref<8x16x4xf32, #tpu.memory_space<vmem>>, %arg2: memref<8x4x16xf32, #tpu.memory_space<vmem>>, %arg3: memref<8x32x16xf32, #tpu.memory_space<vmem>>, %arg4: memref<8x16x32xf32, #tpu.memory_space<vmem>>, %arg5: memref<1x32xf32, #tpu.memory_space<vmem>>, %arg6: memref<1x32xf32, #tpu.memory_space<vmem>>, %arg7: memref<8x16x32xf32, #tpu.memory_space<vmem>>, %arg8: memref<8x16x16xf32, #tpu.memory_space<vmem>>) attributes {dimension_semantics = [#tpu.dimension_semantics<parallel>], iteration_bounds = array<i64: 2>, scalar_prefetch = 0 : i64, scratch_operands = 0 : i64, tpu.core_type = #tpu.core_type<tc>, window_params = [{transform_indices = @transform_0, window_bounds = array<i64: 8, 16, 4>}, {transform_indices = @transform_1, window_bounds = array<i64: 8, 4, 16>}, {transform_indices = @transform_2, window_bounds = array<i64: 8, 32, 16>}, {transform_indices = @transform_3, window_bounds = array<i64: 8, 16, 32>}, {pipeline_mode = #tpu.pipeline_mode<synchronous>, transform_indices = @transform_4, window_bounds = array<i64: 1, 32>}, {pipeline_mode = #tpu.pipeline_mode<synchronous>, transform_indices = @transform_5, window_bounds = array<i64: 1, 32>}, {transform_indices = @transform_6, window_bounds = array<i64: 8, 16, 32>}, {transform_indices = @transform_7, window_bounds = array<i64: 8, 16, 16>}]} {
    %c0 = arith.constant 0 : index
    %c0_0 = arith.constant 0 : index
    %c0_1 = arith.constant 0 : index
    %0 = vector.load %arg1[%c0, %c0_0, %c0_1] : memref<8x16x4xf32, #tpu.memory_space<vmem>>, vector<8x16x4xf32>
    %c0_2 = arith.constant 0 : index
    %c0_3 = arith.constant 0 : index
    %c0_4 = arith.constant 0 : index
    %1 = vector.load %arg2[%c0_2, %c0_3, %c0_4] : memref<8x4x16xf32, #tpu.memory_space<vmem>>, vector<8x4x16xf32>
    %c0_5 = arith.constant 0 : index
    %c0_6 = arith.constant 0 : index
    %c0_7 = arith.constant 0 : index
    %2 = vector.load %arg3[%c0_5, %c0_6, %c0_7] : memref<8x32x16xf32, #tpu.memory_space<vmem>>, vector<8x32x16xf32>
    "tpu.trace_start"() <{level = 10 : i32, message = "bnc,bcm->bnm"}> : () -> ()
    %cst = arith.constant dense<0.000000e+00> : vector<8x16x16xf32>
    %3 = tpu.matmul %0, %1, %cst {dimension_numbers = #tpu.dot_dimension_numbers<[2], [1], [1], [2], [0, 0, 0, 1, 1, 2], [0], [0]>} : vector<8x16x4xf32>, vector<8x4x16xf32>, vector<8x16x16xf32> -> vector<8x16x16xf32>
    "tpu.trace_stop"() : () -> ()
    %cst_8 = arith.constant 0.176776692 : f32
    %4 = vector.broadcast %cst_8 : f32 to vector<8x16x16xf32>
    %5 = arith.mulf %3, %4 : vector<8x16x16xf32>
    %cst_9 = arith.constant dense<0xFF800000> : vector<8x16xf32>
    %6 = vector.multi_reduction <maximumf>, %5, %cst_9 [2] : vector<8x16x16xf32> to vector<8x16xf32>
    %7 = vector.shape_cast %6 : vector<8x16xf32> to vector<8x16x1xf32>
    %8 = vector.broadcast %7 : vector<8x16x1xf32> to vector<8x16x16xf32>
    %9 = arith.subf %5, %8 : vector<8x16x16xf32>
    %10 = math.exp %9 : vector<8x16x16xf32>
    %cst_10 = arith.constant dense<0.000000e+00> : vector<8x16xf32>
    %11 = vector.multi_reduction <add>, %10, %cst_10 [2] : vector<8x16x16xf32> to vector<8x16xf32>
    %12 = vector.shape_cast %11 : vector<8x16xf32> to vector<8x16x1xf32>
    %13 = tpu.reciprocal %12 {approx = true} : vector<8x16x1xf32> -> vector<8x16x1xf32>
    %14 = vector.broadcast %13 : vector<8x16x1xf32> to vector<8x16x16xf32>
    %15 = arith.mulf %10, %14 : vector<8x16x16xf32>
    %c0_11 = arith.constant 0 : index
    %c0_12 = arith.constant 0 : index
    %c0_13 = arith.constant 0 : index
    %16 = vector.load %arg8[%c0_11, %c0_12, %c0_13] : memref<8x16x16xf32, #tpu.memory_space<vmem>>, vector<8x16x16xf32>
    tpu.vector_store %arg8[%c0_11, %c0_12, %c0_13], %15 {strides = array<i32>} : memref<8x16x16xf32, #tpu.memory_space<vmem>>, vector<8x16x16xf32>,
    "tpu.trace_start"() <{level = 10 : i32, message = "bnm,bcm->bnc"}> : () -> ()
    %cst_14 = arith.constant dense<0.000000e+00> : vector<8x16x32xf32>
    %17 = tpu.matmul %15, %2, %cst_14 {dimension_numbers = #tpu.dot_dimension_numbers<[2], [2], [1], [1], [0, 0, 0, 1, 1, 1], [0], [0]>} : vector<8x16x16xf32>, vector<8x32x16xf32>, vector<8x16x32xf32> -> vector<8x16x32xf32>
    "tpu.trace_stop"() : () -> ()
    %c0_15 = arith.constant 0 : index
    %c0_16 = arith.constant 0 : index
    %c0_17 = arith.constant 0 : index
    %18 = vector.load %arg4[%c0_15, %c0_16, %c0_17] : memref<8x16x32xf32, #tpu.memory_space<vmem>>, vector<8x16x32xf32>
    %19 = arith.addf %18, %17 : vector<8x16x32xf32>
    %c0_18 = arith.constant 0 : index
    %c0_19 = arith.constant 0 : index
    %20 = vector.load %arg5[%c0_18, %c0_19] : memref<1x32xf32, #tpu.memory_space<vmem>>, vector<1x32xf32>
    %c0_20 = arith.constant 0 : index
    %c0_21 = arith.constant 0 : index
    %21 = vector.load %arg6[%c0_20, %c0_21] : memref<1x32xf32, #tpu.memory_space<vmem>>, vector<1x32xf32>
    %cst_22 = arith.constant dense<0.000000e+00> : vector<8x16xf32>
    %22 = vector.multi_reduction <add>, %19, %cst_22 [2] : vector<8x16x32xf32> to vector<8x16xf32>
    %23 = vector.shape_cast %22 : vector<8x16xf32> to vector<8x16x1xf32>
    %cst_23 = arith.constant 3.200000e+01 : f32
    %24 = vector.broadcast %cst_23 : f32 to vector<8x16x1xf32>
    %25 = arith.divf %23, %24 : vector<8x16x1xf32>
    %26 = vector.broadcast %25 : vector<8x16x1xf32> to vector<8x16x32xf32>
    %27 = arith.subf %19, %26 : vector<8x16x32xf32>
    %28 = arith.mulf %27, %27 : vector<8x16x32xf32>
    %cst_24 = arith.constant dense<0.000000e+00> : vector<8x16xf32>
    %29 = vector.multi_reduction <add>, %28, %cst_24 [2] : vector<8x16x32xf32> to vector<8x16xf32>
    %30 = vector.shape_cast %29 : vector<8x16xf32> to vector<8x16x1xf32>
    %cst_25 = arith.constant 3.200000e+01 : f32
    %31 = vector.broadcast %cst_25 : f32 to vector<8x16x1xf32>
    %32 = arith.divf %30, %31 : vector<8x16x1xf32>
    %cst_26 = arith.constant 9.99999974E-6 : f32
    %33 = vector.broadcast %cst_26 : f32 to vector<8x16x1xf32>
    %34 = arith.addf %32, %33 : vector<8x16x1xf32>
    %35 = math.rsqrt %34 : vector<8x16x1xf32>
    %36 = vector.broadcast %35 : vector<8x16x1xf32> to vector<8x16x32xf32>
    %37 = arith.mulf %27, %36 : vector<8x16x32xf32>
    %38 = vector.shape_cast %20 : vector<1x32xf32> to vector<1x1x32xf32>
    %39 = vector.broadcast %38 : vector<1x1x32xf32> to vector<8x16x32xf32>
    %40 = arith.mulf %37, %39 : vector<8x16x32xf32>
    %41 = vector.shape_cast %21 : vector<1x32xf32> to vector<1x1x32xf32>
    %42 = vector.broadcast %41 : vector<1x1x32xf32> to vector<8x16x32xf32>
    %43 = arith.addf %40, %42 : vector<8x16x32xf32>
    %c0_27 = arith.constant 0 : index
    %c0_28 = arith.constant 0 : index
    %c0_29 = arith.constant 0 : index
    %44 = vector.load %arg7[%c0_27, %c0_28, %c0_29] : memref<8x16x32xf32, #tpu.memory_space<vmem>>, vector<8x16x32xf32>
    tpu.vector_store %arg7[%c0_27, %c0_28, %c0_29], %43 {strides = array<i32>} : memref<8x16x32xf32, #tpu.memory_space<vmem>>, vector<8x16x32xf32>,
    return
  }
  func.func @transform_0(%arg0: i32) -> (i32, i32, i32) {
    %c0_i32 = arith.constant 0 : i32
    %c0_i32_0 = arith.constant 0 : i32
    %c0_i32_1 = arith.constant 0 : i32
    return %arg0, %c0_i32, %c0_i32_0 : i32, i32, i32
  }
  func.func @transform_1(%arg0: i32) -> (i32, i32, i32) {
    %c0_i32 = arith.constant 0 : i32
    %c0_i32_0 = arith.constant 0 : i32
    %c0_i32_1 = arith.constant 0 : i32
    return %arg0, %c0_i32, %c0_i32_0 : i32, i32, i32
  }
  func.func @transform_2(%arg0: i32) -> (i32, i32, i32) {
    %c0_i32 = arith.constant 0 : i32
    %c0_i32_0 = arith.constant 0 : i32
    %c0_i32_1 = arith.constant 0 : i32
    return %arg0, %c0_i32, %c0_i32_0 : i32, i32, i32
  }
  func.func @transform_3(%arg0: i32) -> (i32, i32, i32) {
    %c0_i32 = arith.constant 0 : i32
    %c0_i32_0 = arith.constant 0 : i32
    %c0_i32_1 = arith.constant 0 : i32
    return %arg0, %c0_i32, %c0_i32_0 : i32, i32, i32
  }
  func.func @transform_4(%arg0: i32) -> (i32, i32) {
    %c0_i32 = arith.constant 0 : i32
    %c0_i32_0 = arith.constant 0 : i32
    %c0_i32_1 = arith.constant 0 : i32
    return %c0_i32, %c0_i32_0 : i32, i32
  }
  func.func @transform_5(%arg0: i32) -> (i32, i32) {
    %c0_i32 = arith.constant 0 : i32
    %c0_i32_0 = arith.constant 0 : i32
    %c0_i32_1 = arith.constant 0 : i32
    return %c0_i32, %c0_i32_0 : i32, i32
  }
  func.func @transform_6(%arg0: i32) -> (i32, i32, i32) {
    %c0_i32 = arith.constant 0 : i32
    %c0_i32_0 = arith.constant 0 : i32
    %c0_i32_1 = arith.constant 0 : i32
    return %arg0, %c0_i32, %c0_i32_0 : i32, i32, i32
  }
  func.func @transform_7(%arg0: i32) -> (i32, i32, i32) {
    %c0_i32 = arith.constant 0 : i32
    %c0_i32_0 = arith.constant 0 : i32
    %c0_i32_1 = arith.constant 0 : i32
    return %arg0, %c0_i32, %c0_i32_0 : i32, i32, i32
  }
}

module attributes {stable_mosaic.version = 11 : i64} {
  func.func @_linear_kernel(%arg0: i32, %arg1: memref<128x32xf32, #tpu.memory_space<vmem>>, %arg2: memref<32x40xf32, #tpu.memory_space<vmem>>, %arg3: memref<1x40xf32, #tpu.memory_space<vmem>>, %arg4: memref<128x40xf32, #tpu.memory_space<vmem>>) attributes {dimension_semantics = [#tpu.dimension_semantics<parallel>], iteration_bounds = array<i64: 2>, scalar_prefetch = 0 : i64, scratch_operands = 0 : i64, tpu.core_type = #tpu.core_type<tc>, window_params = [{transform_indices = @transform_0, window_bounds = array<i64: 128, 32>}, {pipeline_mode = #tpu.pipeline_mode<synchronous>, transform_indices = @transform_1, window_bounds = array<i64: 32, 40>}, {pipeline_mode = #tpu.pipeline_mode<synchronous>, transform_indices = @transform_2, window_bounds = array<i64: 1, 40>}, {transform_indices = @transform_3, window_bounds = array<i64: 128, 40>}]} {
    %c0 = arith.constant 0 : index
    %c0_0 = arith.constant 0 : index
    %0 = vector.load %arg1[%c0, %c0_0] : memref<128x32xf32, #tpu.memory_space<vmem>>, vector<128x32xf32>
    %c0_1 = arith.constant 0 : index
    %c0_2 = arith.constant 0 : index
    %1 = vector.load %arg2[%c0_1, %c0_2] : memref<32x40xf32, #tpu.memory_space<vmem>>, vector<32x40xf32>
    %cst = arith.constant dense<0.000000e+00> : vector<128x40xf32>
    %2 = tpu.matmul %0, %1, %cst {dimension_numbers = #tpu.dot_dimension_numbers<[1], [0], [0], [1], [0, 0, 1, 1], [], []>} : vector<128x32xf32>, vector<32x40xf32>, vector<128x40xf32> -> vector<128x40xf32>
    %c0_3 = arith.constant 0 : index
    %c0_4 = arith.constant 0 : index
    %3 = vector.load %arg3[%c0_3, %c0_4] : memref<1x40xf32, #tpu.memory_space<vmem>>, vector<1x40xf32>
    %4 = vector.broadcast %3 : vector<1x40xf32> to vector<128x40xf32>
    %5 = arith.addf %2, %4 : vector<128x40xf32>
    %c0_5 = arith.constant 0 : index
    %c0_6 = arith.constant 0 : index
    %6 = vector.load %arg4[%c0_5, %c0_6] : memref<128x40xf32, #tpu.memory_space<vmem>>, vector<128x40xf32>
    tpu.vector_store %arg4[%c0_5, %c0_6], %5 {strides = array<i32>} : memref<128x40xf32, #tpu.memory_space<vmem>>, vector<128x40xf32>,
    return
  }
  func.func @transform_0(%arg0: i32) -> (i32, i32) {
    %c0_i32 = arith.constant 0 : i32
    %c0_i32_0 = arith.constant 0 : i32
    return %arg0, %c0_i32 : i32, i32
  }
  func.func @transform_1(%arg0: i32) -> (i32, i32) {
    %c0_i32 = arith.constant 0 : i32
    %c0_i32_0 = arith.constant 0 : i32
    %c0_i32_1 = arith.constant 0 : i32
    return %c0_i32, %c0_i32_0 : i32, i32
  }
  func.func @transform_2(%arg0: i32) -> (i32, i32) {
    %c0_i32 = arith.constant 0 : i32
    %c0_i32_0 = arith.constant 0 : i32
    %c0_i32_1 = arith.constant 0 : i32
    return %c0_i32, %c0_i32_0 : i32, i32
  }
  func.func @transform_3(%arg0: i32) -> (i32, i32) {
    %c0_i32 = arith.constant 0 : i32
    %c0_i32_0 = arith.constant 0 : i32
    return %arg0, %c0_i32 : i32, i32
  }
}

module attributes {stable_mosaic.version = 11 : i64} {
  func.func @_temporal_attn_kernel(%arg0: i32, %arg1: memref<16x8x96xf32, #tpu.memory_space<vmem>>, %arg2: memref<16x8x32xf32, #tpu.memory_space<vmem>>) attributes {dimension_semantics = [#tpu.dimension_semantics<parallel>], iteration_bounds = array<i64: 2>, scalar_prefetch = 0 : i64, scratch_operands = 0 : i64, tpu.core_type = #tpu.core_type<tc>, window_params = [{transform_indices = @transform_0, window_bounds = array<i64: 16, 8, 96>}, {transform_indices = @transform_1, window_bounds = array<i64: 16, 8, 32>}]} {
    %c0 = arith.constant 0 : index
    %c0_0 = arith.constant 0 : index
    %c0_1 = arith.constant 0 : index
    %0 = vector.load %arg1[%c0, %c0_0, %c0_1] : memref<16x8x96xf32, #tpu.memory_space<vmem>>, vector<16x8x96xf32>
    %1 = vector.extract_strided_slice %0 {offsets = [0, 0, 0], sizes = [16, 8, 8], strides = [1, 1, 1]} : vector<16x8x96xf32> to vector<16x8x8xf32>
    %2 = vector.extract_strided_slice %0 {offsets = [0, 0, 32], sizes = [16, 8, 8], strides = [1, 1, 1]} : vector<16x8x96xf32> to vector<16x8x8xf32>
    %3 = vector.extract_strided_slice %0 {offsets = [0, 0, 64], sizes = [16, 8, 8], strides = [1, 1, 1]} : vector<16x8x96xf32> to vector<16x8x8xf32>
    "tpu.trace_start"() <{level = 10 : i32, message = "btd,bsd->bts"}> : () -> ()
    %cst = arith.constant dense<0.000000e+00> : vector<16x8x8xf32>
    %4 = tpu.matmul %1, %2, %cst {dimension_numbers = #tpu.dot_dimension_numbers<[2], [2], [1], [1], [0, 0, 0, 1, 1, 1], [0], [0]>} : vector<16x8x8xf32>, vector<16x8x8xf32>, vector<16x8x8xf32> -> vector<16x8x8xf32>
    "tpu.trace_stop"() : () -> ()
    %cst_2 = arith.constant 0.353553385 : f32
    %5 = vector.broadcast %cst_2 : f32 to vector<16x8x8xf32>
    %6 = arith.mulf %4, %5 : vector<16x8x8xf32>
    %cst_3 = arith.constant dense<0xFF800000> : vector<16x8xf32>
    %7 = vector.multi_reduction <maximumf>, %6, %cst_3 [2] : vector<16x8x8xf32> to vector<16x8xf32>
    %8 = vector.shape_cast %7 : vector<16x8xf32> to vector<16x8x1xf32>
    %9 = vector.broadcast %8 : vector<16x8x1xf32> to vector<16x8x8xf32>
    %10 = arith.subf %6, %9 : vector<16x8x8xf32>
    %11 = math.exp %10 : vector<16x8x8xf32>
    %cst_4 = arith.constant dense<0.000000e+00> : vector<16x8xf32>
    %12 = vector.multi_reduction <add>, %11, %cst_4 [2] : vector<16x8x8xf32> to vector<16x8xf32>
    %13 = vector.shape_cast %12 : vector<16x8xf32> to vector<16x8x1xf32>
    %14 = tpu.reciprocal %13 {approx = true} : vector<16x8x1xf32> -> vector<16x8x1xf32>
    %15 = vector.broadcast %14 : vector<16x8x1xf32> to vector<16x8x8xf32>
    %16 = arith.mulf %11, %15 : vector<16x8x8xf32>
    "tpu.trace_start"() <{level = 10 : i32, message = "bts,bsd->btd"}> : () -> ()
    %cst_5 = arith.constant dense<0.000000e+00> : vector<16x8x8xf32>
    %17 = tpu.matmul %16, %3, %cst_5 {dimension_numbers = #tpu.dot_dimension_numbers<[2], [1], [1], [2], [0, 0, 0, 1, 1, 2], [0], [0]>} : vector<16x8x8xf32>, vector<16x8x8xf32>, vector<16x8x8xf32> -> vector<16x8x8xf32>
    "tpu.trace_stop"() : () -> ()
    %c0_6 = arith.constant 0 : index
    %c0_7 = arith.constant 0 : index
    %c0_8 = arith.constant 0 : index
    %18 = vector.load %arg2[%c0_6, %c0_7, %c0_8] : memref<16x8x32xf32, #tpu.memory_space<vmem>>, vector<16x8x8xf32>
    tpu.vector_store %arg2[%c0_6, %c0_7, %c0_8], %17 {strides = array<i32>} : memref<16x8x32xf32, #tpu.memory_space<vmem>>, vector<16x8x8xf32>,
    %19 = vector.extract_strided_slice %0 {offsets = [0, 0, 8], sizes = [16, 8, 8], strides = [1, 1, 1]} : vector<16x8x96xf32> to vector<16x8x8xf32>
    %20 = vector.extract_strided_slice %0 {offsets = [0, 0, 40], sizes = [16, 8, 8], strides = [1, 1, 1]} : vector<16x8x96xf32> to vector<16x8x8xf32>
    %21 = vector.extract_strided_slice %0 {offsets = [0, 0, 72], sizes = [16, 8, 8], strides = [1, 1, 1]} : vector<16x8x96xf32> to vector<16x8x8xf32>
    "tpu.trace_start"() <{level = 10 : i32, message = "btd,bsd->bts"}> : () -> ()
    %cst_9 = arith.constant dense<0.000000e+00> : vector<16x8x8xf32>
    %22 = tpu.matmul %19, %20, %cst_9 {dimension_numbers = #tpu.dot_dimension_numbers<[2], [2], [1], [1], [0, 0, 0, 1, 1, 1], [0], [0]>} : vector<16x8x8xf32>, vector<16x8x8xf32>, vector<16x8x8xf32> -> vector<16x8x8xf32>
    "tpu.trace_stop"() : () -> ()
    %cst_10 = arith.constant 0.353553385 : f32
    %23 = vector.broadcast %cst_10 : f32 to vector<16x8x8xf32>
    %24 = arith.mulf %22, %23 : vector<16x8x8xf32>
    %cst_11 = arith.constant dense<0xFF800000> : vector<16x8xf32>
    %25 = vector.multi_reduction <maximumf>, %24, %cst_11 [2] : vector<16x8x8xf32> to vector<16x8xf32>
    %26 = vector.shape_cast %25 : vector<16x8xf32> to vector<16x8x1xf32>
    %27 = vector.broadcast %26 : vector<16x8x1xf32> to vector<16x8x8xf32>
    %28 = arith.subf %24, %27 : vector<16x8x8xf32>
    %29 = math.exp %28 : vector<16x8x8xf32>
    %cst_12 = arith.constant dense<0.000000e+00> : vector<16x8xf32>
    %30 = vector.multi_reduction <add>, %29, %cst_12 [2] : vector<16x8x8xf32> to vector<16x8xf32>
    %31 = vector.shape_cast %30 : vector<16x8xf32> to vector<16x8x1xf32>
    %32 = tpu.reciprocal %31 {approx = true} : vector<16x8x1xf32> -> vector<16x8x1xf32>
    %33 = vector.broadcast %32 : vector<16x8x1xf32> to vector<16x8x8xf32>
    %34 = arith.mulf %29, %33 : vector<16x8x8xf32>
    "tpu.trace_start"() <{level = 10 : i32, message = "bts,bsd->btd"}> : () -> ()
    %cst_13 = arith.constant dense<0.000000e+00> : vector<16x8x8xf32>
    %35 = tpu.matmul %34, %21, %cst_13 {dimension_numbers = #tpu.dot_dimension_numbers<[2], [1], [1], [2], [0, 0, 0, 1, 1, 2], [0], [0]>} : vector<16x8x8xf32>, vector<16x8x8xf32>, vector<16x8x8xf32> -> vector<16x8x8xf32>
    "tpu.trace_stop"() : () -> ()
    %c0_14 = arith.constant 0 : index
    %c0_15 = arith.constant 0 : index
    %c8 = arith.constant 8 : index
    %36 = vector.load %arg2[%c0_14, %c0_15, %c8] : memref<16x8x32xf32, #tpu.memory_space<vmem>>, vector<16x8x8xf32>
    tpu.vector_store %arg2[%c0_14, %c0_15, %c8], %35 {strides = array<i32>} : memref<16x8x32xf32, #tpu.memory_space<vmem>>, vector<16x8x8xf32>,
    %37 = vector.extract_strided_slice %0 {offsets = [0, 0, 16], sizes = [16, 8, 8], strides = [1, 1, 1]} : vector<16x8x96xf32> to vector<16x8x8xf32>
    %38 = vector.extract_strided_slice %0 {offsets = [0, 0, 48], sizes = [16, 8, 8], strides = [1, 1, 1]} : vector<16x8x96xf32> to vector<16x8x8xf32>
    %39 = vector.extract_strided_slice %0 {offsets = [0, 0, 80], sizes = [16, 8, 8], strides = [1, 1, 1]} : vector<16x8x96xf32> to vector<16x8x8xf32>
    "tpu.trace_start"() <{level = 10 : i32, message = "btd,bsd->bts"}> : () -> ()
    %cst_16 = arith.constant dense<0.000000e+00> : vector<16x8x8xf32>
    %40 = tpu.matmul %37, %38, %cst_16 {dimension_numbers = #tpu.dot_dimension_numbers<[2], [2], [1], [1], [0, 0, 0, 1, 1, 1], [0], [0]>} : vector<16x8x8xf32>, vector<16x8x8xf32>, vector<16x8x8xf32> -> vector<16x8x8xf32>
    "tpu.trace_stop"() : () -> ()
    %cst_17 = arith.constant 0.353553385 : f32
    %41 = vector.broadcast %cst_17 : f32 to vector<16x8x8xf32>
    %42 = arith.mulf %40, %41 : vector<16x8x8xf32>
    %cst_18 = arith.constant dense<0xFF800000> : vector<16x8xf32>
    %43 = vector.multi_reduction <maximumf>, %42, %cst_18 [2] : vector<16x8x8xf32> to vector<16x8xf32>
    %44 = vector.shape_cast %43 : vector<16x8xf32> to vector<16x8x1xf32>
    %45 = vector.broadcast %44 : vector<16x8x1xf32> to vector<16x8x8xf32>
    %46 = arith.subf %42, %45 : vector<16x8x8xf32>
    %47 = math.exp %46 : vector<16x8x8xf32>
    %cst_19 = arith.constant dense<0.000000e+00> : vector<16x8xf32>
    %48 = vector.multi_reduction <add>, %47, %cst_19 [2] : vector<16x8x8xf32> to vector<16x8xf32>
    %49 = vector.shape_cast %48 : vector<16x8xf32> to vector<16x8x1xf32>
    %50 = tpu.reciprocal %49 {approx = true} : vector<16x8x1xf32> -> vector<16x8x1xf32>
    %51 = vector.broadcast %50 : vector<16x8x1xf32> to vector<16x8x8xf32>
    %52 = arith.mulf %47, %51 : vector<16x8x8xf32>
    "tpu.trace_start"() <{level = 10 : i32, message = "bts,bsd->btd"}> : () -> ()
    %cst_20 = arith.constant dense<0.000000e+00> : vector<16x8x8xf32>
    %53 = tpu.matmul %52, %39, %cst_20 {dimension_numbers = #tpu.dot_dimension_numbers<[2], [1], [1], [2], [0, 0, 0, 1, 1, 2], [0], [0]>} : vector<16x8x8xf32>, vector<16x8x8xf32>, vector<16x8x8xf32> -> vector<16x8x8xf32>
    "tpu.trace_stop"() : () -> ()
    %c0_21 = arith.constant 0 : index
    %c0_22 = arith.constant 0 : index
    %c16 = arith.constant 16 : index
    %54 = vector.load %arg2[%c0_21, %c0_22, %c16] : memref<16x8x32xf32, #tpu.memory_space<vmem>>, vector<16x8x8xf32>
    tpu.vector_store %arg2[%c0_21, %c0_22, %c16], %53 {strides = array<i32>} : memref<16x8x32xf32, #tpu.memory_space<vmem>>, vector<16x8x8xf32>,
    %55 = vector.extract_strided_slice %0 {offsets = [0, 0, 24], sizes = [16, 8, 8], strides = [1, 1, 1]} : vector<16x8x96xf32> to vector<16x8x8xf32>
    %56 = vector.extract_strided_slice %0 {offsets = [0, 0, 56], sizes = [16, 8, 8], strides = [1, 1, 1]} : vector<16x8x96xf32> to vector<16x8x8xf32>
    %57 = vector.extract_strided_slice %0 {offsets = [0, 0, 88], sizes = [16, 8, 8], strides = [1, 1, 1]} : vector<16x8x96xf32> to vector<16x8x8xf32>
    "tpu.trace_start"() <{level = 10 : i32, message = "btd,bsd->bts"}> : () -> ()
    %cst_23 = arith.constant dense<0.000000e+00> : vector<16x8x8xf32>
    %58 = tpu.matmul %55, %56, %cst_23 {dimension_numbers = #tpu.dot_dimension_numbers<[2], [2], [1], [1], [0, 0, 0, 1, 1, 1], [0], [0]>} : vector<16x8x8xf32>, vector<16x8x8xf32>, vector<16x8x8xf32> -> vector<16x8x8xf32>
    "tpu.trace_stop"() : () -> ()
    %cst_24 = arith.constant 0.353553385 : f32
    %59 = vector.broadcast %cst_24 : f32 to vector<16x8x8xf32>
    %60 = arith.mulf %58, %59 : vector<16x8x8xf32>
    %cst_25 = arith.constant dense<0xFF800000> : vector<16x8xf32>
    %61 = vector.multi_reduction <maximumf>, %60, %cst_25 [2] : vector<16x8x8xf32> to vector<16x8xf32>
    %62 = vector.shape_cast %61 : vector<16x8xf32> to vector<16x8x1xf32>
    %63 = vector.broadcast %62 : vector<16x8x1xf32> to vector<16x8x8xf32>
    %64 = arith.subf %60, %63 : vector<16x8x8xf32>
    %65 = math.exp %64 : vector<16x8x8xf32>
    %cst_26 = arith.constant dense<0.000000e+00> : vector<16x8xf32>
    %66 = vector.multi_reduction <add>, %65, %cst_26 [2] : vector<16x8x8xf32> to vector<16x8xf32>
    %67 = vector.shape_cast %66 : vector<16x8xf32> to vector<16x8x1xf32>
    %68 = tpu.reciprocal %67 {approx = true} : vector<16x8x1xf32> -> vector<16x8x1xf32>
    %69 = vector.broadcast %68 : vector<16x8x1xf32> to vector<16x8x8xf32>
    %70 = arith.mulf %65, %69 : vector<16x8x8xf32>
    "tpu.trace_start"() <{level = 10 : i32, message = "bts,bsd->btd"}> : () -> ()
    %cst_27 = arith.constant dense<0.000000e+00> : vector<16x8x8xf32>
    %71 = tpu.matmul %70, %57, %cst_27 {dimension_numbers = #tpu.dot_dimension_numbers<[2], [1], [1], [2], [0, 0, 0, 1, 1, 2], [0], [0]>} : vector<16x8x8xf32>, vector<16x8x8xf32>, vector<16x8x8xf32> -> vector<16x8x8xf32>
    "tpu.trace_stop"() : () -> ()
    %c0_28 = arith.constant 0 : index
    %c0_29 = arith.constant 0 : index
    %c24 = arith.constant 24 : index
    %72 = vector.load %arg2[%c0_28, %c0_29, %c24] : memref<16x8x32xf32, #tpu.memory_space<vmem>>, vector<16x8x8xf32>
    tpu.vector_store %arg2[%c0_28, %c0_29, %c24], %71 {strides = array<i32>} : memref<16x8x32xf32, #tpu.memory_space<vmem>>, vector<16x8x8xf32>,
    return
  }
  func.func @transform_0(%arg0: i32) -> (i32, i32, i32) {
    %c0_i32 = arith.constant 0 : i32
    %c0_i32_0 = arith.constant 0 : i32
    %c0_i32_1 = arith.constant 0 : i32
    return %arg0, %c0_i32, %c0_i32_0 : i32, i32, i32
  }
  func.func @transform_1(%arg0: i32) -> (i32, i32, i32) {
    %c0_i32 = arith.constant 0 : i32
    %c0_i32_0 = arith.constant 0 : i32
    %c0_i32_1 = arith.constant 0 : i32
    return %arg0, %c0_i32, %c0_i32_0 : i32, i32, i32
  }
}

module attributes {stable_mosaic.version = 11 : i64} {
  func.func @_linear_kernel(%arg0: i32, %arg1: memref<128x32xf32, #tpu.memory_space<vmem>>, %arg2: memref<32x96xf32, #tpu.memory_space<vmem>>, %arg3: memref<1x96xf32, #tpu.memory_space<vmem>>, %arg4: memref<128x96xf32, #tpu.memory_space<vmem>>) attributes {dimension_semantics = [#tpu.dimension_semantics<parallel>], iteration_bounds = array<i64: 2>, scalar_prefetch = 0 : i64, scratch_operands = 0 : i64, tpu.core_type = #tpu.core_type<tc>, window_params = [{transform_indices = @transform_0, window_bounds = array<i64: 128, 32>}, {pipeline_mode = #tpu.pipeline_mode<synchronous>, transform_indices = @transform_1, window_bounds = array<i64: 32, 96>}, {pipeline_mode = #tpu.pipeline_mode<synchronous>, transform_indices = @transform_2, window_bounds = array<i64: 1, 96>}, {transform_indices = @transform_3, window_bounds = array<i64: 128, 96>}]} {
    %c0 = arith.constant 0 : index
    %c0_0 = arith.constant 0 : index
    %0 = vector.load %arg1[%c0, %c0_0] : memref<128x32xf32, #tpu.memory_space<vmem>>, vector<128x32xf32>
    %c0_1 = arith.constant 0 : index
    %c0_2 = arith.constant 0 : index
    %1 = vector.load %arg2[%c0_1, %c0_2] : memref<32x96xf32, #tpu.memory_space<vmem>>, vector<32x96xf32>
    %cst = arith.constant dense<0.000000e+00> : vector<128x96xf32>
    %2 = tpu.matmul %0, %1, %cst {dimension_numbers = #tpu.dot_dimension_numbers<[1], [0], [0], [1], [0, 0, 1, 1], [], []>} : vector<128x32xf32>, vector<32x96xf32>, vector<128x96xf32> -> vector<128x96xf32>
    %c0_3 = arith.constant 0 : index
    %c0_4 = arith.constant 0 : index
    %3 = vector.load %arg3[%c0_3, %c0_4] : memref<1x96xf32, #tpu.memory_space<vmem>>, vector<1x96xf32>
    %4 = vector.broadcast %3 : vector<1x96xf32> to vector<128x96xf32>
    %5 = arith.addf %2, %4 : vector<128x96xf32>
    %c0_5 = arith.constant 0 : index
    %c0_6 = arith.constant 0 : index
    %6 = vector.load %arg4[%c0_5, %c0_6] : memref<128x96xf32, #tpu.memory_space<vmem>>, vector<128x96xf32>
    tpu.vector_store %arg4[%c0_5, %c0_6], %5 {strides = array<i32>} : memref<128x96xf32, #tpu.memory_space<vmem>>, vector<128x96xf32>,
    return
  }
  func.func @transform_0(%arg0: i32) -> (i32, i32) {
    %c0_i32 = arith.constant 0 : i32
    %c0_i32_0 = arith.constant 0 : i32
    return %arg0, %c0_i32 : i32, i32
  }
  func.func @transform_1(%arg0: i32) -> (i32, i32) {
    %c0_i32 = arith.constant 0 : i32
    %c0_i32_0 = arith.constant 0 : i32
    %c0_i32_1 = arith.constant 0 : i32
    return %c0_i32, %c0_i32_0 : i32, i32
  }
  func.func @transform_2(%arg0: i32) -> (i32, i32) {
    %c0_i32 = arith.constant 0 : i32
    %c0_i32_0 = arith.constant 0 : i32
    %c0_i32_1 = arith.constant 0 : i32
    return %c0_i32, %c0_i32_0 : i32, i32
  }
  func.func @transform_3(%arg0: i32) -> (i32, i32) {
    %c0_i32 = arith.constant 0 : i32
    %c0_i32_0 = arith.constant 0 : i32
    return %arg0, %c0_i32 : i32, i32
  }
}

module attributes {stable_mosaic.version = 11 : i64} {
  func.func @_proj_ln_ffn_kernel(%arg0: i32, %arg1: memref<128x32xf32, #tpu.memory_space<vmem>>, %arg2: memref<128x32xf32, #tpu.memory_space<vmem>>, %arg3: memref<32x32xf32, #tpu.memory_space<vmem>>, %arg4: memref<1x32xf32, #tpu.memory_space<vmem>>, %arg5: memref<1x32xf32, #tpu.memory_space<vmem>>, %arg6: memref<1x32xf32, #tpu.memory_space<vmem>>, %arg7: memref<32x128xf32, #tpu.memory_space<vmem>>, %arg8: memref<1x128xf32, #tpu.memory_space<vmem>>, %arg9: memref<128x32xf32, #tpu.memory_space<vmem>>, %arg10: memref<1x32xf32, #tpu.memory_space<vmem>>, %arg11: memref<128x32xf32, #tpu.memory_space<vmem>>) attributes {dimension_semantics = [#tpu.dimension_semantics<parallel>], iteration_bounds = array<i64: 2>, scalar_prefetch = 0 : i64, scratch_operands = 0 : i64, tpu.core_type = #tpu.core_type<tc>, window_params = [{transform_indices = @transform_0, window_bounds = array<i64: 128, 32>}, {transform_indices = @transform_1, window_bounds = array<i64: 128, 32>}, {pipeline_mode = #tpu.pipeline_mode<synchronous>, transform_indices = @transform_2, window_bounds = array<i64: 32, 32>}, {pipeline_mode = #tpu.pipeline_mode<synchronous>, transform_indices = @transform_3, window_bounds = array<i64: 1, 32>}, {pipeline_mode = #tpu.pipeline_mode<synchronous>, transform_indices = @transform_4, window_bounds = array<i64: 1, 32>}, {pipeline_mode = #tpu.pipeline_mode<synchronous>, transform_indices = @transform_5, window_bounds = array<i64: 1, 32>}, {pipeline_mode = #tpu.pipeline_mode<synchronous>, transform_indices = @transform_6, window_bounds = array<i64: 32, 128>}, {pipeline_mode = #tpu.pipeline_mode<synchronous>, transform_indices = @transform_7, window_bounds = array<i64: 1, 128>}, {pipeline_mode = #tpu.pipeline_mode<synchronous>, transform_indices = @transform_8, window_bounds = array<i64: 128, 32>}, {pipeline_mode = #tpu.pipeline_mode<synchronous>, transform_indices = @transform_9, window_bounds = array<i64: 1, 32>}, {transform_indices = @transform_10, window_bounds = array<i64: 128, 32>}]} {
    %c0 = arith.constant 0 : index
    %c0_0 = arith.constant 0 : index
    %0 = vector.load %arg1[%c0, %c0_0] : memref<128x32xf32, #tpu.memory_space<vmem>>, vector<128x32xf32>
    %c0_1 = arith.constant 0 : index
    %c0_2 = arith.constant 0 : index
    %1 = vector.load %arg3[%c0_1, %c0_2] : memref<32x32xf32, #tpu.memory_space<vmem>>, vector<32x32xf32>
    %cst = arith.constant dense<0.000000e+00> : vector<128x32xf32>
    %2 = tpu.matmul %0, %1, %cst {dimension_numbers = #tpu.dot_dimension_numbers<[1], [0], [0], [1], [0, 0, 1, 1], [], []>} : vector<128x32xf32>, vector<32x32xf32>, vector<128x32xf32> -> vector<128x32xf32>
    %c0_3 = arith.constant 0 : index
    %c0_4 = arith.constant 0 : index
    %3 = vector.load %arg4[%c0_3, %c0_4] : memref<1x32xf32, #tpu.memory_space<vmem>>, vector<1x32xf32>
    %4 = vector.broadcast %3 : vector<1x32xf32> to vector<128x32xf32>
    %5 = arith.addf %2, %4 : vector<128x32xf32>
    %c0_5 = arith.constant 0 : index
    %c0_6 = arith.constant 0 : index
    %6 = vector.load %arg2[%c0_5, %c0_6] : memref<128x32xf32, #tpu.memory_space<vmem>>, vector<128x32xf32>
    %7 = arith.addf %6, %5 : vector<128x32xf32>
    %c0_7 = arith.constant 0 : index
    %c0_8 = arith.constant 0 : index
    %8 = vector.load %arg5[%c0_7, %c0_8] : memref<1x32xf32, #tpu.memory_space<vmem>>, vector<1x32xf32>
    %c0_9 = arith.constant 0 : index
    %c0_10 = arith.constant 0 : index
    %9 = vector.load %arg6[%c0_9, %c0_10] : memref<1x32xf32, #tpu.memory_space<vmem>>, vector<1x32xf32>
    %cst_11 = arith.constant dense<0.000000e+00> : vector<128xf32>
    %10 = vector.multi_reduction <add>, %7, %cst_11 [1] : vector<128x32xf32> to vector<128xf32>
    %11 = vector.shape_cast %10 : vector<128xf32> to vector<128x1xf32>
    %cst_12 = arith.constant 3.200000e+01 : f32
    %12 = vector.broadcast %cst_12 : f32 to vector<128x1xf32>
    %13 = arith.divf %11, %12 : vector<128x1xf32>
    %14 = vector.broadcast %13 : vector<128x1xf32> to vector<128x32xf32>
    %15 = arith.subf %7, %14 : vector<128x32xf32>
    %16 = arith.mulf %15, %15 : vector<128x32xf32>
    %cst_13 = arith.constant dense<0.000000e+00> : vector<128xf32>
    %17 = vector.multi_reduction <add>, %16, %cst_13 [1] : vector<128x32xf32> to vector<128xf32>
    %18 = vector.shape_cast %17 : vector<128xf32> to vector<128x1xf32>
    %cst_14 = arith.constant 3.200000e+01 : f32
    %19 = vector.broadcast %cst_14 : f32 to vector<128x1xf32>
    %20 = arith.divf %18, %19 : vector<128x1xf32>
    %cst_15 = arith.constant 9.99999974E-6 : f32
    %21 = vector.broadcast %cst_15 : f32 to vector<128x1xf32>
    %22 = arith.addf %20, %21 : vector<128x1xf32>
    %23 = math.rsqrt %22 : vector<128x1xf32>
    %24 = vector.broadcast %23 : vector<128x1xf32> to vector<128x32xf32>
    %25 = arith.mulf %15, %24 : vector<128x32xf32>
    %26 = vector.broadcast %8 : vector<1x32xf32> to vector<128x32xf32>
    %27 = arith.mulf %25, %26 : vector<128x32xf32>
    %28 = vector.broadcast %9 : vector<1x32xf32> to vector<128x32xf32>
    %29 = arith.addf %27, %28 : vector<128x32xf32>
    %c0_16 = arith.constant 0 : index
    %c0_17 = arith.constant 0 : index
    %30 = vector.load %arg7[%c0_16, %c0_17] : memref<32x128xf32, #tpu.memory_space<vmem>>, vector<32x128xf32>
    %cst_18 = arith.constant dense<0.000000e+00> : vector<128x128xf32>
    %31 = tpu.matmul %29, %30, %cst_18 {dimension_numbers = #tpu.dot_dimension_numbers<[1], [0], [0], [1], [0, 0, 1, 1], [], []>} : vector<128x32xf32>, vector<32x128xf32>, vector<128x128xf32> -> vector<128x128xf32>
    %c0_19 = arith.constant 0 : index
    %c0_20 = arith.constant 0 : index
    %32 = vector.load %arg8[%c0_19, %c0_20] : memref<1x128xf32, #tpu.memory_space<vmem>>, vector<1x128xf32>
    %33 = vector.broadcast %32 : vector<1x128xf32> to vector<128x128xf32>
    %34 = arith.addf %31, %33 : vector<128x128xf32>
    %cst_21 = arith.constant 0.000000e+00 : f32
    %35 = vector.broadcast %cst_21 : f32 to vector<128x128xf32>
    %36 = arith.maximumf %34, %35 : vector<128x128xf32>
    %c0_22 = arith.constant 0 : index
    %c0_23 = arith.constant 0 : index
    %37 = vector.load %arg9[%c0_22, %c0_23] : memref<128x32xf32, #tpu.memory_space<vmem>>, vector<128x32xf32>
    %cst_24 = arith.constant dense<0.000000e+00> : vector<128x32xf32>
    %38 = tpu.matmul %36, %37, %cst_24 {dimension_numbers = #tpu.dot_dimension_numbers<[1], [0], [0], [1], [0, 0, 1, 1], [], []>} : vector<128x128xf32>, vector<128x32xf32>, vector<128x32xf32> -> vector<128x32xf32>
    %c0_25 = arith.constant 0 : index
    %c0_26 = arith.constant 0 : index
    %39 = vector.load %arg10[%c0_25, %c0_26] : memref<1x32xf32, #tpu.memory_space<vmem>>, vector<1x32xf32>
    %40 = vector.broadcast %39 : vector<1x32xf32> to vector<128x32xf32>
    %41 = arith.addf %38, %40 : vector<128x32xf32>
    %42 = arith.addf %29, %41 : vector<128x32xf32>
    %c0_27 = arith.constant 0 : index
    %c0_28 = arith.constant 0 : index
    %43 = vector.load %arg11[%c0_27, %c0_28] : memref<128x32xf32, #tpu.memory_space<vmem>>, vector<128x32xf32>
    tpu.vector_store %arg11[%c0_27, %c0_28], %42 {strides = array<i32>} : memref<128x32xf32, #tpu.memory_space<vmem>>, vector<128x32xf32>,
    return
  }
  func.func @transform_0(%arg0: i32) -> (i32, i32) {
    %c0_i32 = arith.constant 0 : i32
    %c0_i32_0 = arith.constant 0 : i32
    return %arg0, %c0_i32 : i32, i32
  }
  func.func @transform_1(%arg0: i32) -> (i32, i32) {
    %c0_i32 = arith.constant 0 : i32
    %c0_i32_0 = arith.constant 0 : i32
    return %arg0, %c0_i32 : i32, i32
  }
  func.func @transform_2(%arg0: i32) -> (i32, i32) {
    %c0_i32 = arith.constant 0 : i32
    %c0_i32_0 = arith.constant 0 : i32
    %c0_i32_1 = arith.constant 0 : i32
    return %c0_i32, %c0_i32_0 : i32, i32
  }
  func.func @transform_3(%arg0: i32) -> (i32, i32) {
    %c0_i32 = arith.constant 0 : i32
    %c0_i32_0 = arith.constant 0 : i32
    %c0_i32_1 = arith.constant 0 : i32
    return %c0_i32, %c0_i32_0 : i32, i32
  }
  func.func @transform_4(%arg0: i32) -> (i32, i32) {
    %c0_i32 = arith.constant 0 : i32
    %c0_i32_0 = arith.constant 0 : i32
    %c0_i32_1 = arith.constant 0 : i32
    return %c0_i32, %c0_i32_0 : i32, i32
  }
  func.func @transform_5(%arg0: i32) -> (i32, i32) {
    %c0_i32 = arith.constant 0 : i32
    %c0_i32_0 = arith.constant 0 : i32
    %c0_i32_1 = arith.constant 0 : i32
    return %c0_i32, %c0_i32_0 : i32, i32
  }
  func.func @transform_6(%arg0: i32) -> (i32, i32) {
    %c0_i32 = arith.constant 0 : i32
    %c0_i32_0 = arith.constant 0 : i32
    %c0_i32_1 = arith.constant 0 : i32
    return %c0_i32, %c0_i32_0 : i32, i32
  }
  func.func @transform_7(%arg0: i32) -> (i32, i32) {
    %c0_i32 = arith.constant 0 : i32
    %c0_i32_0 = arith.constant 0 : i32
    %c0_i32_1 = arith.constant 0 : i32
    return %c0_i32, %c0_i32_0 : i32, i32
  }
  func.func @transform_8(%arg0: i32) -> (i32, i32) {
    %c0_i32 = arith.constant 0 : i32
    %c0_i32_0 = arith.constant 0 : i32
    %c0_i32_1 = arith.constant 0 : i32
    return %c0_i32, %c0_i32_0 : i32, i32
  }
  func.func @transform_9(%arg0: i32) -> (i32, i32) {
    %c0_i32 = arith.constant 0 : i32
    %c0_i32_0 = arith.constant 0 : i32
    %c0_i32_1 = arith.constant 0 : i32
    return %c0_i32, %c0_i32_0 : i32, i32
  }
  func.func @transform_10(%arg0: i32) -> (i32, i32) {
    %c0_i32 = arith.constant 0 : i32
    %c0_i32_0 = arith.constant 0 : i32
    return %arg0, %c0_i32 : i32, i32
  }
}

</mosaic_0001>

<llo_original>
// kernel: stgnn_layer_pallas.5
$region0: #{stgnn_layer_pallas.5}
  #allocation0 [shape = 'u32[]', space=smem, size = 0x4, offset = 0x4, fixed_abs, tag = 'smem constant byte address 0x4 - core index']
  #allocation1 [shape = 'u32[72,128]{1,0:T(1,128)}', space=vmem, size = 0x9000, scoped, tag = 'internal scratch']
  %s0 = inlined_call_operand.vmem [shape: f32[256,32], index: 0, kind: input, shape index: {}]
  %s1 = inlined_call_operand.vmem [shape: f32[32,40], index: 1, kind: input, shape index: {}]
  %s2 = inlined_call_operand.vmem [shape: f32[1,40], index: 2, kind: input, shape index: {}]
  %s3 = inlined_call_operand.vmem [shape: f32[256,40], index: 3, kind: output, shape index: {}]
  %s4 = sld [smem:[#allocation0]]
  $region45: #{stgnn_layer_pallas.5} parent=0
    _
  %s6 = ssub.s32 1, %s4
  %s7 = scalar_select 0, %s6, %s4
  loop: start=0, step=1, limit=4
  $region2: #{stgnn_layer_pallas.5} parent=0 // loop_pre_header
    _
  $region3: #{stgnn_layer_pallas.5} parent=0 // loop_header
    %s9 = sphi 0, %s13
    %p10 = scmp.ge.s32.totalorder %s9, 4
    %s19 = sphi 0, %s21
    %s22 = sphi 0, %s19
    %s23 = sphi 0, %s22
    %s39 = sphi 0, %s23
    %s43 = sphi 0, %s43
    %s45 = sphi 0, %s43
    %s46 = sphi 0, %s45
    %s60 = sphi 0, %s46
    %s64 = sphi 0, %s64
    %s66 = sphi 0, %s64
    %s67 = sphi 0, %s66
    %s81 = sphi 0, %s67
    %s87 = sphi 0, %s89
    %s90 = sphi 0, %s87
    %s91 = sphi 0, %s90
    %s107 = sphi 0, %s91
  $region4: #{stgnn_layer_pallas.5} parent=0 // loop_header_branch
    %12 = sbr.rel (%p10) target = $region8
  $region5: #{stgnn_layer_pallas.5} parent=0 // loop_body
    %s14 = ssub.s32 %s9, 1
    %s15 = ssub.s32 %s9, 2
    %s16 = sadd.s32 %s9, 1
    %s17 = ssub.s32 %s9, %s16
    %p18 = scmp.eq.s32.totalorder %s17, 0
    %s20 = sadd.s32 %s19, 1
    %s21 = scalar_select %p18, %s19, %s20
    %p24 = pneg %p18
    %p25 = scmp.eq.s32.totalorder %s9, 1
    %p26 = por %p24, %p25
    %p27 = scmp.ne.s32.totalorder %s19, %s22
    %p28 = scmp.eq.s32.totalorder %s9, 0
    %p29 = por %p27, %p28
    %p30 = scmp.ne.s32.totalorder %s19, %s22
    %p31 = scmp.eq.s32.totalorder %s14, 1
    %p32 = por %p30, %p31
    %p33 = scmp.ne.s32.totalorder %s22, %s23
    %p34 = scmp.eq.s32.totalorder %s14, 0
    %p35 = por %p33, %p34
    %p36 = scmp.ne.s32.totalorder %s22, %s23
    %p37 = scmp.eq.s32.totalorder %s15, 1
    %p38 = por %p36, %p37
    %p40 = scmp.ne.s32.totalorder %s23, %s39
    %p41 = scmp.eq.s32.totalorder %s15, 0
    %p42 = por %p40, %p41
    %s44 = sadd.s32 %s43, 1
    %p47 = scmp.eq.s32.totalorder %s9, 1
    %p48 = scmp.ne.s32.totalorder %s43, %s45
    %p49 = scmp.eq.s32.totalorder %s9, 0
    %p50 = por %p48, %p49
    %p51 = scmp.ne.s32.totalorder %s43, %s45
    %p52 = scmp.eq.s32.totalorder %s14, 1
    %p53 = por %p51, %p52
    %p54 = scmp.ne.s32.totalorder %s45, %s46
    %p55 = scmp.eq.s32.totalorder %s14, 0
    %p56 = por %p54, %p55
    %p57 = scmp.ne.s32.totalorder %s45, %s46
    %p58 = scmp.eq.s32.totalorder %s15, 1
    %p59 = por %p57, %p58
    %p61 = scmp.ne.s32.totalorder %s46, %s60
    %p62 = scmp.eq.s32.totalorder %s15, 0
    %p63 = por %p61, %p62
    %s65 = sadd.s32 %s64, 1
    %p68 = scmp.eq.s32.totalorder %s9, 1
    %p69 = scmp.ne.s32.totalorder %s64, %s66
    %p70 = scmp.eq.s32.totalorder %s9, 0
    %p71 = por %p69, %p70
    %p72 = scmp.ne.s32.totalorder %s64, %s66
    %p73 = scmp.eq.s32.totalorder %s14, 1
    %p74 = por %p72, %p73
    %p75 = scmp.ne.s32.totalorder %s66, %s67
    %p76 = scmp.eq.s32.totalorder %s14, 0
    %p77 = por %p75, %p76
    %p78 = scmp.ne.s32.totalorder %s66, %s67
    %p79 = scmp.eq.s32.totalorder %s15, 1
    %p80 = por %p78, %p79
    %p82 = scmp.ne.s32.totalorder %s67, %s81
    %p83 = scmp.eq.s32.totalorder %s15, 0
    %p84 = por %p82, %p83
    %s85 = ssub.s32 %s9, %s16
    %p86 = scmp.eq.s32.totalorder %s85, 0
    %s88 = sadd.s32 %s87, 1
    %s89 = scalar_select %p86, %s87, %s88
    %p92 = pneg %p86
    %p93 = scmp.eq.s32.totalorder %s9, 1
    %p94 = por %p92, %p93
    %p95 = scmp.ne.s32.totalorder %s87, %s90
    %p96 = scmp.eq.s32.totalorder %s9, 0
    %p97 = por %p95, %p96
    %p98 = scmp.ne.s32.totalorder %s87, %s90
    %p99 = scmp.eq.s32.totalorder %s14, 1
    %p100 = por %p98, %p99
    %p101 = scmp.ne.s32.totalorder %s90, %s91
    %p102 = scmp.eq.s32.totalorder %s14, 0
    %p103 = por %p101, %p102
    %p104 = scmp.ne.s32.totalorder %s90, %s91
    %p105 = scmp.eq.s32.totalorder %s15, 1
    %p106 = por %p104, %p105
    %p108 = scmp.ne.s32.totalorder %s91, %s107
    %p109 = scmp.eq.s32.totalorder %s15, 0
    %p110 = por %p108, %p109
    %p111 = scmp.le.s32.totalorder 1, %s9
    %p112 = scmp.lt.s32.totalorder %s9, 3
    %p113 = pnand %p111, %p112
    %p114 = pneg %p113
    // Predicated region
    $region9: #{stgnn_layer_pallas.5} parent=5 // pred_check
      _
    $region10: #{stgnn_layer_pallas.5} parent=5 // pred_check_branch
      %116 = sbr.rel (%p113) target = $region12
    $region11: #{stgnn_layer_pallas.5} parent=5 // pred_region
      %s117 = ssub.s32 %s9, 1
      // Predicated region
      $region13: #{stgnn_layer_pallas.5} parent=11 // pred_check
        %p118 = pneg %p56
      $region14: #{stgnn_layer_pallas.5} parent=11 // pred_check_branch
        %120 = sbr.rel (%p118) target = $region16
      $region15: #{stgnn_layer_pallas.5} parent=11 // pred_region
        _
      $region16: #{stgnn_layer_pallas.5} parent=11 // pred_fallthru
        _
      // Predicated region
      $region17: #{stgnn_layer_pallas.5} parent=11 // pred_check
        %p121 = pneg %p77
      $region18: #{stgnn_layer_pallas.5} parent=11 // pred_check_branch
        %123 = sbr.rel (%p121) target = $region20
      $region19: #{stgnn_layer_pallas.5} parent=11 // pred_region
        _
      $region20: #{stgnn_layer_pallas.5} parent=11 // pred_fallthru
        _
    $region12: #{stgnn_layer_pallas.5} parent=5 // pred_fallthru
      _
    %p124 = scmp.lt.s32.totalorder %s9, 2
    // Predicated region
    $region21: #{stgnn_layer_pallas.5} parent=5 // pred_check
      %p125 = pneg %p124
    $region22: #{stgnn_layer_pallas.5} parent=5 // pred_check_branch
      %127 = sbr.rel (%p125) target = $region24
    $region23: #{stgnn_layer_pallas.5} parent=5 // pred_region
      // Predicated region
      $region25: #{stgnn_layer_pallas.5} parent=23 // pred_check
        %p128 = pneg %p29
      $region26: #{stgnn_layer_pallas.5} parent=23 // pred_check_branch
        %130 = sbr.rel (%p128) target = $region28
      $region27: #{stgnn_layer_pallas.5} parent=23 // pred_region
        %s131 = smul.u32 16, %s9
        %p132 = scmp.lt.s32.totalorder %s131, 31
        %s133 = scalar_select %p132, %s131, 31
        %s134 = smul.addr %s133, 8
        %s135 = scalar_lea.vmem %s0, %s134
        %s136 = smul.u32 16, %s9
      $region28: #{stgnn_layer_pallas.5} parent=23 // pred_fallthru
        _
    $region24: #{stgnn_layer_pallas.5} parent=5 // pred_fallthru
      _
    %p137 = scmp.le.s32.totalorder 1, %s9
    %p138 = scmp.lt.s32.totalorder %s9, 3
    %p139 = pnand %p137, %p138
    %p140 = pneg %p139
    // Predicated region
    $region29: #{stgnn_layer_pallas.5} parent=5 // pred_check
      _
    $region30: #{stgnn_layer_pallas.5} parent=5 // pred_check_branch
      %142 = sbr.rel (%p139) target = $region32
    $region31: #{stgnn_layer_pallas.5} parent=5 // pred_region
      %s143 = ssub.s32 %s9, 1
      %s144 = smul.u32 16, %s14
      %p145 = scmp.lt.s32.totalorder %s144, 31
      %s146 = scalar_select %p145, %s144, 31
      %s147 = smul.addr %s146, 8
      %s148 = scalar_lea.vmem %s0, %s147
      %p149 = pneg %p35
      %p150 = pneg %p32
      %p151 = pneg %p56
      %p152 = pneg %p53
      %p153 = pneg %p77
      %p154 = pneg %p74
      %p155 = pneg %p103
      %p156 = pneg %p100
      %s157 = smul.u32 16, %s14
      %p158 = scmp.lt.s32.totalorder %s157, 31
      %s159 = scalar_select %p158, %s157, 31
      %s160 = smul.addr %s159, 8
      %s161 = scalar_lea.vmem %s3, %s160
      %s162 = smul.u32 16, %s14
      %p163 = scmp.lt.s32.totalorder %s162, 31
      %s164 = scalar_select %p163, %s162, 31
      %s165 = smul.addr %s164, 8
      %s166 = scalar_lea.vmem %s0, %s165
      %s167 = smul.u32 16, %s14
      %s168 = smul.u32 16, %s14
      %p169 = scmp.lt.s32.totalorder %s168, 31
      %s170 = scalar_select %p169, %s168, 31
      %s171 = smul.addr %s170, 8
      %s172 = scalar_lea.vmem %s3, %s171
      %s173 = smul.u32 16, %s14
      %v174 = vld [vmem:[%s166] sm:$0xff]
      %v175 = vld [vmem:[%s166 + $0x8] sm:$0xff]
      %v176 = vld [vmem:[%s166 + $0x10] sm:$0xff]
      %v177 = vld [vmem:[%s166 + $0x18] sm:$0xff]
      %v178 = vld [vmem:[%s166 + $0x20] sm:$0xff]
      %v179 = vld [vmem:[%s166 + $0x28] sm:$0xff]
      %v180 = vld [vmem:[%s166 + $0x30] sm:$0xff]
      %v181 = vld [vmem:[%s166 + $0x38] sm:$0xff]
      %v182 = vld [vmem:[%s166 + $0x40] sm:$0xff]
      %v183 = vld [vmem:[%s166 + $0x48] sm:$0xff]
      %v184 = vld [vmem:[%s166 + $0x50] sm:$0xff]
      %v185 = vld [vmem:[%s166 + $0x58] sm:$0xff]
      %v186 = vld [vmem:[%s166 + $0x60] sm:$0xff]
      %v187 = vld [vmem:[%s166 + $0x68] sm:$0xff]
      %v188 = vld [vmem:[%s166 + $0x70] sm:$0xff]
      %v189 = vld [vmem:[%s166 + $0x78] sm:$0xff]
      %v190 = vld [vmem:[%s1] sm:$0xff]
      %v191 = vld [vmem:[%s1 + $0x8] sm:$0xff]
      %v192 = vld [vmem:[%s1 + $0x10] sm:$0xff]
      %v193 = vld [vmem:[%s1 + $0x18] sm:$0xff]
      %v194 = vld [vmem:[%s2] sm:$0x1]
      %v196 = vperm.slane %v194, 0
      %vm198 = vcmask 261120
      %v200 = vsel %vm198, %v174, 0
      %v203 = vsel %vm198, %v175, 0
      %v206 = vsel %vm198, %v176, 0
      %v209 = vsel %vm198, %v177, 0
      %v212 = vsel %vm198, %v178, 0
      %v215 = vsel %vm198, %v179, 0
      %v218 = vsel %vm198, %v180, 0
      %v221 = vsel %vm198, %v181, 0
      %v224 = vsel %vm198, %v182, 0
      %v227 = vsel %vm198, %v183, 0
      %v230 = vsel %vm198, %v184, 0
      %v233 = vsel %vm198, %v185, 0
      %v236 = vsel %vm198, %v186, 0
      %v239 = vsel %vm198, %v187, 0
      %v242 = vsel %vm198, %v188, 0
      %v245 = vsel %vm198, %v189, 0
      %247 = vmatpush.msra.mxu0 0.0
      %248 = vmatpush.msra.mxu0 0.0
      %249 = vmatpush.msra.mxu0 0.0
      %250 = vmatpush.msra.mxu0 0.0
      %251 = vmatpush.msra.mxu0 0.0
      %252 = vmatpush.msra.mxu0 0.0
      %253 = vmatpush.msra.mxu0 0.0
      %254 = vmatpush.msra.mxu0 0.0
      %255 = vmatpush.msra.mxu0 0.0
      %256 = vmatpush.msra.mxu0 0.0
      %257 = vmatpush.msra.mxu0 0.0
      %258 = vmatpush.msra.mxu0 0.0
      %259 = vmatpush.msra.mxu0 %v193
      %260 = vmatpush.msra.mxu0 %v192
      %261 = vmatpush.msra.mxu0 %v191
      %262 = vmatpush.msra.mxu0 %v190
      %263 = vmatmul.f32.gmra.mxu0 %v200
      %v264 = vpop.f32.mrf.mxu0
      %v265 = vadd.f32 %v196, %v264
      %266 = vmatmul.f32.gmra.mxu0 %v203
      %v267 = vpop.f32.mrf.mxu0
      %v268 = vadd.f32 %v196, %v267
      %269 = vmatmul.f32.gmra.mxu0 %v206
      %v270 = vpop.f32.mrf.mxu0
      %v271 = vadd.f32 %v196, %v270
      %272 = vmatmul.f32.gmra.mxu0 %v209
      %v273 = vpop.f32.mrf.mxu0
      %v274 = vadd.f32 %v196, %v273
      %275 = vmatmul.f32.gmra.mxu0 %v212
      %v276 = vpop.f32.mrf.mxu0
      %v277 = vadd.f32 %v196, %v276
      %278 = vmatmul.f32.gmra.mxu0 %v215
      %v279 = vpop.f32.mrf.mxu0
      %v280 = vadd.f32 %v196, %v279
      %281 = vmatmul.f32.gmra.mxu0 %v218
      %v282 = vpop.f32.mrf.mxu0
      %v283 = vadd.f32 %v196, %v282
      %284 = vmatmul.f32.gmra.mxu0 %v221
      %v285 = vpop.f32.mrf.mxu0
      %v286 = vadd.f32 %v196, %v285
      %287 = vmatmul.f32.gmra.mxu0 %v224
      %v288 = vpop.f32.mrf.mxu0
      %v289 = vadd.f32 %v196, %v288
      %290 = vmatmul.f32.gmra.mxu0 %v227
      %v291 = vpop.f32.mrf.mxu0
      %v292 = vadd.f32 %v196, %v291
      %293 = vmatmul.f32.gmra.mxu0 %v230
      %v294 = vpop.f32.mrf.mxu0
      %v295 = vadd.f32 %v196, %v294
      %296 = vmatmul.f32.gmra.mxu0 %v233
      %v297 = vpop.f32.mrf.mxu0
      %v298 = vadd.f32 %v196, %v297
      %299 = vmatmul.f32.gmra.mxu0 %v236
      %v300 = vpop.f32.mrf.mxu0
      %v301 = vadd.f32 %v196, %v300
      %302 = vmatmul.f32.gmra.mxu0 %v239
      %v303 = vpop.f32.mrf.mxu0
      %v304 = vadd.f32 %v196, %v303
      %305 = vmatmul.f32.gmra.mxu0 %v242
      %v306 = vpop.f32.mrf.mxu0
      %v307 = vadd.f32 %v196, %v306
      %308 = vmatmul.f32.gmra.mxu0 %v245
      %v309 = vpop.f32.mrf.mxu0
      %v310 = vadd.f32 %v196, %v309
      %311 = vdwg.mxu0
      %vm312 = vcmask 326656
      %313 = vst.msk [vmem:[%s172] sm:$0xff] %vm312, %v265
      %314 = vst.msk [vmem:[%s172 + $0x8] sm:$0xff] %vm312, %v268
      %315 = vst.msk [vmem:[%s172 + $0x10] sm:$0xff] %vm312, %v271
      %316 = vst.msk [vmem:[%s172 + $0x18] sm:$0xff] %vm312, %v274
      %317 = vst.msk [vmem:[%s172 + $0x20] sm:$0xff] %vm312, %v277
      %318 = vst.msk [vmem:[%s172 + $0x28] sm:$0xff] %vm312, %v280
      %319 = vst.msk [vmem:[%s172 + $0x30] sm:$0xff] %vm312, %v283
      %320 = vst.msk [vmem:[%s172 + $0x38] sm:$0xff] %vm312, %v286
      %321 = vst.msk [vmem:[%s172 + $0x40] sm:$0xff] %vm312, %v289
      %322 = vst.msk [vmem:[%s172 + $0x48] sm:$0xff] %vm312, %v292
      %323 = vst.msk [vmem:[%s172 + $0x50] sm:$0xff] %vm312, %v295
      %324 = vst.msk [vmem:[%s172 + $0x58] sm:$0xff] %vm312, %v298
      %325 = vst.msk [vmem:[%s172 + $0x60] sm:$0xff] %vm312, %v301
      %326 = vst.msk [vmem:[%s172 + $0x68] sm:$0xff] %vm312, %v304
      %327 = vst.msk [vmem:[%s172 + $0x70] sm:$0xff] %vm312, %v307
      %328 = vst.msk [vmem:[%s172 + $0x78] sm:$0xff] %vm312, %v310
      %s329 = smul.u32 16, %s14
      %p330 = scmp.lt.s32.totalorder %s329, 31
      %s331 = scalar_select %p330, %s329, 31
      %s332 = smul.addr %s331, 8
      %s333 = scalar_lea.vmem %s3, %s332
      // Predicated region
      $region33: #{stgnn_layer_pallas.5} parent=31 // pred_check
        %p334 = pneg %p100
      $region34: #{stgnn_layer_pallas.5} parent=31 // pred_check_branch
        %336 = sbr.rel (%p334) target = $region36
      $region35: #{stgnn_layer_pallas.5} parent=31 // pred_region
        %s337 = smul.u32 16, %s14
      $region36: #{stgnn_layer_pallas.5} parent=31 // pred_fallthru
        _
    $region32: #{stgnn_layer_pallas.5} parent=5 // pred_fallthru
      _
    %p338 = scmp.le.s32.totalorder 2, %s9
    // Predicated region
    $region37: #{stgnn_layer_pallas.5} parent=5 // pred_check
      %p339 = pneg %p338
    $region38: #{stgnn_layer_pallas.5} parent=5 // pred_check_branch
      %341 = sbr.rel (%p339) target = $region40
    $region39: #{stgnn_layer_pallas.5} parent=5 // pred_region
      %s342 = ssub.s32 %s9, 2
      // Predicated region
      $region41: #{stgnn_layer_pallas.5} parent=39 // pred_check
        %p343 = pneg %p106
      $region42: #{stgnn_layer_pallas.5} parent=39 // pred_check_branch
        %345 = sbr.rel (%p343) target = $region44
      $region43: #{stgnn_layer_pallas.5} parent=39 // pred_region
        %s346 = smul.u32 16, %s15
        %p347 = scmp.lt.s32.totalorder %s346, 31
        %s348 = scalar_select %p347, %s346, 31
        %s349 = smul.addr %s348, 8
        %s350 = scalar_lea.vmem %s3, %s349
      $region44: #{stgnn_layer_pallas.5} parent=39 // pred_fallthru
        _
    $region40: #{stgnn_layer_pallas.5} parent=5 // pred_fallthru
      _
  $region6: #{stgnn_layer_pallas.5} parent=0 // loop_footer
    %s13 = sadd.s32 1, %s9
  $region7: #{stgnn_layer_pallas.5} parent=0 // loop_footer_branch
    %8 = sbr.rel target = $region3
  $region8: #{stgnn_layer_pallas.5} parent=0 // loop_exit
    _

// kernel: stgnn_layer_pallas.7
$region0: #{stgnn_layer_pallas.7}
  #allocation0 [shape = 'u32[]', space=smem, size = 0x4, offset = 0x4, fixed_abs, tag = 'smem constant byte address 0x4 - core index']
  #allocation1 [shape = 'u32[72,128]{1,0:T(1,128)}', space=vmem, size = 0x9000, scoped, tag = 'internal scratch']
  %s0 = inlined_call_operand.vmem [shape: f32[256,32], index: 0, kind: input, shape index: {}]
  %s1 = inlined_call_operand.vmem [shape: f32[32,96], index: 1, kind: input, shape index: {}]
  %s2 = inlined_call_operand.vmem [shape: f32[1,96], index: 2, kind: input, shape index: {}]
  %s3 = inlined_call_operand.vmem [shape: f32[256,96], index: 3, kind: output, shape index: {}]
  %s4 = sld [smem:[#allocation0]]
  $region45: #{stgnn_layer_pallas.7} parent=0
    _
  %s6 = ssub.s32 1, %s4
  %s7 = scalar_select 0, %s6, %s4
  loop: start=0, step=1, limit=4
  $region2: #{stgnn_layer_pallas.7} parent=0 // loop_pre_header
    _
  $region3: #{stgnn_layer_pallas.7} parent=0 // loop_header
    %s9 = sphi 0, %s13
    %p10 = scmp.ge.s32.totalorder %s9, 4
    %s19 = sphi 0, %s21
    %s22 = sphi 0, %s19
    %s23 = sphi 0, %s22
    %s39 = sphi 0, %s23
    %s43 = sphi 0, %s43
    %s45 = sphi 0, %s43
    %s46 = sphi 0, %s45
    %s60 = sphi 0, %s46
    %s64 = sphi 0, %s64
    %s66 = sphi 0, %s64
    %s67 = sphi 0, %s66
    %s81 = sphi 0, %s67
    %s87 = sphi 0, %s89
    %s90 = sphi 0, %s87
    %s91 = sphi 0, %s90
    %s107 = sphi 0, %s91
  $region4: #{stgnn_layer_pallas.7} parent=0 // loop_header_branch
    %12 = sbr.rel (%p10) target = $region8
  $region5: #{stgnn_layer_pallas.7} parent=0 // loop_body
    %s14 = ssub.s32 %s9, 1
    %s15 = ssub.s32 %s9, 2
    %s16 = sadd.s32 %s9, 1
    %s17 = ssub.s32 %s9, %s16
    %p18 = scmp.eq.s32.totalorder %s17, 0
    %s20 = sadd.s32 %s19, 1
    %s21 = scalar_select %p18, %s19, %s20
    %p24 = pneg %p18
    %p25 = scmp.eq.s32.totalorder %s9, 1
    %p26 = por %p24, %p25
    %p27 = scmp.ne.s32.totalorder %s19, %s22
    %p28 = scmp.eq.s32.totalorder %s9, 0
    %p29 = por %p27, %p28
    %p30 = scmp.ne.s32.totalorder %s19, %s22
    %p31 = scmp.eq.s32.totalorder %s14, 1
    %p32 = por %p30, %p31
    %p33 = scmp.ne.s32.totalorder %s22, %s23
    %p34 = scmp.eq.s32.totalorder %s14, 0
    %p35 = por %p33, %p34
    %p36 = scmp.ne.s32.totalorder %s22, %s23
    %p37 = scmp.eq.s32.totalorder %s15, 1
    %p38 = por %p36, %p37
    %p40 = scmp.ne.s32.totalorder %s23, %s39
    %p41 = scmp.eq.s32.totalorder %s15, 0
    %p42 = por %p40, %p41
    %s44 = sadd.s32 %s43, 1
    %p47 = scmp.eq.s32.totalorder %s9, 1
    %p48 = scmp.ne.s32.totalorder %s43, %s45
    %p49 = scmp.eq.s32.totalorder %s9, 0
    %p50 = por %p48, %p49
    %p51 = scmp.ne.s32.totalorder %s43, %s45
    %p52 = scmp.eq.s32.totalorder %s14, 1
    %p53 = por %p51, %p52
    %p54 = scmp.ne.s32.totalorder %s45, %s46
    %p55 = scmp.eq.s32.totalorder %s14, 0
    %p56 = por %p54, %p55
    %p57 = scmp.ne.s32.totalorder %s45, %s46
    %p58 = scmp.eq.s32.totalorder %s15, 1
    %p59 = por %p57, %p58
    %p61 = scmp.ne.s32.totalorder %s46, %s60
    %p62 = scmp.eq.s32.totalorder %s15, 0
    %p63 = por %p61, %p62
    %s65 = sadd.s32 %s64, 1
    %p68 = scmp.eq.s32.totalorder %s9, 1
    %p69 = scmp.ne.s32.totalorder %s64, %s66
    %p70 = scmp.eq.s32.totalorder %s9, 0
    %p71 = por %p69, %p70
    %p72 = scmp.ne.s32.totalorder %s64, %s66
    %p73 = scmp.eq.s32.totalorder %s14, 1
    %p74 = por %p72, %p73
    %p75 = scmp.ne.s32.totalorder %s66, %s67
    %p76 = scmp.eq.s32.totalorder %s14, 0
    %p77 = por %p75, %p76
    %p78 = scmp.ne.s32.totalorder %s66, %s67
    %p79 = scmp.eq.s32.totalorder %s15, 1
    %p80 = por %p78, %p79
    %p82 = scmp.ne.s32.totalorder %s67, %s81
    %p83 = scmp.eq.s32.totalorder %s15, 0
    %p84 = por %p82, %p83
    %s85 = ssub.s32 %s9, %s16
    %p86 = scmp.eq.s32.totalorder %s85, 0
    %s88 = sadd.s32 %s87, 1
    %s89 = scalar_select %p86, %s87, %s88
    %p92 = pneg %p86
    %p93 = scmp.eq.s32.totalorder %s9, 1
    %p94 = por %p92, %p93
    %p95 = scmp.ne.s32.totalorder %s87, %s90
    %p96 = scmp.eq.s32.totalorder %s9, 0
    %p97 = por %p95, %p96
    %p98 = scmp.ne.s32.totalorder %s87, %s90
    %p99 = scmp.eq.s32.totalorder %s14, 1
    %p100 = por %p98, %p99
    %p101 = scmp.ne.s32.totalorder %s90, %s91
    %p102 = scmp.eq.s32.totalorder %s14, 0
    %p103 = por %p101, %p102
    %p104 = scmp.ne.s32.totalorder %s90, %s91
    %p105 = scmp.eq.s32.totalorder %s15, 1
    %p106 = por %p104, %p105
    %p108 = scmp.ne.s32.totalorder %s91, %s107
    %p109 = scmp.eq.s32.totalorder %s15, 0
    %p110 = por %p108, %p109
    %p111 = scmp.le.s32.totalorder 1, %s9
    %p112 = scmp.lt.s32.totalorder %s9, 3
    %p113 = pnand %p111, %p112
    %p114 = pneg %p113
    // Predicated region
    $region9: #{stgnn_layer_pallas.7} parent=5 // pred_check
      _
    $region10: #{stgnn_layer_pallas.7} parent=5 // pred_check_branch
      %116 = sbr.rel (%p113) target = $region12
    $region11: #{stgnn_layer_pallas.7} parent=5 // pred_region
      %s117 = ssub.s32 %s9, 1
      // Predicated region
      $region13: #{stgnn_layer_pallas.7} parent=11 // pred_check
        %p118 = pneg %p56
      $region14: #{stgnn_layer_pallas.7} parent=11 // pred_check_branch
        %120 = sbr.rel (%p118) target = $region16
      $region15: #{stgnn_layer_pallas.7} parent=11 // pred_region
        _
      $region16: #{stgnn_layer_pallas.7} parent=11 // pred_fallthru
        _
      // Predicated region
      $region17: #{stgnn_layer_pallas.7} parent=11 // pred_check
        %p121 = pneg %p77
      $region18: #{stgnn_layer_pallas.7} parent=11 // pred_check_branch
        %123 = sbr.rel (%p121) target = $region20
      $region19: #{stgnn_layer_pallas.7} parent=11 // pred_region
        _
      $region20: #{stgnn_layer_pallas.7} parent=11 // pred_fallthru
        _
    $region12: #{stgnn_layer_pallas.7} parent=5 // pred_fallthru
      _
    %p124 = scmp.lt.s32.totalorder %s9, 2
    // Predicated region
    $region21: #{stgnn_layer_pallas.7} parent=5 // pred_check
      %p125 = pneg %p124
    $region22: #{stgnn_layer_pallas.7} parent=5 // pred_check_branch
      %127 = sbr.rel (%p125) target = $region24
    $region23: #{stgnn_layer_pallas.7} parent=5 // pred_region
      // Predicated region
      $region25: #{stgnn_layer_pallas.7} parent=23 // pred_check
        %p128 = pneg %p29
      $region26: #{stgnn_layer_pallas.7} parent=23 // pred_check_branch
        %130 = sbr.rel (%p128) target = $region28
      $region27: #{stgnn_layer_pallas.7} parent=23 // pred_region
        %s131 = smul.u32 16, %s9
        %p132 = scmp.lt.s32.totalorder %s131, 31
        %s133 = scalar_select %p132, %s131, 31
        %s134 = smul.addr %s133, 8
        %s135 = scalar_lea.vmem %s0, %s134
        %s136 = smul.u32 16, %s9
      $region28: #{stgnn_layer_pallas.7} parent=23 // pred_fallthru
        _
    $region24: #{stgnn_layer_pallas.7} parent=5 // pred_fallthru
      _
    %p137 = scmp.le.s32.totalorder 1, %s9
    %p138 = scmp.lt.s32.totalorder %s9, 3
    %p139 = pnand %p137, %p138
    %p140 = pneg %p139
    // Predicated region
    $region29: #{stgnn_layer_pallas.7} parent=5 // pred_check
      _
    $region30: #{stgnn_layer_pallas.7} parent=5 // pred_check_branch
      %142 = sbr.rel (%p139) target = $region32
    $region31: #{stgnn_layer_pallas.7} parent=5 // pred_region
      %s143 = ssub.s32 %s9, 1
      %s144 = smul.u32 16, %s14
      %p145 = scmp.lt.s32.totalorder %s144, 31
      %s146 = scalar_select %p145, %s144, 31
      %s147 = smul.addr %s146, 8
      %s148 = scalar_lea.vmem %s0, %s147
      %p149 = pneg %p35
      %p150 = pneg %p32
      %p151 = pneg %p56
      %p152 = pneg %p53
      %p153 = pneg %p77
      %p154 = pneg %p74
      %p155 = pneg %p103
      %p156 = pneg %p100
      %s157 = smul.u32 16, %s14
      %p158 = scmp.lt.s32.totalorder %s157, 31
      %s159 = scalar_select %p158, %s157, 31
      %s160 = smul.addr %s159, 8
      %s161 = scalar_lea.vmem %s3, %s160
      %s162 = smul.u32 16, %s14
      %p163 = scmp.lt.s32.totalorder %s162, 31
      %s164 = scalar_select %p163, %s162, 31
      %s165 = smul.addr %s164, 8
      %s166 = scalar_lea.vmem %s0, %s165
      %s167 = smul.u32 16, %s14
      %s168 = smul.u32 16, %s14
      %p169 = scmp.lt.s32.totalorder %s168, 31
      %s170 = scalar_select %p169, %s168, 31
      %s171 = smul.addr %s170, 8
      %s172 = scalar_lea.vmem %s3, %s171
      %s173 = smul.u32 16, %s14
      %v174 = vld [vmem:[%s166] sm:$0xff]
      %v175 = vld [vmem:[%s166 + $0x8] sm:$0xff]
      %v176 = vld [vmem:[%s166 + $0x10] sm:$0xff]
      %v177 = vld [vmem:[%s166 + $0x18] sm:$0xff]
      %v178 = vld [vmem:[%s166 + $0x20] sm:$0xff]
      %v179 = vld [vmem:[%s166 + $0x28] sm:$0xff]
      %v180 = vld [vmem:[%s166 + $0x30] sm:$0xff]
      %v181 = vld [vmem:[%s166 + $0x38] sm:$0xff]
      %v182 = vld [vmem:[%s166 + $0x40] sm:$0xff]
      %v183 = vld [vmem:[%s166 + $0x48] sm:$0xff]
      %v184 = vld [vmem:[%s166 + $0x50] sm:$0xff]
      %v185 = vld [vmem:[%s166 + $0x58] sm:$0xff]
      %v186 = vld [vmem:[%s166 + $0x60] sm:$0xff]
      %v187 = vld [vmem:[%s166 + $0x68] sm:$0xff]
      %v188 = vld [vmem:[%s166 + $0x70] sm:$0xff]
      %v189 = vld [vmem:[%s166 + $0x78] sm:$0xff]
      %v190 = vld [vmem:[%s1] sm:$0xff]
      %v191 = vld [vmem:[%s1 + $0x8] sm:$0xff]
      %v192 = vld [vmem:[%s1 + $0x10] sm:$0xff]
      %v193 = vld [vmem:[%s1 + $0x18] sm:$0xff]
      %v194 = vld [vmem:[%s2] sm:$0x1]
      %v196 = vperm.slane %v194, 0
      %vm198 = vcmask 261120
      %v200 = vsel %vm198, %v174, 0
      %v203 = vsel %vm198, %v175, 0
      %v206 = vsel %vm198, %v176, 0
      %v209 = vsel %vm198, %v177, 0
      %v212 = vsel %vm198, %v178, 0
      %v215 = vsel %vm198, %v179, 0
      %v218 = vsel %vm198, %v180, 0
      %v221 = vsel %vm198, %v181, 0
      %v224 = vsel %vm198, %v182, 0
      %v227 = vsel %vm198, %v183, 0
      %v230 = vsel %vm198, %v184, 0
      %v233 = vsel %vm198, %v185, 0
      %v236 = vsel %vm198, %v186, 0
      %v239 = vsel %vm198, %v187, 0
      %v242 = vsel %vm198, %v188, 0
      %v245 = vsel %vm198, %v189, 0
      %247 = vmatpush.msra.mxu0 0.0
      %248 = vmatpush.msra.mxu0 0.0
      %249 = vmatpush.msra.mxu0 0.0
      %250 = vmatpush.msra.mxu0 0.0
      %251 = vmatpush.msra.mxu0 0.0
      %252 = vmatpush.msra.mxu0 0.0
      %253 = vmatpush.msra.mxu0 0.0
      %254 = vmatpush.msra.mxu0 0.0
      %255 = vmatpush.msra.mxu0 0.0
      %256 = vmatpush.msra.mxu0 0.0
      %257 = vmatpush.msra.mxu0 0.0
      %258 = vmatpush.msra.mxu0 0.0
      %259 = vmatpush.msra.mxu0 %v193
      %260 = vmatpush.msra.mxu0 %v192
      %261 = vmatpush.msra.mxu0 %v191
      %262 = vmatpush.msra.mxu0 %v190
      %263 = vmatmul.f32.gmra.mxu0 %v200
      %v264 = vpop.f32.mrf.mxu0
      %v265 = vadd.f32 %v196, %v264
      %266 = vmatmul.f32.gmra.mxu0 %v203
      %v267 = vpop.f32.mrf.mxu0
      %v268 = vadd.f32 %v196, %v267
      %269 = vmatmul.f32.gmra.mxu0 %v206
      %v270 = vpop.f32.mrf.mxu0
      %v271 = vadd.f32 %v196, %v270
      %272 = vmatmul.f32.gmra.mxu0 %v209
      %v273 = vpop.f32.mrf.mxu0
      %v274 = vadd.f32 %v196, %v273
      %275 = vmatmul.f32.gmra.mxu0 %v212
      %v276 = vpop.f32.mrf.mxu0
      %v277 = vadd.f32 %v196, %v276
      %278 = vmatmul.f32.gmra.mxu0 %v215
      %v279 = vpop.f32.mrf.mxu0
      %v280 = vadd.f32 %v196, %v279
      %281 = vmatmul.f32.gmra.mxu0 %v218
      %v282 = vpop.f32.mrf.mxu0
      %v283 = vadd.f32 %v196, %v282
      %284 = vmatmul.f32.gmra.mxu0 %v221
      %v285 = vpop.f32.mrf.mxu0
      %v286 = vadd.f32 %v196, %v285
      %287 = vmatmul.f32.gmra.mxu0 %v224
      %v288 = vpop.f32.mrf.mxu0
      %v289 = vadd.f32 %v196, %v288
      %290 = vmatmul.f32.gmra.mxu0 %v227
      %v291 = vpop.f32.mrf.mxu0
      %v292 = vadd.f32 %v196, %v291
      %293 = vmatmul.f32.gmra.mxu0 %v230
      %v294 = vpop.f32.mrf.mxu0
      %v295 = vadd.f32 %v196, %v294
      %296 = vmatmul.f32.gmra.mxu0 %v233
      %v297 = vpop.f32.mrf.mxu0
      %v298 = vadd.f32 %v196, %v297
      %299 = vmatmul.f32.gmra.mxu0 %v236
      %v300 = vpop.f32.mrf.mxu0
      %v301 = vadd.f32 %v196, %v300
      %302 = vmatmul.f32.gmra.mxu0 %v239
      %v303 = vpop.f32.mrf.mxu0
      %v304 = vadd.f32 %v196, %v303
      %305 = vmatmul.f32.gmra.mxu0 %v242
      %v306 = vpop.f32.mrf.mxu0
      %v307 = vadd.f32 %v196, %v306
      %308 = vmatmul.f32.gmra.mxu0 %v245
      %v309 = vpop.f32.mrf.mxu0
      %v310 = vadd.f32 %v196, %v309
      %311 = vdwg.mxu0
      %vm312 = vcmask 785408
      %313 = vst.msk [vmem:[%s172] sm:$0xff] %vm312, %v265
      %314 = vst.msk [vmem:[%s172 + $0x8] sm:$0xff] %vm312, %v268
      %315 = vst.msk [vmem:[%s172 + $0x10] sm:$0xff] %vm312, %v271
      %316 = vst.msk [vmem:[%s172 + $0x18] sm:$0xff] %vm312, %v274
      %317 = vst.msk [vmem:[%s172 + $0x20] sm:$0xff] %vm312, %v277
      %318 = vst.msk [vmem:[%s172 + $0x28] sm:$0xff] %vm312, %v280
      %319 = vst.msk [vmem:[%s172 + $0x30] sm:$0xff] %vm312, %v283
      %320 = vst.msk [vmem:[%s172 + $0x38] sm:$0xff] %vm312, %v286
      %321 = vst.msk [vmem:[%s172 + $0x40] sm:$0xff] %vm312, %v289
      %322 = vst.msk [vmem:[%s172 + $0x48] sm:$0xff] %vm312, %v292
      %323 = vst.msk [vmem:[%s172 + $0x50] sm:$0xff] %vm312, %v295
      %324 = vst.msk [vmem:[%s172 + $0x58] sm:$0xff] %vm312, %v298
      %325 = vst.msk [vmem:[%s172 + $0x60] sm:$0xff] %vm312, %v301
      %326 = vst.msk [vmem:[%s172 + $0x68] sm:$0xff] %vm312, %v304
      %327 = vst.msk [vmem:[%s172 + $0x70] sm:$0xff] %vm312, %v307
      %328 = vst.msk [vmem:[%s172 + $0x78] sm:$0xff] %vm312, %v310
      %s329 = smul.u32 16, %s14
      %p330 = scmp.lt.s32.totalorder %s329, 31
      %s331 = scalar_select %p330, %s329, 31
      %s332 = smul.addr %s331, 8
      %s333 = scalar_lea.vmem %s3, %s332
      // Predicated region
      $region33: #{stgnn_layer_pallas.7} parent=31 // pred_check
        %p334 = pneg %p100
      $region34: #{stgnn_layer_pallas.7} parent=31 // pred_check_branch
        %336 = sbr.rel (%p334) target = $region36
      $region35: #{stgnn_layer_pallas.7} parent=31 // pred_region
        %s337 = smul.u32 16, %s14
      $region36: #{stgnn_layer_pallas.7} parent=31 // pred_fallthru
        _
    $region32: #{stgnn_layer_pallas.7} parent=5 // pred_fallthru
      _
    %p338 = scmp.le.s32.totalorder 2, %s9
    // Predicated region
    $region37: #{stgnn_layer_pallas.7} parent=5 // pred_check
      %p339 = pneg %p338
    $region38: #{stgnn_layer_pallas.7} parent=5 // pred_check_branch
      %341 = sbr.rel (%p339) target = $region40
    $region39: #{stgnn_layer_pallas.7} parent=5 // pred_region
      %s342 = ssub.s32 %s9, 2
      // Predicated region
      $region41: #{stgnn_layer_pallas.7} parent=39 // pred_check
        %p343 = pneg %p106
      $region42: #{stgnn_layer_pallas.7} parent=39 // pred_check_branch
        %345 = sbr.rel (%p343) target = $region44
      $region43: #{stgnn_layer_pallas.7} parent=39 // pred_region
        %s346 = smul.u32 16, %s15
        %p347 = scmp.lt.s32.totalorder %s346, 31
        %s348 = scalar_select %p347, %s346, 31
        %s349 = smul.addr %s348, 8
        %s350 = scalar_lea.vmem %s3, %s349
      $region44: #{stgnn_layer_pallas.7} parent=39 // pred_fallthru
        _
    $region40: #{stgnn_layer_pallas.7} parent=5 // pred_fallthru
      _
  $region6: #{stgnn_layer_pallas.7} parent=0 // loop_footer
    %s13 = sadd.s32 1, %s9
  $region7: #{stgnn_layer_pallas.7} parent=0 // loop_footer_branch
    %8 = sbr.rel target = $region3
  $region8: #{stgnn_layer_pallas.7} parent=0 // loop_exit
    _

// kernel: stgnn_layer_pallas.6
$region0: #{stgnn_layer_pallas.6}
  #allocation0 [shape = 'u32[]', space=smem, size = 0x4, offset = 0x4, fixed_abs, tag = 'smem constant byte address 0x4 - core index']
  #allocation1 [shape = 'u32[72,128]{1,0:T(1,128)}', space=vmem, size = 0x9000, scoped, tag = 'internal scratch']
  %s0 = inlined_call_operand.vmem [shape: f32[16,16,4], index: 0, kind: input, shape index: {}]
  %s1 = inlined_call_operand.vmem [shape: f32[16,4,16], index: 1, kind: input, shape index: {}]
  %s2 = inlined_call_operand.vmem [shape: f32[16,32,16], index: 2, kind: input, shape index: {}]
  %s3 = inlined_call_operand.vmem [shape: f32[16,16,32], index: 3, kind: input, shape index: {}]
  %s4 = inlined_call_operand.vmem [shape: f32[1,32], index: 4, kind: input, shape index: {}]
  %s5 = inlined_call_operand.vmem [shape: f32[1,32], index: 5, kind: input, shape index: {}]
  %s6 = inlined_call_operand.vmem [shape: f32[16,16,32], index: 6, kind: output, shape index: {0}]
  %s7 = inlined_call_operand.hbm [shape: f32[16,16,16], index: 7, kind: output, shape index: {1}]
  %8 = xla_tuple %s6, %s7
  %s9 = sld [smem:[#allocation0]]
  $region65: #{stgnn_layer_pallas.6} parent=0
    _
  %s11 = ssub.s32 1, %s9
  %s12 = scalar_select 0, %s11, %s9
  $region1: #{stgnn_layer_pallas.6} parent=0
    #allocation2 [shape = 'u8[131072]{0}', space=vmem, size = 0x20000, scoped, tag = 'output window, operand 1']
    #allocation3 [shape = 's32[2]{0}', space=sflag, size = 0x8, scoped, tag = 'scoped memory for stgnn_layer_pallas.6']
    %13 = vsyncpa [#allocation3], 0
    %s14 = scalar_lea.sflag [#allocation3], 1
    %15 = vsyncpa %s14, 0
    loop: start=0, step=1, limit=4
    $region2: #{stgnn_layer_pallas.6} parent=1 // loop_pre_header
      _
    $region3: #{stgnn_layer_pallas.6} parent=1 // loop_header
      %s17 = sphi 0, %s21
      %p18 = scmp.ge.s32.totalorder %s17, 4
      %s27 = sphi 0, %s29
      %s30 = sphi 0, %s27
      %s31 = sphi 0, %s30
      %s47 = sphi 0, %s31
      %s53 = sphi 0, %s55
      %s56 = sphi 0, %s53
      %s57 = sphi 0, %s56
      %s73 = sphi 0, %s57
      %s79 = sphi 0, %s81
      %s82 = sphi 0, %s79
      %s83 = sphi 0, %s82
      %s99 = sphi 0, %s83
      %s105 = sphi 0, %s107
      %s108 = sphi 0, %s105
      %s109 = sphi 0, %s108
      %s125 = sphi 0, %s109
      %s129 = sphi 0, %s129
      %s131 = sphi 0, %s129
      %s132 = sphi 0, %s131
      %s146 = sphi 0, %s132
      %s150 = sphi 0, %s150
      %s152 = sphi 0, %s150
      %s153 = sphi 0, %s152
      %s167 = sphi 0, %s153
      %s173 = sphi 0, %s175
      %s176 = sphi 0, %s173
      %s177 = sphi 0, %s176
      %s193 = sphi 0, %s177
      %s199 = sphi 0, %s201
      %s202 = sphi 0, %s199
      %s203 = sphi 0, %s202
      %s219 = sphi 0, %s203
    $region4: #{stgnn_layer_pallas.6} parent=1 // loop_header_branch
      %20 = sbr.rel (%p18) target = $region8
    $region5: #{stgnn_layer_pallas.6} parent=1 // loop_body
      %s22 = ssub.s32 %s17, 1
      %s23 = ssub.s32 %s17, 2
      %s24 = sadd.s32 %s17, 1
      %s25 = ssub.s32 %s17, %s24
      %p26 = scmp.eq.s32.totalorder %s25, 0
      %s28 = sadd.s32 %s27, 1
      %s29 = scalar_select %p26, %s27, %s28
      %p32 = pneg %p26
      %p33 = scmp.eq.s32.totalorder %s17, 1
      %p34 = por %p32, %p33
      %p35 = scmp.ne.s32.totalorder %s27, %s30
      %p36 = scmp.eq.s32.totalorder %s17, 0
      %p37 = por %p35, %p36
      %p38 = scmp.ne.s32.totalorder %s27, %s30
      %p39 = scmp.eq.s32.totalorder %s22, 1
      %p40 = por %p38, %p39
      %p41 = scmp.ne.s32.totalorder %s30, %s31
      %p42 = scmp.eq.s32.totalorder %s22, 0
      %p43 = por %p41, %p42
      %p44 = scmp.ne.s32.totalorder %s30, %s31
      %p45 = scmp.eq.s32.totalorder %s23, 1
      %p46 = por %p44, %p45
      %p48 = scmp.ne.s32.totalorder %s31, %s47
      %p49 = scmp.eq.s32.totalorder %s23, 0
      %p50 = por %p48, %p49
      %s51 = ssub.s32 %s17, %s24
      %p52 = scmp.eq.s32.totalorder %s51, 0
      %s54 = sadd.s32 %s53, 1
      %s55 = scalar_select %p52, %s53, %s54
      %p58 = pneg %p52
      %p59 = scmp.eq.s32.totalorder %s17, 1
      %p60 = por %p58, %p59
      %p61 = scmp.ne.s32.totalorder %s53, %s56
      %p62 = scmp.eq.s32.totalorder %s17, 0
      %p63 = por %p61, %p62
      %p64 = scmp.ne.s32.totalorder %s53, %s56
      %p65 = scmp.eq.s32.totalorder %s22, 1
      %p66 = por %p64, %p65
      %p67 = scmp.ne.s32.totalorder %s56, %s57
      %p68 = scmp.eq.s32.totalorder %s22, 0
      %p69 = por %p67, %p68
      %p70 = scmp.ne.s32.totalorder %s56, %s57
      %p71 = scmp.eq.s32.totalorder %s23, 1
      %p72 = por %p70, %p71
      %p74 = scmp.ne.s32.totalorder %s57, %s73
      %p75 = scmp.eq.s32.totalorder %s23, 0
      %p76 = por %p74, %p75
      %s77 = ssub.s32 %s17, %s24
      %p78 = scmp.eq.s32.totalorder %s77, 0
      %s80 = sadd.s32 %s79, 1
      %s81 = scalar_select %p78, %s79, %s80
      %p84 = pneg %p78
      %p85 = scmp.eq.s32.totalorder %s17, 1
      %p86 = por %p84, %p85
      %p87 = scmp.ne.s32.totalorder %s79, %s82
      %p88 = scmp.eq.s32.totalorder %s17, 0
      %p89 = por %p87, %p88
      %p90 = scmp.ne.s32.totalorder %s79, %s82
      %p91 = scmp.eq.s32.totalorder %s22, 1
      %p92 = por %p90, %p91
      %p93 = scmp.ne.s32.totalorder %s82, %s83
      %p94 = scmp.eq.s32.totalorder %s22, 0
      %p95 = por %p93, %p94
      %p96 = scmp.ne.s32.totalorder %s82, %s83
      %p97 = scmp.eq.s32.totalorder %s23, 1
      %p98 = por %p96, %p97
      %p100 = scmp.ne.s32.totalorder %s83, %s99
      %p101 = scmp.eq.s32.totalorder %s23, 0
      %p102 = por %p100, %p101
      %s103 = ssub.s32 %s17, %s24
      %p104 = scmp.eq.s32.totalorder %s103, 0
      %s106 = sadd.s32 %s105, 1
      %s107 = scalar_select %p104, %s105, %s106
      %p110 = pneg %p104
      %p111 = scmp.eq.s32.totalorder %s17, 1
      %p112 = por %p110, %p111
      %p113 = scmp.ne.s32.totalorder %s105, %s108
      %p114 = scmp.eq.s32.totalorder %s17, 0
      %p115 = por %p113, %p114
      %p116 = scmp.ne.s32.totalorder %s105, %s108
      %p117 = scmp.eq.s32.totalorder %s22, 1
      %p118 = por %p116, %p117
      %p119 = scmp.ne.s32.totalorder %s108, %s109
      %p120 = scmp.eq.s32.totalorder %s22, 0
      %p121 = por %p119, %p120
      %p122 = scmp.ne.s32.totalorder %s108, %s109
      %p123 = scmp.eq.s32.totalorder %s23, 1
      %p124 = por %p122, %p123
      %p126 = scmp.ne.s32.totalorder %s109, %s125
      %p127 = scmp.eq.s32.totalorder %s23, 0
      %p128 = por %p126, %p127
      %s130 = sadd.s32 %s129, 1
      %p133 = scmp.eq.s32.totalorder %s17, 1
      %p134 = scmp.ne.s32.totalorder %s129, %s131
      %p135 = scmp.eq.s32.totalorder %s17, 0
      %p136 = por %p134, %p135
      %p137 = scmp.ne.s32.totalorder %s129, %s131
      %p138 = scmp.eq.s32.totalorder %s22, 1
      %p139 = por %p137, %p138
      %p140 = scmp.ne.s32.totalorder %s131, %s132
      %p141 = scmp.eq.s32.totalorder %s22, 0
      %p142 = por %p140, %p141
      %p143 = scmp.ne.s32.totalorder %s131, %s132
      %p144 = scmp.eq.s32.totalorder %s23, 1
      %p145 = por %p143, %p144
      %p147 = scmp.ne.s32.totalorder %s132, %s146
      %p148 = scmp.eq.s32.totalorder %s23, 0
      %p149 = por %p147, %p148
      %s151 = sadd.s32 %s150, 1
      %p154 = scmp.eq.s32.totalorder %s17, 1
      %p155 = scmp.ne.s32.totalorder %s150, %s152
      %p156 = scmp.eq.s32.totalorder %s17, 0
      %p157 = por %p155, %p156
      %p158 = scmp.ne.s32.totalorder %s150, %s152
      %p159 = scmp.eq.s32.totalorder %s22, 1
      %p160 = por %p158, %p159
      %p161 = scmp.ne.s32.totalorder %s152, %s153
      %p162 = scmp.eq.s32.totalorder %s22, 0
      %p163 = por %p161, %p162
      %p164 = scmp.ne.s32.totalorder %s152, %s153
      %p165 = scmp.eq.s32.totalorder %s23, 1
      %p166 = por %p164, %p165
      %p168 = scmp.ne.s32.totalorder %s153, %s167
      %p169 = scmp.eq.s32.totalorder %s23, 0
      %p170 = por %p168, %p169
      %s171 = ssub.s32 %s17, %s24
      %p172 = scmp.eq.s32.totalorder %s171, 0
      %s174 = sadd.s32 %s173, 1
      %s175 = scalar_select %p172, %s173, %s174
      %p178 = pneg %p172
      %p179 = scmp.eq.s32.totalorder %s17, 1
      %p180 = por %p178, %p179
      %p181 = scmp.ne.s32.totalorder %s173, %s176
      %p182 = scmp.eq.s32.totalorder %s17, 0
      %p183 = por %p181, %p182
      %p184 = scmp.ne.s32.totalorder %s173, %s176
      %p185 = scmp.eq.s32.totalorder %s22, 1
      %p186 = por %p184, %p185
      %p187 = scmp.ne.s32.totalorder %s176, %s177
      %p188 = scmp.eq.s32.totalorder %s22, 0
      %p189 = por %p187, %p188
      %p190 = scmp.ne.s32.totalorder %s176, %s177
      %p191 = scmp.eq.s32.totalorder %s23, 1
      %p192 = por %p190, %p191
      %p194 = scmp.ne.s32.totalorder %s177, %s193
      %p195 = scmp.eq.s32.totalorder %s23, 0
      %p196 = por %p194, %p195
      %s197 = ssub.s32 %s17, %s24
      %p198 = scmp.eq.s32.totalorder %s197, 0
      %s200 = sadd.s32 %s199, 1
      %s201 = scalar_select %p198, %s199, %s200
      %p204 = pneg %p198
      %p205 = scmp.eq.s32.totalorder %s17, 1
      %p206 = por %p204, %p205
      %p207 = scmp.ne.s32.totalorder %s199, %s202
      %p208 = scmp.eq.s32.totalorder %s17, 0
      %p209 = por %p207, %p208
      %p210 = scmp.ne.s32.totalorder %s199, %s202
      %p211 = scmp.eq.s32.totalorder %s22, 1
      %p212 = por %p210, %p211
      %p213 = scmp.ne.s32.totalorder %s202, %s203
      %p214 = scmp.eq.s32.totalorder %s22, 0
      %p215 = por %p213, %p214
      %p216 = scmp.ne.s32.totalorder %s202, %s203
      %p217 = scmp.eq.s32.totalorder %s23, 1
      %p218 = por %p216, %p217
      %p220 = scmp.ne.s32.totalorder %s203, %s219
      %p221 = scmp.eq.s32.totalorder %s23, 0
      %p222 = por %p220, %p221
      %p223 = scmp.le.s32.totalorder 1, %s17
      %p224 = scmp.lt.s32.totalorder %s17, 3
      %p225 = pnand %p223, %p224
      %p226 = pneg %p225
      // Predicated region
      $region9: #{stgnn_layer_pallas.6} parent=5 // pred_check
        _
      $region10: #{stgnn_layer_pallas.6} parent=5 // pred_check_branch
        %228 = sbr.rel (%p225) target = $region12
      $region11: #{stgnn_layer_pallas.6} parent=5 // pred_region
        %s229 = ssub.s32 %s17, 1
        // Predicated region
        $region13: #{stgnn_layer_pallas.6} parent=11 // pred_check
          %p230 = pneg %p142
        $region14: #{stgnn_layer_pallas.6} parent=11 // pred_check_branch
          %232 = sbr.rel (%p230) target = $region16
        $region15: #{stgnn_layer_pallas.6} parent=11 // pred_region
          _
        $region16: #{stgnn_layer_pallas.6} parent=11 // pred_fallthru
          _
        // Predicated region
        $region17: #{stgnn_layer_pallas.6} parent=11 // pred_check
          %p233 = pneg %p163
        $region18: #{stgnn_layer_pallas.6} parent=11 // pred_check_branch
          %235 = sbr.rel (%p233) target = $region20
        $region19: #{stgnn_layer_pallas.6} parent=11 // pred_region
          _
        $region20: #{stgnn_layer_pallas.6} parent=11 // pred_fallthru
          _
      $region12: #{stgnn_layer_pallas.6} parent=5 // pred_fallthru
        _
      %p236 = scmp.lt.s32.totalorder %s17, 2
      // Predicated region
      $region21: #{stgnn_layer_pallas.6} parent=5 // pred_check
        %p237 = pneg %p236
      $region22: #{stgnn_layer_pallas.6} parent=5 // pred_check_branch
        %239 = sbr.rel (%p237) target = $region24
      $region23: #{stgnn_layer_pallas.6} parent=5 // pred_region
        // Predicated region
        $region25: #{stgnn_layer_pallas.6} parent=23 // pred_check
          %p240 = pneg %p37
        $region26: #{stgnn_layer_pallas.6} parent=23 // pred_check_branch
          %242 = sbr.rel (%p240) target = $region28
        $region27: #{stgnn_layer_pallas.6} parent=23 // pred_region
          %s243 = smul.u32 8, %s17
          %p244 = scmp.lt.s32.totalorder %s243, 15
          %s245 = scalar_select %p244, %s243, 15
          %s246 = smul.addr %s245, 2
          %s247 = smul.addr %s246, 8
          %s248 = scalar_lea.vmem %s0, %s247
          %s249 = smul.u32 8, %s17
        $region28: #{stgnn_layer_pallas.6} parent=23 // pred_fallthru
          _
        // Predicated region
        $region29: #{stgnn_layer_pallas.6} parent=23 // pred_check
          %p250 = pneg %p63
        $region30: #{stgnn_layer_pallas.6} parent=23 // pred_check_branch
          %252 = sbr.rel (%p250) target = $region32
        $region31: #{stgnn_layer_pallas.6} parent=23 // pred_region
          %s253 = smul.u32 8, %s17
          %p254 = scmp.lt.s32.totalorder %s253, 15
          %s255 = scalar_select %p254, %s253, 15
          %s256 = smul.addr %s255, 4
          %s257 = scalar_lea.vmem %s1, %s256
          %s258 = smul.u32 8, %s17
        $region32: #{stgnn_layer_pallas.6} parent=23 // pred_fallthru
          _
        // Predicated region
        $region33: #{stgnn_layer_pallas.6} parent=23 // pred_check
          %p259 = pneg %p89
        $region34: #{stgnn_layer_pallas.6} parent=23 // pred_check_branch
          %261 = sbr.rel (%p259) target = $region36
        $region35: #{stgnn_layer_pallas.6} parent=23 // pred_region
          %s262 = smul.u32 8, %s17
          %p263 = scmp.lt.s32.totalorder %s262, 15
          %s264 = scalar_select %p263, %s262, 15
          %s265 = smul.addr %s264, 4
          %s266 = smul.addr %s265, 8
          %s267 = scalar_lea.vmem %s2, %s266
          %s268 = smul.u32 8, %s17
        $region36: #{stgnn_layer_pallas.6} parent=23 // pred_fallthru
          _
        // Predicated region
        $region37: #{stgnn_layer_pallas.6} parent=23 // pred_check
          %p269 = pneg %p115
        $region38: #{stgnn_layer_pallas.6} parent=23 // pred_check_branch
          %271 = sbr.rel (%p269) target = $region40
        $region39: #{stgnn_layer_pallas.6} parent=23 // pred_region
          %s272 = smul.u32 8, %s17
          %p273 = scmp.lt.s32.totalorder %s272, 15
          %s274 = scalar_select %p273, %s272, 15
          %s275 = smul.addr %s274, 2
          %s276 = smul.addr %s275, 8
          %s277 = scalar_lea.vmem %s3, %s276
          %s278 = smul.u32 8, %s17
        $region40: #{stgnn_layer_pallas.6} parent=23 // pred_fallthru
          _
      $region24: #{stgnn_layer_pallas.6} parent=5 // pred_fallthru
        _
      %p279 = scmp.le.s32.totalorder 1, %s17
      %p280 = scmp.lt.s32.totalorder %s17, 3
      %p281 = pnand %p279, %p280
      %p282 = pneg %p281
      // Predicated region
      $region41: #{stgnn_layer_pallas.6} parent=5 // pred_check
        _
      $region42: #{stgnn_layer_pallas.6} parent=5 // pred_check_branch
        %284 = sbr.rel (%p281) target = $region44
      $region43: #{stgnn_layer_pallas.6} parent=5 // pred_region
        %s285 = ssub.s32 %s17, 1
        %s286 = smul.u32 8, %s22
        %p287 = scmp.lt.s32.totalorder %s286, 15
        %s288 = scalar_select %p287, %s286, 15
        %s289 = smul.addr %s288, 2
        %s290 = smul.addr %s289, 8
        %s291 = scalar_lea.vmem %s0, %s290
        %p292 = pneg %p43
        %p293 = pneg %p40
        %s294 = smul.u32 8, %s22
        %p295 = scmp.lt.s32.totalorder %s294, 15
        %s296 = scalar_select %p295, %s294, 15
        %s297 = smul.addr %s296, 4
        %s298 = scalar_lea.vmem %s1, %s297
        %p299 = pneg %p69
        %p300 = pneg %p66
        %s301 = smul.u32 8, %s22
        %p302 = scmp.lt.s32.totalorder %s301, 15
        %s303 = scalar_select %p302, %s301, 15
        %s304 = smul.addr %s303, 4
        %s305 = smul.addr %s304, 8
        %s306 = scalar_lea.vmem %s2, %s305
        %p307 = pneg %p95
        %p308 = pneg %p92
        %s309 = smul.u32 8, %s22
        %p310 = scmp.lt.s32.totalorder %s309, 15
        %s311 = scalar_select %p310, %s309, 15
        %s312 = smul.addr %s311, 2
        %s313 = smul.addr %s312, 8
        %s314 = scalar_lea.vmem %s3, %s313
        %p315 = pneg %p121
        %p316 = pneg %p118
        %p317 = pneg %p142
        %p318 = pneg %p139
        %p319 = pneg %p163
        %p320 = pneg %p160
        %p321 = pneg %p189
        %p322 = pneg %p186
        %s323 = smul.u32 8, %s22
        %p324 = scmp.lt.s32.totalorder %s323, 15
        %s325 = scalar_select %p324, %s323, 15
        %s326 = smul.addr %s325, 2
        %s327 = smul.addr %s326, 8
        %s328 = scalar_lea.vmem %s6, %s327
        %p329 = pneg %p215
        %p330 = pneg %p212
        %s331 = sand.u32 %s202, 1
        %s332 = scalar_lea.sflag [#allocation3], %s331
        %s333 = sand.u32 %s202, 1
        %s334 = smul.addr %s333, 128
        %s335 = scalar_lea.vmem [#allocation2], %s334
        %s336 = smul.u32 8, %s22
        %p337 = scmp.lt.s32.totalorder %s336, 15
        %s338 = scalar_select %p337, %s336, 15
        %s339 = smul.addr %s338, 2
        %s340 = smul.addr %s339, 8
        %s341 = scalar_lea.vmem %s0, %s340
        %s342 = smul.u32 8, %s22
        %s343 = smul.u32 8, %s22
        %p344 = scmp.lt.s32.totalorder %s343, 15
        %s345 = scalar_select %p344, %s343, 15
        %s346 = smul.addr %s345, 4
        %s347 = scalar_lea.vmem %s1, %s346
        %s348 = smul.u32 8, %s22
        %s349 = smul.u32 8, %s22
        %p350 = scmp.lt.s32.totalorder %s349, 15
        %s351 = scalar_select %p350, %s349, 15
        %s352 = smul.addr %s351, 4
        %s353 = smul.addr %s352, 8
        %s354 = scalar_lea.vmem %s2, %s353
        %s355 = smul.u32 8, %s22
        %s356 = smul.u32 8, %s22
        %p357 = scmp.lt.s32.totalorder %s356, 15
        %s358 = scalar_select %p357, %s356, 15
        %s359 = smul.addr %s358, 2
        %s360 = smul.addr %s359, 8
        %s361 = scalar_lea.vmem %s3, %s360
        %s362 = smul.u32 8, %s22
        %s363 = smul.u32 8, %s22
        %p364 = scmp.lt.s32.totalorder %s363, 15
        %s365 = scalar_select %p364, %s363, 15
        %s366 = smul.addr %s365, 2
        %s367 = smul.addr %s366, 8
        %s368 = scalar_lea.vmem %s6, %s367
        %s369 = smul.u32 8, %s22
        %s370 = smul.u32 8, %s22
        %v371 = vld [vmem:[%s341] sm:$0xff]
        %v372 = vld [vmem:[%s341 + $0x8] sm:$0xff]
        %v373 = vld [vmem:[%s341 + $0x10] sm:$0xff]
        %v374 = vld [vmem:[%s341 + $0x18] sm:$0xff]
        %v375 = vld [vmem:[%s341 + $0x20] sm:$0xff]
        %v376 = vld [vmem:[%s341 + $0x28] sm:$0xff]
        %v377 = vld [vmem:[%s341 + $0x30] sm:$0xff]
        %v378 = vld [vmem:[%s341 + $0x38] sm:$0xff]
        %v379 = vld [vmem:[%s341 + $0x40] sm:$0xff]
        %v380 = vld [vmem:[%s341 + $0x48] sm:$0xff]
        %v381 = vld [vmem:[%s341 + $0x50] sm:$0xff]
        %v382 = vld [vmem:[%s341 + $0x58] sm:$0xff]
        %v383 = vld [vmem:[%s341 + $0x60] sm:$0xff]
        %v384 = vld [vmem:[%s341 + $0x68] sm:$0xff]
        %v385 = vld [vmem:[%s341 + $0x70] sm:$0xff]
        %v386 = vld [vmem:[%s341 + $0x78] sm:$0xff]
        %v387 = vld [vmem:[%s347] sm:$0xf]
        %v388 = vld [vmem:[%s347 + $0x4] sm:$0xf]
        %v389 = vld [vmem:[%s347 + $0x8] sm:$0xf]
        %v390 = vld [vmem:[%s347 + $0xc] sm:$0xf]
        %v391 = vld [vmem:[%s347 + $0x10] sm:$0xf]
        %v392 = vld [vmem:[%s347 + $0x14] sm:$0xf]
        %v393 = vld [vmem:[%s347 + $0x18] sm:$0xf]
        %v394 = vld [vmem:[%s347 + $0x1c] sm:$0xf]
        %v395 = vld [vmem:[%s354] sm:$0xff]
        %v396 = vld [vmem:[%s354 + $0x8] sm:$0xff]
        %v397 = vld [vmem:[%s354 + $0x10] sm:$0xff]
        %v398 = vld [vmem:[%s354 + $0x18] sm:$0xff]
        %v399 = vld [vmem:[%s354 + $0x20] sm:$0xff]
        %v400 = vld [vmem:[%s354 + $0x28] sm:$0xff]
        %v401 = vld [vmem:[%s354 + $0x30] sm:$0xff]
        %v402 = vld [vmem:[%s354 + $0x38] sm:$0xff]
        %v403 = vld [vmem:[%s354 + $0x40] sm:$0xff]
        %v404 = vld [vmem:[%s354 + $0x48] sm:$0xff]
        %v405 = vld [vmem:[%s354 + $0x50] sm:$0xff]
        %v406 = vld [vmem:[%s354 + $0x58] sm:$0xff]
        %v407 = vld [vmem:[%s354 + $0x60] sm:$0xff]
        %v408 = vld [vmem:[%s354 + $0x68] sm:$0xff]
        %v409 = vld [vmem:[%s354 + $0x70] sm:$0xff]
        %v410 = vld [vmem:[%s354 + $0x78] sm:$0xff]
        %v411 = vld [vmem:[%s354 + $0x80] sm:$0xff]
        %v412 = vld [vmem:[%s354 + $0x88] sm:$0xff]
        %v413 = vld [vmem:[%s354 + $0x90] sm:$0xff]
        %v414 = vld [vmem:[%s354 + $0x98] sm:$0xff]
        %v415 = vld [vmem:[%s354 + $0xa0] sm:$0xff]
        %v416 = vld [vmem:[%s354 + $0xa8] sm:$0xff]
        %v417 = vld [vmem:[%s354 + $0xb0] sm:$0xff]
        %v418 = vld [vmem:[%s354 + $0xb8] sm:$0xff]
        %v419 = vld [vmem:[%s354 + $0xc0] sm:$0xff]
        %v420 = vld [vmem:[%s354 + $0xc8] sm:$0xff]
        %v421 = vld [vmem:[%s354 + $0xd0] sm:$0xff]
        %v422 = vld [vmem:[%s354 + $0xd8] sm:$0xff]
        %v423 = vld [vmem:[%s354 + $0xe0] sm:$0xff]
        %v424 = vld [vmem:[%s354 + $0xe8] sm:$0xff]
        %v425 = vld [vmem:[%s354 + $0xf0] sm:$0xff]
        %v426 = vld [vmem:[%s354 + $0xf8] sm:$0xff]
        %vm427 = vcmask 31744
        %v429 = vsel %vm427, %v371, 0
        %v432 = vsel %vm427, %v372, 0
        %vm434 = vcmask 1043456
        %v436 = vsel %vm434, %v387, 0
        %438 = vmatpush.msra.mxu0 0.0
        %439 = vmatpush.msra.mxu0 0.0
        %440 = vmatpush.msra.mxu0 0.0
        %441 = vmatpush.msra.mxu0 0.0
        %442 = vmatpush.msra.mxu0 0.0
        %443 = vmatpush.msra.mxu0 0.0
        %444 = vmatpush.msra.mxu0 0.0
        %445 = vmatpush.msra.mxu0 0.0
        %446 = vmatpush.msra.mxu0 0.0
        %447 = vmatpush.msra.mxu0 0.0
        %448 = vmatpush.msra.mxu0 0.0
        %449 = vmatpush.msra.mxu0 0.0
        %450 = vmatpush.msra.mxu0 0.0
        %451 = vmatpush.msra.mxu0 0.0
        %452 = vmatpush.msra.mxu0 0.0
        %453 = vmatpush.msra.mxu0 %v436
        %454 = vmatmul.f32.gmra.mxu0 %v429
        %v455 = vpop.f32.mrf.mxu0
        %v456 = vadd.f32 0.0, %v455
        %457 = vmatmul.f32.gmra.mxu0 %v432
        %v458 = vpop.f32.mrf.mxu0
        %v459 = vadd.f32 0.0, %v458
        %460 = vdwg.mxu0
        %v462 = vsel %vm427, %v373, 0
        %v465 = vsel %vm427, %v374, 0
        %v468 = vsel %vm434, %v388, 0
        %470 = vmatpush.msra.mxu0 0.0
        %471 = vmatpush.msra.mxu0 0.0
        %472 = vmatpush.msra.mxu0 0.0
        %473 = vmatpush.msra.mxu0 0.0
        %474 = vmatpush.msra.mxu0 0.0
        %475 = vmatpush.msra.mxu0 0.0
        %476 = vmatpush.msra.mxu0 0.0
        %477 = vmatpush.msra.mxu0 0.0
        %478 = vmatpush.msra.mxu0 0.0
        %479 = vmatpush.msra.mxu0 0.0
        %480 = vmatpush.msra.mxu0 0.0
        %481 = vmatpush.msra.mxu0 0.0
        %482 = vmatpush.msra.mxu0 0.0
        %483 = vmatpush.msra.mxu0 0.0
        %484 = vmatpush.msra.mxu0 0.0
        %485 = vmatpush.msra.mxu0 %v468
        %486 = vmatmul.f32.gmra.mxu0 %v462
        %v487 = vpop.f32.mrf.mxu0
        %v488 = vadd.f32 0.0, %v487
        %489 = vmatmul.f32.gmra.mxu0 %v465
        %v490 = vpop.f32.mrf.mxu0
        %v491 = vadd.f32 0.0, %v490
        %492 = vdwg.mxu0
        %v494 = vsel %vm427, %v375, 0
        %v497 = vsel %vm427, %v376, 0
        %v500 = vsel %vm434, %v389, 0
        %502 = vmatpush.msra.mxu0 0.0
        %503 = vmatpush.msra.mxu0 0.0
        %504 = vmatpush.msra.mxu0 0.0
        %505 = vmatpush.msra.mxu0 0.0
        %506 = vmatpush.msra.mxu0 0.0
        %507 = vmatpush.msra.mxu0 0.0
        %508 = vmatpush.msra.mxu0 0.0
        %509 = vmatpush.msra.mxu0 0.0
        %510 = vmatpush.msra.mxu0 0.0
        %511 = vmatpush.msra.mxu0 0.0
        %512 = vmatpush.msra.mxu0 0.0
        %513 = vmatpush.msra.mxu0 0.0
        %514 = vmatpush.msra.mxu0 0.0
        %515 = vmatpush.msra.mxu0 0.0
        %516 = vmatpush.msra.mxu0 0.0
        %517 = vmatpush.msra.mxu0 %v500
        %518 = vmatmul.f32.gmra.mxu0 %v494
        %v519 = vpop.f32.mrf.mxu0
        %v520 = vadd.f32 0.0, %v519
        %521 = vmatmul.f32.gmra.mxu0 %v497
        %v522 = vpop.f32.mrf.mxu0
        %v523 = vadd.f32 0.0, %v522
        %524 = vdwg.mxu0
        %v526 = vsel %vm427, %v377, 0
        %v529 = vsel %vm427, %v378, 0
        %v532 = vsel %vm434, %v390, 0
        %534 = vmatpush.msra.mxu0 0.0
        %535 = vmatpush.msra.mxu0 0.0
        %536 = vmatpush.msra.mxu0 0.0
        %537 = vmatpush.msra.mxu0 0.0
        %538 = vmatpush.msra.mxu0 0.0
        %539 = vmatpush.msra.mxu0 0.0
        %540 = vmatpush.msra.mxu0 0.0
        %541 = vmatpush.msra.mxu0 0.0
        %542 = vmatpush.msra.mxu0 0.0
        %543 = vmatpush.msra.mxu0 0.0
        %544 = vmatpush.msra.mxu0 0.0
        %545 = vmatpush.msra.mxu0 0.0
        %546 = vmatpush.msra.mxu0 0.0
        %547 = vmatpush.msra.mxu0 0.0
        %548 = vmatpush.msra.mxu0 0.0
        %549 = vmatpush.msra.mxu0 %v532
        %550 = vmatmul.f32.gmra.mxu0 %v526
        %v551 = vpop.f32.mrf.mxu0
        %v552 = vadd.f32 0.0, %v551
        %553 = vmatmul.f32.gmra.mxu0 %v529
        %v554 = vpop.f32.mrf.mxu0
        %v555 = vadd.f32 0.0, %v554
        %556 = vdwg.mxu0
        %v558 = vsel %vm427, %v379, 0
        %v561 = vsel %vm427, %v380, 0
        %v564 = vsel %vm434, %v391, 0
        %566 = vmatpush.msra.mxu0 0.0
        %567 = vmatpush.msra.mxu0 0.0
        %568 = vmatpush.msra.mxu0 0.0
        %569 = vmatpush.msra.mxu0 0.0
        %570 = vmatpush.msra.mxu0 0.0
        %571 = vmatpush.msra.mxu0 0.0
        %572 = vmatpush.msra.mxu0 0.0
        %573 = vmatpush.msra.mxu0 0.0
        %574 = vmatpush.msra.mxu0 0.0
        %575 = vmatpush.msra.mxu0 0.0
        %576 = vmatpush.msra.mxu0 0.0
        %577 = vmatpush.msra.mxu0 0.0
        %578 = vmatpush.msra.mxu0 0.0
        %579 = vmatpush.msra.mxu0 0.0
        %580 = vmatpush.msra.mxu0 0.0
        %581 = vmatpush.msra.mxu0 %v564
        %582 = vmatmul.f32.gmra.mxu0 %v558
        %v583 = vpop.f32.mrf.mxu0
        %v584 = vadd.f32 0.0, %v583
        %585 = vmatmul.f32.gmra.mxu0 %v561
        %v586 = vpop.f32.mrf.mxu0
        %v587 = vadd.f32 0.0, %v586
        %588 = vdwg.mxu0
        %v590 = vsel %vm427, %v381, 0
        %v593 = vsel %vm427, %v382, 0
        %v596 = vsel %vm434, %v392, 0
        %598 = vmatpush.msra.mxu0 0.0
        %599 = vmatpush.msra.mxu0 0.0
        %600 = vmatpush.msra.mxu0 0.0
        %601 = vmatpush.msra.mxu0 0.0
        %602 = vmatpush.msra.mxu0 0.0
        %603 = vmatpush.msra.mxu0 0.0
        %604 = vmatpush.msra.mxu0 0.0
        %605 = vmatpush.msra.mxu0 0.0
        %606 = vmatpush.msra.mxu0 0.0
        %607 = vmatpush.msra.mxu0 0.0
        %608 = vmatpush.msra.mxu0 0.0
        %609 = vmatpush.msra.mxu0 0.0
        %610 = vmatpush.msra.mxu0 0.0
        %611 = vmatpush.msra.mxu0 0.0
        %612 = vmatpush.msra.mxu0 0.0
        %613 = vmatpush.msra.mxu0 %v596
        %614 = vmatmul.f32.gmra.mxu0 %v590
        %v615 = vpop.f32.mrf.mxu0
        %v616 = vadd.f32 0.0, %v615
        %617 = vmatmul.f32.gmra.mxu0 %v593
        %v618 = vpop.f32.mrf.mxu0
        %v619 = vadd.f32 0.0, %v618
        %620 = vdwg.mxu0
        %v622 = vsel %vm427, %v383, 0
        %v625 = vsel %vm427, %v384, 0
        %v628 = vsel %vm434, %v393, 0
        %630 = vmatpush.msra.mxu0 0.0
        %631 = vmatpush.msra.mxu0 0.0
        %632 = vmatpush.msra.mxu0 0.0
        %633 = vmatpush.msra.mxu0 0.0
        %634 = vmatpush.msra.mxu0 0.0
        %635 = vmatpush.msra.mxu0 0.0
        %636 = vmatpush.msra.mxu0 0.0
        %637 = vmatpush.msra.mxu0 0.0
        %638 = vmatpush.msra.mxu0 0.0
        %639 = vmatpush.msra.mxu0 0.0
        %640 = vmatpush.msra.mxu0 0.0
        %641 = vmatpush.msra.mxu0 0.0
        %642 = vmatpush.msra.mxu0 0.0
        %643 = vmatpush.msra.mxu0 0.0
        %644 = vmatpush.msra.mxu0 0.0
        %645 = vmatpush.msra.mxu0 %v628
        %646 = vmatmul.f32.gmra.mxu0 %v622
        %v647 = vpop.f32.mrf.mxu0
        %v648 = vadd.f32 0.0, %v647
        %649 = vmatmul.f32.gmra.mxu0 %v625
        %v650 = vpop.f32.mrf.mxu0
        %v651 = vadd.f32 0.0, %v650
        %652 = vdwg.mxu0
        %v654 = vsel %vm427, %v385, 0
        %v657 = vsel %vm427, %v386, 0
        %v660 = vsel %vm434, %v394, 0
        %662 = vmatpush.msra.mxu0 0.0
        %663 = vmatpush.msra.mxu0 0.0
        %664 = vmatpush.msra.mxu0 0.0
        %665 = vmatpush.msra.mxu0 0.0
        %666 = vmatpush.msra.mxu0 0.0
        %667 = vmatpush.msra.mxu0 0.0
        %668 = vmatpush.msra.mxu0 0.0
        %669 = vmatpush.msra.mxu0 0.0
        %670 = vmatpush.msra.mxu0 0.0
        %671 = vmatpush.msra.mxu0 0.0
        %672 = vmatpush.msra.mxu0 0.0
        %673 = vmatpush.msra.mxu0 0.0
        %674 = vmatpush.msra.mxu0 0.0
        %675 = vmatpush.msra.mxu0 0.0
        %676 = vmatpush.msra.mxu0 0.0
        %677 = vmatpush.msra.mxu0 %v660
        %678 = vmatmul.f32.gmra.mxu0 %v654
        %v679 = vpop.f32.mrf.mxu0
        %v680 = vadd.f32 0.0, %v679
        %681 = vmatmul.f32.gmra.mxu0 %v657
        %v682 = vpop.f32.mrf.mxu0
        %v683 = vadd.f32 0.0, %v682
        %684 = vdwg.mxu0
        %v685 = vmul.f32 %v456, 0.17677669
        %v686 = vmul.f32 %v459, 0.17677669
        %v687 = vmul.f32 %v488, 0.17677669
        %v688 = vmul.f32 %v491, 0.17677669
        %v689 = vmul.f32 %v520, 0.17677669
        %v690 = vmul.f32 %v523, 0.17677669
        %v691 = vmul.f32 %v552, 0.17677669
        %v692 = vmul.f32 %v555, 0.17677669
        %v693 = vmul.f32 %v584, 0.17677669
        %v694 = vmul.f32 %v587, 0.17677669
        %v695 = vmul.f32 %v616, 0.17677669
        %v696 = vmul.f32 %v619, 0.17677669
        %v697 = vmul.f32 %v648, 0.17677669
        %v698 = vmul.f32 %v651, 0.17677669
        %v699 = vmul.f32 %v680, 0.17677669
        %v700 = vmul.f32 %v683, 0.17677669
        %vm701 = vcmask 130048
        %v702 = vsel %vm701, %v685, -inf
        %703 = vmax.xlane.f32.xlu0 %v702
        %v704 = vpop.xlane.xlu0 %703
        %v705 = vsel %vm701, %v686, -inf
        %706 = vmax.xlane.f32.xlu0 %v705
        %v707 = vpop.xlane.xlu0 %706
        %v708 = vsel %vm701, %v687, -inf
        %709 = vmax.xlane.f32.xlu0 %v708
        %v710 = vpop.xlane.xlu0 %709
        %v711 = vsel %vm701, %v688, -inf
        %712 = vmax.xlane.f32.xlu0 %v711
        %v713 = vpop.xlane.xlu0 %712
        %v714 = vsel %vm701, %v689, -inf
        %715 = vmax.xlane.f32.xlu0 %v714
        %v716 = vpop.xlane.xlu0 %715
        %v717 = vsel %vm701, %v690, -inf
        %718 = vmax.xlane.f32.xlu0 %v717
        %v719 = vpop.xlane.xlu0 %718
        %v720 = vsel %vm701, %v691, -inf
        %721 = vmax.xlane.f32.xlu0 %v720
        %v722 = vpop.xlane.xlu0 %721
        %v723 = vsel %vm701, %v692, -inf
        %724 = vmax.xlane.f32.xlu0 %v723
        %v725 = vpop.xlane.xlu0 %724
        %v726 = vsel %vm701, %v693, -inf
        %727 = vmax.xlane.f32.xlu0 %v726
        %v728 = vpop.xlane.xlu0 %727
        %v729 = vsel %vm701, %v694, -inf
        %730 = vmax.xlane.f32.xlu0 %v729
        %v731 = vpop.xlane.xlu0 %730
        %v732 = vsel %vm701, %v695, -inf
        %733 = vmax.xlane.f32.xlu0 %v732
        %v734 = vpop.xlane.xlu0 %733
        %v735 = vsel %vm701, %v696, -inf
        %736 = vmax.xlane.f32.xlu0 %v735
        %v737 = vpop.xlane.xlu0 %736
        %v738 = vsel %vm701, %v697, -inf
        %739 = vmax.xlane.f32.xlu0 %v738
        %v740 = vpop.xlane.xlu0 %739
        %v741 = vsel %vm701, %v698, -inf
        %742 = vmax.xlane.f32.xlu0 %v741
        %v743 = vpop.xlane.xlu0 %742
        %v744 = vsel %vm701, %v699, -inf
        %745 = vmax.xlane.f32.xlu0 %v744
        %v746 = vpop.xlane.xlu0 %745
        %v747 = vsel %vm701, %v700, -inf
        %748 = vmax.xlane.f32.xlu0 %v747
        %v749 = vpop.xlane.xlu0 %748
        %v750 = vsub.f32 %v685, %v704
        %v751 = vsub.f32 %v686, %v707
        %v752 = vsub.f32 %v687, %v710
        %v753 = vsub.f32 %v688, %v713
        %v754 = vsub.f32 %v689, %v716
        %v755 = vsub.f32 %v690, %v719
        %v756 = vsub.f32 %v691, %v722
        %v757 = vsub.f32 %v692, %v725
        %v758 = vsub.f32 %v693, %v728
        %v759 = vsub.f32 %v694, %v731
        %v760 = vsub.f32 %v695, %v734
        %v761 = vsub.f32 %v696, %v737
        %v762 = vsub.f32 %v697, %v740
        %v763 = vsub.f32 %v698, %v743
        %v764 = vsub.f32 %v699, %v746
        %v765 = vsub.f32 %v700, %v749
        %v766 = vmul.f32 %v750, 1.442695
        %v767 = vpow.pop %v766
        %v768 = vmul.f32 %v751, 1.442695
        %v769 = vpow.pop %v768
        %v770 = vmul.f32 %v752, 1.442695
        %v771 = vpow.pop %v770
        %v772 = vmul.f32 %v753, 1.442695
        %v773 = vpow.pop %v772
        %v774 = vmul.f32 %v754, 1.442695
        %v775 = vpow.pop %v774
        %v776 = vmul.f32 %v755, 1.442695
        %v777 = vpow.pop %v776
        %v778 = vmul.f32 %v756, 1.442695
        %v779 = vpow.pop %v778
        %v780 = vmul.f32 %v757, 1.442695
        %v781 = vpow.pop %v780
        %v782 = vmul.f32 %v758, 1.442695
        %v783 = vpow.pop %v782
        %v784 = vmul.f32 %v759, 1.442695
        %v785 = vpow.pop %v784
        %v786 = vmul.f32 %v760, 1.442695
        %v787 = vpow.pop %v786
        %v788 = vmul.f32 %v761, 1.442695
        %v789 = vpow.pop %v788
        %v790 = vmul.f32 %v762, 1.442695
        %v791 = vpow.pop %v790
        %v792 = vmul.f32 %v763, 1.442695
        %v793 = vpow.pop %v792
        %v794 = vmul.f32 %v764, 1.442695
        %v795 = vpow.pop %v794
        %v796 = vmul.f32 %v765, 1.442695
        %v797 = vpow.pop %v796
        %v798 = vsel %vm701, %v767, 0.0
        %799 = vadd.xlane.f32.xlu0 %v798
        %v800 = vpop.xlane.xlu0 %799
        %v801 = vsel %vm701, %v769, 0.0
        %802 = vadd.xlane.f32.xlu0 %v801
        %v803 = vpop.xlane.xlu0 %802
        %v804 = vsel %vm701, %v771, 0.0
        %805 = vadd.xlane.f32.xlu0 %v804
        %v806 = vpop.xlane.xlu0 %805
        %v807 = vsel %vm701, %v773, 0.0
        %808 = vadd.xlane.f32.xlu0 %v807
        %v809 = vpop.xlane.xlu0 %808
        %v810 = vsel %vm701, %v775, 0.0
        %811 = vadd.xlane.f32.xlu0 %v810
        %v812 = vpop.xlane.xlu0 %811
        %v813 = vsel %vm701, %v777, 0.0
        %814 = vadd.xlane.f32.xlu0 %v813
        %v815 = vpop.xlane.xlu0 %814
        %v816 = vsel %vm701, %v779, 0.0
        %817 = vadd.xlane.f32.xlu0 %v816
        %v818 = vpop.xlane.xlu0 %817
        %v819 = vsel %vm701, %v781, 0.0
        %820 = vadd.xlane.f32.xlu0 %v819
        %v821 = vpop.xlane.xlu0 %820
        %v822 = vsel %vm701, %v783, 0.0
        %823 = vadd.xlane.f32.xlu0 %v822
        %v824 = vpop.xlane.xlu0 %823
        %v825 = vsel %vm701, %v785, 0.0
        %826 = vadd.xlane.f32.xlu0 %v825
        %v827 = vpop.xlane.xlu0 %826
        %v828 = vsel %vm701, %v787, 0.0
        %829 = vadd.xlane.f32.xlu0 %v828
        %v830 = vpop.xlane.xlu0 %829
        %v831 = vsel %vm701, %v789, 0.0
        %832 = vadd.xlane.f32.xlu0 %v831
        %v833 = vpop.xlane.xlu0 %832
        %v834 = vsel %vm701, %v791, 0.0
        %835 = vadd.xlane.f32.xlu0 %v834
        %v836 = vpop.xlane.xlu0 %835
        %v837 = vsel %vm701, %v793, 0.0
        %838 = vadd.xlane.f32.xlu0 %v837
        %v839 = vpop.xlane.xlu0 %838
        %v840 = vsel %vm701, %v795, 0.0
        %841 = vadd.xlane.f32.xlu0 %v840
        %v842 = vpop.xlane.xlu0 %841
        %v843 = vsel %vm701, %v797, 0.0
        %844 = vadd.xlane.f32.xlu0 %v843
        %v845 = vpop.xlane.xlu0 %844
        %v846 = vrcp.pop %v800
        %v847 = vrcp.pop %v803
        %v848 = vrcp.pop %v806
        %v849 = vrcp.pop %v809
        %v850 = vrcp.pop %v812
        %v851 = vrcp.pop %v815
        %v852 = vrcp.pop %v818
        %v853 = vrcp.pop %v821
        %v854 = vrcp.pop %v824
        %v855 = vrcp.pop %v827
        %v856 = vrcp.pop %v830
        %v857 = vrcp.pop %v833
        %v858 = vrcp.pop %v836
        %v859 = vrcp.pop %v839
        %v860 = vrcp.pop %v842
        %v861 = vrcp.pop %v845
        %v862 = vmul.f32 %v767, %v846
        %v863 = vmul.f32 %v769, %v847
        %v864 = vmul.f32 %v771, %v848
        %v865 = vmul.f32 %v773, %v849
        %v866 = vmul.f32 %v775, %v850
        %v867 = vmul.f32 %v777, %v851
        %v868 = vmul.f32 %v779, %v852
        %v869 = vmul.f32 %v781, %v853
        %v870 = vmul.f32 %v783, %v854
        %v871 = vmul.f32 %v785, %v855
        %v872 = vmul.f32 %v787, %v856
        %v873 = vmul.f32 %v789, %v857
        %v874 = vmul.f32 %v791, %v858
        %v875 = vmul.f32 %v793, %v859
        %v876 = vmul.f32 %v795, %v860
        %v877 = vmul.f32 %v797, %v861
        %878 = vst.msk [vmem:[%s335] sm:$0xff] %vm701, %v862
        %879 = vst.msk [vmem:[%s335 + $0x8] sm:$0xff] %vm701, %v863
        %880 = vst.msk [vmem:[%s335 + $0x10] sm:$0xff] %vm701, %v864
        %881 = vst.msk [vmem:[%s335 + $0x18] sm:$0xff] %vm701, %v865
        %882 = vst.msk [vmem:[%s335 + $0x20] sm:$0xff] %vm701, %v866
        %883 = vst.msk [vmem:[%s335 + $0x28] sm:$0xff] %vm701, %v867
        %884 = vst.msk [vmem:[%s335 + $0x30] sm:$0xff] %vm701, %v868
        %885 = vst.msk [vmem:[%s335 + $0x38] sm:$0xff] %vm701, %v869
        %886 = vst.msk [vmem:[%s335 + $0x40] sm:$0xff] %vm701, %v870
        %887 = vst.msk [vmem:[%s335 + $0x48] sm:$0xff] %vm701, %v871
        %888 = vst.msk [vmem:[%s335 + $0x50] sm:$0xff] %vm701, %v872
        %889 = vst.msk [vmem:[%s335 + $0x58] sm:$0xff] %vm701, %v873
        %890 = vst.msk [vmem:[%s335 + $0x60] sm:$0xff] %vm701, %v874
        %891 = vst.msk [vmem:[%s335 + $0x68] sm:$0xff] %vm701, %v875
        %892 = vst.msk [vmem:[%s335 + $0x70] sm:$0xff] %vm701, %v876
        %893 = vst.msk [vmem:[%s335 + $0x78] sm:$0xff] %vm701, %v877
        %v895 = vsel %vm701, %v862, 0
        %v898 = vsel %vm701, %v863, 0
        %v901 = vsel %vm701, %v395, 0
        %v904 = vsel %vm701, %v396, 0
        %v907 = vsel %vm701, %v397, 0
        %v910 = vsel %vm701, %v398, 0
        %912 = vmatpush.xpose.msra.mxu0 0.0
        %913 = vmatpush.xpose.msra.mxu0 0.0
        %914 = vmatpush.xpose.msra.mxu0 0.0
        %915 = vmatpush.xpose.msra.mxu0 0.0
        %916 = vmatpush.xpose.msra.mxu0 0.0
        %917 = vmatpush.xpose.msra.mxu0 0.0
        %918 = vmatpush.xpose.msra.mxu0 0.0
        %919 = vmatpush.xpose.msra.mxu0 0.0
        %920 = vmatpush.xpose.msra.mxu0 0.0
        %921 = vmatpush.xpose.msra.mxu0 0.0
        %922 = vmatpush.xpose.msra.mxu0 0.0
        %923 = vmatpush.xpose.msra.mxu0 0.0
        %924 = vmatpush.xpose.msra.mxu0 %v910
        %925 = vmatpush.xpose.msra.mxu0 %v907
        %926 = vmatpush.xpose.msra.mxu0 %v904
        %927 = vmatpush.xpose.msra.mxu0 %v901
        %928 = vmatmul.f32.gmra.mxu0 %v895
        %v929 = vpop.f32.mrf.mxu0
        %v930 = vadd.f32 0.0, %v929
        %931 = vmatmul.f32.gmra.mxu0 %v898
        %v932 = vpop.f32.mrf.mxu0
        %v933 = vadd.f32 0.0, %v932
        %934 = vdwg.mxu0
        %v936 = vsel %vm701, %v864, 0
        %v939 = vsel %vm701, %v865, 0
        %v942 = vsel %vm701, %v399, 0
        %v945 = vsel %vm701, %v400, 0
        %v948 = vsel %vm701, %v401, 0
        %v951 = vsel %vm701, %v402, 0
        %953 = vmatpush.xpose.msra.mxu0 0.0
        %954 = vmatpush.xpose.msra.mxu0 0.0
        %955 = vmatpush.xpose.msra.mxu0 0.0
        %956 = vmatpush.xpose.msra.mxu0 0.0
        %957 = vmatpush.xpose.msra.mxu0 0.0
        %958 = vmatpush.xpose.msra.mxu0 0.0
        %959 = vmatpush.xpose.msra.mxu0 0.0
        %960 = vmatpush.xpose.msra.mxu0 0.0
        %961 = vmatpush.xpose.msra.mxu0 0.0
        %962 = vmatpush.xpose.msra.mxu0 0.0
        %963 = vmatpush.xpose.msra.mxu0 0.0
        %964 = vmatpush.xpose.msra.mxu0 0.0
        %965 = vmatpush.xpose.msra.mxu0 %v951
        %966 = vmatpush.xpose.msra.mxu0 %v948
        %967 = vmatpush.xpose.msra.mxu0 %v945
        %968 = vmatpush.xpose.msra.mxu0 %v942
        %969 = vmatmul.f32.gmra.mxu0 %v936
        %v970 = vpop.f32.mrf.mxu0
        %v971 = vadd.f32 0.0, %v970
        %972 = vmatmul.f32.gmra.mxu0 %v939
        %v973 = vpop.f32.mrf.mxu0
        %v974 = vadd.f32 0.0, %v973
        %975 = vdwg.mxu0
        %v977 = vsel %vm701, %v866, 0
        %v980 = vsel %vm701, %v867, 0
        %v983 = vsel %vm701, %v403, 0
        %v986 = vsel %vm701, %v404, 0
        %v989 = vsel %vm701, %v405, 0
        %v992 = vsel %vm701, %v406, 0
        %994 = vmatpush.xpose.msra.mxu0 0.0
        %995 = vmatpush.xpose.msra.mxu0 0.0
        %996 = vmatpush.xpose.msra.mxu0 0.0
        %997 = vmatpush.xpose.msra.mxu0 0.0
        %998 = vmatpush.xpose.msra.mxu0 0.0
        %999 = vmatpush.xpose.msra.mxu0 0.0
        %1000 = vmatpush.xpose.msra.mxu0 0.0
        %1001 = vmatpush.xpose.msra.mxu0 0.0
        %1002 = vmatpush.xpose.msra.mxu0 0.0
        %1003 = vmatpush.xpose.msra.mxu0 0.0
        %1004 = vmatpush.xpose.msra.mxu0 0.0
        %1005 = vmatpush.xpose.msra.mxu0 0.0
        %1006 = vmatpush.xpose.msra.mxu0 %v992
        %1007 = vmatpush.xpose.msra.mxu0 %v989
        %1008 = vmatpush.xpose.msra.mxu0 %v986
        %1009 = vmatpush.xpose.msra.mxu0 %v983
        %1010 = vmatmul.f32.gmra.mxu0 %v977
        %v1011 = vpop.f32.mrf.mxu0
        %v1012 = vadd.f32 0.0, %v1011
        %1013 = vmatmul.f32.gmra.mxu0 %v980
        %v1014 = vpop.f32.mrf.mxu0
        %v1015 = vadd.f32 0.0, %v1014
        %1016 = vdwg.mxu0
        %v1018 = vsel %vm701, %v868, 0
        %v1021 = vsel %vm701, %v869, 0
        %v1024 = vsel %vm701, %v407, 0
        %v1027 = vsel %vm701, %v408, 0
        %v1030 = vsel %vm701, %v409, 0
        %v1033 = vsel %vm701, %v410, 0
        %1035 = vmatpush.xpose.msra.mxu0 0.0
        %1036 = vmatpush.xpose.msra.mxu0 0.0
        %1037 = vmatpush.xpose.msra.mxu0 0.0
        %1038 = vmatpush.xpose.msra.mxu0 0.0
        %1039 = vmatpush.xpose.msra.mxu0 0.0
        %1040 = vmatpush.xpose.msra.mxu0 0.0
        %1041 = vmatpush.xpose.msra.mxu0 0.0
        %1042 = vmatpush.xpose.msra.mxu0 0.0
        %1043 = vmatpush.xpose.msra.mxu0 0.0
        %1044 = vmatpush.xpose.msra.mxu0 0.0
        %1045 = vmatpush.xpose.msra.mxu0 0.0
        %1046 = vmatpush.xpose.msra.mxu0 0.0
        %1047 = vmatpush.xpose.msra.mxu0 %v1033
        %1048 = vmatpush.xpose.msra.mxu0 %v1030
        %1049 = vmatpush.xpose.msra.mxu0 %v1027
        %1050 = vmatpush.xpose.msra.mxu0 %v1024
        %1051 = vmatmul.f32.gmra.mxu0 %v1018
        %v1052 = vpop.f32.mrf.mxu0
        %v1053 = vadd.f32 0.0, %v1052
        %1054 = vmatmul.f32.gmra.mxu0 %v1021
        %v1055 = vpop.f32.mrf.mxu0
        %v1056 = vadd.f32 0.0, %v1055
        %1057 = vdwg.mxu0
        %v1059 = vsel %vm701, %v870, 0
        %v1062 = vsel %vm701, %v871, 0
        %v1065 = vsel %vm701, %v411, 0
        %v1068 = vsel %vm701, %v412, 0
        %v1071 = vsel %vm701, %v413, 0
        %v1074 = vsel %vm701, %v414, 0
        %1076 = vmatpush.xpose.msra.mxu0 0.0
        %1077 = vmatpush.xpose.msra.mxu0 0.0
        %1078 = vmatpush.xpose.msra.mxu0 0.0
        %1079 = vmatpush.xpose.msra.mxu0 0.0
        %1080 = vmatpush.xpose.msra.mxu0 0.0
        %1081 = vmatpush.xpose.msra.mxu0 0.0
        %1082 = vmatpush.xpose.msra.mxu0 0.0
        %1083 = vmatpush.xpose.msra.mxu0 0.0
        %1084 = vmatpush.xpose.msra.mxu0 0.0
        %1085 = vmatpush.xpose.msra.mxu0 0.0
        %1086 = vmatpush.xpose.msra.mxu0 0.0
        %1087 = vmatpush.xpose.msra.mxu0 0.0
        %1088 = vmatpush.xpose.msra.mxu0 %v1074
        %1089 = vmatpush.xpose.msra.mxu0 %v1071
        %1090 = vmatpush.xpose.msra.mxu0 %v1068
        %1091 = vmatpush.xpose.msra.mxu0 %v1065
        %1092 = vmatmul.f32.gmra.mxu0 %v1059
        %v1093 = vpop.f32.mrf.mxu0
        %v1094 = vadd.f32 0.0, %v1093
        %1095 = vmatmul.f32.gmra.mxu0 %v1062
        %v1096 = vpop.f32.mrf.mxu0
        %v1097 = vadd.f32 0.0, %v1096
        %1098 = vdwg.mxu0
        %v1100 = vsel %vm701, %v872, 0
        %v1103 = vsel %vm701, %v873, 0
        %v1106 = vsel %vm701, %v415, 0
        %v1109 = vsel %vm701, %v416, 0
        %v1112 = vsel %vm701, %v417, 0
        %v1115 = vsel %vm701, %v418, 0
        %1117 = vmatpush.xpose.msra.mxu0 0.0
        %1118 = vmatpush.xpose.msra.mxu0 0.0
        %1119 = vmatpush.xpose.msra.mxu0 0.0
        %1120 = vmatpush.xpose.msra.mxu0 0.0
        %1121 = vmatpush.xpose.msra.mxu0 0.0
        %1122 = vmatpush.xpose.msra.mxu0 0.0
        %1123 = vmatpush.xpose.msra.mxu0 0.0
        %1124 = vmatpush.xpose.msra.mxu0 0.0
        %1125 = vmatpush.xpose.msra.mxu0 0.0
        %1126 = vmatpush.xpose.msra.mxu0 0.0
        %1127 = vmatpush.xpose.msra.mxu0 0.0
        %1128 = vmatpush.xpose.msra.mxu0 0.0
        %1129 = vmatpush.xpose.msra.mxu0 %v1115
        %1130 = vmatpush.xpose.msra.mxu0 %v1112
        %1131 = vmatpush.xpose.msra.mxu0 %v1109
        %1132 = vmatpush.xpose.msra.mxu0 %v1106
        %1133 = vmatmul.f32.gmra.mxu0 %v1100
        %v1134 = vpop.f32.mrf.mxu0
        %v1135 = vadd.f32 0.0, %v1134
        %1136 = vmatmul.f32.gmra.mxu0 %v1103
        %v1137 = vpop.f32.mrf.mxu0
        %v1138 = vadd.f32 0.0, %v1137
        %1139 = vdwg.mxu0
        %v1141 = vsel %vm701, %v874, 0
        %v1144 = vsel %vm701, %v875, 0
        %v1147 = vsel %vm701, %v419, 0
        %v1150 = vsel %vm701, %v420, 0
        %v1153 = vsel %vm701, %v421, 0
        %v1156 = vsel %vm701, %v422, 0
        %1158 = vmatpush.xpose.msra.mxu0 0.0
        %1159 = vmatpush.xpose.msra.mxu0 0.0
        %1160 = vmatpush.xpose.msra.mxu0 0.0
        %1161 = vmatpush.xpose.msra.mxu0 0.0
        %1162 = vmatpush.xpose.msra.mxu0 0.0
        %1163 = vmatpush.xpose.msra.mxu0 0.0
        %1164 = vmatpush.xpose.msra.mxu0 0.0
        %1165 = vmatpush.xpose.msra.mxu0 0.0
        %1166 = vmatpush.xpose.msra.mxu0 0.0
        %1167 = vmatpush.xpose.msra.mxu0 0.0
        %1168 = vmatpush.xpose.msra.mxu0 0.0
        %1169 = vmatpush.xpose.msra.mxu0 0.0
        %1170 = vmatpush.xpose.msra.mxu0 %v1156
        %1171 = vmatpush.xpose.msra.mxu0 %v1153
        %1172 = vmatpush.xpose.msra.mxu0 %v1150
        %1173 = vmatpush.xpose.msra.mxu0 %v1147
        %1174 = vmatmul.f32.gmra.mxu0 %v1141
        %v1175 = vpop.f32.mrf.mxu0
        %v1176 = vadd.f32 0.0, %v1175
        %1177 = vmatmul.f32.gmra.mxu0 %v1144
        %v1178 = vpop.f32.mrf.mxu0
        %v1179 = vadd.f32 0.0, %v1178
        %1180 = vdwg.mxu0
        %v1182 = vsel %vm701, %v876, 0
        %v1185 = vsel %vm701, %v877, 0
        %v1188 = vsel %vm701, %v423, 0
        %v1191 = vsel %vm701, %v424, 0
        %v1194 = vsel %vm701, %v425, 0
        %v1197 = vsel %vm701, %v426, 0
        %1199 = vmatpush.xpose.msra.mxu0 0.0
        %1200 = vmatpush.xpose.msra.mxu0 0.0
        %1201 = vmatpush.xpose.msra.mxu0 0.0
        %1202 = vmatpush.xpose.msra.mxu0 0.0
        %1203 = vmatpush.xpose.msra.mxu0 0.0
        %1204 = vmatpush.xpose.msra.mxu0 0.0
        %1205 = vmatpush.xpose.msra.mxu0 0.0
        %1206 = vmatpush.xpose.msra.mxu0 0.0
        %1207 = vmatpush.xpose.msra.mxu0 0.0
        %1208 = vmatpush.xpose.msra.mxu0 0.0
        %1209 = vmatpush.xpose.msra.mxu0 0.0
        %1210 = vmatpush.xpose.msra.mxu0 0.0
        %1211 = vmatpush.xpose.msra.mxu0 %v1197
        %1212 = vmatpush.xpose.msra.mxu0 %v1194
        %1213 = vmatpush.xpose.msra.mxu0 %v1191
        %1214 = vmatpush.xpose.msra.mxu0 %v1188
        %1215 = vmatmul.f32.gmra.mxu0 %v1182
        %v1216 = vpop.f32.mrf.mxu0
        %v1217 = vadd.f32 0.0, %v1216
        %1218 = vmatmul.f32.gmra.mxu0 %v1185
        %v1219 = vpop.f32.mrf.mxu0
        %v1220 = vadd.f32 0.0, %v1219
        %1221 = vdwg.mxu0
        %v1222 = vld [vmem:[%s361] sm:$0xff]
        %v1223 = vld [vmem:[%s361 + $0x8] sm:$0xff]
        %v1224 = vld [vmem:[%s361 + $0x10] sm:$0xff]
        %v1225 = vld [vmem:[%s361 + $0x18] sm:$0xff]
        %v1226 = vld [vmem:[%s361 + $0x20] sm:$0xff]
        %v1227 = vld [vmem:[%s361 + $0x28] sm:$0xff]
        %v1228 = vld [vmem:[%s361 + $0x30] sm:$0xff]
        %v1229 = vld [vmem:[%s361 + $0x38] sm:$0xff]
        %v1230 = vld [vmem:[%s361 + $0x40] sm:$0xff]
        %v1231 = vld [vmem:[%s361 + $0x48] sm:$0xff]
        %v1232 = vld [vmem:[%s361 + $0x50] sm:$0xff]
        %v1233 = vld [vmem:[%s361 + $0x58] sm:$0xff]
        %v1234 = vld [vmem:[%s361 + $0x60] sm:$0xff]
        %v1235 = vld [vmem:[%s361 + $0x68] sm:$0xff]
        %v1236 = vld [vmem:[%s361 + $0x70] sm:$0xff]
        %v1237 = vld [vmem:[%s361 + $0x78] sm:$0xff]
        %v1238 = vadd.f32 %v1222, %v930
        %v1239 = vadd.f32 %v1223, %v933
        %v1240 = vadd.f32 %v1224, %v971
        %v1241 = vadd.f32 %v1225, %v974
        %v1242 = vadd.f32 %v1226, %v1012
        %v1243 = vadd.f32 %v1227, %v1015
        %v1244 = vadd.f32 %v1228, %v1053
        %v1245 = vadd.f32 %v1229, %v1056
        %v1246 = vadd.f32 %v1230, %v1094
        %v1247 = vadd.f32 %v1231, %v1097
        %v1248 = vadd.f32 %v1232, %v1135
        %v1249 = vadd.f32 %v1233, %v1138
        %v1250 = vadd.f32 %v1234, %v1176
        %v1251 = vadd.f32 %v1235, %v1179
        %v1252 = vadd.f32 %v1236, %v1217
        %v1253 = vadd.f32 %v1237, %v1220
        %v1254 = vld [vmem:[%s4] sm:$0x1]
        %v1255 = vld [vmem:[%s5] sm:$0x1]
        %vm1256 = vcmask 261120
        %v1257 = vsel %vm1256, %v1238, 0.0
        %1258 = vadd.xlane.f32.xlu0 %v1257
        %v1259 = vpop.xlane.xlu0 %1258
        %v1260 = vsel %vm1256, %v1239, 0.0
        %1261 = vadd.xlane.f32.xlu0 %v1260
        %v1262 = vpop.xlane.xlu0 %1261
        %v1263 = vsel %vm1256, %v1240, 0.0
        %1264 = vadd.xlane.f32.xlu0 %v1263
        %v1265 = vpop.xlane.xlu0 %1264
        %v1266 = vsel %vm1256, %v1241, 0.0
        %1267 = vadd.xlane.f32.xlu0 %v1266
        %v1268 = vpop.xlane.xlu0 %1267
        %v1269 = vsel %vm1256, %v1242, 0.0
        %1270 = vadd.xlane.f32.xlu0 %v1269
        %v1271 = vpop.xlane.xlu0 %1270
        %v1272 = vsel %vm1256, %v1243, 0.0
        %1273 = vadd.xlane.f32.xlu0 %v1272
        %v1274 = vpop.xlane.xlu0 %1273
        %v1275 = vsel %vm1256, %v1244, 0.0
        %1276 = vadd.xlane.f32.xlu0 %v1275
        %v1277 = vpop.xlane.xlu0 %1276
        %v1278 = vsel %vm1256, %v1245, 0.0
        %1279 = vadd.xlane.f32.xlu0 %v1278
        %v1280 = vpop.xlane.xlu0 %1279
        %v1281 = vsel %vm1256, %v1246, 0.0
        %1282 = vadd.xlane.f32.xlu0 %v1281
        %v1283 = vpop.xlane.xlu0 %1282
        %v1284 = vsel %vm1256, %v1247, 0.0
        %1285 = vadd.xlane.f32.xlu0 %v1284
        %v1286 = vpop.xlane.xlu0 %1285
        %v1287 = vsel %vm1256, %v1248, 0.0
        %1288 = vadd.xlane.f32.xlu0 %v1287
        %v1289 = vpop.xlane.xlu0 %1288
        %v1290 = vsel %vm1256, %v1249, 0.0
        %1291 = vadd.xlane.f32.xlu0 %v1290
        %v1292 = vpop.xlane.xlu0 %1291
        %v1293 = vsel %vm1256, %v1250, 0.0
        %1294 = vadd.xlane.f32.xlu0 %v1293
        %v1295 = vpop.xlane.xlu0 %1294
        %v1296 = vsel %vm1256, %v1251, 0.0
        %1297 = vadd.xlane.f32.xlu0 %v1296
        %v1298 = vpop.xlane.xlu0 %1297
        %v1299 = vsel %vm1256, %v1252, 0.0
        %1300 = vadd.xlane.f32.xlu0 %v1299
        %v1301 = vpop.xlane.xlu0 %1300
        %v1302 = vsel %vm1256, %v1253, 0.0
        %1303 = vadd.xlane.f32.xlu0 %v1302
        %v1304 = vpop.xlane.xlu0 %1303
        %v1305 = vrcp.pop 32.0
        %v1306 = vmul.f32 32.0, %v1305
        %v1307 = vsub.f32 1.0, %v1306
        %v1308 = vmul.f32 %v1305, %v1307
        %v1309 = vadd.f32 %v1305, %v1308
        %vm1310 = vweird.f32 %v1305
        %v1311 = vsel %vm1310, %v1305, %v1309
        %v1312 = vmul.f32 %v1259, %v1311
        %v1313 = vmul.f32 %v1262, %v1311
        %v1314 = vmul.f32 %v1265, %v1311
        %v1315 = vmul.f32 %v1268, %v1311
        %v1316 = vmul.f32 %v1271, %v1311
        %v1317 = vmul.f32 %v1274, %v1311
        %v1318 = vmul.f32 %v1277, %v1311
        %v1319 = vmul.f32 %v1280, %v1311
        %v1320 = vmul.f32 %v1283, %v1311
        %v1321 = vmul.f32 %v1286, %v1311
        %v1322 = vmul.f32 %v1289, %v1311
        %v1323 = vmul.f32 %v1292, %v1311
        %v1324 = vmul.f32 %v1295, %v1311
        %v1325 = vmul.f32 %v1298, %v1311
        %v1326 = vmul.f32 %v1301, %v1311
        %v1327 = vmul.f32 %v1304, %v1311
        %v1328 = vsub.f32 %v1238, %v1312
        %v1329 = vsub.f32 %v1239, %v1313
        %v1330 = vsub.f32 %v1240, %v1314
        %v1331 = vsub.f32 %v1241, %v1315
        %v1332 = vsub.f32 %v1242, %v1316
        %v1333 = vsub.f32 %v1243, %v1317
        %v1334 = vsub.f32 %v1244, %v1318
        %v1335 = vsub.f32 %v1245, %v1319
        %v1336 = vsub.f32 %v1246, %v1320
        %v1337 = vsub.f32 %v1247, %v1321
        %v1338 = vsub.f32 %v1248, %v1322
        %v1339 = vsub.f32 %v1249, %v1323
        %v1340 = vsub.f32 %v1250, %v1324
        %v1341 = vsub.f32 %v1251, %v1325
        %v1342 = vsub.f32 %v1252, %v1326
        %v1343 = vsub.f32 %v1253, %v1327
        %v1344 = vmul.f32 %v1328, %v1328
        %v1345 = vmul.f32 %v1329, %v1329
        %v1346 = vmul.f32 %v1330, %v1330
        %v1347 = vmul.f32 %v1331, %v1331
        %v1348 = vmul.f32 %v1332, %v1332
        %v1349 = vmul.f32 %v1333, %v1333
        %v1350 = vmul.f32 %v1334, %v1334
        %v1351 = vmul.f32 %v1335, %v1335
        %v1352 = vmul.f32 %v1336, %v1336
        %v1353 = vmul.f32 %v1337, %v1337
        %v1354 = vmul.f32 %v1338, %v1338
        %v1355 = vmul.f32 %v1339, %v1339
        %v1356 = vmul.f32 %v1340, %v1340
        %v1357 = vmul.f32 %v1341, %v1341
        %v1358 = vmul.f32 %v1342, %v1342
        %v1359 = vmul.f32 %v1343, %v1343
        %v1360 = vsel %vm1256, %v1344, 0.0
        %1361 = vadd.xlane.f32.xlu0 %v1360
        %v1362 = vpop.xlane.xlu0 %1361
        %v1363 = vsel %vm1256, %v1345, 0.0
        %1364 = vadd.xlane.f32.xlu0 %v1363
        %v1365 = vpop.xlane.xlu0 %1364
        %v1366 = vsel %vm1256, %v1346, 0.0
        %1367 = vadd.xlane.f32.xlu0 %v1366
        %v1368 = vpop.xlane.xlu0 %1367
        %v1369 = vsel %vm1256, %v1347, 0.0
        %1370 = vadd.xlane.f32.xlu0 %v1369
        %v1371 = vpop.xlane.xlu0 %1370
        %v1372 = vsel %vm1256, %v1348, 0.0
        %1373 = vadd.xlane.f32.xlu0 %v1372
        %v1374 = vpop.xlane.xlu0 %1373
        %v1375 = vsel %vm1256, %v1349, 0.0
        %1376 = vadd.xlane.f32.xlu0 %v1375
        %v1377 = vpop.xlane.xlu0 %1376
        %v1378 = vsel %vm1256, %v1350, 0.0
        %1379 = vadd.xlane.f32.xlu0 %v1378
        %v1380 = vpop.xlane.xlu0 %1379
        %v1381 = vsel %vm1256, %v1351, 0.0
        %1382 = vadd.xlane.f32.xlu0 %v1381
        %v1383 = vpop.xlane.xlu0 %1382
        %v1384 = vsel %vm1256, %v1352, 0.0
        %1385 = vadd.xlane.f32.xlu0 %v1384
        %v1386 = vpop.xlane.xlu0 %1385
        %v1387 = vsel %vm1256, %v1353, 0.0
        %1388 = vadd.xlane.f32.xlu0 %v1387
        %v1389 = vpop.xlane.xlu0 %1388
        %v1390 = vsel %vm1256, %v1354, 0.0
        %1391 = vadd.xlane.f32.xlu0 %v1390
        %v1392 = vpop.xlane.xlu0 %1391
        %v1393 = vsel %vm1256, %v1355, 0.0
        %1394 = vadd.xlane.f32.xlu0 %v1393
        %v1395 = vpop.xlane.xlu0 %1394
        %v1396 = vsel %vm1256, %v1356, 0.0
        %1397 = vadd.xlane.f32.xlu0 %v1396
        %v1398 = vpop.xlane.xlu0 %1397
        %v1399 = vsel %vm1256, %v1357, 0.0
        %1400 = vadd.xlane.f32.xlu0 %v1399
        %v1401 = vpop.xlane.xlu0 %1400
        %v1402 = vsel %vm1256, %v1358, 0.0
        %1403 = vadd.xlane.f32.xlu0 %v1402
        %v1404 = vpop.xlane.xlu0 %1403
        %v1405 = vsel %vm1256, %v1359, 0.0
        %1406 = vadd.xlane.f32.xlu0 %v1405
        %v1407 = vpop.xlane.xlu0 %1406
        %v1408 = vmul.f32 %v1362, %v1311
        %v1409 = vmul.f32 %v1365, %v1311
        %v1410 = vmul.f32 %v1368, %v1311
        %v1411 = vmul.f32 %v1371, %v1311
        %v1412 = vmul.f32 %v1374, %v1311
        %v1413 = vmul.f32 %v1377, %v1311
        %v1414 = vmul.f32 %v1380, %v1311
        %v1415 = vmul.f32 %v1383, %v1311
        %v1416 = vmul.f32 %v1386, %v1311
        %v1417 = vmul.f32 %v1389, %v1311
        %v1418 = vmul.f32 %v1392, %v1311
        %v1419 = vmul.f32 %v1395, %v1311
        %v1420 = vmul.f32 %v1398, %v1311
        %v1421 = vmul.f32 %v1401, %v1311
        %v1422 = vmul.f32 %v1404, %v1311
        %v1423 = vmul.f32 %v1407, %v1311
        %v1424 = vadd.f32 %v1408, 1e-05
        %v1425 = vadd.f32 %v1409, 1e-05
        %v1426 = vadd.f32 %v1410, 1e-05
        %v1427 = vadd.f32 %v1411, 1e-05
        %v1428 = vadd.f32 %v1412, 1e-05
        %v1429 = vadd.f32 %v1413, 1e-05
        %v1430 = vadd.f32 %v1414, 1e-05
        %v1431 = vadd.f32 %v1415, 1e-05
        %v1432 = vadd.f32 %v1416, 1e-05
        %v1433 = vadd.f32 %v1417, 1e-05
        %v1434 = vadd.f32 %v1418, 1e-05
        %v1435 = vadd.f32 %v1419, 1e-05
        %v1436 = vadd.f32 %v1420, 1e-05
        %v1437 = vadd.f32 %v1421, 1e-05
        %v1438 = vadd.f32 %v1422, 1e-05
        %v1439 = vadd.f32 %v1423, 1e-05
        %v1440 = vrsqrt.pop %v1424
        %v1441 = vmul.f32 %v1440, %v1424
        %v1442 = vmul.f32 %v1441, %v1440
        %v1443 = vmul.f32 0.5, %v1442
        %v1444 = vsub.f32 1.5, %v1443
        %v1445 = vmul.f32 %v1440, %v1444
        %vm1446 = vweird.f32 %v1424
        %vm1447 = vweird.f32 %v1440
        %vm1448 = vmor %vm1446, %vm1447
        %v1449 = vsel %vm1448, %v1440, %v1445
        %v1450 = vrsqrt.pop %v1425
        %v1451 = vmul.f32 %v1450, %v1425
        %v1452 = vmul.f32 %v1451, %v1450
        %v1453 = vmul.f32 0.5, %v1452
        %v1454 = vsub.f32 1.5, %v1453
        %v1455 = vmul.f32 %v1450, %v1454
        %vm1456 = vweird.f32 %v1425
        %vm1457 = vweird.f32 %v1450
        %vm1458 = vmor %vm1456, %vm1457
        %v1459 = vsel %vm1458, %v1450, %v1455
        %v1460 = vrsqrt.pop %v1426
        %v1461 = vmul.f32 %v1460, %v1426
        %v1462 = vmul.f32 %v1461, %v1460
        %v1463 = vmul.f32 0.5, %v1462
        %v1464 = vsub.f32 1.5, %v1463
        %v1465 = vmul.f32 %v1460, %v1464
        %vm1466 = vweird.f32 %v1426
        %vm1467 = vweird.f32 %v1460
        %vm1468 = vmor %vm1466, %vm1467
        %v1469 = vsel %vm1468, %v1460, %v1465
        %v1470 = vrsqrt.pop %v1427
        %v1471 = vmul.f32 %v1470, %v1427
        %v1472 = vmul.f32 %v1471, %v1470
        %v1473 = vmul.f32 0.5, %v1472
        %v1474 = vsub.f32 1.5, %v1473
        %v1475 = vmul.f32 %v1470, %v1474
        %vm1476 = vweird.f32 %v1427
        %vm1477 = vweird.f32 %v1470
        %vm1478 = vmor %vm1476, %vm1477
        %v1479 = vsel %vm1478, %v1470, %v1475
        %v1480 = vrsqrt.pop %v1428
        %v1481 = vmul.f32 %v1480, %v1428
        %v1482 = vmul.f32 %v1481, %v1480
        %v1483 = vmul.f32 0.5, %v1482
        %v1484 = vsub.f32 1.5, %v1483
        %v1485 = vmul.f32 %v1480, %v1484
        %vm1486 = vweird.f32 %v1428
        %vm1487 = vweird.f32 %v1480
        %vm1488 = vmor %vm1486, %vm1487
        %v1489 = vsel %vm1488, %v1480, %v1485
        %v1490 = vrsqrt.pop %v1429
        %v1491 = vmul.f32 %v1490, %v1429
        %v1492 = vmul.f32 %v1491, %v1490
        %v1493 = vmul.f32 0.5, %v1492
        %v1494 = vsub.f32 1.5, %v1493
        %v1495 = vmul.f32 %v1490, %v1494
        %vm1496 = vweird.f32 %v1429
        %vm1497 = vweird.f32 %v1490
        %vm1498 = vmor %vm1496, %vm1497
        %v1499 = vsel %vm1498, %v1490, %v1495
        %v1500 = vrsqrt.pop %v1430
        %v1501 = vmul.f32 %v1500, %v1430
        %v1502 = vmul.f32 %v1501, %v1500
        %v1503 = vmul.f32 0.5, %v1502
        %v1504 = vsub.f32 1.5, %v1503
        %v1505 = vmul.f32 %v1500, %v1504
        %vm1506 = vweird.f32 %v1430
        %vm1507 = vweird.f32 %v1500
        %vm1508 = vmor %vm1506, %vm1507
        %v1509 = vsel %vm1508, %v1500, %v1505
        %v1510 = vrsqrt.pop %v1431
        %v1511 = vmul.f32 %v1510, %v1431
        %v1512 = vmul.f32 %v1511, %v1510
        %v1513 = vmul.f32 0.5, %v1512
        %v1514 = vsub.f32 1.5, %v1513
        %v1515 = vmul.f32 %v1510, %v1514
        %vm1516 = vweird.f32 %v1431
        %vm1517 = vweird.f32 %v1510
        %vm1518 = vmor %vm1516, %vm1517
        %v1519 = vsel %vm1518, %v1510, %v1515
        %v1520 = vrsqrt.pop %v1432
        %v1521 = vmul.f32 %v1520, %v1432
        %v1522 = vmul.f32 %v1521, %v1520
        %v1523 = vmul.f32 0.5, %v1522
        %v1524 = vsub.f32 1.5, %v1523
        %v1525 = vmul.f32 %v1520, %v1524
        %vm1526 = vweird.f32 %v1432
        %vm1527 = vweird.f32 %v1520
        %vm1528 = vmor %vm1526, %vm1527
        %v1529 = vsel %vm1528, %v1520, %v1525
        %v1530 = vrsqrt.pop %v1433
        %v1531 = vmul.f32 %v1530, %v1433
        %v1532 = vmul.f32 %v1531, %v1530
        %v1533 = vmul.f32 0.5, %v1532
        %v1534 = vsub.f32 1.5, %v1533
        %v1535 = vmul.f32 %v1530, %v1534
        %vm1536 = vweird.f32 %v1433
        %vm1537 = vweird.f32 %v1530
        %vm1538 = vmor %vm1536, %vm1537
        %v1539 = vsel %vm1538, %v1530, %v1535
        %v1540 = vrsqrt.pop %v1434
        %v1541 = vmul.f32 %v1540, %v1434
        %v1542 = vmul.f32 %v1541, %v1540
        %v1543 = vmul.f32 0.5, %v1542
        %v1544 = vsub.f32 1.5, %v1543
        %v1545 = vmul.f32 %v1540, %v1544
        %vm1546 = vweird.f32 %v1434
        %vm1547 = vweird.f32 %v1540
        %vm1548 = vmor %vm1546, %vm1547
        %v1549 = vsel %vm1548, %v1540, %v1545
        %v1550 = vrsqrt.pop %v1435
        %v1551 = vmul.f32 %v1550, %v1435
        %v1552 = vmul.f32 %v1551, %v1550
        %v1553 = vmul.f32 0.5, %v1552
        %v1554 = vsub.f32 1.5, %v1553
        %v1555 = vmul.f32 %v1550, %v1554
        %vm1556 = vweird.f32 %v1435
        %vm1557 = vweird.f32 %v1550
        %vm1558 = vmor %vm1556, %vm1557
        %v1559 = vsel %vm1558, %v1550, %v1555
        %v1560 = vrsqrt.pop %v1436
        %v1561 = vmul.f32 %v1560, %v1436
        %v1562 = vmul.f32 %v1561, %v1560
        %v1563 = vmul.f32 0.5, %v1562
        %v1564 = vsub.f32 1.5, %v1563
        %v1565 = vmul.f32 %v1560, %v1564
        %vm1566 = vweird.f32 %v1436
        %vm1567 = vweird.f32 %v1560
        %vm1568 = vmor %vm1566, %vm1567
        %v1569 = vsel %vm1568, %v1560, %v1565
        %v1570 = vrsqrt.pop %v1437
        %v1571 = vmul.f32 %v1570, %v1437
        %v1572 = vmul.f32 %v1571, %v1570
        %v1573 = vmul.f32 0.5, %v1572
        %v1574 = vsub.f32 1.5, %v1573
        %v1575 = vmul.f32 %v1570, %v1574
        %vm1576 = vweird.f32 %v1437
        %vm1577 = vweird.f32 %v1570
        %vm1578 = vmor %vm1576, %vm1577
        %v1579 = vsel %vm1578, %v1570, %v1575
        %v1580 = vrsqrt.pop %v1438
        %v1581 = vmul.f32 %v1580, %v1438
        %v1582 = vmul.f32 %v1581, %v1580
        %v1583 = vmul.f32 0.5, %v1582
        %v1584 = vsub.f32 1.5, %v1583
        %v1585 = vmul.f32 %v1580, %v1584
        %vm1586 = vweird.f32 %v1438
        %vm1587 = vweird.f32 %v1580
        %vm1588 = vmor %vm1586, %vm1587
        %v1589 = vsel %vm1588, %v1580, %v1585
        %v1590 = vrsqrt.pop %v1439
        %v1591 = vmul.f32 %v1590, %v1439
        %v1592 = vmul.f32 %v1591, %v1590
        %v1593 = vmul.f32 0.5, %v1592
        %v1594 = vsub.f32 1.5, %v1593
        %v1595 = vmul.f32 %v1590, %v1594
        %vm1596 = vweird.f32 %v1439
        %vm1597 = vweird.f32 %v1590
        %vm1598 = vmor %vm1596, %vm1597
        %v1599 = vsel %vm1598, %v1590, %v1595
        %v1600 = vmul.f32 %v1328, %v1449
        %v1601 = vmul.f32 %v1329, %v1459
        %v1602 = vmul.f32 %v1330, %v1469
        %v1603 = vmul.f32 %v1331, %v1479
        %v1604 = vmul.f32 %v1332, %v1489
        %v1605 = vmul.f32 %v1333, %v1499
        %v1606 = vmul.f32 %v1334, %v1509
        %v1607 = vmul.f32 %v1335, %v1519
        %v1608 = vmul.f32 %v1336, %v1529
        %v1609 = vmul.f32 %v1337, %v1539
        %v1610 = vmul.f32 %v1338, %v1549
        %v1611 = vmul.f32 %v1339, %v1559
        %v1612 = vmul.f32 %v1340, %v1569
        %v1613 = vmul.f32 %v1341, %v1579
        %v1614 = vmul.f32 %v1342, %v1589
        %v1615 = vmul.f32 %v1343, %v1599
        %v1617 = vperm.slane %v1254, 0
        %v1619 = vmul.f32 %v1600, %v1617
        %v1620 = vmul.f32 %v1601, %v1617
        %v1621 = vmul.f32 %v1602, %v1617
        %v1622 = vmul.f32 %v1603, %v1617
        %v1623 = vmul.f32 %v1604, %v1617
        %v1624 = vmul.f32 %v1605, %v1617
        %v1625 = vmul.f32 %v1606, %v1617
        %v1626 = vmul.f32 %v1607, %v1617
        %v1627 = vmul.f32 %v1608, %v1617
        %v1628 = vmul.f32 %v1609, %v1617
        %v1629 = vmul.f32 %v1610, %v1617
        %v1630 = vmul.f32 %v1611, %v1617
        %v1631 = vmul.f32 %v1612, %v1617
        %v1632 = vmul.f32 %v1613, %v1617
        %v1633 = vmul.f32 %v1614, %v1617
        %v1634 = vmul.f32 %v1615, %v1617
        %v1636 = vperm.slane %v1255, 0
        %v1638 = vadd.f32 %v1619, %v1636
        %v1639 = vadd.f32 %v1620, %v1636
        %v1640 = vadd.f32 %v1621, %v1636
        %v1641 = vadd.f32 %v1622, %v1636
        %v1642 = vadd.f32 %v1623, %v1636
        %v1643 = vadd.f32 %v1624, %v1636
        %v1644 = vadd.f32 %v1625, %v1636
        %v1645 = vadd.f32 %v1626, %v1636
        %v1646 = vadd.f32 %v1627, %v1636
        %v1647 = vadd.f32 %v1628, %v1636
        %v1648 = vadd.f32 %v1629, %v1636
        %v1649 = vadd.f32 %v1630, %v1636
        %v1650 = vadd.f32 %v1631, %v1636
        %v1651 = vadd.f32 %v1632, %v1636
        %v1652 = vadd.f32 %v1633, %v1636
        %v1653 = vadd.f32 %v1634, %v1636
        %1654 = vst.msk [vmem:[%s368] sm:$0xff] %vm1256, %v1638
        %1655 = vst.msk [vmem:[%s368 + $0x8] sm:$0xff] %vm1256, %v1639
        %1656 = vst.msk [vmem:[%s368 + $0x10] sm:$0xff] %vm1256, %v1640
        %1657 = vst.msk [vmem:[%s368 + $0x18] sm:$0xff] %vm1256, %v1641
        %1658 = vst.msk [vmem:[%s368 + $0x20] sm:$0xff] %vm1256, %v1642
        %1659 = vst.msk [vmem:[%s368 + $0x28] sm:$0xff] %vm1256, %v1643
        %1660 = vst.msk [vmem:[%s368 + $0x30] sm:$0xff] %vm1256, %v1644
        %1661 = vst.msk [vmem:[%s368 + $0x38] sm:$0xff] %vm1256, %v1645
        %1662 = vst.msk [vmem:[%s368 + $0x40] sm:$0xff] %vm1256, %v1646
        %1663 = vst.msk [vmem:[%s368 + $0x48] sm:$0xff] %vm1256, %v1647
        %1664 = vst.msk [vmem:[%s368 + $0x50] sm:$0xff] %vm1256, %v1648
        %1665 = vst.msk [vmem:[%s368 + $0x58] sm:$0xff] %vm1256, %v1649
        %1666 = vst.msk [vmem:[%s368 + $0x60] sm:$0xff] %vm1256, %v1650
        %1667 = vst.msk [vmem:[%s368 + $0x68] sm:$0xff] %vm1256, %v1651
        %1668 = vst.msk [vmem:[%s368 + $0x70] sm:$0xff] %vm1256, %v1652
        %1669 = vst.msk [vmem:[%s368 + $0x78] sm:$0xff] %vm1256, %v1653
        %s1670 = smul.u32 8, %s22
        %p1671 = scmp.lt.s32.totalorder %s1670, 15
        %s1672 = scalar_select %p1671, %s1670, 15
        %s1673 = smul.addr %s1672, 2
        %s1674 = smul.addr %s1673, 8
        %s1675 = scalar_lea.vmem %s6, %s1674
        %s1676 = sand.u32 %s202, 1
        %s1677 = scalar_lea.sflag [#allocation3], %s1676
        %s1678 = sand.u32 %s202, 1
        %s1679 = smul.addr %s1678, 128
        %s1680 = scalar_lea.vmem [#allocation2], %s1679
        // Predicated region
        $region45: #{stgnn_layer_pallas.6} parent=43 // pred_check
          %p1681 = pneg %p186
        $region46: #{stgnn_layer_pallas.6} parent=43 // pred_check_branch
          %1683 = sbr.rel (%p1681) target = $region48
        $region47: #{stgnn_layer_pallas.6} parent=43 // pred_region
          %s1684 = smul.u32 8, %s22
        $region48: #{stgnn_layer_pallas.6} parent=43 // pred_fallthru
          _
        // Predicated region
        $region49: #{stgnn_layer_pallas.6} parent=43 // pred_check
          %p1685 = pneg %p212
        $region50: #{stgnn_layer_pallas.6} parent=43 // pred_check_branch
          %1687 = sbr.rel (%p1685) target = $region52
        $region51: #{stgnn_layer_pallas.6} parent=43 // pred_region
          %s1688 = smul.u32 8, %s22
          %1690 = vsyncadd %s1677, 0
          %s1691 = smul.addr %s1688, 2
          %s1692 = smul.addr %s1691, 8
          %s1693 = scalar_lea.hbm %s7, %s1692
          %s1694 = sshll.u32 %s1680, 4
          %s1695 = int_to_ptr.vmem [resolvable:$true] %s1694
          %s1696 = sshll.u32 %s1693, 4
          %s1697 = int_to_ptr.hbm [resolvable:$true] %s1696
          %1702 = dma.vmem_to_hbm [thread:$0]  %s1695, 2048, %s1697, %s1677, 128, 128, 8
        $region52: #{stgnn_layer_pallas.6} parent=43 // pred_fallthru
          _
      $region44: #{stgnn_layer_pallas.6} parent=5 // pred_fallthru
        _
      %p1703 = scmp.le.s32.totalorder 2, %s17
      // Predicated region
      $region53: #{stgnn_layer_pallas.6} parent=5 // pred_check
        %p1704 = pneg %p1703
      $region54: #{stgnn_layer_pallas.6} parent=5 // pred_check_branch
        %1706 = sbr.rel (%p1704) target = $region56
      $region55: #{stgnn_layer_pallas.6} parent=5 // pred_region
        %s1707 = ssub.s32 %s17, 2
        // Predicated region
        $region57: #{stgnn_layer_pallas.6} parent=55 // pred_check
          %p1708 = pneg %p192
        $region58: #{stgnn_layer_pallas.6} parent=55 // pred_check_branch
          %1710 = sbr.rel (%p1708) target = $region60
        $region59: #{stgnn_layer_pallas.6} parent=55 // pred_region
          %s1711 = smul.u32 8, %s23
          %p1712 = scmp.lt.s32.totalorder %s1711, 15
          %s1713 = scalar_select %p1712, %s1711, 15
          %s1714 = smul.addr %s1713, 2
          %s1715 = smul.addr %s1714, 8
          %s1716 = scalar_lea.vmem %s6, %s1715
        $region60: #{stgnn_layer_pallas.6} parent=55 // pred_fallthru
          _
        // Predicated region
        $region61: #{stgnn_layer_pallas.6} parent=55 // pred_check
          %p1717 = pneg %p218
        $region62: #{stgnn_layer_pallas.6} parent=55 // pred_check_branch
          %1719 = sbr.rel (%p1717) target = $region64
        $region63: #{stgnn_layer_pallas.6} parent=55 // pred_region
          %s1720 = sand.u32 %s203, 1
          %s1721 = scalar_lea.sflag [#allocation3], %s1720
          %s1722 = sand.u32 %s203, 1
          %s1723 = smul.addr %s1722, 128
          %s1724 = scalar_lea.vmem [#allocation2], %s1723
          %1726 = dma.done %s1721, 2048
        $region64: #{stgnn_layer_pallas.6} parent=55 // pred_fallthru
          _
      $region56: #{stgnn_layer_pallas.6} parent=5 // pred_fallthru
        _
    $region6: #{stgnn_layer_pallas.6} parent=1 // loop_footer
      %s21 = sadd.s32 1, %s17
    $region7: #{stgnn_layer_pallas.6} parent=1 // loop_footer_branch
      %16 = sbr.rel target = $region3
    $region8: #{stgnn_layer_pallas.6} parent=1 // loop_exit
      _
    %1727 = vsyncpa [#allocation3], 1
    %s1728 = scalar_lea.sflag [#allocation3], 1
    %1729 = vsyncpa %s1728, 1

// kernel: stgnn_layer_pallas.9
$region0: #{stgnn_layer_pallas.9}
  #allocation0 [shape = 'u32[]', space=smem, size = 0x4, offset = 0x4, fixed_abs, tag = 'smem constant byte address 0x4 - core index']
  #allocation1 [shape = 'u32[72,128]{1,0:T(1,128)}', space=vmem, size = 0x9000, scoped, tag = 'internal scratch']
  %s0 = inlined_call_operand.vmem [shape: f32[256,32], index: 0, kind: input, shape index: {}]
  %s1 = inlined_call_operand.vmem [shape: f32[256,32], index: 1, kind: input, shape index: {}]
  %s2 = inlined_call_operand.vmem [shape: f32[32,32], index: 2, kind: input, shape index: {}]
  %s3 = inlined_call_operand.vmem [shape: f32[1,32], index: 3, kind: input, shape index: {}]
  %s4 = inlined_call_operand.vmem [shape: f32[1,32], index: 4, kind: input, shape index: {}]
  %s5 = inlined_call_operand.vmem [shape: f32[1,32], index: 5, kind: input, shape index: {}]
  %s6 = inlined_call_operand.vmem [shape: f32[32,128], index: 6, kind: input, shape index: {}]
  %s7 = inlined_call_operand.vmem [shape: f32[1,128], index: 7, kind: input, shape index: {}]
  %s8 = inlined_call_operand.vmem [shape: f32[128,32], index: 8, kind: input, shape index: {}]
  %s9 = inlined_call_operand.vmem [shape: f32[1,32], index: 9, kind: input, shape index: {}]
  %s10 = inlined_call_operand.hbm [shape: f32[256,32], index: 10, kind: output, shape index: {}]
  %s11 = sld [smem:[#allocation0]]
  $region73: #{stgnn_layer_pallas.9} parent=0
    _
  %s13 = ssub.s32 1, %s11
  %s14 = scalar_select 0, %s13, %s11
  $region1: #{stgnn_layer_pallas.9} parent=0
    #allocation2 [shape = 'u8[131072]{0}', space=vmem, size = 0x20000, scoped, tag = 'output window, operand 0']
    #allocation3 [shape = 's32[2]{0}', space=sflag, size = 0x8, scoped, tag = 'scoped memory for stgnn_layer_pallas.9']
    %15 = vsyncpa [#allocation3], 0
    %s16 = scalar_lea.sflag [#allocation3], 1
    %17 = vsyncpa %s16, 0
    loop: start=0, step=1, limit=4
    $region2: #{stgnn_layer_pallas.9} parent=1 // loop_pre_header
      _
    $region3: #{stgnn_layer_pallas.9} parent=1 // loop_header
      %s19 = sphi 0, %s23
      %p20 = scmp.ge.s32.totalorder %s19, 4
      %s29 = sphi 0, %s31
      %s32 = sphi 0, %s29
      %s33 = sphi 0, %s32
      %s49 = sphi 0, %s33
      %s55 = sphi 0, %s57
      %s58 = sphi 0, %s55
      %s59 = sphi 0, %s58
      %s75 = sphi 0, %s59
      %s79 = sphi 0, %s79
      %s81 = sphi 0, %s79
      %s82 = sphi 0, %s81
      %s96 = sphi 0, %s82
      %s100 = sphi 0, %s100
      %s102 = sphi 0, %s100
      %s103 = sphi 0, %s102
      %s117 = sphi 0, %s103
      %s121 = sphi 0, %s121
      %s123 = sphi 0, %s121
      %s124 = sphi 0, %s123
      %s138 = sphi 0, %s124
      %s142 = sphi 0, %s142
      %s144 = sphi 0, %s142
      %s145 = sphi 0, %s144
      %s159 = sphi 0, %s145
      %s163 = sphi 0, %s163
      %s165 = sphi 0, %s163
      %s166 = sphi 0, %s165
      %s180 = sphi 0, %s166
      %s184 = sphi 0, %s184
      %s186 = sphi 0, %s184
      %s187 = sphi 0, %s186
      %s201 = sphi 0, %s187
      %s205 = sphi 0, %s205
      %s207 = sphi 0, %s205
      %s208 = sphi 0, %s207
      %s222 = sphi 0, %s208
      %s226 = sphi 0, %s226
      %s228 = sphi 0, %s226
      %s229 = sphi 0, %s228
      %s243 = sphi 0, %s229
      %s249 = sphi 0, %s251
      %s252 = sphi 0, %s249
      %s253 = sphi 0, %s252
      %s269 = sphi 0, %s253
    $region4: #{stgnn_layer_pallas.9} parent=1 // loop_header_branch
      %22 = sbr.rel (%p20) target = $region8
    $region5: #{stgnn_layer_pallas.9} parent=1 // loop_body
      %s24 = ssub.s32 %s19, 1
      %s25 = ssub.s32 %s19, 2
      %s26 = sadd.s32 %s19, 1
      %s27 = ssub.s32 %s19, %s26
      %p28 = scmp.eq.s32.totalorder %s27, 0
      %s30 = sadd.s32 %s29, 1
      %s31 = scalar_select %p28, %s29, %s30
      %p34 = pneg %p28
      %p35 = scmp.eq.s32.totalorder %s19, 1
      %p36 = por %p34, %p35
      %p37 = scmp.ne.s32.totalorder %s29, %s32
      %p38 = scmp.eq.s32.totalorder %s19, 0
      %p39 = por %p37, %p38
      %p40 = scmp.ne.s32.totalorder %s29, %s32
      %p41 = scmp.eq.s32.totalorder %s24, 1
      %p42 = por %p40, %p41
      %p43 = scmp.ne.s32.totalorder %s32, %s33
      %p44 = scmp.eq.s32.totalorder %s24, 0
      %p45 = por %p43, %p44
      %p46 = scmp.ne.s32.totalorder %s32, %s33
      %p47 = scmp.eq.s32.totalorder %s25, 1
      %p48 = por %p46, %p47
      %p50 = scmp.ne.s32.totalorder %s33, %s49
      %p51 = scmp.eq.s32.totalorder %s25, 0
      %p52 = por %p50, %p51
      %s53 = ssub.s32 %s19, %s26
      %p54 = scmp.eq.s32.totalorder %s53, 0
      %s56 = sadd.s32 %s55, 1
      %s57 = scalar_select %p54, %s55, %s56
      %p60 = pneg %p54
      %p61 = scmp.eq.s32.totalorder %s19, 1
      %p62 = por %p60, %p61
      %p63 = scmp.ne.s32.totalorder %s55, %s58
      %p64 = scmp.eq.s32.totalorder %s19, 0
      %p65 = por %p63, %p64
      %p66 = scmp.ne.s32.totalorder %s55, %s58
      %p67 = scmp.eq.s32.totalorder %s24, 1
      %p68 = por %p66, %p67
      %p69 = scmp.ne.s32.totalorder %s58, %s59
      %p70 = scmp.eq.s32.totalorder %s24, 0
      %p71 = por %p69, %p70
      %p72 = scmp.ne.s32.totalorder %s58, %s59
      %p73 = scmp.eq.s32.totalorder %s25, 1
      %p74 = por %p72, %p73
      %p76 = scmp.ne.s32.totalorder %s59, %s75
      %p77 = scmp.eq.s32.totalorder %s25, 0
      %p78 = por %p76, %p77
      %s80 = sadd.s32 %s79, 1
      %p83 = scmp.eq.s32.totalorder %s19, 1
      %p84 = scmp.ne.s32.totalorder %s79, %s81
      %p85 = scmp.eq.s32.totalorder %s19, 0
      %p86 = por %p84, %p85
      %p87 = scmp.ne.s32.totalorder %s79, %s81
      %p88 = scmp.eq.s32.totalorder %s24, 1
      %p89 = por %p87, %p88
      %p90 = scmp.ne.s32.totalorder %s81, %s82
      %p91 = scmp.eq.s32.totalorder %s24, 0
      %p92 = por %p90, %p91
      %p93 = scmp.ne.s32.totalorder %s81, %s82
      %p94 = scmp.eq.s32.totalorder %s25, 1
      %p95 = por %p93, %p94
      %p97 = scmp.ne.s32.totalorder %s82, %s96
      %p98 = scmp.eq.s32.totalorder %s25, 0
      %p99 = por %p97, %p98
      %s101 = sadd.s32 %s100, 1
      %p104 = scmp.eq.s32.totalorder %s19, 1
      %p105 = scmp.ne.s32.totalorder %s100, %s102
      %p106 = scmp.eq.s32.totalorder %s19, 0
      %p107 = por %p105, %p106
      %p108 = scmp.ne.s32.totalorder %s100, %s102
      %p109 = scmp.eq.s32.totalorder %s24, 1
      %p110 = por %p108, %p109
      %p111 = scmp.ne.s32.totalorder %s102, %s103
      %p112 = scmp.eq.s32.totalorder %s24, 0
      %p113 = por %p111, %p112
      %p114 = scmp.ne.s32.totalorder %s102, %s103
      %p115 = scmp.eq.s32.totalorder %s25, 1
      %p116 = por %p114, %p115
      %p118 = scmp.ne.s32.totalorder %s103, %s117
      %p119 = scmp.eq.s32.totalorder %s25, 0
      %p120 = por %p118, %p119
      %s122 = sadd.s32 %s121, 1
      %p125 = scmp.eq.s32.totalorder %s19, 1
      %p126 = scmp.ne.s32.totalorder %s121, %s123
      %p127 = scmp.eq.s32.totalorder %s19, 0
      %p128 = por %p126, %p127
      %p129 = scmp.ne.s32.totalorder %s121, %s123
      %p130 = scmp.eq.s32.totalorder %s24, 1
      %p131 = por %p129, %p130
      %p132 = scmp.ne.s32.totalorder %s123, %s124
      %p133 = scmp.eq.s32.totalorder %s24, 0
      %p134 = por %p132, %p133
      %p135 = scmp.ne.s32.totalorder %s123, %s124
      %p136 = scmp.eq.s32.totalorder %s25, 1
      %p137 = por %p135, %p136
      %p139 = scmp.ne.s32.totalorder %s124, %s138
      %p140 = scmp.eq.s32.totalorder %s25, 0
      %p141 = por %p139, %p140
      %s143 = sadd.s32 %s142, 1
      %p146 = scmp.eq.s32.totalorder %s19, 1
      %p147 = scmp.ne.s32.totalorder %s142, %s144
      %p148 = scmp.eq.s32.totalorder %s19, 0
      %p149 = por %p147, %p148
      %p150 = scmp.ne.s32.totalorder %s142, %s144
      %p151 = scmp.eq.s32.totalorder %s24, 1
      %p152 = por %p150, %p151
      %p153 = scmp.ne.s32.totalorder %s144, %s145
      %p154 = scmp.eq.s32.totalorder %s24, 0
      %p155 = por %p153, %p154
      %p156 = scmp.ne.s32.totalorder %s144, %s145
      %p157 = scmp.eq.s32.totalorder %s25, 1
      %p158 = por %p156, %p157
      %p160 = scmp.ne.s32.totalorder %s145, %s159
      %p161 = scmp.eq.s32.totalorder %s25, 0
      %p162 = por %p160, %p161
      %s164 = sadd.s32 %s163, 1
      %p167 = scmp.eq.s32.totalorder %s19, 1
      %p168 = scmp.ne.s32.totalorder %s163, %s165
      %p169 = scmp.eq.s32.totalorder %s19, 0
      %p170 = por %p168, %p169
      %p171 = scmp.ne.s32.totalorder %s163, %s165
      %p172 = scmp.eq.s32.totalorder %s24, 1
      %p173 = por %p171, %p172
      %p174 = scmp.ne.s32.totalorder %s165, %s166
      %p175 = scmp.eq.s32.totalorder %s24, 0
      %p176 = por %p174, %p175
      %p177 = scmp.ne.s32.totalorder %s165, %s166
      %p178 = scmp.eq.s32.totalorder %s25, 1
      %p179 = por %p177, %p178
      %p181 = scmp.ne.s32.totalorder %s166, %s180
      %p182 = scmp.eq.s32.totalorder %s25, 0
      %p183 = por %p181, %p182
      %s185 = sadd.s32 %s184, 1
      %p188 = scmp.eq.s32.totalorder %s19, 1
      %p189 = scmp.ne.s32.totalorder %s184, %s186
      %p190 = scmp.eq.s32.totalorder %s19, 0
      %p191 = por %p189, %p190
      %p192 = scmp.ne.s32.totalorder %s184, %s186
      %p193 = scmp.eq.s32.totalorder %s24, 1
      %p194 = por %p192, %p193
      %p195 = scmp.ne.s32.totalorder %s186, %s187
      %p196 = scmp.eq.s32.totalorder %s24, 0
      %p197 = por %p195, %p196
      %p198 = scmp.ne.s32.totalorder %s186, %s187
      %p199 = scmp.eq.s32.totalorder %s25, 1
      %p200 = por %p198, %p199
      %p202 = scmp.ne.s32.totalorder %s187, %s201
      %p203 = scmp.eq.s32.totalorder %s25, 0
      %p204 = por %p202, %p203
      %s206 = sadd.s32 %s205, 1
      %p209 = scmp.eq.s32.totalorder %s19, 1
      %p210 = scmp.ne.s32.totalorder %s205, %s207
      %p211 = scmp.eq.s32.totalorder %s19, 0
      %p212 = por %p210, %p211
      %p213 = scmp.ne.s32.totalorder %s205, %s207
      %p214 = scmp.eq.s32.totalorder %s24, 1
      %p215 = por %p213, %p214
      %p216 = scmp.ne.s32.totalorder %s207, %s208
      %p217 = scmp.eq.s32.totalorder %s24, 0
      %p218 = por %p216, %p217
      %p219 = scmp.ne.s32.totalorder %s207, %s208
      %p220 = scmp.eq.s32.totalorder %s25, 1
      %p221 = por %p219, %p220
      %p223 = scmp.ne.s32.totalorder %s208, %s222
      %p224 = scmp.eq.s32.totalorder %s25, 0
      %p225 = por %p223, %p224
      %s227 = sadd.s32 %s226, 1
      %p230 = scmp.eq.s32.totalorder %s19, 1
      %p231 = scmp.ne.s32.totalorder %s226, %s228
      %p232 = scmp.eq.s32.totalorder %s19, 0
      %p233 = por %p231, %p232
      %p234 = scmp.ne.s32.totalorder %s226, %s228
      %p235 = scmp.eq.s32.totalorder %s24, 1
      %p236 = por %p234, %p235
      %p237 = scmp.ne.s32.totalorder %s228, %s229
      %p238 = scmp.eq.s32.totalorder %s24, 0
      %p239 = por %p237, %p238
      %p240 = scmp.ne.s32.totalorder %s228, %s229
      %p241 = scmp.eq.s32.totalorder %s25, 1
      %p242 = por %p240, %p241
      %p244 = scmp.ne.s32.totalorder %s229, %s243
      %p245 = scmp.eq.s32.totalorder %s25, 0
      %p246 = por %p244, %p245
      %s247 = ssub.s32 %s19, %s26
      %p248 = scmp.eq.s32.totalorder %s247, 0
      %s250 = sadd.s32 %s249, 1
      %s251 = scalar_select %p248, %s249, %s250
      %p254 = pneg %p248
      %p255 = scmp.eq.s32.totalorder %s19, 1
      %p256 = por %p254, %p255
      %p257 = scmp.ne.s32.totalorder %s249, %s252
      %p258 = scmp.eq.s32.totalorder %s19, 0
      %p259 = por %p257, %p258
      %p260 = scmp.ne.s32.totalorder %s249, %s252
      %p261 = scmp.eq.s32.totalorder %s24, 1
      %p262 = por %p260, %p261
      %p263 = scmp.ne.s32.totalorder %s252, %s253
      %p264 = scmp.eq.s32.totalorder %s24, 0
      %p265 = por %p263, %p264
      %p266 = scmp.ne.s32.totalorder %s252, %s253
      %p267 = scmp.eq.s32.totalorder %s25, 1
      %p268 = por %p266, %p267
      %p270 = scmp.ne.s32.totalorder %s253, %s269
      %p271 = scmp.eq.s32.totalorder %s25, 0
      %p272 = por %p270, %p271
      %p273 = scmp.le.s32.totalorder 1, %s19
      %p274 = scmp.lt.s32.totalorder %s19, 3
      %p275 = pnand %p273, %p274
      %p276 = pneg %p275
      // Predicated region
      $region9: #{stgnn_layer_pallas.9} parent=5 // pred_check
        _
      $region10: #{stgnn_layer_pallas.9} parent=5 // pred_check_branch
        %278 = sbr.rel (%p275) target = $region12
      $region11: #{stgnn_layer_pallas.9} parent=5 // pred_region
        %s279 = ssub.s32 %s19, 1
        // Predicated region
        $region13: #{stgnn_layer_pallas.9} parent=11 // pred_check
          %p280 = pneg %p92
        $region14: #{stgnn_layer_pallas.9} parent=11 // pred_check_branch
          %282 = sbr.rel (%p280) target = $region16
        $region15: #{stgnn_layer_pallas.9} parent=11 // pred_region
          _
        $region16: #{stgnn_layer_pallas.9} parent=11 // pred_fallthru
          _
        // Predicated region
        $region17: #{stgnn_layer_pallas.9} parent=11 // pred_check
          %p283 = pneg %p113
        $region18: #{stgnn_layer_pallas.9} parent=11 // pred_check_branch
          %285 = sbr.rel (%p283) target = $region20
        $region19: #{stgnn_layer_pallas.9} parent=11 // pred_region
          _
        $region20: #{stgnn_layer_pallas.9} parent=11 // pred_fallthru
          _
        // Predicated region
        $region21: #{stgnn_layer_pallas.9} parent=11 // pred_check
          %p286 = pneg %p134
        $region22: #{stgnn_layer_pallas.9} parent=11 // pred_check_branch
          %288 = sbr.rel (%p286) target = $region24
        $region23: #{stgnn_layer_pallas.9} parent=11 // pred_region
          _
        $region24: #{stgnn_layer_pallas.9} parent=11 // pred_fallthru
          _
        // Predicated region
        $region25: #{stgnn_layer_pallas.9} parent=11 // pred_check
          %p289 = pneg %p155
        $region26: #{stgnn_layer_pallas.9} parent=11 // pred_check_branch
          %291 = sbr.rel (%p289) target = $region28
        $region27: #{stgnn_layer_pallas.9} parent=11 // pred_region
          _
        $region28: #{stgnn_layer_pallas.9} parent=11 // pred_fallthru
          _
        // Predicated region
        $region29: #{stgnn_layer_pallas.9} parent=11 // pred_check
          %p292 = pneg %p176
        $region30: #{stgnn_layer_pallas.9} parent=11 // pred_check_branch
          %294 = sbr.rel (%p292) target = $region32
        $region31: #{stgnn_layer_pallas.9} parent=11 // pred_region
          _
        $region32: #{stgnn_layer_pallas.9} parent=11 // pred_fallthru
          _
        // Predicated region
        $region33: #{stgnn_layer_pallas.9} parent=11 // pred_check
          %p295 = pneg %p197
        $region34: #{stgnn_layer_pallas.9} parent=11 // pred_check_branch
          %297 = sbr.rel (%p295) target = $region36
        $region35: #{stgnn_layer_pallas.9} parent=11 // pred_region
          _
        $region36: #{stgnn_layer_pallas.9} parent=11 // pred_fallthru
          _
        // Predicated region
        $region37: #{stgnn_layer_pallas.9} parent=11 // pred_check
          %p298 = pneg %p218
        $region38: #{stgnn_layer_pallas.9} parent=11 // pred_check_branch
          %300 = sbr.rel (%p298) target = $region40
        $region39: #{stgnn_layer_pallas.9} parent=11 // pred_region
          _
        $region40: #{stgnn_layer_pallas.9} parent=11 // pred_fallthru
          _
        // Predicated region
        $region41: #{stgnn_layer_pallas.9} parent=11 // pred_check
          %p301 = pneg %p239
        $region42: #{stgnn_layer_pallas.9} parent=11 // pred_check_branch
          %303 = sbr.rel (%p301) target = $region44
        $region43: #{stgnn_layer_pallas.9} parent=11 // pred_region
          _
        $region44: #{stgnn_layer_pallas.9} parent=11 // pred_fallthru
          _
      $region12: #{stgnn_layer_pallas.9} parent=5 // pred_fallthru
        _
      %p304 = scmp.lt.s32.totalorder %s19, 2
      // Predicated region
      $region45: #{stgnn_layer_pallas.9} parent=5 // pred_check
        %p305 = pneg %p304
      $region46: #{stgnn_layer_pallas.9} parent=5 // pred_check_branch
        %307 = sbr.rel (%p305) target = $region48
      $region47: #{stgnn_layer_pallas.9} parent=5 // pred_region
        // Predicated region
        $region49: #{stgnn_layer_pallas.9} parent=47 // pred_check
          %p308 = pneg %p39
        $region50: #{stgnn_layer_pallas.9} parent=47 // pred_check_branch
          %310 = sbr.rel (%p308) target = $region52
        $region51: #{stgnn_layer_pallas.9} parent=47 // pred_region
          %s311 = smul.u32 16, %s19
          %p312 = scmp.lt.s32.totalorder %s311, 31
          %s313 = scalar_select %p312, %s311, 31
          %s314 = smul.addr %s313, 8
          %s315 = scalar_lea.vmem %s0, %s314
          %s316 = smul.u32 16, %s19
        $region52: #{stgnn_layer_pallas.9} parent=47 // pred_fallthru
          _
        // Predicated region
        $region53: #{stgnn_layer_pallas.9} parent=47 // pred_check
          %p317 = pneg %p65
        $region54: #{stgnn_layer_pallas.9} parent=47 // pred_check_branch
          %319 = sbr.rel (%p317) target = $region56
        $region55: #{stgnn_layer_pallas.9} parent=47 // pred_region
          %s320 = smul.u32 16, %s19
          %p321 = scmp.lt.s32.totalorder %s320, 31
          %s322 = scalar_select %p321, %s320, 31
          %s323 = smul.addr %s322, 8
          %s324 = scalar_lea.vmem %s1, %s323
          %s325 = smul.u32 16, %s19
        $region56: #{stgnn_layer_pallas.9} parent=47 // pred_fallthru
          _
      $region48: #{stgnn_layer_pallas.9} parent=5 // pred_fallthru
        _
      %p326 = scmp.le.s32.totalorder 1, %s19
      %p327 = scmp.lt.s32.totalorder %s19, 3
      %p328 = pnand %p326, %p327
      %p329 = pneg %p328
      // Predicated region
      $region57: #{stgnn_layer_pallas.9} parent=5 // pred_check
        _
      $region58: #{stgnn_layer_pallas.9} parent=5 // pred_check_branch
        %331 = sbr.rel (%p328) target = $region60
      $region59: #{stgnn_layer_pallas.9} parent=5 // pred_region
        %s332 = ssub.s32 %s19, 1
        %s333 = smul.u32 16, %s24
        %p334 = scmp.lt.s32.totalorder %s333, 31
        %s335 = scalar_select %p334, %s333, 31
        %s336 = smul.addr %s335, 8
        %s337 = scalar_lea.vmem %s0, %s336
        %p338 = pneg %p45
        %p339 = pneg %p42
        %s340 = smul.u32 16, %s24
        %p341 = scmp.lt.s32.totalorder %s340, 31
        %s342 = scalar_select %p341, %s340, 31
        %s343 = smul.addr %s342, 8
        %s344 = scalar_lea.vmem %s1, %s343
        %p345 = pneg %p71
        %p346 = pneg %p68
        %p347 = pneg %p92
        %p348 = pneg %p89
        %p349 = pneg %p113
        %p350 = pneg %p110
        %p351 = pneg %p134
        %p352 = pneg %p131
        %p353 = pneg %p155
        %p354 = pneg %p152
        %p355 = pneg %p176
        %p356 = pneg %p173
        %p357 = pneg %p197
        %p358 = pneg %p194
        %p359 = pneg %p218
        %p360 = pneg %p215
        %p361 = pneg %p239
        %p362 = pneg %p236
        %p363 = pneg %p265
        %p364 = pneg %p262
        %s365 = sand.u32 %s252, 1
        %s366 = scalar_lea.sflag [#allocation3], %s365
        %s367 = sand.u32 %s252, 1
        %s368 = smul.addr %s367, 128
        %s369 = scalar_lea.vmem [#allocation2], %s368
        %s370 = smul.u32 16, %s24
        %p371 = scmp.lt.s32.totalorder %s370, 31
        %s372 = scalar_select %p371, %s370, 31
        %s373 = smul.addr %s372, 8
        %s374 = scalar_lea.vmem %s0, %s373
        %s375 = smul.u32 16, %s24
        %s376 = smul.u32 16, %s24
        %p377 = scmp.lt.s32.totalorder %s376, 31
        %s378 = scalar_select %p377, %s376, 31
        %s379 = smul.addr %s378, 8
        %s380 = scalar_lea.vmem %s1, %s379
        %s381 = smul.u32 16, %s24
        %s382 = smul.u32 16, %s24
        %v383 = vld [vmem:[%s374] sm:$0xff]
        %v384 = vld [vmem:[%s374 + $0x8] sm:$0xff]
        %v385 = vld [vmem:[%s374 + $0x10] sm:$0xff]
        %v386 = vld [vmem:[%s374 + $0x18] sm:$0xff]
        %v387 = vld [vmem:[%s374 + $0x20] sm:$0xff]
        %v388 = vld [vmem:[%s374 + $0x28] sm:$0xff]
        %v389 = vld [vmem:[%s374 + $0x30] sm:$0xff]
        %v390 = vld [vmem:[%s374 + $0x38] sm:$0xff]
        %v391 = vld [vmem:[%s374 + $0x40] sm:$0xff]
        %v392 = vld [vmem:[%s374 + $0x48] sm:$0xff]
        %v393 = vld [vmem:[%s374 + $0x50] sm:$0xff]
        %v394 = vld [vmem:[%s374 + $0x58] sm:$0xff]
        %v395 = vld [vmem:[%s374 + $0x60] sm:$0xff]
        %v396 = vld [vmem:[%s374 + $0x68] sm:$0xff]
        %v397 = vld [vmem:[%s374 + $0x70] sm:$0xff]
        %v398 = vld [vmem:[%s374 + $0x78] sm:$0xff]
        %v399 = vld [vmem:[%s2] sm:$0xff]
        %v400 = vld [vmem:[%s2 + $0x8] sm:$0xff]
        %v401 = vld [vmem:[%s2 + $0x10] sm:$0xff]
        %v402 = vld [vmem:[%s2 + $0x18] sm:$0xff]
        %v403 = vld [vmem:[%s3] sm:$0x1]
        %v405 = vperm.slane %v403, 0
        %vm407 = vcmask 261120
        %v409 = vsel %vm407, %v383, 0
        %v412 = vsel %vm407, %v384, 0
        %v415 = vsel %vm407, %v385, 0
        %v418 = vsel %vm407, %v386, 0
        %v421 = vsel %vm407, %v387, 0
        %v424 = vsel %vm407, %v388, 0
        %v427 = vsel %vm407, %v389, 0
        %v430 = vsel %vm407, %v390, 0
        %v433 = vsel %vm407, %v391, 0
        %v436 = vsel %vm407, %v392, 0
        %v439 = vsel %vm407, %v393, 0
        %v442 = vsel %vm407, %v394, 0
        %v445 = vsel %vm407, %v395, 0
        %v448 = vsel %vm407, %v396, 0
        %v451 = vsel %vm407, %v397, 0
        %v454 = vsel %vm407, %v398, 0
        %456 = vmatpush.msra.mxu0 0.0
        %457 = vmatpush.msra.mxu0 0.0
        %458 = vmatpush.msra.mxu0 0.0
        %459 = vmatpush.msra.mxu0 0.0
        %460 = vmatpush.msra.mxu0 0.0
        %461 = vmatpush.msra.mxu0 0.0
        %462 = vmatpush.msra.mxu0 0.0
        %463 = vmatpush.msra.mxu0 0.0
        %464 = vmatpush.msra.mxu0 0.0
        %465 = vmatpush.msra.mxu0 0.0
        %466 = vmatpush.msra.mxu0 0.0
        %467 = vmatpush.msra.mxu0 0.0
        %468 = vmatpush.msra.mxu0 %v402
        %469 = vmatpush.msra.mxu0 %v401
        %470 = vmatpush.msra.mxu0 %v400
        %471 = vmatpush.msra.mxu0 %v399
        %472 = vmatmul.f32.gmra.mxu0 %v409
        %v473 = vpop.f32.mrf.mxu0
        %v474 = vadd.f32 %v405, %v473
        %475 = vmatmul.f32.gmra.mxu0 %v412
        %v476 = vpop.f32.mrf.mxu0
        %v477 = vadd.f32 %v405, %v476
        %478 = vmatmul.f32.gmra.mxu0 %v415
        %v479 = vpop.f32.mrf.mxu0
        %v480 = vadd.f32 %v405, %v479
        %481 = vmatmul.f32.gmra.mxu0 %v418
        %v482 = vpop.f32.mrf.mxu0
        %v483 = vadd.f32 %v405, %v482
        %484 = vmatmul.f32.gmra.mxu0 %v421
        %v485 = vpop.f32.mrf.mxu0
        %v486 = vadd.f32 %v405, %v485
        %487 = vmatmul.f32.gmra.mxu0 %v424
        %v488 = vpop.f32.mrf.mxu0
        %v489 = vadd.f32 %v405, %v488
        %490 = vmatmul.f32.gmra.mxu0 %v427
        %v491 = vpop.f32.mrf.mxu0
        %v492 = vadd.f32 %v405, %v491
        %493 = vmatmul.f32.gmra.mxu0 %v430
        %v494 = vpop.f32.mrf.mxu0
        %v495 = vadd.f32 %v405, %v494
        %496 = vmatmul.f32.gmra.mxu0 %v433
        %v497 = vpop.f32.mrf.mxu0
        %v498 = vadd.f32 %v405, %v497
        %499 = vmatmul.f32.gmra.mxu0 %v436
        %v500 = vpop.f32.mrf.mxu0
        %v501 = vadd.f32 %v405, %v500
        %502 = vmatmul.f32.gmra.mxu0 %v439
        %v503 = vpop.f32.mrf.mxu0
        %v504 = vadd.f32 %v405, %v503
        %505 = vmatmul.f32.gmra.mxu0 %v442
        %v506 = vpop.f32.mrf.mxu0
        %v507 = vadd.f32 %v405, %v506
        %508 = vmatmul.f32.gmra.mxu0 %v445
        %v509 = vpop.f32.mrf.mxu0
        %v510 = vadd.f32 %v405, %v509
        %511 = vmatmul.f32.gmra.mxu0 %v448
        %v512 = vpop.f32.mrf.mxu0
        %v513 = vadd.f32 %v405, %v512
        %514 = vmatmul.f32.gmra.mxu0 %v451
        %v515 = vpop.f32.mrf.mxu0
        %v516 = vadd.f32 %v405, %v515
        %517 = vmatmul.f32.gmra.mxu0 %v454
        %v518 = vpop.f32.mrf.mxu0
        %v519 = vadd.f32 %v405, %v518
        %520 = vdwg.mxu0
        %v521 = vld [vmem:[%s380] sm:$0xff]
        %v522 = vld [vmem:[%s380 + $0x8] sm:$0xff]
        %v523 = vld [vmem:[%s380 + $0x10] sm:$0xff]
        %v524 = vld [vmem:[%s380 + $0x18] sm:$0xff]
        %v525 = vld [vmem:[%s380 + $0x20] sm:$0xff]
        %v526 = vld [vmem:[%s380 + $0x28] sm:$0xff]
        %v527 = vld [vmem:[%s380 + $0x30] sm:$0xff]
        %v528 = vld [vmem:[%s380 + $0x38] sm:$0xff]
        %v529 = vld [vmem:[%s380 + $0x40] sm:$0xff]
        %v530 = vld [vmem:[%s380 + $0x48] sm:$0xff]
        %v531 = vld [vmem:[%s380 + $0x50] sm:$0xff]
        %v532 = vld [vmem:[%s380 + $0x58] sm:$0xff]
        %v533 = vld [vmem:[%s380 + $0x60] sm:$0xff]
        %v534 = vld [vmem:[%s380 + $0x68] sm:$0xff]
        %v535 = vld [vmem:[%s380 + $0x70] sm:$0xff]
        %v536 = vld [vmem:[%s380 + $0x78] sm:$0xff]
        %v537 = vadd.f32 %v521, %v474
        %v538 = vadd.f32 %v522, %v477
        %v539 = vadd.f32 %v523, %v480
        %v540 = vadd.f32 %v524, %v483
        %v541 = vadd.f32 %v525, %v486
        %v542 = vadd.f32 %v526, %v489
        %v543 = vadd.f32 %v527, %v492
        %v544 = vadd.f32 %v528, %v495
        %v545 = vadd.f32 %v529, %v498
        %v546 = vadd.f32 %v530, %v501
        %v547 = vadd.f32 %v531, %v504
        %v548 = vadd.f32 %v532, %v507
        %v549 = vadd.f32 %v533, %v510
        %v550 = vadd.f32 %v534, %v513
        %v551 = vadd.f32 %v535, %v516
        %v552 = vadd.f32 %v536, %v519
        %v553 = vld [vmem:[%s4] sm:$0x1]
        %v554 = vld [vmem:[%s5] sm:$0x1]
        %v555 = vsel %vm407, %v537, 0.0
        %556 = vadd.xlane.f32.xlu0 %v555
        %v557 = vpop.xlane.xlu0 %556
        %v558 = vsel %vm407, %v538, 0.0
        %559 = vadd.xlane.f32.xlu0 %v558
        %v560 = vpop.xlane.xlu0 %559
        %v561 = vsel %vm407, %v539, 0.0
        %562 = vadd.xlane.f32.xlu0 %v561
        %v563 = vpop.xlane.xlu0 %562
        %v564 = vsel %vm407, %v540, 0.0
        %565 = vadd.xlane.f32.xlu0 %v564
        %v566 = vpop.xlane.xlu0 %565
        %v567 = vsel %vm407, %v541, 0.0
        %568 = vadd.xlane.f32.xlu0 %v567
        %v569 = vpop.xlane.xlu0 %568
        %v570 = vsel %vm407, %v542, 0.0
        %571 = vadd.xlane.f32.xlu0 %v570
        %v572 = vpop.xlane.xlu0 %571
        %v573 = vsel %vm407, %v543, 0.0
        %574 = vadd.xlane.f32.xlu0 %v573
        %v575 = vpop.xlane.xlu0 %574
        %v576 = vsel %vm407, %v544, 0.0
        %577 = vadd.xlane.f32.xlu0 %v576
        %v578 = vpop.xlane.xlu0 %577
        %v579 = vsel %vm407, %v545, 0.0
        %580 = vadd.xlane.f32.xlu0 %v579
        %v581 = vpop.xlane.xlu0 %580
        %v582 = vsel %vm407, %v546, 0.0
        %583 = vadd.xlane.f32.xlu0 %v582
        %v584 = vpop.xlane.xlu0 %583
        %v585 = vsel %vm407, %v547, 0.0
        %586 = vadd.xlane.f32.xlu0 %v585
        %v587 = vpop.xlane.xlu0 %586
        %v588 = vsel %vm407, %v548, 0.0
        %589 = vadd.xlane.f32.xlu0 %v588
        %v590 = vpop.xlane.xlu0 %589
        %v591 = vsel %vm407, %v549, 0.0
        %592 = vadd.xlane.f32.xlu0 %v591
        %v593 = vpop.xlane.xlu0 %592
        %v594 = vsel %vm407, %v550, 0.0
        %595 = vadd.xlane.f32.xlu0 %v594
        %v596 = vpop.xlane.xlu0 %595
        %v597 = vsel %vm407, %v551, 0.0
        %598 = vadd.xlane.f32.xlu0 %v597
        %v599 = vpop.xlane.xlu0 %598
        %v600 = vsel %vm407, %v552, 0.0
        %601 = vadd.xlane.f32.xlu0 %v600
        %v602 = vpop.xlane.xlu0 %601
        %v603 = vrcp.pop 32.0
        %v604 = vmul.f32 32.0, %v603
        %v605 = vsub.f32 1.0, %v604
        %v606 = vmul.f32 %v603, %v605
        %v607 = vadd.f32 %v603, %v606
        %vm608 = vweird.f32 %v603
        %v609 = vsel %vm608, %v603, %v607
        %v610 = vmul.f32 %v557, %v609
        %v611 = vmul.f32 %v560, %v609
        %v612 = vmul.f32 %v563, %v609
        %v613 = vmul.f32 %v566, %v609
        %v614 = vmul.f32 %v569, %v609
        %v615 = vmul.f32 %v572, %v609
        %v616 = vmul.f32 %v575, %v609
        %v617 = vmul.f32 %v578, %v609
        %v618 = vmul.f32 %v581, %v609
        %v619 = vmul.f32 %v584, %v609
        %v620 = vmul.f32 %v587, %v609
        %v621 = vmul.f32 %v590, %v609
        %v622 = vmul.f32 %v593, %v609
        %v623 = vmul.f32 %v596, %v609
        %v624 = vmul.f32 %v599, %v609
        %v625 = vmul.f32 %v602, %v609
        %v626 = vsub.f32 %v537, %v610
        %v627 = vsub.f32 %v538, %v611
        %v628 = vsub.f32 %v539, %v612
        %v629 = vsub.f32 %v540, %v613
        %v630 = vsub.f32 %v541, %v614
        %v631 = vsub.f32 %v542, %v615
        %v632 = vsub.f32 %v543, %v616
        %v633 = vsub.f32 %v544, %v617
        %v634 = vsub.f32 %v545, %v618
        %v635 = vsub.f32 %v546, %v619
        %v636 = vsub.f32 %v547, %v620
        %v637 = vsub.f32 %v548, %v621
        %v638 = vsub.f32 %v549, %v622
        %v639 = vsub.f32 %v550, %v623
        %v640 = vsub.f32 %v551, %v624
        %v641 = vsub.f32 %v552, %v625
        %v642 = vmul.f32 %v626, %v626
        %v643 = vmul.f32 %v627, %v627
        %v644 = vmul.f32 %v628, %v628
        %v645 = vmul.f32 %v629, %v629
        %v646 = vmul.f32 %v630, %v630
        %v647 = vmul.f32 %v631, %v631
        %v648 = vmul.f32 %v632, %v632
        %v649 = vmul.f32 %v633, %v633
        %v650 = vmul.f32 %v634, %v634
        %v651 = vmul.f32 %v635, %v635
        %v652 = vmul.f32 %v636, %v636
        %v653 = vmul.f32 %v637, %v637
        %v654 = vmul.f32 %v638, %v638
        %v655 = vmul.f32 %v639, %v639
        %v656 = vmul.f32 %v640, %v640
        %v657 = vmul.f32 %v641, %v641
        %v658 = vsel %vm407, %v642, 0.0
        %659 = vadd.xlane.f32.xlu0 %v658
        %v660 = vpop.xlane.xlu0 %659
        %v661 = vsel %vm407, %v643, 0.0
        %662 = vadd.xlane.f32.xlu0 %v661
        %v663 = vpop.xlane.xlu0 %662
        %v664 = vsel %vm407, %v644, 0.0
        %665 = vadd.xlane.f32.xlu0 %v664
        %v666 = vpop.xlane.xlu0 %665
        %v667 = vsel %vm407, %v645, 0.0
        %668 = vadd.xlane.f32.xlu0 %v667
        %v669 = vpop.xlane.xlu0 %668
        %v670 = vsel %vm407, %v646, 0.0
        %671 = vadd.xlane.f32.xlu0 %v670
        %v672 = vpop.xlane.xlu0 %671
        %v673 = vsel %vm407, %v647, 0.0
        %674 = vadd.xlane.f32.xlu0 %v673
        %v675 = vpop.xlane.xlu0 %674
        %v676 = vsel %vm407, %v648, 0.0
        %677 = vadd.xlane.f32.xlu0 %v676
        %v678 = vpop.xlane.xlu0 %677
        %v679 = vsel %vm407, %v649, 0.0
        %680 = vadd.xlane.f32.xlu0 %v679
        %v681 = vpop.xlane.xlu0 %680
        %v682 = vsel %vm407, %v650, 0.0
        %683 = vadd.xlane.f32.xlu0 %v682
        %v684 = vpop.xlane.xlu0 %683
        %v685 = vsel %vm407, %v651, 0.0
        %686 = vadd.xlane.f32.xlu0 %v685
        %v687 = vpop.xlane.xlu0 %686
        %v688 = vsel %vm407, %v652, 0.0
        %689 = vadd.xlane.f32.xlu0 %v688
        %v690 = vpop.xlane.xlu0 %689
        %v691 = vsel %vm407, %v653, 0.0
        %692 = vadd.xlane.f32.xlu0 %v691
        %v693 = vpop.xlane.xlu0 %692
        %v694 = vsel %vm407, %v654, 0.0
        %695 = vadd.xlane.f32.xlu0 %v694
        %v696 = vpop.xlane.xlu0 %695
        %v697 = vsel %vm407, %v655, 0.0
        %698 = vadd.xlane.f32.xlu0 %v697
        %v699 = vpop.xlane.xlu0 %698
        %v700 = vsel %vm407, %v656, 0.0
        %701 = vadd.xlane.f32.xlu0 %v700
        %v702 = vpop.xlane.xlu0 %701
        %v703 = vsel %vm407, %v657, 0.0
        %704 = vadd.xlane.f32.xlu0 %v703
        %v705 = vpop.xlane.xlu0 %704
        %v706 = vmul.f32 %v660, %v609
        %v707 = vmul.f32 %v663, %v609
        %v708 = vmul.f32 %v666, %v609
        %v709 = vmul.f32 %v669, %v609
        %v710 = vmul.f32 %v672, %v609
        %v711 = vmul.f32 %v675, %v609
        %v712 = vmul.f32 %v678, %v609
        %v713 = vmul.f32 %v681, %v609
        %v714 = vmul.f32 %v684, %v609
        %v715 = vmul.f32 %v687, %v609
        %v716 = vmul.f32 %v690, %v609
        %v717 = vmul.f32 %v693, %v609
        %v718 = vmul.f32 %v696, %v609
        %v719 = vmul.f32 %v699, %v609
        %v720 = vmul.f32 %v702, %v609
        %v721 = vmul.f32 %v705, %v609
        %v722 = vadd.f32 %v706, 1e-05
        %v723 = vadd.f32 %v707, 1e-05
        %v724 = vadd.f32 %v708, 1e-05
        %v725 = vadd.f32 %v709, 1e-05
        %v726 = vadd.f32 %v710, 1e-05
        %v727 = vadd.f32 %v711, 1e-05
        %v728 = vadd.f32 %v712, 1e-05
        %v729 = vadd.f32 %v713, 1e-05
        %v730 = vadd.f32 %v714, 1e-05
        %v731 = vadd.f32 %v715, 1e-05
        %v732 = vadd.f32 %v716, 1e-05
        %v733 = vadd.f32 %v717, 1e-05
        %v734 = vadd.f32 %v718, 1e-05
        %v735 = vadd.f32 %v719, 1e-05
        %v736 = vadd.f32 %v720, 1e-05
        %v737 = vadd.f32 %v721, 1e-05
        %v738 = vrsqrt.pop %v722
        %v739 = vmul.f32 %v738, %v722
        %v740 = vmul.f32 %v739, %v738
        %v741 = vmul.f32 0.5, %v740
        %v742 = vsub.f32 1.5, %v741
        %v743 = vmul.f32 %v738, %v742
        %vm744 = vweird.f32 %v722
        %vm745 = vweird.f32 %v738
        %vm746 = vmor %vm744, %vm745
        %v747 = vsel %vm746, %v738, %v743
        %v748 = vrsqrt.pop %v723
        %v749 = vmul.f32 %v748, %v723
        %v750 = vmul.f32 %v749, %v748
        %v751 = vmul.f32 0.5, %v750
        %v752 = vsub.f32 1.5, %v751
        %v753 = vmul.f32 %v748, %v752
        %vm754 = vweird.f32 %v723
        %vm755 = vweird.f32 %v748
        %vm756 = vmor %vm754, %vm755
        %v757 = vsel %vm756, %v748, %v753
        %v758 = vrsqrt.pop %v724
        %v759 = vmul.f32 %v758, %v724
        %v760 = vmul.f32 %v759, %v758
        %v761 = vmul.f32 0.5, %v760
        %v762 = vsub.f32 1.5, %v761
        %v763 = vmul.f32 %v758, %v762
        %vm764 = vweird.f32 %v724
        %vm765 = vweird.f32 %v758
        %vm766 = vmor %vm764, %vm765
        %v767 = vsel %vm766, %v758, %v763
        %v768 = vrsqrt.pop %v725
        %v769 = vmul.f32 %v768, %v725
        %v770 = vmul.f32 %v769, %v768
        %v771 = vmul.f32 0.5, %v770
        %v772 = vsub.f32 1.5, %v771
        %v773 = vmul.f32 %v768, %v772
        %vm774 = vweird.f32 %v725
        %vm775 = vweird.f32 %v768
        %vm776 = vmor %vm774, %vm775
        %v777 = vsel %vm776, %v768, %v773
        %v778 = vrsqrt.pop %v726
        %v779 = vmul.f32 %v778, %v726
        %v780 = vmul.f32 %v779, %v778
        %v781 = vmul.f32 0.5, %v780
        %v782 = vsub.f32 1.5, %v781
        %v783 = vmul.f32 %v778, %v782
        %vm784 = vweird.f32 %v726
        %vm785 = vweird.f32 %v778
        %vm786 = vmor %vm784, %vm785
        %v787 = vsel %vm786, %v778, %v783
        %v788 = vrsqrt.pop %v727
        %v789 = vmul.f32 %v788, %v727
        %v790 = vmul.f32 %v789, %v788
        %v791 = vmul.f32 0.5, %v790
        %v792 = vsub.f32 1.5, %v791
        %v793 = vmul.f32 %v788, %v792
        %vm794 = vweird.f32 %v727
        %vm795 = vweird.f32 %v788
        %vm796 = vmor %vm794, %vm795
        %v797 = vsel %vm796, %v788, %v793
        %v798 = vrsqrt.pop %v728
        %v799 = vmul.f32 %v798, %v728
        %v800 = vmul.f32 %v799, %v798
        %v801 = vmul.f32 0.5, %v800
        %v802 = vsub.f32 1.5, %v801
        %v803 = vmul.f32 %v798, %v802
        %vm804 = vweird.f32 %v728
        %vm805 = vweird.f32 %v798
        %vm806 = vmor %vm804, %vm805
        %v807 = vsel %vm806, %v798, %v803
        %v808 = vrsqrt.pop %v729
        %v809 = vmul.f32 %v808, %v729
        %v810 = vmul.f32 %v809, %v808
        %v811 = vmul.f32 0.5, %v810
        %v812 = vsub.f32 1.5, %v811
        %v813 = vmul.f32 %v808, %v812
        %vm814 = vweird.f32 %v729
        %vm815 = vweird.f32 %v808
        %vm816 = vmor %vm814, %vm815
        %v817 = vsel %vm816, %v808, %v813
        %v818 = vrsqrt.pop %v730
        %v819 = vmul.f32 %v818, %v730
        %v820 = vmul.f32 %v819, %v818
        %v821 = vmul.f32 0.5, %v820
        %v822 = vsub.f32 1.5, %v821
        %v823 = vmul.f32 %v818, %v822
        %vm824 = vweird.f32 %v730
        %vm825 = vweird.f32 %v818
        %vm826 = vmor %vm824, %vm825
        %v827 = vsel %vm826, %v818, %v823
        %v828 = vrsqrt.pop %v731
        %v829 = vmul.f32 %v828, %v731
        %v830 = vmul.f32 %v829, %v828
        %v831 = vmul.f32 0.5, %v830
        %v832 = vsub.f32 1.5, %v831
        %v833 = vmul.f32 %v828, %v832
        %vm834 = vweird.f32 %v731
        %vm835 = vweird.f32 %v828
        %vm836 = vmor %vm834, %vm835
        %v837 = vsel %vm836, %v828, %v833
        %v838 = vrsqrt.pop %v732
        %v839 = vmul.f32 %v838, %v732
        %v840 = vmul.f32 %v839, %v838
        %v841 = vmul.f32 0.5, %v840
        %v842 = vsub.f32 1.5, %v841
        %v843 = vmul.f32 %v838, %v842
        %vm844 = vweird.f32 %v732
        %vm845 = vweird.f32 %v838
        %vm846 = vmor %vm844, %vm845
        %v847 = vsel %vm846, %v838, %v843
        %v848 = vrsqrt.pop %v733
        %v849 = vmul.f32 %v848, %v733
        %v850 = vmul.f32 %v849, %v848
        %v851 = vmul.f32 0.5, %v850
        %v852 = vsub.f32 1.5, %v851
        %v853 = vmul.f32 %v848, %v852
        %vm854 = vweird.f32 %v733
        %vm855 = vweird.f32 %v848
        %vm856 = vmor %vm854, %vm855
        %v857 = vsel %vm856, %v848, %v853
        %v858 = vrsqrt.pop %v734
        %v859 = vmul.f32 %v858, %v734
        %v860 = vmul.f32 %v859, %v858
        %v861 = vmul.f32 0.5, %v860
        %v862 = vsub.f32 1.5, %v861
        %v863 = vmul.f32 %v858, %v862
        %vm864 = vweird.f32 %v734
        %vm865 = vweird.f32 %v858
        %vm866 = vmor %vm864, %vm865
        %v867 = vsel %vm866, %v858, %v863
        %v868 = vrsqrt.pop %v735
        %v869 = vmul.f32 %v868, %v735
        %v870 = vmul.f32 %v869, %v868
        %v871 = vmul.f32 0.5, %v870
        %v872 = vsub.f32 1.5, %v871
        %v873 = vmul.f32 %v868, %v872
        %vm874 = vweird.f32 %v735
        %vm875 = vweird.f32 %v868
        %vm876 = vmor %vm874, %vm875
        %v877 = vsel %vm876, %v868, %v873
        %v878 = vrsqrt.pop %v736
        %v879 = vmul.f32 %v878, %v736
        %v880 = vmul.f32 %v879, %v878
        %v881 = vmul.f32 0.5, %v880
        %v882 = vsub.f32 1.5, %v881
        %v883 = vmul.f32 %v878, %v882
        %vm884 = vweird.f32 %v736
        %vm885 = vweird.f32 %v878
        %vm886 = vmor %vm884, %vm885
        %v887 = vsel %vm886, %v878, %v883
        %v888 = vrsqrt.pop %v737
        %v889 = vmul.f32 %v888, %v737
        %v890 = vmul.f32 %v889, %v888
        %v891 = vmul.f32 0.5, %v890
        %v892 = vsub.f32 1.5, %v891
        %v893 = vmul.f32 %v888, %v892
        %vm894 = vweird.f32 %v737
        %vm895 = vweird.f32 %v888
        %vm896 = vmor %vm894, %vm895
        %v897 = vsel %vm896, %v888, %v893
        %v898 = vmul.f32 %v626, %v747
        %v899 = vmul.f32 %v627, %v757
        %v900 = vmul.f32 %v628, %v767
        %v901 = vmul.f32 %v629, %v777
        %v902 = vmul.f32 %v630, %v787
        %v903 = vmul.f32 %v631, %v797
        %v904 = vmul.f32 %v632, %v807
        %v905 = vmul.f32 %v633, %v817
        %v906 = vmul.f32 %v634, %v827
        %v907 = vmul.f32 %v635, %v837
        %v908 = vmul.f32 %v636, %v847
        %v909 = vmul.f32 %v637, %v857
        %v910 = vmul.f32 %v638, %v867
        %v911 = vmul.f32 %v639, %v877
        %v912 = vmul.f32 %v640, %v887
        %v913 = vmul.f32 %v641, %v897
        %v915 = vperm.slane %v553, 0
        %v917 = vmul.f32 %v898, %v915
        %v918 = vmul.f32 %v899, %v915
        %v919 = vmul.f32 %v900, %v915
        %v920 = vmul.f32 %v901, %v915
        %v921 = vmul.f32 %v902, %v915
        %v922 = vmul.f32 %v903, %v915
        %v923 = vmul.f32 %v904, %v915
        %v924 = vmul.f32 %v905, %v915
        %v925 = vmul.f32 %v906, %v915
        %v926 = vmul.f32 %v907, %v915
        %v927 = vmul.f32 %v908, %v915
        %v928 = vmul.f32 %v909, %v915
        %v929 = vmul.f32 %v910, %v915
        %v930 = vmul.f32 %v911, %v915
        %v931 = vmul.f32 %v912, %v915
        %v932 = vmul.f32 %v913, %v915
        %v934 = vperm.slane %v554, 0
        %v936 = vadd.f32 %v917, %v934
        %v937 = vadd.f32 %v918, %v934
        %v938 = vadd.f32 %v919, %v934
        %v939 = vadd.f32 %v920, %v934
        %v940 = vadd.f32 %v921, %v934
        %v941 = vadd.f32 %v922, %v934
        %v942 = vadd.f32 %v923, %v934
        %v943 = vadd.f32 %v924, %v934
        %v944 = vadd.f32 %v925, %v934
        %v945 = vadd.f32 %v926, %v934
        %v946 = vadd.f32 %v927, %v934
        %v947 = vadd.f32 %v928, %v934
        %v948 = vadd.f32 %v929, %v934
        %v949 = vadd.f32 %v930, %v934
        %v950 = vadd.f32 %v931, %v934
        %v951 = vadd.f32 %v932, %v934
        %v952 = vld [vmem:[%s6] sm:$0xff]
        %v953 = vld [vmem:[%s6 + $0x8] sm:$0xff]
        %v954 = vld [vmem:[%s6 + $0x10] sm:$0xff]
        %v955 = vld [vmem:[%s6 + $0x18] sm:$0xff]
        %v956 = vld [vmem:[%s7] sm:$0x1]
        %v958 = vperm.slane %v956, 0
        %v961 = vsel %vm407, %v936, 0
        %v964 = vsel %vm407, %v937, 0
        %v967 = vsel %vm407, %v938, 0
        %v970 = vsel %vm407, %v939, 0
        %v973 = vsel %vm407, %v940, 0
        %v976 = vsel %vm407, %v941, 0
        %v979 = vsel %vm407, %v942, 0
        %v982 = vsel %vm407, %v943, 0
        %v985 = vsel %vm407, %v944, 0
        %v988 = vsel %vm407, %v945, 0
        %v991 = vsel %vm407, %v946, 0
        %v994 = vsel %vm407, %v947, 0
        %v997 = vsel %vm407, %v948, 0
        %v1000 = vsel %vm407, %v949, 0
        %v1003 = vsel %vm407, %v950, 0
        %v1006 = vsel %vm407, %v951, 0
        %1008 = vmatpush.msra.mxu0 0.0
        %1009 = vmatpush.msra.mxu0 0.0
        %1010 = vmatpush.msra.mxu0 0.0
        %1011 = vmatpush.msra.mxu0 0.0
        %1012 = vmatpush.msra.mxu0 0.0
        %1013 = vmatpush.msra.mxu0 0.0
        %1014 = vmatpush.msra.mxu0 0.0
        %1015 = vmatpush.msra.mxu0 0.0
        %1016 = vmatpush.msra.mxu0 0.0
        %1017 = vmatpush.msra.mxu0 0.0
        %1018 = vmatpush.msra.mxu0 0.0
        %1019 = vmatpush.msra.mxu0 0.0
        %1020 = vmatpush.msra.mxu0 %v955
        %1021 = vmatpush.msra.mxu0 %v954
        %1022 = vmatpush.msra.mxu0 %v953
        %1023 = vmatpush.msra.mxu0 %v952
        %1024 = vmatmul.f32.gmra.mxu0 %v961
        %v1025 = vpop.f32.mrf.mxu0
        %v1026 = vadd.f32 %v958, %v1025
        %1027 = vmatmul.f32.gmra.mxu0 %v964
        %v1028 = vpop.f32.mrf.mxu0
        %v1029 = vadd.f32 %v958, %v1028
        %1030 = vmatmul.f32.gmra.mxu0 %v967
        %v1031 = vpop.f32.mrf.mxu0
        %v1032 = vadd.f32 %v958, %v1031
        %1033 = vmatmul.f32.gmra.mxu0 %v970
        %v1034 = vpop.f32.mrf.mxu0
        %v1035 = vadd.f32 %v958, %v1034
        %1036 = vmatmul.f32.gmra.mxu0 %v973
        %v1037 = vpop.f32.mrf.mxu0
        %v1038 = vadd.f32 %v958, %v1037
        %1039 = vmatmul.f32.gmra.mxu0 %v976
        %v1040 = vpop.f32.mrf.mxu0
        %v1041 = vadd.f32 %v958, %v1040
        %1042 = vmatmul.f32.gmra.mxu0 %v979
        %v1043 = vpop.f32.mrf.mxu0
        %v1044 = vadd.f32 %v958, %v1043
        %1045 = vmatmul.f32.gmra.mxu0 %v982
        %v1046 = vpop.f32.mrf.mxu0
        %v1047 = vadd.f32 %v958, %v1046
        %1048 = vmatmul.f32.gmra.mxu0 %v985
        %v1049 = vpop.f32.mrf.mxu0
        %v1050 = vadd.f32 %v958, %v1049
        %1051 = vmatmul.f32.gmra.mxu0 %v988
        %v1052 = vpop.f32.mrf.mxu0
        %v1053 = vadd.f32 %v958, %v1052
        %1054 = vmatmul.f32.gmra.mxu0 %v991
        %v1055 = vpop.f32.mrf.mxu0
        %v1056 = vadd.f32 %v958, %v1055
        %1057 = vmatmul.f32.gmra.mxu0 %v994
        %v1058 = vpop.f32.mrf.mxu0
        %v1059 = vadd.f32 %v958, %v1058
        %1060 = vmatmul.f32.gmra.mxu0 %v997
        %v1061 = vpop.f32.mrf.mxu0
        %v1062 = vadd.f32 %v958, %v1061
        %1063 = vmatmul.f32.gmra.mxu0 %v1000
        %v1064 = vpop.f32.mrf.mxu0
        %v1065 = vadd.f32 %v958, %v1064
        %1066 = vmatmul.f32.gmra.mxu0 %v1003
        %v1067 = vpop.f32.mrf.mxu0
        %v1068 = vadd.f32 %v958, %v1067
        %1069 = vmatmul.f32.gmra.mxu0 %v1006
        %v1070 = vpop.f32.mrf.mxu0
        %v1071 = vadd.f32 %v958, %v1070
        %1072 = vdwg.mxu0
        %v1073 = vmax.f32 %v1026, 0.0
        %v1074 = vmax.f32 %v1029, 0.0
        %v1075 = vmax.f32 %v1032, 0.0
        %v1076 = vmax.f32 %v1035, 0.0
        %v1077 = vmax.f32 %v1038, 0.0
        %v1078 = vmax.f32 %v1041, 0.0
        %v1079 = vmax.f32 %v1044, 0.0
        %v1080 = vmax.f32 %v1047, 0.0
        %v1081 = vmax.f32 %v1050, 0.0
        %v1082 = vmax.f32 %v1053, 0.0
        %v1083 = vmax.f32 %v1056, 0.0
        %v1084 = vmax.f32 %v1059, 0.0
        %v1085 = vmax.f32 %v1062, 0.0
        %v1086 = vmax.f32 %v1065, 0.0
        %v1087 = vmax.f32 %v1068, 0.0
        %v1088 = vmax.f32 %v1071, 0.0
        %v1089 = vld [vmem:[%s8] sm:$0xff]
        %v1090 = vld [vmem:[%s8 + $0x8] sm:$0xff]
        %v1091 = vld [vmem:[%s8 + $0x10] sm:$0xff]
        %v1092 = vld [vmem:[%s8 + $0x18] sm:$0xff]
        %v1093 = vld [vmem:[%s8 + $0x20] sm:$0xff]
        %v1094 = vld [vmem:[%s8 + $0x28] sm:$0xff]
        %v1095 = vld [vmem:[%s8 + $0x30] sm:$0xff]
        %v1096 = vld [vmem:[%s8 + $0x38] sm:$0xff]
        %v1097 = vld [vmem:[%s8 + $0x40] sm:$0xff]
        %v1098 = vld [vmem:[%s8 + $0x48] sm:$0xff]
        %v1099 = vld [vmem:[%s8 + $0x50] sm:$0xff]
        %v1100 = vld [vmem:[%s8 + $0x58] sm:$0xff]
        %v1101 = vld [vmem:[%s8 + $0x60] sm:$0xff]
        %v1102 = vld [vmem:[%s8 + $0x68] sm:$0xff]
        %v1103 = vld [vmem:[%s8 + $0x70] sm:$0xff]
        %v1104 = vld [vmem:[%s8 + $0x78] sm:$0xff]
        %v1105 = vld [vmem:[%s9] sm:$0x1]
        %v1107 = vperm.slane %v1105, 0
        %1109 = vmatpush.msra.mxu0 %v1104
        %1110 = vmatpush.msra.mxu0 %v1103
        %1111 = vmatpush.msra.mxu0 %v1102
        %1112 = vmatpush.msra.mxu0 %v1101
        %1113 = vmatpush.msra.mxu0 %v1100
        %1114 = vmatpush.msra.mxu0 %v1099
        %1115 = vmatpush.msra.mxu0 %v1098
        %1116 = vmatpush.msra.mxu0 %v1097
        %1117 = vmatpush.msra.mxu0 %v1096
        %1118 = vmatpush.msra.mxu0 %v1095
        %1119 = vmatpush.msra.mxu0 %v1094
        %1120 = vmatpush.msra.mxu0 %v1093
        %1121 = vmatpush.msra.mxu0 %v1092
        %1122 = vmatpush.msra.mxu0 %v1091
        %1123 = vmatpush.msra.mxu0 %v1090
        %1124 = vmatpush.msra.mxu0 %v1089
        %1125 = vmatmul.f32.gmra.mxu0 %v1073
        %v1126 = vpop.f32.mrf.mxu0
        %v1127 = vadd.f32 %v1107, %v1126
        %1128 = vmatmul.f32.gmra.mxu0 %v1074
        %v1129 = vpop.f32.mrf.mxu0
        %v1130 = vadd.f32 %v1107, %v1129
        %1131 = vmatmul.f32.gmra.mxu0 %v1075
        %v1132 = vpop.f32.mrf.mxu0
        %v1133 = vadd.f32 %v1107, %v1132
        %1134 = vmatmul.f32.gmra.mxu0 %v1076
        %v1135 = vpop.f32.mrf.mxu0
        %v1136 = vadd.f32 %v1107, %v1135
        %1137 = vmatmul.f32.gmra.mxu0 %v1077
        %v1138 = vpop.f32.mrf.mxu0
        %v1139 = vadd.f32 %v1107, %v1138
        %1140 = vmatmul.f32.gmra.mxu0 %v1078
        %v1141 = vpop.f32.mrf.mxu0
        %v1142 = vadd.f32 %v1107, %v1141
        %1143 = vmatmul.f32.gmra.mxu0 %v1079
        %v1144 = vpop.f32.mrf.mxu0
        %v1145 = vadd.f32 %v1107, %v1144
        %1146 = vmatmul.f32.gmra.mxu0 %v1080
        %v1147 = vpop.f32.mrf.mxu0
        %v1148 = vadd.f32 %v1107, %v1147
        %1149 = vmatmul.f32.gmra.mxu0 %v1081
        %v1150 = vpop.f32.mrf.mxu0
        %v1151 = vadd.f32 %v1107, %v1150
        %1152 = vmatmul.f32.gmra.mxu0 %v1082
        %v1153 = vpop.f32.mrf.mxu0
        %v1154 = vadd.f32 %v1107, %v1153
        %1155 = vmatmul.f32.gmra.mxu0 %v1083
        %v1156 = vpop.f32.mrf.mxu0
        %v1157 = vadd.f32 %v1107, %v1156
        %1158 = vmatmul.f32.gmra.mxu0 %v1084
        %v1159 = vpop.f32.mrf.mxu0
        %v1160 = vadd.f32 %v1107, %v1159
        %1161 = vmatmul.f32.gmra.mxu0 %v1085
        %v1162 = vpop.f32.mrf.mxu0
        %v1163 = vadd.f32 %v1107, %v1162
        %1164 = vmatmul.f32.gmra.mxu0 %v1086
        %v1165 = vpop.f32.mrf.mxu0
        %v1166 = vadd.f32 %v1107, %v1165
        %1167 = vmatmul.f32.gmra.mxu0 %v1087
        %v1168 = vpop.f32.mrf.mxu0
        %v1169 = vadd.f32 %v1107, %v1168
        %1170 = vmatmul.f32.gmra.mxu0 %v1088
        %v1171 = vpop.f32.mrf.mxu0
        %v1172 = vadd.f32 %v1107, %v1171
        %1173 = vdwg.mxu0
        %v1174 = vadd.f32 %v936, %v1127
        %v1175 = vadd.f32 %v937, %v1130
        %v1176 = vadd.f32 %v938, %v1133
        %v1177 = vadd.f32 %v939, %v1136
        %v1178 = vadd.f32 %v940, %v1139
        %v1179 = vadd.f32 %v941, %v1142
        %v1180 = vadd.f32 %v942, %v1145
        %v1181 = vadd.f32 %v943, %v1148
        %v1182 = vadd.f32 %v944, %v1151
        %v1183 = vadd.f32 %v945, %v1154
        %v1184 = vadd.f32 %v946, %v1157
        %v1185 = vadd.f32 %v947, %v1160
        %v1186 = vadd.f32 %v948, %v1163
        %v1187 = vadd.f32 %v949, %v1166
        %v1188 = vadd.f32 %v950, %v1169
        %v1189 = vadd.f32 %v951, %v1172
        %1190 = vst.msk [vmem:[%s369] sm:$0xff] %vm407, %v1174
        %1191 = vst.msk [vmem:[%s369 + $0x8] sm:$0xff] %vm407, %v1175
        %1192 = vst.msk [vmem:[%s369 + $0x10] sm:$0xff] %vm407, %v1176
        %1193 = vst.msk [vmem:[%s369 + $0x18] sm:$0xff] %vm407, %v1177
        %1194 = vst.msk [vmem:[%s369 + $0x20] sm:$0xff] %vm407, %v1178
        %1195 = vst.msk [vmem:[%s369 + $0x28] sm:$0xff] %vm407, %v1179
        %1196 = vst.msk [vmem:[%s369 + $0x30] sm:$0xff] %vm407, %v1180
        %1197 = vst.msk [vmem:[%s369 + $0x38] sm:$0xff] %vm407, %v1181
        %1198 = vst.msk [vmem:[%s369 + $0x40] sm:$0xff] %vm407, %v1182
        %1199 = vst.msk [vmem:[%s369 + $0x48] sm:$0xff] %vm407, %v1183
        %1200 = vst.msk [vmem:[%s369 + $0x50] sm:$0xff] %vm407, %v1184
        %1201 = vst.msk [vmem:[%s369 + $0x58] sm:$0xff] %vm407, %v1185
        %1202 = vst.msk [vmem:[%s369 + $0x60] sm:$0xff] %vm407, %v1186
        %1203 = vst.msk [vmem:[%s369 + $0x68] sm:$0xff] %vm407, %v1187
        %1204 = vst.msk [vmem:[%s369 + $0x70] sm:$0xff] %vm407, %v1188
        %1205 = vst.msk [vmem:[%s369 + $0x78] sm:$0xff] %vm407, %v1189
        %s1206 = sand.u32 %s252, 1
        %s1207 = scalar_lea.sflag [#allocation3], %s1206
        %s1208 = sand.u32 %s252, 1
        %s1209 = smul.addr %s1208, 128
        %s1210 = scalar_lea.vmem [#allocation2], %s1209
        // Predicated region
        $region61: #{stgnn_layer_pallas.9} parent=59 // pred_check
          %p1211 = pneg %p262
        $region62: #{stgnn_layer_pallas.9} parent=59 // pred_check_branch
          %1213 = sbr.rel (%p1211) target = $region64
        $region63: #{stgnn_layer_pallas.9} parent=59 // pred_region
          %s1214 = smul.u32 16, %s24
          %1216 = vsyncadd %s1207, 0
          %s1217 = smul.addr %s1214, 8
          %s1218 = scalar_lea.hbm %s10, %s1217
          %s1219 = sshll.u32 %s1210, 4
          %s1220 = int_to_ptr.vmem [resolvable:$true] %s1219
          %s1221 = sshll.u32 %s1218, 4
          %s1222 = int_to_ptr.hbm [resolvable:$true] %s1221
          %1227 = dma.vmem_to_hbm [thread:$0]  %s1220, 2048, %s1222, %s1207, 128, 128, 8
        $region64: #{stgnn_layer_pallas.9} parent=59 // pred_fallthru
          _
      $region60: #{stgnn_layer_pallas.9} parent=5 // pred_fallthru
        _
      %p1228 = scmp.le.s32.totalorder 2, %s19
      // Predicated region
      $region65: #{stgnn_layer_pallas.9} parent=5 // pred_check
        %p1229 = pneg %p1228
      $region66: #{stgnn_layer_pallas.9} parent=5 // pred_check_branch
        %1231 = sbr.rel (%p1229) target = $region68
      $region67: #{stgnn_layer_pallas.9} parent=5 // pred_region
        %s1232 = ssub.s32 %s19, 2
        // Predicated region
        $region69: #{stgnn_layer_pallas.9} parent=67 // pred_check
          %p1233 = pneg %p268
        $region70: #{stgnn_layer_pallas.9} parent=67 // pred_check_branch
          %1235 = sbr.rel (%p1233) target = $region72
        $region71: #{stgnn_layer_pallas.9} parent=67 // pred_region
          %s1236 = sand.u32 %s253, 1
          %s1237 = scalar_lea.sflag [#allocation3], %s1236
          %s1238 = sand.u32 %s253, 1
          %s1239 = smul.addr %s1238, 128
          %s1240 = scalar_lea.vmem [#allocation2], %s1239
          %1242 = dma.done %s1237, 2048
        $region72: #{stgnn_layer_pallas.9} parent=67 // pred_fallthru
          _
      $region68: #{stgnn_layer_pallas.9} parent=5 // pred_fallthru
        _
    $region6: #{stgnn_layer_pallas.9} parent=1 // loop_footer
      %s23 = sadd.s32 1, %s19
    $region7: #{stgnn_layer_pallas.9} parent=1 // loop_footer_branch
      %18 = sbr.rel target = $region3
    $region8: #{stgnn_layer_pallas.9} parent=1 // loop_exit
      _
    %1243 = vsyncpa [#allocation3], 1
    %s1244 = scalar_lea.sflag [#allocation3], 1
    %1245 = vsyncpa %s1244, 1

// kernel: stgnn_layer_pallas.8
$region0: #{stgnn_layer_pallas.8}
  #allocation0 [shape = 'u32[]', space=smem, size = 0x4, offset = 0x4, fixed_abs, tag = 'smem constant byte address 0x4 - core index']
  #allocation1 [shape = 'u32[72,128]{1,0:T(1,128)}', space=vmem, size = 0x9000, scoped, tag = 'internal scratch']
  %s0 = inlined_call_operand.vmem [shape: f32[32,8,96], index: 0, kind: input, shape index: {}]
  %s1 = inlined_call_operand.vmem [shape: f32[32,8,32], index: 1, kind: output, shape index: {}]
  %s2 = sld [smem:[#allocation0]]
  $region37: #{stgnn_layer_pallas.8} parent=0
    _
  %s4 = ssub.s32 1, %s2
  %s5 = scalar_select 0, %s4, %s2
  loop: start=0, step=1, limit=4
  $region2: #{stgnn_layer_pallas.8} parent=0 // loop_pre_header
    _
  $region3: #{stgnn_layer_pallas.8} parent=0 // loop_header
    %s7 = sphi 0, %s11
    %p8 = scmp.ge.s32.totalorder %s7, 4
    %s17 = sphi 0, %s19
    %s20 = sphi 0, %s17
    %s21 = sphi 0, %s20
    %s37 = sphi 0, %s21
    %s43 = sphi 0, %s45
    %s46 = sphi 0, %s43
    %s47 = sphi 0, %s46
    %s63 = sphi 0, %s47
  $region4: #{stgnn_layer_pallas.8} parent=0 // loop_header_branch
    %10 = sbr.rel (%p8) target = $region8
  $region5: #{stgnn_layer_pallas.8} parent=0 // loop_body
    %s12 = ssub.s32 %s7, 1
    %s13 = ssub.s32 %s7, 2
    %s14 = sadd.s32 %s7, 1
    %s15 = ssub.s32 %s7, %s14
    %p16 = scmp.eq.s32.totalorder %s15, 0
    %s18 = sadd.s32 %s17, 1
    %s19 = scalar_select %p16, %s17, %s18
    %p22 = pneg %p16
    %p23 = scmp.eq.s32.totalorder %s7, 1
    %p24 = por %p22, %p23
    %p25 = scmp.ne.s32.totalorder %s17, %s20
    %p26 = scmp.eq.s32.totalorder %s7, 0
    %p27 = por %p25, %p26
    %p28 = scmp.ne.s32.totalorder %s17, %s20
    %p29 = scmp.eq.s32.totalorder %s12, 1
    %p30 = por %p28, %p29
    %p31 = scmp.ne.s32.totalorder %s20, %s21
    %p32 = scmp.eq.s32.totalorder %s12, 0
    %p33 = por %p31, %p32
    %p34 = scmp.ne.s32.totalorder %s20, %s21
    %p35 = scmp.eq.s32.totalorder %s13, 1
    %p36 = por %p34, %p35
    %p38 = scmp.ne.s32.totalorder %s21, %s37
    %p39 = scmp.eq.s32.totalorder %s13, 0
    %p40 = por %p38, %p39
    %s41 = ssub.s32 %s7, %s14
    %p42 = scmp.eq.s32.totalorder %s41, 0
    %s44 = sadd.s32 %s43, 1
    %s45 = scalar_select %p42, %s43, %s44
    %p48 = pneg %p42
    %p49 = scmp.eq.s32.totalorder %s7, 1
    %p50 = por %p48, %p49
    %p51 = scmp.ne.s32.totalorder %s43, %s46
    %p52 = scmp.eq.s32.totalorder %s7, 0
    %p53 = por %p51, %p52
    %p54 = scmp.ne.s32.totalorder %s43, %s46
    %p55 = scmp.eq.s32.totalorder %s12, 1
    %p56 = por %p54, %p55
    %p57 = scmp.ne.s32.totalorder %s46, %s47
    %p58 = scmp.eq.s32.totalorder %s12, 0
    %p59 = por %p57, %p58
    %p60 = scmp.ne.s32.totalorder %s46, %s47
    %p61 = scmp.eq.s32.totalorder %s13, 1
    %p62 = por %p60, %p61
    %p64 = scmp.ne.s32.totalorder %s47, %s63
    %p65 = scmp.eq.s32.totalorder %s13, 0
    %p66 = por %p64, %p65
    %p67 = scmp.le.s32.totalorder 1, %s7
    %p68 = scmp.lt.s32.totalorder %s7, 3
    %p69 = pnand %p67, %p68
    %p70 = pneg %p69
    // Predicated region
    $region9: #{stgnn_layer_pallas.8} parent=5 // pred_check
      _
    $region10: #{stgnn_layer_pallas.8} parent=5 // pred_check_branch
      %72 = sbr.rel (%p69) target = $region12
    $region11: #{stgnn_layer_pallas.8} parent=5 // pred_region
      %s73 = ssub.s32 %s7, 1
    $region12: #{stgnn_layer_pallas.8} parent=5 // pred_fallthru
      _
    %p74 = scmp.lt.s32.totalorder %s7, 2
    // Predicated region
    $region13: #{stgnn_layer_pallas.8} parent=5 // pred_check
      %p75 = pneg %p74
    $region14: #{stgnn_layer_pallas.8} parent=5 // pred_check_branch
      %77 = sbr.rel (%p75) target = $region16
    $region15: #{stgnn_layer_pallas.8} parent=5 // pred_region
      // Predicated region
      $region17: #{stgnn_layer_pallas.8} parent=15 // pred_check
        %p78 = pneg %p27
      $region18: #{stgnn_layer_pallas.8} parent=15 // pred_check_branch
        %80 = sbr.rel (%p78) target = $region20
      $region19: #{stgnn_layer_pallas.8} parent=15 // pred_region
        %s81 = smul.u32 16, %s7
        %p82 = scmp.lt.s32.totalorder %s81, 31
        %s83 = scalar_select %p82, %s81, 31
        %s84 = smul.addr %s83, 8
        %s85 = scalar_lea.vmem %s0, %s84
        %s86 = smul.u32 16, %s7
      $region20: #{stgnn_layer_pallas.8} parent=15 // pred_fallthru
        _
    $region16: #{stgnn_layer_pallas.8} parent=5 // pred_fallthru
      _
    %p87 = scmp.le.s32.totalorder 1, %s7
    %p88 = scmp.lt.s32.totalorder %s7, 3
    %p89 = pnand %p87, %p88
    %p90 = pneg %p89
    // Predicated region
    $region21: #{stgnn_layer_pallas.8} parent=5 // pred_check
      _
    $region22: #{stgnn_layer_pallas.8} parent=5 // pred_check_branch
      %92 = sbr.rel (%p89) target = $region24
    $region23: #{stgnn_layer_pallas.8} parent=5 // pred_region
      %s93 = ssub.s32 %s7, 1
      %s94 = smul.u32 16, %s12
      %p95 = scmp.lt.s32.totalorder %s94, 31
      %s96 = scalar_select %p95, %s94, 31
      %s97 = smul.addr %s96, 8
      %s98 = scalar_lea.vmem %s0, %s97
      %p99 = pneg %p33
      %p100 = pneg %p30
      %p101 = pneg %p59
      %p102 = pneg %p56
      %s103 = smul.u32 16, %s12
      %p104 = scmp.lt.s32.totalorder %s103, 31
      %s105 = scalar_select %p104, %s103, 31
      %s106 = smul.addr %s105, 8
      %s107 = scalar_lea.vmem %s1, %s106
      %s108 = smul.u32 16, %s12
      %p109 = scmp.lt.s32.totalorder %s108, 31
      %s110 = scalar_select %p109, %s108, 31
      %s111 = smul.addr %s110, 8
      %s112 = scalar_lea.vmem %s0, %s111
      %s113 = smul.u32 16, %s12
      %s114 = smul.u32 16, %s12
      %p115 = scmp.lt.s32.totalorder %s114, 31
      %s116 = scalar_select %p115, %s114, 31
      %s117 = smul.addr %s116, 8
      %s118 = scalar_lea.vmem %s1, %s117
      %s119 = smul.u32 16, %s12
      %v120 = vld [vmem:[%s112] sm:$0xff]
      %v121 = vld [vmem:[%s112 + $0x8] sm:$0xff]
      %v122 = vld [vmem:[%s112 + $0x10] sm:$0xff]
      %v123 = vld [vmem:[%s112 + $0x18] sm:$0xff]
      %v124 = vld [vmem:[%s112 + $0x20] sm:$0xff]
      %v125 = vld [vmem:[%s112 + $0x28] sm:$0xff]
      %v126 = vld [vmem:[%s112 + $0x30] sm:$0xff]
      %v127 = vld [vmem:[%s112 + $0x38] sm:$0xff]
      %v128 = vld [vmem:[%s112 + $0x40] sm:$0xff]
      %v129 = vld [vmem:[%s112 + $0x48] sm:$0xff]
      %v130 = vld [vmem:[%s112 + $0x50] sm:$0xff]
      %v131 = vld [vmem:[%s112 + $0x58] sm:$0xff]
      %v132 = vld [vmem:[%s112 + $0x60] sm:$0xff]
      %v133 = vld [vmem:[%s112 + $0x68] sm:$0xff]
      %v134 = vld [vmem:[%s112 + $0x70] sm:$0xff]
      %v135 = vld [vmem:[%s112 + $0x78] sm:$0xff]
      %137 = vrot.lane.b32.xlu0 %v120, 96
      %v138 = vpop.permute.xlu0 %137
      %vm139 = vcmask 64512
      %v140 = vsel %vm139, %v120, 0
      %v142 = vsel %vm139, %v138, 0
      %144 = vmatpush.xpose.msra.mxu0 0.0
      %145 = vmatpush.xpose.msra.mxu0 0.0
      %146 = vmatpush.xpose.msra.mxu0 0.0
      %147 = vmatpush.xpose.msra.mxu0 0.0
      %148 = vmatpush.xpose.msra.mxu0 0.0
      %149 = vmatpush.xpose.msra.mxu0 0.0
      %150 = vmatpush.xpose.msra.mxu0 0.0
      %151 = vmatpush.xpose.msra.mxu0 0.0
      %152 = vmatpush.xpose.msra.mxu0 0.0
      %153 = vmatpush.xpose.msra.mxu0 0.0
      %154 = vmatpush.xpose.msra.mxu0 0.0
      %155 = vmatpush.xpose.msra.mxu0 0.0
      %156 = vmatpush.xpose.msra.mxu0 0.0
      %157 = vmatpush.xpose.msra.mxu0 0.0
      %158 = vmatpush.xpose.msra.mxu0 0.0
      %159 = vmatpush.xpose.msra.mxu0 %v142
      %160 = vmatmul.f32.gmra.mxu0 %v140
      %v161 = vpop.f32.mrf.mxu0
      %v162 = vadd.f32 0.0, %v161
      %163 = vdwg.mxu0
      %165 = vrot.lane.b32.xlu0 %v121, 96
      %v166 = vpop.permute.xlu0 %165
      %v167 = vsel %vm139, %v121, 0
      %v169 = vsel %vm139, %v166, 0
      %171 = vmatpush.xpose.msra.mxu0 0.0
      %172 = vmatpush.xpose.msra.mxu0 0.0
      %173 = vmatpush.xpose.msra.mxu0 0.0
      %174 = vmatpush.xpose.msra.mxu0 0.0
      %175 = vmatpush.xpose.msra.mxu0 0.0
      %176 = vmatpush.xpose.msra.mxu0 0.0
      %177 = vmatpush.xpose.msra.mxu0 0.0
      %178 = vmatpush.xpose.msra.mxu0 0.0
      %179 = vmatpush.xpose.msra.mxu0 0.0
      %180 = vmatpush.xpose.msra.mxu0 0.0
      %181 = vmatpush.xpose.msra.mxu0 0.0
      %182 = vmatpush.xpose.msra.mxu0 0.0
      %183 = vmatpush.xpose.msra.mxu0 0.0
      %184 = vmatpush.xpose.msra.mxu0 0.0
      %185 = vmatpush.xpose.msra.mxu0 0.0
      %186 = vmatpush.xpose.msra.mxu0 %v169
      %187 = vmatmul.f32.gmra.mxu0 %v167
      %v188 = vpop.f32.mrf.mxu0
      %v189 = vadd.f32 0.0, %v188
      %190 = vdwg.mxu0
      %192 = vrot.lane.b32.xlu0 %v122, 96
      %v193 = vpop.permute.xlu0 %192
      %v194 = vsel %vm139, %v122, 0
      %v196 = vsel %vm139, %v193, 0
      %198 = vmatpush.xpose.msra.mxu0 0.0
      %199 = vmatpush.xpose.msra.mxu0 0.0
      %200 = vmatpush.xpose.msra.mxu0 0.0
      %201 = vmatpush.xpose.msra.mxu0 0.0
      %202 = vmatpush.xpose.msra.mxu0 0.0
      %203 = vmatpush.xpose.msra.mxu0 0.0
      %204 = vmatpush.xpose.msra.mxu0 0.0
      %205 = vmatpush.xpose.msra.mxu0 0.0
      %206 = vmatpush.xpose.msra.mxu0 0.0
      %207 = vmatpush.xpose.msra.mxu0 0.0
      %208 = vmatpush.xpose.msra.mxu0 0.0
      %209 = vmatpush.xpose.msra.mxu0 0.0
      %210 = vmatpush.xpose.msra.mxu0 0.0
      %211 = vmatpush.xpose.msra.mxu0 0.0
      %212 = vmatpush.xpose.msra.mxu0 0.0
      %213 = vmatpush.xpose.msra.mxu0 %v196
      %214 = vmatmul.f32.gmra.mxu0 %v194
      %v215 = vpop.f32.mrf.mxu0
      %v216 = vadd.f32 0.0, %v215
      %217 = vdwg.mxu0
      %219 = vrot.lane.b32.xlu0 %v123, 96
      %v220 = vpop.permute.xlu0 %219
      %v221 = vsel %vm139, %v123, 0
      %v223 = vsel %vm139, %v220, 0
      %225 = vmatpush.xpose.msra.mxu0 0.0
      %226 = vmatpush.xpose.msra.mxu0 0.0
      %227 = vmatpush.xpose.msra.mxu0 0.0
      %228 = vmatpush.xpose.msra.mxu0 0.0
      %229 = vmatpush.xpose.msra.mxu0 0.0
      %230 = vmatpush.xpose.msra.mxu0 0.0
      %231 = vmatpush.xpose.msra.mxu0 0.0
      %232 = vmatpush.xpose.msra.mxu0 0.0
      %233 = vmatpush.xpose.msra.mxu0 0.0
      %234 = vmatpush.xpose.msra.mxu0 0.0
      %235 = vmatpush.xpose.msra.mxu0 0.0
      %236 = vmatpush.xpose.msra.mxu0 0.0
      %237 = vmatpush.xpose.msra.mxu0 0.0
      %238 = vmatpush.xpose.msra.mxu0 0.0
      %239 = vmatpush.xpose.msra.mxu0 0.0
      %240 = vmatpush.xpose.msra.mxu0 %v223
      %241 = vmatmul.f32.gmra.mxu0 %v221
      %v242 = vpop.f32.mrf.mxu0
      %v243 = vadd.f32 0.0, %v242
      %244 = vdwg.mxu0
      %246 = vrot.lane.b32.xlu0 %v124, 96
      %v247 = vpop.permute.xlu0 %246
      %v248 = vsel %vm139, %v124, 0
      %v250 = vsel %vm139, %v247, 0
      %252 = vmatpush.xpose.msra.mxu0 0.0
      %253 = vmatpush.xpose.msra.mxu0 0.0
      %254 = vmatpush.xpose.msra.mxu0 0.0
      %255 = vmatpush.xpose.msra.mxu0 0.0
      %256 = vmatpush.xpose.msra.mxu0 0.0
      %257 = vmatpush.xpose.msra.mxu0 0.0
      %258 = vmatpush.xpose.msra.mxu0 0.0
      %259 = vmatpush.xpose.msra.mxu0 0.0
      %260 = vmatpush.xpose.msra.mxu0 0.0
      %261 = vmatpush.xpose.msra.mxu0 0.0
      %262 = vmatpush.xpose.msra.mxu0 0.0
      %263 = vmatpush.xpose.msra.mxu0 0.0
      %264 = vmatpush.xpose.msra.mxu0 0.0
      %265 = vmatpush.xpose.msra.mxu0 0.0
      %266 = vmatpush.xpose.msra.mxu0 0.0
      %267 = vmatpush.xpose.msra.mxu0 %v250
      %268 = vmatmul.f32.gmra.mxu0 %v248
      %v269 = vpop.f32.mrf.mxu0
      %v270 = vadd.f32 0.0, %v269
      %271 = vdwg.mxu0
      %273 = vrot.lane.b32.xlu0 %v125, 96
      %v274 = vpop.permute.xlu0 %273
      %v275 = vsel %vm139, %v125, 0
      %v277 = vsel %vm139, %v274, 0
      %279 = vmatpush.xpose.msra.mxu0 0.0
      %280 = vmatpush.xpose.msra.mxu0 0.0
      %281 = vmatpush.xpose.msra.mxu0 0.0
      %282 = vmatpush.xpose.msra.mxu0 0.0
      %283 = vmatpush.xpose.msra.mxu0 0.0
      %284 = vmatpush.xpose.msra.mxu0 0.0
      %285 = vmatpush.xpose.msra.mxu0 0.0
      %286 = vmatpush.xpose.msra.mxu0 0.0
      %287 = vmatpush.xpose.msra.mxu0 0.0
      %288 = vmatpush.xpose.msra.mxu0 0.0
      %289 = vmatpush.xpose.msra.mxu0 0.0
      %290 = vmatpush.xpose.msra.mxu0 0.0
      %291 = vmatpush.xpose.msra.mxu0 0.0
      %292 = vmatpush.xpose.msra.mxu0 0.0
      %293 = vmatpush.xpose.msra.mxu0 0.0
      %294 = vmatpush.xpose.msra.mxu0 %v277
      %295 = vmatmul.f32.gmra.mxu0 %v275
      %v296 = vpop.f32.mrf.mxu0
      %v297 = vadd.f32 0.0, %v296
      %298 = vdwg.mxu0
      %300 = vrot.lane.b32.xlu0 %v126, 96
      %v301 = vpop.permute.xlu0 %300
      %v302 = vsel %vm139, %v126, 0
      %v304 = vsel %vm139, %v301, 0
      %306 = vmatpush.xpose.msra.mxu0 0.0
      %307 = vmatpush.xpose.msra.mxu0 0.0
      %308 = vmatpush.xpose.msra.mxu0 0.0
      %309 = vmatpush.xpose.msra.mxu0 0.0
      %310 = vmatpush.xpose.msra.mxu0 0.0
      %311 = vmatpush.xpose.msra.mxu0 0.0
      %312 = vmatpush.xpose.msra.mxu0 0.0
      %313 = vmatpush.xpose.msra.mxu0 0.0
      %314 = vmatpush.xpose.msra.mxu0 0.0
      %315 = vmatpush.xpose.msra.mxu0 0.0
      %316 = vmatpush.xpose.msra.mxu0 0.0
      %317 = vmatpush.xpose.msra.mxu0 0.0
      %318 = vmatpush.xpose.msra.mxu0 0.0
      %319 = vmatpush.xpose.msra.mxu0 0.0
      %320 = vmatpush.xpose.msra.mxu0 0.0
      %321 = vmatpush.xpose.msra.mxu0 %v304
      %322 = vmatmul.f32.gmra.mxu0 %v302
      %v323 = vpop.f32.mrf.mxu0
      %v324 = vadd.f32 0.0, %v323
      %325 = vdwg.mxu0
      %327 = vrot.lane.b32.xlu0 %v127, 96
      %v328 = vpop.permute.xlu0 %327
      %v329 = vsel %vm139, %v127, 0
      %v331 = vsel %vm139, %v328, 0
      %333 = vmatpush.xpose.msra.mxu0 0.0
      %334 = vmatpush.xpose.msra.mxu0 0.0
      %335 = vmatpush.xpose.msra.mxu0 0.0
      %336 = vmatpush.xpose.msra.mxu0 0.0
      %337 = vmatpush.xpose.msra.mxu0 0.0
      %338 = vmatpush.xpose.msra.mxu0 0.0
      %339 = vmatpush.xpose.msra.mxu0 0.0
      %340 = vmatpush.xpose.msra.mxu0 0.0
      %341 = vmatpush.xpose.msra.mxu0 0.0
      %342 = vmatpush.xpose.msra.mxu0 0.0
      %343 = vmatpush.xpose.msra.mxu0 0.0
      %344 = vmatpush.xpose.msra.mxu0 0.0
      %345 = vmatpush.xpose.msra.mxu0 0.0
      %346 = vmatpush.xpose.msra.mxu0 0.0
      %347 = vmatpush.xpose.msra.mxu0 0.0
      %348 = vmatpush.xpose.msra.mxu0 %v331
      %349 = vmatmul.f32.gmra.mxu0 %v329
      %v350 = vpop.f32.mrf.mxu0
      %v351 = vadd.f32 0.0, %v350
      %352 = vdwg.mxu0
      %354 = vrot.lane.b32.xlu0 %v128, 96
      %v355 = vpop.permute.xlu0 %354
      %v356 = vsel %vm139, %v128, 0
      %v358 = vsel %vm139, %v355, 0
      %360 = vmatpush.xpose.msra.mxu0 0.0
      %361 = vmatpush.xpose.msra.mxu0 0.0
      %362 = vmatpush.xpose.msra.mxu0 0.0
      %363 = vmatpush.xpose.msra.mxu0 0.0
      %364 = vmatpush.xpose.msra.mxu0 0.0
      %365 = vmatpush.xpose.msra.mxu0 0.0
      %366 = vmatpush.xpose.msra.mxu0 0.0
      %367 = vmatpush.xpose.msra.mxu0 0.0
      %368 = vmatpush.xpose.msra.mxu0 0.0
      %369 = vmatpush.xpose.msra.mxu0 0.0
      %370 = vmatpush.xpose.msra.mxu0 0.0
      %371 = vmatpush.xpose.msra.mxu0 0.0
      %372 = vmatpush.xpose.msra.mxu0 0.0
      %373 = vmatpush.xpose.msra.mxu0 0.0
      %374 = vmatpush.xpose.msra.mxu0 0.0
      %375 = vmatpush.xpose.msra.mxu0 %v358
      %376 = vmatmul.f32.gmra.mxu0 %v356
      %v377 = vpop.f32.mrf.mxu0
      %v378 = vadd.f32 0.0, %v377
      %379 = vdwg.mxu0
      %381 = vrot.lane.b32.xlu0 %v129, 96
      %v382 = vpop.permute.xlu0 %381
      %v383 = vsel %vm139, %v129, 0
      %v385 = vsel %vm139, %v382, 0
      %387 = vmatpush.xpose.msra.mxu0 0.0
      %388 = vmatpush.xpose.msra.mxu0 0.0
      %389 = vmatpush.xpose.msra.mxu0 0.0
      %390 = vmatpush.xpose.msra.mxu0 0.0
      %391 = vmatpush.xpose.msra.mxu0 0.0
      %392 = vmatpush.xpose.msra.mxu0 0.0
      %393 = vmatpush.xpose.msra.mxu0 0.0
      %394 = vmatpush.xpose.msra.mxu0 0.0
      %395 = vmatpush.xpose.msra.mxu0 0.0
      %396 = vmatpush.xpose.msra.mxu0 0.0
      %397 = vmatpush.xpose.msra.mxu0 0.0
      %398 = vmatpush.xpose.msra.mxu0 0.0
      %399 = vmatpush.xpose.msra.mxu0 0.0
      %400 = vmatpush.xpose.msra.mxu0 0.0
      %401 = vmatpush.xpose.msra.mxu0 0.0
      %402 = vmatpush.xpose.msra.mxu0 %v385
      %403 = vmatmul.f32.gmra.mxu0 %v383
      %v404 = vpop.f32.mrf.mxu0
      %v405 = vadd.f32 0.0, %v404
      %406 = vdwg.mxu0
      %408 = vrot.lane.b32.xlu0 %v130, 96
      %v409 = vpop.permute.xlu0 %408
      %v410 = vsel %vm139, %v130, 0
      %v412 = vsel %vm139, %v409, 0
      %414 = vmatpush.xpose.msra.mxu0 0.0
      %415 = vmatpush.xpose.msra.mxu0 0.0
      %416 = vmatpush.xpose.msra.mxu0 0.0
      %417 = vmatpush.xpose.msra.mxu0 0.0
      %418 = vmatpush.xpose.msra.mxu0 0.0
      %419 = vmatpush.xpose.msra.mxu0 0.0
      %420 = vmatpush.xpose.msra.mxu0 0.0
      %421 = vmatpush.xpose.msra.mxu0 0.0
      %422 = vmatpush.xpose.msra.mxu0 0.0
      %423 = vmatpush.xpose.msra.mxu0 0.0
      %424 = vmatpush.xpose.msra.mxu0 0.0
      %425 = vmatpush.xpose.msra.mxu0 0.0
      %426 = vmatpush.xpose.msra.mxu0 0.0
      %427 = vmatpush.xpose.msra.mxu0 0.0
      %428 = vmatpush.xpose.msra.mxu0 0.0
      %429 = vmatpush.xpose.msra.mxu0 %v412
      %430 = vmatmul.f32.gmra.mxu0 %v410
      %v431 = vpop.f32.mrf.mxu0
      %v432 = vadd.f32 0.0, %v431
      %433 = vdwg.mxu0
      %435 = vrot.lane.b32.xlu0 %v131, 96
      %v436 = vpop.permute.xlu0 %435
      %v437 = vsel %vm139, %v131, 0
      %v439 = vsel %vm139, %v436, 0
      %441 = vmatpush.xpose.msra.mxu0 0.0
      %442 = vmatpush.xpose.msra.mxu0 0.0
      %443 = vmatpush.xpose.msra.mxu0 0.0
      %444 = vmatpush.xpose.msra.mxu0 0.0
      %445 = vmatpush.xpose.msra.mxu0 0.0
      %446 = vmatpush.xpose.msra.mxu0 0.0
      %447 = vmatpush.xpose.msra.mxu0 0.0
      %448 = vmatpush.xpose.msra.mxu0 0.0
      %449 = vmatpush.xpose.msra.mxu0 0.0
      %450 = vmatpush.xpose.msra.mxu0 0.0
      %451 = vmatpush.xpose.msra.mxu0 0.0
      %452 = vmatpush.xpose.msra.mxu0 0.0
      %453 = vmatpush.xpose.msra.mxu0 0.0
      %454 = vmatpush.xpose.msra.mxu0 0.0
      %455 = vmatpush.xpose.msra.mxu0 0.0
      %456 = vmatpush.xpose.msra.mxu0 %v439
      %457 = vmatmul.f32.gmra.mxu0 %v437
      %v458 = vpop.f32.mrf.mxu0
      %v459 = vadd.f32 0.0, %v458
      %460 = vdwg.mxu0
      %462 = vrot.lane.b32.xlu0 %v132, 96
      %v463 = vpop.permute.xlu0 %462
      %v464 = vsel %vm139, %v132, 0
      %v466 = vsel %vm139, %v463, 0
      %468 = vmatpush.xpose.msra.mxu0 0.0
      %469 = vmatpush.xpose.msra.mxu0 0.0
      %470 = vmatpush.xpose.msra.mxu0 0.0
      %471 = vmatpush.xpose.msra.mxu0 0.0
      %472 = vmatpush.xpose.msra.mxu0 0.0
      %473 = vmatpush.xpose.msra.mxu0 0.0
      %474 = vmatpush.xpose.msra.mxu0 0.0
      %475 = vmatpush.xpose.msra.mxu0 0.0
      %476 = vmatpush.xpose.msra.mxu0 0.0
      %477 = vmatpush.xpose.msra.mxu0 0.0
      %478 = vmatpush.xpose.msra.mxu0 0.0
      %479 = vmatpush.xpose.msra.mxu0 0.0
      %480 = vmatpush.xpose.msra.mxu0 0.0
      %481 = vmatpush.xpose.msra.mxu0 0.0
      %482 = vmatpush.xpose.msra.mxu0 0.0
      %483 = vmatpush.xpose.msra.mxu0 %v466
      %484 = vmatmul.f32.gmra.mxu0 %v464
      %v485 = vpop.f32.mrf.mxu0
      %v486 = vadd.f32 0.0, %v485
      %487 = vdwg.mxu0
      %489 = vrot.lane.b32.xlu0 %v133, 96
      %v490 = vpop.permute.xlu0 %489
      %v491 = vsel %vm139, %v133, 0
      %v493 = vsel %vm139, %v490, 0
      %495 = vmatpush.xpose.msra.mxu0 0.0
      %496 = vmatpush.xpose.msra.mxu0 0.0
      %497 = vmatpush.xpose.msra.mxu0 0.0
      %498 = vmatpush.xpose.msra.mxu0 0.0
      %499 = vmatpush.xpose.msra.mxu0 0.0
      %500 = vmatpush.xpose.msra.mxu0 0.0
      %501 = vmatpush.xpose.msra.mxu0 0.0
      %502 = vmatpush.xpose.msra.mxu0 0.0
      %503 = vmatpush.xpose.msra.mxu0 0.0
      %504 = vmatpush.xpose.msra.mxu0 0.0
      %505 = vmatpush.xpose.msra.mxu0 0.0
      %506 = vmatpush.xpose.msra.mxu0 0.0
      %507 = vmatpush.xpose.msra.mxu0 0.0
      %508 = vmatpush.xpose.msra.mxu0 0.0
      %509 = vmatpush.xpose.msra.mxu0 0.0
      %510 = vmatpush.xpose.msra.mxu0 %v493
      %511 = vmatmul.f32.gmra.mxu0 %v491
      %v512 = vpop.f32.mrf.mxu0
      %v513 = vadd.f32 0.0, %v512
      %514 = vdwg.mxu0
      %516 = vrot.lane.b32.xlu0 %v134, 96
      %v517 = vpop.permute.xlu0 %516
      %v518 = vsel %vm139, %v134, 0
      %v520 = vsel %vm139, %v517, 0
      %522 = vmatpush.xpose.msra.mxu0 0.0
      %523 = vmatpush.xpose.msra.mxu0 0.0
      %524 = vmatpush.xpose.msra.mxu0 0.0
      %525 = vmatpush.xpose.msra.mxu0 0.0
      %526 = vmatpush.xpose.msra.mxu0 0.0
      %527 = vmatpush.xpose.msra.mxu0 0.0
      %528 = vmatpush.xpose.msra.mxu0 0.0
      %529 = vmatpush.xpose.msra.mxu0 0.0
      %530 = vmatpush.xpose.msra.mxu0 0.0
      %531 = vmatpush.xpose.msra.mxu0 0.0
      %532 = vmatpush.xpose.msra.mxu0 0.0
      %533 = vmatpush.xpose.msra.mxu0 0.0
      %534 = vmatpush.xpose.msra.mxu0 0.0
      %535 = vmatpush.xpose.msra.mxu0 0.0
      %536 = vmatpush.xpose.msra.mxu0 0.0
      %537 = vmatpush.xpose.msra.mxu0 %v520
      %538 = vmatmul.f32.gmra.mxu0 %v518
      %v539 = vpop.f32.mrf.mxu0
      %v540 = vadd.f32 0.0, %v539
      %541 = vdwg.mxu0
      %543 = vrot.lane.b32.xlu0 %v135, 96
      %v544 = vpop.permute.xlu0 %543
      %v545 = vsel %vm139, %v135, 0
      %v547 = vsel %vm139, %v544, 0
      %549 = vmatpush.xpose.msra.mxu0 0.0
      %550 = vmatpush.xpose.msra.mxu0 0.0
      %551 = vmatpush.xpose.msra.mxu0 0.0
      %552 = vmatpush.xpose.msra.mxu0 0.0
      %553 = vmatpush.xpose.msra.mxu0 0.0
      %554 = vmatpush.xpose.msra.mxu0 0.0
      %555 = vmatpush.xpose.msra.mxu0 0.0
      %556 = vmatpush.xpose.msra.mxu0 0.0
      %557 = vmatpush.xpose.msra.mxu0 0.0
      %558 = vmatpush.xpose.msra.mxu0 0.0
      %559 = vmatpush.xpose.msra.mxu0 0.0
      %560 = vmatpush.xpose.msra.mxu0 0.0
      %561 = vmatpush.xpose.msra.mxu0 0.0
      %562 = vmatpush.xpose.msra.mxu0 0.0
      %563 = vmatpush.xpose.msra.mxu0 0.0
      %564 = vmatpush.xpose.msra.mxu0 %v547
      %565 = vmatmul.f32.gmra.mxu0 %v545
      %v566 = vpop.f32.mrf.mxu0
      %v567 = vadd.f32 0.0, %v566
      %568 = vdwg.mxu0
      %v569 = vmul.f32 %v162, 0.35355338
      %v570 = vmul.f32 %v189, 0.35355338
      %v571 = vmul.f32 %v216, 0.35355338
      %v572 = vmul.f32 %v243, 0.35355338
      %v573 = vmul.f32 %v270, 0.35355338
      %v574 = vmul.f32 %v297, 0.35355338
      %v575 = vmul.f32 %v324, 0.35355338
      %v576 = vmul.f32 %v351, 0.35355338
      %v577 = vmul.f32 %v378, 0.35355338
      %v578 = vmul.f32 %v405, 0.35355338
      %v579 = vmul.f32 %v432, 0.35355338
      %v580 = vmul.f32 %v459, 0.35355338
      %v581 = vmul.f32 %v486, 0.35355338
      %v582 = vmul.f32 %v513, 0.35355338
      %v583 = vmul.f32 %v540, 0.35355338
      %v584 = vmul.f32 %v567, 0.35355338
      %v585 = vsel %vm139, %v569, -inf
      %586 = vmax.xlane.f32.xlu0 %v585
      %v587 = vpop.xlane.xlu0 %586
      %v588 = vsel %vm139, %v570, -inf
      %589 = vmax.xlane.f32.xlu0 %v588
      %v590 = vpop.xlane.xlu0 %589
      %v591 = vsel %vm139, %v571, -inf
      %592 = vmax.xlane.f32.xlu0 %v591
      %v593 = vpop.xlane.xlu0 %592
      %v594 = vsel %vm139, %v572, -inf
      %595 = vmax.xlane.f32.xlu0 %v594
      %v596 = vpop.xlane.xlu0 %595
      %v597 = vsel %vm139, %v573, -inf
      %598 = vmax.xlane.f32.xlu0 %v597
      %v599 = vpop.xlane.xlu0 %598
      %v600 = vsel %vm139, %v574, -inf
      %601 = vmax.xlane.f32.xlu0 %v600
      %v602 = vpop.xlane.xlu0 %601
      %v603 = vsel %vm139, %v575, -inf
      %604 = vmax.xlane.f32.xlu0 %v603
      %v605 = vpop.xlane.xlu0 %604
      %v606 = vsel %vm139, %v576, -inf
      %607 = vmax.xlane.f32.xlu0 %v606
      %v608 = vpop.xlane.xlu0 %607
      %v609 = vsel %vm139, %v577, -inf
      %610 = vmax.xlane.f32.xlu0 %v609
      %v611 = vpop.xlane.xlu0 %610
      %v612 = vsel %vm139, %v578, -inf
      %613 = vmax.xlane.f32.xlu0 %v612
      %v614 = vpop.xlane.xlu0 %613
      %v615 = vsel %vm139, %v579, -inf
      %616 = vmax.xlane.f32.xlu0 %v615
      %v617 = vpop.xlane.xlu0 %616
      %v618 = vsel %vm139, %v580, -inf
      %619 = vmax.xlane.f32.xlu0 %v618
      %v620 = vpop.xlane.xlu0 %619
      %v621 = vsel %vm139, %v581, -inf
      %622 = vmax.xlane.f32.xlu0 %v621
      %v623 = vpop.xlane.xlu0 %622
      %v624 = vsel %vm139, %v582, -inf
      %625 = vmax.xlane.f32.xlu0 %v624
      %v626 = vpop.xlane.xlu0 %625
      %v627 = vsel %vm139, %v583, -inf
      %628 = vmax.xlane.f32.xlu0 %v627
      %v629 = vpop.xlane.xlu0 %628
      %v630 = vsel %vm139, %v584, -inf
      %631 = vmax.xlane.f32.xlu0 %v630
      %v632 = vpop.xlane.xlu0 %631
      %v633 = vsub.f32 %v569, %v587
      %v634 = vsub.f32 %v570, %v590
      %v635 = vsub.f32 %v571, %v593
      %v636 = vsub.f32 %v572, %v596
      %v637 = vsub.f32 %v573, %v599
      %v638 = vsub.f32 %v574, %v602
      %v639 = vsub.f32 %v575, %v605
      %v640 = vsub.f32 %v576, %v608
      %v641 = vsub.f32 %v577, %v611
      %v642 = vsub.f32 %v578, %v614
      %v643 = vsub.f32 %v579, %v617
      %v644 = vsub.f32 %v580, %v620
      %v645 = vsub.f32 %v581, %v623
      %v646 = vsub.f32 %v582, %v626
      %v647 = vsub.f32 %v583, %v629
      %v648 = vsub.f32 %v584, %v632
      %v649 = vmul.f32 %v633, 1.442695
      %v650 = vpow.pop %v649
      %v651 = vmul.f32 %v634, 1.442695
      %v652 = vpow.pop %v651
      %v653 = vmul.f32 %v635, 1.442695
      %v654 = vpow.pop %v653
      %v655 = vmul.f32 %v636, 1.442695
      %v656 = vpow.pop %v655
      %v657 = vmul.f32 %v637, 1.442695
      %v658 = vpow.pop %v657
      %v659 = vmul.f32 %v638, 1.442695
      %v660 = vpow.pop %v659
      %v661 = vmul.f32 %v639, 1.442695
      %v662 = vpow.pop %v661
      %v663 = vmul.f32 %v640, 1.442695
      %v664 = vpow.pop %v663
      %v665 = vmul.f32 %v641, 1.442695
      %v666 = vpow.pop %v665
      %v667 = vmul.f32 %v642, 1.442695
      %v668 = vpow.pop %v667
      %v669 = vmul.f32 %v643, 1.442695
      %v670 = vpow.pop %v669
      %v671 = vmul.f32 %v644, 1.442695
      %v672 = vpow.pop %v671
      %v673 = vmul.f32 %v645, 1.442695
      %v674 = vpow.pop %v673
      %v675 = vmul.f32 %v646, 1.442695
      %v676 = vpow.pop %v675
      %v677 = vmul.f32 %v647, 1.442695
      %v678 = vpow.pop %v677
      %v679 = vmul.f32 %v648, 1.442695
      %v680 = vpow.pop %v679
      %v681 = vsel %vm139, %v650, 0.0
      %682 = vadd.xlane.f32.xlu0 %v681
      %v683 = vpop.xlane.xlu0 %682
      %v684 = vsel %vm139, %v652, 0.0
      %685 = vadd.xlane.f32.xlu0 %v684
      %v686 = vpop.xlane.xlu0 %685
      %v687 = vsel %vm139, %v654, 0.0
      %688 = vadd.xlane.f32.xlu0 %v687
      %v689 = vpop.xlane.xlu0 %688
      %v690 = vsel %vm139, %v656, 0.0
      %691 = vadd.xlane.f32.xlu0 %v690
      %v692 = vpop.xlane.xlu0 %691
      %v693 = vsel %vm139, %v658, 0.0
      %694 = vadd.xlane.f32.xlu0 %v693
      %v695 = vpop.xlane.xlu0 %694
      %v696 = vsel %vm139, %v660, 0.0
      %697 = vadd.xlane.f32.xlu0 %v696
      %v698 = vpop.xlane.xlu0 %697
      %v699 = vsel %vm139, %v662, 0.0
      %700 = vadd.xlane.f32.xlu0 %v699
      %v701 = vpop.xlane.xlu0 %700
      %v702 = vsel %vm139, %v664, 0.0
      %703 = vadd.xlane.f32.xlu0 %v702
      %v704 = vpop.xlane.xlu0 %703
      %v705 = vsel %vm139, %v666, 0.0
      %706 = vadd.xlane.f32.xlu0 %v705
      %v707 = vpop.xlane.xlu0 %706
      %v708 = vsel %vm139, %v668, 0.0
      %709 = vadd.xlane.f32.xlu0 %v708
      %v710 = vpop.xlane.xlu0 %709
      %v711 = vsel %vm139, %v670, 0.0
      %712 = vadd.xlane.f32.xlu0 %v711
      %v713 = vpop.xlane.xlu0 %712
      %v714 = vsel %vm139, %v672, 0.0
      %715 = vadd.xlane.f32.xlu0 %v714
      %v716 = vpop.xlane.xlu0 %715
      %v717 = vsel %vm139, %v674, 0.0
      %718 = vadd.xlane.f32.xlu0 %v717
      %v719 = vpop.xlane.xlu0 %718
      %v720 = vsel %vm139, %v676, 0.0
      %721 = vadd.xlane.f32.xlu0 %v720
      %v722 = vpop.xlane.xlu0 %721
      %v723 = vsel %vm139, %v678, 0.0
      %724 = vadd.xlane.f32.xlu0 %v723
      %v725 = vpop.xlane.xlu0 %724
      %v726 = vsel %vm139, %v680, 0.0
      %727 = vadd.xlane.f32.xlu0 %v726
      %v728 = vpop.xlane.xlu0 %727
      %v729 = vrcp.pop %v683
      %v730 = vrcp.pop %v686
      %v731 = vrcp.pop %v689
      %v732 = vrcp.pop %v692
      %v733 = vrcp.pop %v695
      %v734 = vrcp.pop %v698
      %v735 = vrcp.pop %v701
      %v736 = vrcp.pop %v704
      %v737 = vrcp.pop %v707
      %v738 = vrcp.pop %v710
      %v739 = vrcp.pop %v713
      %v740 = vrcp.pop %v716
      %v741 = vrcp.pop %v719
      %v742 = vrcp.pop %v722
      %v743 = vrcp.pop %v725
      %v744 = vrcp.pop %v728
      %v745 = vmul.f32 %v650, %v729
      %v746 = vmul.f32 %v652, %v730
      %v747 = vmul.f32 %v654, %v731
      %v748 = vmul.f32 %v656, %v732
      %v749 = vmul.f32 %v658, %v733
      %v750 = vmul.f32 %v660, %v734
      %v751 = vmul.f32 %v662, %v735
      %v752 = vmul.f32 %v664, %v736
      %v753 = vmul.f32 %v666, %v737
      %v754 = vmul.f32 %v668, %v738
      %v755 = vmul.f32 %v670, %v739
      %v756 = vmul.f32 %v672, %v740
      %v757 = vmul.f32 %v674, %v741
      %v758 = vmul.f32 %v676, %v742
      %v759 = vmul.f32 %v678, %v743
      %v760 = vmul.f32 %v680, %v744
      %761 = vrot.lane.b32.xlu0 %v120, 64
      %v762 = vpop.permute.xlu0 %761
      %v765 = vsel %vm139, %v745, 0
      %767 = vmatpush.msra.mxu0 0.0
      %768 = vmatpush.msra.mxu0 0.0
      %769 = vmatpush.msra.mxu0 0.0
      %770 = vmatpush.msra.mxu0 0.0
      %771 = vmatpush.msra.mxu0 0.0
      %772 = vmatpush.msra.mxu0 0.0
      %773 = vmatpush.msra.mxu0 0.0
      %774 = vmatpush.msra.mxu0 0.0
      %775 = vmatpush.msra.mxu0 0.0
      %776 = vmatpush.msra.mxu0 0.0
      %777 = vmatpush.msra.mxu0 0.0
      %778 = vmatpush.msra.mxu0 0.0
      %779 = vmatpush.msra.mxu0 0.0
      %780 = vmatpush.msra.mxu0 0.0
      %781 = vmatpush.msra.mxu0 0.0
      %782 = vmatpush.msra.mxu0 %v762
      %783 = vmatmul.f32.gmra.mxu0 %v765
      %v784 = vpop.f32.mrf.mxu0
      %v785 = vadd.f32 0.0, %v784
      %786 = vdwg.mxu0
      %787 = vrot.lane.b32.xlu0 %v121, 64
      %v788 = vpop.permute.xlu0 %787
      %v791 = vsel %vm139, %v746, 0
      %793 = vmatpush.msra.mxu0 0.0
      %794 = vmatpush.msra.mxu0 0.0
      %795 = vmatpush.msra.mxu0 0.0
      %796 = vmatpush.msra.mxu0 0.0
      %797 = vmatpush.msra.mxu0 0.0
      %798 = vmatpush.msra.mxu0 0.0
      %799 = vmatpush.msra.mxu0 0.0
      %800 = vmatpush.msra.mxu0 0.0
      %801 = vmatpush.msra.mxu0 0.0
      %802 = vmatpush.msra.mxu0 0.0
      %803 = vmatpush.msra.mxu0 0.0
      %804 = vmatpush.msra.mxu0 0.0
      %805 = vmatpush.msra.mxu0 0.0
      %806 = vmatpush.msra.mxu0 0.0
      %807 = vmatpush.msra.mxu0 0.0
      %808 = vmatpush.msra.mxu0 %v788
      %809 = vmatmul.f32.gmra.mxu0 %v791
      %v810 = vpop.f32.mrf.mxu0
      %v811 = vadd.f32 0.0, %v810
      %812 = vdwg.mxu0
      %813 = vrot.lane.b32.xlu0 %v122, 64
      %v814 = vpop.permute.xlu0 %813
      %v817 = vsel %vm139, %v747, 0
      %819 = vmatpush.msra.mxu0 0.0
      %820 = vmatpush.msra.mxu0 0.0
      %821 = vmatpush.msra.mxu0 0.0
      %822 = vmatpush.msra.mxu0 0.0
      %823 = vmatpush.msra.mxu0 0.0
      %824 = vmatpush.msra.mxu0 0.0
      %825 = vmatpush.msra.mxu0 0.0
      %826 = vmatpush.msra.mxu0 0.0
      %827 = vmatpush.msra.mxu0 0.0
      %828 = vmatpush.msra.mxu0 0.0
      %829 = vmatpush.msra.mxu0 0.0
      %830 = vmatpush.msra.mxu0 0.0
      %831 = vmatpush.msra.mxu0 0.0
      %832 = vmatpush.msra.mxu0 0.0
      %833 = vmatpush.msra.mxu0 0.0
      %834 = vmatpush.msra.mxu0 %v814
      %835 = vmatmul.f32.gmra.mxu0 %v817
      %v836 = vpop.f32.mrf.mxu0
      %v837 = vadd.f32 0.0, %v836
      %838 = vdwg.mxu0
      %839 = vrot.lane.b32.xlu0 %v123, 64
      %v840 = vpop.permute.xlu0 %839
      %v843 = vsel %vm139, %v748, 0
      %845 = vmatpush.msra.mxu0 0.0
      %846 = vmatpush.msra.mxu0 0.0
      %847 = vmatpush.msra.mxu0 0.0
      %848 = vmatpush.msra.mxu0 0.0
      %849 = vmatpush.msra.mxu0 0.0
      %850 = vmatpush.msra.mxu0 0.0
      %851 = vmatpush.msra.mxu0 0.0
      %852 = vmatpush.msra.mxu0 0.0
      %853 = vmatpush.msra.mxu0 0.0
      %854 = vmatpush.msra.mxu0 0.0
      %855 = vmatpush.msra.mxu0 0.0
      %856 = vmatpush.msra.mxu0 0.0
      %857 = vmatpush.msra.mxu0 0.0
      %858 = vmatpush.msra.mxu0 0.0
      %859 = vmatpush.msra.mxu0 0.0
      %860 = vmatpush.msra.mxu0 %v840
      %861 = vmatmul.f32.gmra.mxu0 %v843
      %v862 = vpop.f32.mrf.mxu0
      %v863 = vadd.f32 0.0, %v862
      %864 = vdwg.mxu0
      %865 = vrot.lane.b32.xlu0 %v124, 64
      %v866 = vpop.permute.xlu0 %865
      %v869 = vsel %vm139, %v749, 0
      %871 = vmatpush.msra.mxu0 0.0
      %872 = vmatpush.msra.mxu0 0.0
      %873 = vmatpush.msra.mxu0 0.0
      %874 = vmatpush.msra.mxu0 0.0
      %875 = vmatpush.msra.mxu0 0.0
      %876 = vmatpush.msra.mxu0 0.0
      %877 = vmatpush.msra.mxu0 0.0
      %878 = vmatpush.msra.mxu0 0.0
      %879 = vmatpush.msra.mxu0 0.0
      %880 = vmatpush.msra.mxu0 0.0
      %881 = vmatpush.msra.mxu0 0.0
      %882 = vmatpush.msra.mxu0 0.0
      %883 = vmatpush.msra.mxu0 0.0
      %884 = vmatpush.msra.mxu0 0.0
      %885 = vmatpush.msra.mxu0 0.0
      %886 = vmatpush.msra.mxu0 %v866
      %887 = vmatmul.f32.gmra.mxu0 %v869
      %v888 = vpop.f32.mrf.mxu0
      %v889 = vadd.f32 0.0, %v888
      %890 = vdwg.mxu0
      %891 = vrot.lane.b32.xlu0 %v125, 64
      %v892 = vpop.permute.xlu0 %891
      %v895 = vsel %vm139, %v750, 0
      %897 = vmatpush.msra.mxu0 0.0
      %898 = vmatpush.msra.mxu0 0.0
      %899 = vmatpush.msra.mxu0 0.0
      %900 = vmatpush.msra.mxu0 0.0
      %901 = vmatpush.msra.mxu0 0.0
      %902 = vmatpush.msra.mxu0 0.0
      %903 = vmatpush.msra.mxu0 0.0
      %904 = vmatpush.msra.mxu0 0.0
      %905 = vmatpush.msra.mxu0 0.0
      %906 = vmatpush.msra.mxu0 0.0
      %907 = vmatpush.msra.mxu0 0.0
      %908 = vmatpush.msra.mxu0 0.0
      %909 = vmatpush.msra.mxu0 0.0
      %910 = vmatpush.msra.mxu0 0.0
      %911 = vmatpush.msra.mxu0 0.0
      %912 = vmatpush.msra.mxu0 %v892
      %913 = vmatmul.f32.gmra.mxu0 %v895
      %v914 = vpop.f32.mrf.mxu0
      %v915 = vadd.f32 0.0, %v914
      %916 = vdwg.mxu0
      %917 = vrot.lane.b32.xlu0 %v126, 64
      %v918 = vpop.permute.xlu0 %917
      %v921 = vsel %vm139, %v751, 0
      %923 = vmatpush.msra.mxu0 0.0
      %924 = vmatpush.msra.mxu0 0.0
      %925 = vmatpush.msra.mxu0 0.0
      %926 = vmatpush.msra.mxu0 0.0
      %927 = vmatpush.msra.mxu0 0.0
      %928 = vmatpush.msra.mxu0 0.0
      %929 = vmatpush.msra.mxu0 0.0
      %930 = vmatpush.msra.mxu0 0.0
      %931 = vmatpush.msra.mxu0 0.0
      %932 = vmatpush.msra.mxu0 0.0
      %933 = vmatpush.msra.mxu0 0.0
      %934 = vmatpush.msra.mxu0 0.0
      %935 = vmatpush.msra.mxu0 0.0
      %936 = vmatpush.msra.mxu0 0.0
      %937 = vmatpush.msra.mxu0 0.0
      %938 = vmatpush.msra.mxu0 %v918
      %939 = vmatmul.f32.gmra.mxu0 %v921
      %v940 = vpop.f32.mrf.mxu0
      %v941 = vadd.f32 0.0, %v940
      %942 = vdwg.mxu0
      %943 = vrot.lane.b32.xlu0 %v127, 64
      %v944 = vpop.permute.xlu0 %943
      %v947 = vsel %vm139, %v752, 0
      %949 = vmatpush.msra.mxu0 0.0
      %950 = vmatpush.msra.mxu0 0.0
      %951 = vmatpush.msra.mxu0 0.0
      %952 = vmatpush.msra.mxu0 0.0
      %953 = vmatpush.msra.mxu0 0.0
      %954 = vmatpush.msra.mxu0 0.0
      %955 = vmatpush.msra.mxu0 0.0
      %956 = vmatpush.msra.mxu0 0.0
      %957 = vmatpush.msra.mxu0 0.0
      %958 = vmatpush.msra.mxu0 0.0
      %959 = vmatpush.msra.mxu0 0.0
      %960 = vmatpush.msra.mxu0 0.0
      %961 = vmatpush.msra.mxu0 0.0
      %962 = vmatpush.msra.mxu0 0.0
      %963 = vmatpush.msra.mxu0 0.0
      %964 = vmatpush.msra.mxu0 %v944
      %965 = vmatmul.f32.gmra.mxu0 %v947
      %v966 = vpop.f32.mrf.mxu0
      %v967 = vadd.f32 0.0, %v966
      %968 = vdwg.mxu0
      %969 = vrot.lane.b32.xlu0 %v128, 64
      %v970 = vpop.permute.xlu0 %969
      %v973 = vsel %vm139, %v753, 0
      %975 = vmatpush.msra.mxu0 0.0
      %976 = vmatpush.msra.mxu0 0.0
      %977 = vmatpush.msra.mxu0 0.0
      %978 = vmatpush.msra.mxu0 0.0
      %979 = vmatpush.msra.mxu0 0.0
      %980 = vmatpush.msra.mxu0 0.0
      %981 = vmatpush.msra.mxu0 0.0
      %982 = vmatpush.msra.mxu0 0.0
      %983 = vmatpush.msra.mxu0 0.0
      %984 = vmatpush.msra.mxu0 0.0
      %985 = vmatpush.msra.mxu0 0.0
      %986 = vmatpush.msra.mxu0 0.0
      %987 = vmatpush.msra.mxu0 0.0
      %988 = vmatpush.msra.mxu0 0.0
      %989 = vmatpush.msra.mxu0 0.0
      %990 = vmatpush.msra.mxu0 %v970
      %991 = vmatmul.f32.gmra.mxu0 %v973
      %v992 = vpop.f32.mrf.mxu0
      %v993 = vadd.f32 0.0, %v992
      %994 = vdwg.mxu0
      %995 = vrot.lane.b32.xlu0 %v129, 64
      %v996 = vpop.permute.xlu0 %995
      %v999 = vsel %vm139, %v754, 0
      %1001 = vmatpush.msra.mxu0 0.0
      %1002 = vmatpush.msra.mxu0 0.0
      %1003 = vmatpush.msra.mxu0 0.0
      %1004 = vmatpush.msra.mxu0 0.0
      %1005 = vmatpush.msra.mxu0 0.0
      %1006 = vmatpush.msra.mxu0 0.0
      %1007 = vmatpush.msra.mxu0 0.0
      %1008 = vmatpush.msra.mxu0 0.0
      %1009 = vmatpush.msra.mxu0 0.0
      %1010 = vmatpush.msra.mxu0 0.0
      %1011 = vmatpush.msra.mxu0 0.0
      %1012 = vmatpush.msra.mxu0 0.0
      %1013 = vmatpush.msra.mxu0 0.0
      %1014 = vmatpush.msra.mxu0 0.0
      %1015 = vmatpush.msra.mxu0 0.0
      %1016 = vmatpush.msra.mxu0 %v996
      %1017 = vmatmul.f32.gmra.mxu0 %v999
      %v1018 = vpop.f32.mrf.mxu0
      %v1019 = vadd.f32 0.0, %v1018
      %1020 = vdwg.mxu0
      %1021 = vrot.lane.b32.xlu0 %v130, 64
      %v1022 = vpop.permute.xlu0 %1021
      %v1025 = vsel %vm139, %v755, 0
      %1027 = vmatpush.msra.mxu0 0.0
      %1028 = vmatpush.msra.mxu0 0.0
      %1029 = vmatpush.msra.mxu0 0.0
      %1030 = vmatpush.msra.mxu0 0.0
      %1031 = vmatpush.msra.mxu0 0.0
      %1032 = vmatpush.msra.mxu0 0.0
      %1033 = vmatpush.msra.mxu0 0.0
      %1034 = vmatpush.msra.mxu0 0.0
      %1035 = vmatpush.msra.mxu0 0.0
      %1036 = vmatpush.msra.mxu0 0.0
      %1037 = vmatpush.msra.mxu0 0.0
      %1038 = vmatpush.msra.mxu0 0.0
      %1039 = vmatpush.msra.mxu0 0.0
      %1040 = vmatpush.msra.mxu0 0.0
      %1041 = vmatpush.msra.mxu0 0.0
      %1042 = vmatpush.msra.mxu0 %v1022
      %1043 = vmatmul.f32.gmra.mxu0 %v1025
      %v1044 = vpop.f32.mrf.mxu0
      %v1045 = vadd.f32 0.0, %v1044
      %1046 = vdwg.mxu0
      %1047 = vrot.lane.b32.xlu0 %v131, 64
      %v1048 = vpop.permute.xlu0 %1047
      %v1051 = vsel %vm139, %v756, 0
      %1053 = vmatpush.msra.mxu0 0.0
      %1054 = vmatpush.msra.mxu0 0.0
      %1055 = vmatpush.msra.mxu0 0.0
      %1056 = vmatpush.msra.mxu0 0.0
      %1057 = vmatpush.msra.mxu0 0.0
      %1058 = vmatpush.msra.mxu0 0.0
      %1059 = vmatpush.msra.mxu0 0.0
      %1060 = vmatpush.msra.mxu0 0.0
      %1061 = vmatpush.msra.mxu0 0.0
      %1062 = vmatpush.msra.mxu0 0.0
      %1063 = vmatpush.msra.mxu0 0.0
      %1064 = vmatpush.msra.mxu0 0.0
      %1065 = vmatpush.msra.mxu0 0.0
      %1066 = vmatpush.msra.mxu0 0.0
      %1067 = vmatpush.msra.mxu0 0.0
      %1068 = vmatpush.msra.mxu0 %v1048
      %1069 = vmatmul.f32.gmra.mxu0 %v1051
      %v1070 = vpop.f32.mrf.mxu0
      %v1071 = vadd.f32 0.0, %v1070
      %1072 = vdwg.mxu0
      %1073 = vrot.lane.b32.xlu0 %v132, 64
      %v1074 = vpop.permute.xlu0 %1073
      %v1077 = vsel %vm139, %v757, 0
      %1079 = vmatpush.msra.mxu0 0.0
      %1080 = vmatpush.msra.mxu0 0.0
      %1081 = vmatpush.msra.mxu0 0.0
      %1082 = vmatpush.msra.mxu0 0.0
      %1083 = vmatpush.msra.mxu0 0.0
      %1084 = vmatpush.msra.mxu0 0.0
      %1085 = vmatpush.msra.mxu0 0.0
      %1086 = vmatpush.msra.mxu0 0.0
      %1087 = vmatpush.msra.mxu0 0.0
      %1088 = vmatpush.msra.mxu0 0.0
      %1089 = vmatpush.msra.mxu0 0.0
      %1090 = vmatpush.msra.mxu0 0.0
      %1091 = vmatpush.msra.mxu0 0.0
      %1092 = vmatpush.msra.mxu0 0.0
      %1093 = vmatpush.msra.mxu0 0.0
      %1094 = vmatpush.msra.mxu0 %v1074
      %1095 = vmatmul.f32.gmra.mxu0 %v1077
      %v1096 = vpop.f32.mrf.mxu0
      %v1097 = vadd.f32 0.0, %v1096
      %1098 = vdwg.mxu0
      %1099 = vrot.lane.b32.xlu0 %v133, 64
      %v1100 = vpop.permute.xlu0 %1099
      %v1103 = vsel %vm139, %v758, 0
      %1105 = vmatpush.msra.mxu0 0.0
      %1106 = vmatpush.msra.mxu0 0.0
      %1107 = vmatpush.msra.mxu0 0.0
      %1108 = vmatpush.msra.mxu0 0.0
      %1109 = vmatpush.msra.mxu0 0.0
      %1110 = vmatpush.msra.mxu0 0.0
      %1111 = vmatpush.msra.mxu0 0.0
      %1112 = vmatpush.msra.mxu0 0.0
      %1113 = vmatpush.msra.mxu0 0.0
      %1114 = vmatpush.msra.mxu0 0.0
      %1115 = vmatpush.msra.mxu0 0.0
      %1116 = vmatpush.msra.mxu0 0.0
      %1117 = vmatpush.msra.mxu0 0.0
      %1118 = vmatpush.msra.mxu0 0.0
      %1119 = vmatpush.msra.mxu0 0.0
      %1120 = vmatpush.msra.mxu0 %v1100
      %1121 = vmatmul.f32.gmra.mxu0 %v1103
      %v1122 = vpop.f32.mrf.mxu0
      %v1123 = vadd.f32 0.0, %v1122
      %1124 = vdwg.mxu0
      %1125 = vrot.lane.b32.xlu0 %v134, 64
      %v1126 = vpop.permute.xlu0 %1125
      %v1129 = vsel %vm139, %v759, 0
      %1131 = vmatpush.msra.mxu0 0.0
      %1132 = vmatpush.msra.mxu0 0.0
      %1133 = vmatpush.msra.mxu0 0.0
      %1134 = vmatpush.msra.mxu0 0.0
      %1135 = vmatpush.msra.mxu0 0.0
      %1136 = vmatpush.msra.mxu0 0.0
      %1137 = vmatpush.msra.mxu0 0.0
      %1138 = vmatpush.msra.mxu0 0.0
      %1139 = vmatpush.msra.mxu0 0.0
      %1140 = vmatpush.msra.mxu0 0.0
      %1141 = vmatpush.msra.mxu0 0.0
      %1142 = vmatpush.msra.mxu0 0.0
      %1143 = vmatpush.msra.mxu0 0.0
      %1144 = vmatpush.msra.mxu0 0.0
      %1145 = vmatpush.msra.mxu0 0.0
      %1146 = vmatpush.msra.mxu0 %v1126
      %1147 = vmatmul.f32.gmra.mxu0 %v1129
      %v1148 = vpop.f32.mrf.mxu0
      %v1149 = vadd.f32 0.0, %v1148
      %1150 = vdwg.mxu0
      %1151 = vrot.lane.b32.xlu0 %v135, 64
      %v1152 = vpop.permute.xlu0 %1151
      %v1155 = vsel %vm139, %v760, 0
      %1157 = vmatpush.msra.mxu0 0.0
      %1158 = vmatpush.msra.mxu0 0.0
      %1159 = vmatpush.msra.mxu0 0.0
      %1160 = vmatpush.msra.mxu0 0.0
      %1161 = vmatpush.msra.mxu0 0.0
      %1162 = vmatpush.msra.mxu0 0.0
      %1163 = vmatpush.msra.mxu0 0.0
      %1164 = vmatpush.msra.mxu0 0.0
      %1165 = vmatpush.msra.mxu0 0.0
      %1166 = vmatpush.msra.mxu0 0.0
      %1167 = vmatpush.msra.mxu0 0.0
      %1168 = vmatpush.msra.mxu0 0.0
      %1169 = vmatpush.msra.mxu0 0.0
      %1170 = vmatpush.msra.mxu0 0.0
      %1171 = vmatpush.msra.mxu0 0.0
      %1172 = vmatpush.msra.mxu0 %v1152
      %1173 = vmatmul.f32.gmra.mxu0 %v1155
      %v1174 = vpop.f32.mrf.mxu0
      %v1175 = vadd.f32 0.0, %v1174
      %1176 = vdwg.mxu0
      %1177 = vst.msk [vmem:[%s118] sm:$0xff] %vm139, %v785
      %1178 = vst.msk [vmem:[%s118 + $0x8] sm:$0xff] %vm139, %v811
      %1179 = vst.msk [vmem:[%s118 + $0x10] sm:$0xff] %vm139, %v837
      %1180 = vst.msk [vmem:[%s118 + $0x18] sm:$0xff] %vm139, %v863
      %1181 = vst.msk [vmem:[%s118 + $0x20] sm:$0xff] %vm139, %v889
      %1182 = vst.msk [vmem:[%s118 + $0x28] sm:$0xff] %vm139, %v915
      %1183 = vst.msk [vmem:[%s118 + $0x30] sm:$0xff] %vm139, %v941
      %1184 = vst.msk [vmem:[%s118 + $0x38] sm:$0xff] %vm139, %v967
      %1185 = vst.msk [vmem:[%s118 + $0x40] sm:$0xff] %vm139, %v993
      %1186 = vst.msk [vmem:[%s118 + $0x48] sm:$0xff] %vm139, %v1019
      %1187 = vst.msk [vmem:[%s118 + $0x50] sm:$0xff] %vm139, %v1045
      %1188 = vst.msk [vmem:[%s118 + $0x58] sm:$0xff] %vm139, %v1071
      %1189 = vst.msk [vmem:[%s118 + $0x60] sm:$0xff] %vm139, %v1097
      %1190 = vst.msk [vmem:[%s118 + $0x68] sm:$0xff] %vm139, %v1123
      %1191 = vst.msk [vmem:[%s118 + $0x70] sm:$0xff] %vm139, %v1149
      %1192 = vst.msk [vmem:[%s118 + $0x78] sm:$0xff] %vm139, %v1175
      %1193 = vrot.lane.b32.xlu0 %v120, 120
      %v1194 = vpop.permute.xlu0 %1193
      %1195 = vrot.lane.b32.xlu0 %v120, 88
      %v1196 = vpop.permute.xlu0 %1195
      %v1197 = vsel %vm139, %v1194, 0
      %v1199 = vsel %vm139, %v1196, 0
      %1201 = vmatpush.xpose.msra.mxu0 0.0
      %1202 = vmatpush.xpose.msra.mxu0 0.0
      %1203 = vmatpush.xpose.msra.mxu0 0.0
      %1204 = vmatpush.xpose.msra.mxu0 0.0
      %1205 = vmatpush.xpose.msra.mxu0 0.0
      %1206 = vmatpush.xpose.msra.mxu0 0.0
      %1207 = vmatpush.xpose.msra.mxu0 0.0
      %1208 = vmatpush.xpose.msra.mxu0 0.0
      %1209 = vmatpush.xpose.msra.mxu0 0.0
      %1210 = vmatpush.xpose.msra.mxu0 0.0
      %1211 = vmatpush.xpose.msra.mxu0 0.0
      %1212 = vmatpush.xpose.msra.mxu0 0.0
      %1213 = vmatpush.xpose.msra.mxu0 0.0
      %1214 = vmatpush.xpose.msra.mxu0 0.0
      %1215 = vmatpush.xpose.msra.mxu0 0.0
      %1216 = vmatpush.xpose.msra.mxu0 %v1199
      %1217 = vmatmul.f32.gmra.mxu0 %v1197
      %v1218 = vpop.f32.mrf.mxu0
      %v1219 = vadd.f32 0.0, %v1218
      %1220 = vdwg.mxu0
      %1221 = vrot.lane.b32.xlu0 %v121, 120
      %v1222 = vpop.permute.xlu0 %1221
      %1223 = vrot.lane.b32.xlu0 %v121, 88
      %v1224 = vpop.permute.xlu0 %1223
      %v1225 = vsel %vm139, %v1222, 0
      %v1227 = vsel %vm139, %v1224, 0
      %1229 = vmatpush.xpose.msra.mxu0 0.0
      %1230 = vmatpush.xpose.msra.mxu0 0.0
      %1231 = vmatpush.xpose.msra.mxu0 0.0
      %1232 = vmatpush.xpose.msra.mxu0 0.0
      %1233 = vmatpush.xpose.msra.mxu0 0.0
      %1234 = vmatpush.xpose.msra.mxu0 0.0
      %1235 = vmatpush.xpose.msra.mxu0 0.0
      %1236 = vmatpush.xpose.msra.mxu0 0.0
      %1237 = vmatpush.xpose.msra.mxu0 0.0
      %1238 = vmatpush.xpose.msra.mxu0 0.0
      %1239 = vmatpush.xpose.msra.mxu0 0.0
      %1240 = vmatpush.xpose.msra.mxu0 0.0
      %1241 = vmatpush.xpose.msra.mxu0 0.0
      %1242 = vmatpush.xpose.msra.mxu0 0.0
      %1243 = vmatpush.xpose.msra.mxu0 0.0
      %1244 = vmatpush.xpose.msra.mxu0 %v1227
      %1245 = vmatmul.f32.gmra.mxu0 %v1225
      %v1246 = vpop.f32.mrf.mxu0
      %v1247 = vadd.f32 0.0, %v1246
      %1248 = vdwg.mxu0
      %1249 = vrot.lane.b32.xlu0 %v122, 120
      %v1250 = vpop.permute.xlu0 %1249
      %1251 = vrot.lane.b32.xlu0 %v122, 88
      %v1252 = vpop.permute.xlu0 %1251
      %v1253 = vsel %vm139, %v1250, 0
      %v1255 = vsel %vm139, %v1252, 0
      %1257 = vmatpush.xpose.msra.mxu0 0.0
      %1258 = vmatpush.xpose.msra.mxu0 0.0
      %1259 = vmatpush.xpose.msra.mxu0 0.0
      %1260 = vmatpush.xpose.msra.mxu0 0.0
      %1261 = vmatpush.xpose.msra.mxu0 0.0
      %1262 = vmatpush.xpose.msra.mxu0 0.0
      %1263 = vmatpush.xpose.msra.mxu0 0.0
      %1264 = vmatpush.xpose.msra.mxu0 0.0
      %1265 = vmatpush.xpose.msra.mxu0 0.0
      %1266 = vmatpush.xpose.msra.mxu0 0.0
      %1267 = vmatpush.xpose.msra.mxu0 0.0
      %1268 = vmatpush.xpose.msra.mxu0 0.0
      %1269 = vmatpush.xpose.msra.mxu0 0.0
      %1270 = vmatpush.xpose.msra.mxu0 0.0
      %1271 = vmatpush.xpose.msra.mxu0 0.0
      %1272 = vmatpush.xpose.msra.mxu0 %v1255
      %1273 = vmatmul.f32.gmra.mxu0 %v1253
      %v1274 = vpop.f32.mrf.mxu0
      %v1275 = vadd.f32 0.0, %v1274
      %1276 = vdwg.mxu0
      %1277 = vrot.lane.b32.xlu0 %v123, 120
      %v1278 = vpop.permute.xlu0 %1277
      %1279 = vrot.lane.b32.xlu0 %v123, 88
      %v1280 = vpop.permute.xlu0 %1279
      %v1281 = vsel %vm139, %v1278, 0
      %v1283 = vsel %vm139, %v1280, 0
      %1285 = vmatpush.xpose.msra.mxu0 0.0
      %1286 = vmatpush.xpose.msra.mxu0 0.0
      %1287 = vmatpush.xpose.msra.mxu0 0.0
      %1288 = vmatpush.xpose.msra.mxu0 0.0
      %1289 = vmatpush.xpose.msra.mxu0 0.0
      %1290 = vmatpush.xpose.msra.mxu0 0.0
      %1291 = vmatpush.xpose.msra.mxu0 0.0
      %1292 = vmatpush.xpose.msra.mxu0 0.0
      %1293 = vmatpush.xpose.msra.mxu0 0.0
      %1294 = vmatpush.xpose.msra.mxu0 0.0
      %1295 = vmatpush.xpose.msra.mxu0 0.0
      %1296 = vmatpush.xpose.msra.mxu0 0.0
      %1297 = vmatpush.xpose.msra.mxu0 0.0
      %1298 = vmatpush.xpose.msra.mxu0 0.0
      %1299 = vmatpush.xpose.msra.mxu0 0.0
      %1300 = vmatpush.xpose.msra.mxu0 %v1283
      %1301 = vmatmul.f32.gmra.mxu0 %v1281
      %v1302 = vpop.f32.mrf.mxu0
      %v1303 = vadd.f32 0.0, %v1302
      %1304 = vdwg.mxu0
      %1305 = vrot.lane.b32.xlu0 %v124, 120
      %v1306 = vpop.permute.xlu0 %1305
      %1307 = vrot.lane.b32.xlu0 %v124, 88
      %v1308 = vpop.permute.xlu0 %1307
      %v1309 = vsel %vm139, %v1306, 0
      %v1311 = vsel %vm139, %v1308, 0
      %1313 = vmatpush.xpose.msra.mxu0 0.0
      %1314 = vmatpush.xpose.msra.mxu0 0.0
      %1315 = vmatpush.xpose.msra.mxu0 0.0
      %1316 = vmatpush.xpose.msra.mxu0 0.0
      %1317 = vmatpush.xpose.msra.mxu0 0.0
      %1318 = vmatpush.xpose.msra.mxu0 0.0
      %1319 = vmatpush.xpose.msra.mxu0 0.0
      %1320 = vmatpush.xpose.msra.mxu0 0.0
      %1321 = vmatpush.xpose.msra.mxu0 0.0
      %1322 = vmatpush.xpose.msra.mxu0 0.0
      %1323 = vmatpush.xpose.msra.mxu0 0.0
      %1324 = vmatpush.xpose.msra.mxu0 0.0
      %1325 = vmatpush.xpose.msra.mxu0 0.0
      %1326 = vmatpush.xpose.msra.mxu0 0.0
      %1327 = vmatpush.xpose.msra.mxu0 0.0
      %1328 = vmatpush.xpose.msra.mxu0 %v1311
      %1329 = vmatmul.f32.gmra.mxu0 %v1309
      %v1330 = vpop.f32.mrf.mxu0
      %v1331 = vadd.f32 0.0, %v1330
      %1332 = vdwg.mxu0
      %1333 = vrot.lane.b32.xlu0 %v125, 120
      %v1334 = vpop.permute.xlu0 %1333
      %1335 = vrot.lane.b32.xlu0 %v125, 88
      %v1336 = vpop.permute.xlu0 %1335
      %v1337 = vsel %vm139, %v1334, 0
      %v1339 = vsel %vm139, %v1336, 0
      %1341 = vmatpush.xpose.msra.mxu0 0.0
      %1342 = vmatpush.xpose.msra.mxu0 0.0
      %1343 = vmatpush.xpose.msra.mxu0 0.0
      %1344 = vmatpush.xpose.msra.mxu0 0.0
      %1345 = vmatpush.xpose.msra.mxu0 0.0
      %1346 = vmatpush.xpose.msra.mxu0 0.0
      %1347 = vmatpush.xpose.msra.mxu0 0.0
      %1348 = vmatpush.xpose.msra.mxu0 0.0
      %1349 = vmatpush.xpose.msra.mxu0 0.0
      %1350 = vmatpush.xpose.msra.mxu0 0.0
      %1351 = vmatpush.xpose.msra.mxu0 0.0
      %1352 = vmatpush.xpose.msra.mxu0 0.0
      %1353 = vmatpush.xpose.msra.mxu0 0.0
      %1354 = vmatpush.xpose.msra.mxu0 0.0
      %1355 = vmatpush.xpose.msra.mxu0 0.0
      %1356 = vmatpush.xpose.msra.mxu0 %v1339
      %1357 = vmatmul.f32.gmra.mxu0 %v1337
      %v1358 = vpop.f32.mrf.mxu0
      %v1359 = vadd.f32 0.0, %v1358
      %1360 = vdwg.mxu0
      %1361 = vrot.lane.b32.xlu0 %v126, 120
      %v1362 = vpop.permute.xlu0 %1361
      %1363 = vrot.lane.b32.xlu0 %v126, 88
      %v1364 = vpop.permute.xlu0 %1363
      %v1365 = vsel %vm139, %v1362, 0
      %v1367 = vsel %vm139, %v1364, 0
      %1369 = vmatpush.xpose.msra.mxu0 0.0
      %1370 = vmatpush.xpose.msra.mxu0 0.0
      %1371 = vmatpush.xpose.msra.mxu0 0.0
      %1372 = vmatpush.xpose.msra.mxu0 0.0
      %1373 = vmatpush.xpose.msra.mxu0 0.0
      %1374 = vmatpush.xpose.msra.mxu0 0.0
      %1375 = vmatpush.xpose.msra.mxu0 0.0
      %1376 = vmatpush.xpose.msra.mxu0 0.0
      %1377 = vmatpush.xpose.msra.mxu0 0.0
      %1378 = vmatpush.xpose.msra.mxu0 0.0
      %1379 = vmatpush.xpose.msra.mxu0 0.0
      %1380 = vmatpush.xpose.msra.mxu0 0.0
      %1381 = vmatpush.xpose.msra.mxu0 0.0
      %1382 = vmatpush.xpose.msra.mxu0 0.0
      %1383 = vmatpush.xpose.msra.mxu0 0.0
      %1384 = vmatpush.xpose.msra.mxu0 %v1367
      %1385 = vmatmul.f32.gmra.mxu0 %v1365
      %v1386 = vpop.f32.mrf.mxu0
      %v1387 = vadd.f32 0.0, %v1386
      %1388 = vdwg.mxu0
      %1389 = vrot.lane.b32.xlu0 %v127, 120
      %v1390 = vpop.permute.xlu0 %1389
      %1391 = vrot.lane.b32.xlu0 %v127, 88
      %v1392 = vpop.permute.xlu0 %1391
      %v1393 = vsel %vm139, %v1390, 0
      %v1395 = vsel %vm139, %v1392, 0
      %1397 = vmatpush.xpose.msra.mxu0 0.0
      %1398 = vmatpush.xpose.msra.mxu0 0.0
      %1399 = vmatpush.xpose.msra.mxu0 0.0
      %1400 = vmatpush.xpose.msra.mxu0 0.0
      %1401 = vmatpush.xpose.msra.mxu0 0.0
      %1402 = vmatpush.xpose.msra.mxu0 0.0
      %1403 = vmatpush.xpose.msra.mxu0 0.0
      %1404 = vmatpush.xpose.msra.mxu0 0.0
      %1405 = vmatpush.xpose.msra.mxu0 0.0
      %1406 = vmatpush.xpose.msra.mxu0 0.0
      %1407 = vmatpush.xpose.msra.mxu0 0.0
      %1408 = vmatpush.xpose.msra.mxu0 0.0
      %1409 = vmatpush.xpose.msra.mxu0 0.0
      %1410 = vmatpush.xpose.msra.mxu0 0.0
      %1411 = vmatpush.xpose.msra.mxu0 0.0
      %1412 = vmatpush.xpose.msra.mxu0 %v1395
      %1413 = vmatmul.f32.gmra.mxu0 %v1393
      %v1414 = vpop.f32.mrf.mxu0
      %v1415 = vadd.f32 0.0, %v1414
      %1416 = vdwg.mxu0
      %1417 = vrot.lane.b32.xlu0 %v128, 120
      %v1418 = vpop.permute.xlu0 %1417
      %1419 = vrot.lane.b32.xlu0 %v128, 88
      %v1420 = vpop.permute.xlu0 %1419
      %v1421 = vsel %vm139, %v1418, 0
      %v1423 = vsel %vm139, %v1420, 0
      %1425 = vmatpush.xpose.msra.mxu0 0.0
      %1426 = vmatpush.xpose.msra.mxu0 0.0
      %1427 = vmatpush.xpose.msra.mxu0 0.0
      %1428 = vmatpush.xpose.msra.mxu0 0.0
      %1429 = vmatpush.xpose.msra.mxu0 0.0
      %1430 = vmatpush.xpose.msra.mxu0 0.0
      %1431 = vmatpush.xpose.msra.mxu0 0.0
      %1432 = vmatpush.xpose.msra.mxu0 0.0
      %1433 = vmatpush.xpose.msra.mxu0 0.0
      %1434 = vmatpush.xpose.msra.mxu0 0.0
      %1435 = vmatpush.xpose.msra.mxu0 0.0
      %1436 = vmatpush.xpose.msra.mxu0 0.0
      %1437 = vmatpush.xpose.msra.mxu0 0.0
      %1438 = vmatpush.xpose.msra.mxu0 0.0
      %1439 = vmatpush.xpose.msra.mxu0 0.0
      %1440 = vmatpush.xpose.msra.mxu0 %v1423
      %1441 = vmatmul.f32.gmra.mxu0 %v1421
      %v1442 = vpop.f32.mrf.mxu0
      %v1443 = vadd.f32 0.0, %v1442
      %1444 = vdwg.mxu0
      %1445 = vrot.lane.b32.xlu0 %v129, 120
      %v1446 = vpop.permute.xlu0 %1445
      %1447 = vrot.lane.b32.xlu0 %v129, 88
      %v1448 = vpop.permute.xlu0 %1447
      %v1449 = vsel %vm139, %v1446, 0
      %v1451 = vsel %vm139, %v1448, 0
      %1453 = vmatpush.xpose.msra.mxu0 0.0
      %1454 = vmatpush.xpose.msra.mxu0 0.0
      %1455 = vmatpush.xpose.msra.mxu0 0.0
      %1456 = vmatpush.xpose.msra.mxu0 0.0
      %1457 = vmatpush.xpose.msra.mxu0 0.0
      %1458 = vmatpush.xpose.msra.mxu0 0.0
      %1459 = vmatpush.xpose.msra.mxu0 0.0
      %1460 = vmatpush.xpose.msra.mxu0 0.0
      %1461 = vmatpush.xpose.msra.mxu0 0.0
      %1462 = vmatpush.xpose.msra.mxu0 0.0
      %1463 = vmatpush.xpose.msra.mxu0 0.0
      %1464 = vmatpush.xpose.msra.mxu0 0.0
      %1465 = vmatpush.xpose.msra.mxu0 0.0
      %1466 = vmatpush.xpose.msra.mxu0 0.0
      %1467 = vmatpush.xpose.msra.mxu0 0.0
      %1468 = vmatpush.xpose.msra.mxu0 %v1451
      %1469 = vmatmul.f32.gmra.mxu0 %v1449
      %v1470 = vpop.f32.mrf.mxu0
      %v1471 = vadd.f32 0.0, %v1470
      %1472 = vdwg.mxu0
      %1473 = vrot.lane.b32.xlu0 %v130, 120
      %v1474 = vpop.permute.xlu0 %1473
      %1475 = vrot.lane.b32.xlu0 %v130, 88
      %v1476 = vpop.permute.xlu0 %1475
      %v1477 = vsel %vm139, %v1474, 0
      %v1479 = vsel %vm139, %v1476, 0
      %1481 = vmatpush.xpose.msra.mxu0 0.0
      %1482 = vmatpush.xpose.msra.mxu0 0.0
      %1483 = vmatpush.xpose.msra.mxu0 0.0
      %1484 = vmatpush.xpose.msra.mxu0 0.0
      %1485 = vmatpush.xpose.msra.mxu0 0.0
      %1486 = vmatpush.xpose.msra.mxu0 0.0
      %1487 = vmatpush.xpose.msra.mxu0 0.0
      %1488 = vmatpush.xpose.msra.mxu0 0.0
      %1489 = vmatpush.xpose.msra.mxu0 0.0
      %1490 = vmatpush.xpose.msra.mxu0 0.0
      %1491 = vmatpush.xpose.msra.mxu0 0.0
      %1492 = vmatpush.xpose.msra.mxu0 0.0
      %1493 = vmatpush.xpose.msra.mxu0 0.0
      %1494 = vmatpush.xpose.msra.mxu0 0.0
      %1495 = vmatpush.xpose.msra.mxu0 0.0
      %1496 = vmatpush.xpose.msra.mxu0 %v1479
      %1497 = vmatmul.f32.gmra.mxu0 %v1477
      %v1498 = vpop.f32.mrf.mxu0
      %v1499 = vadd.f32 0.0, %v1498
      %1500 = vdwg.mxu0
      %1501 = vrot.lane.b32.xlu0 %v131, 120
      %v1502 = vpop.permute.xlu0 %1501
      %1503 = vrot.lane.b32.xlu0 %v131, 88
      %v1504 = vpop.permute.xlu0 %1503
      %v1505 = vsel %vm139, %v1502, 0
      %v1507 = vsel %vm139, %v1504, 0
      %1509 = vmatpush.xpose.msra.mxu0 0.0
      %1510 = vmatpush.xpose.msra.mxu0 0.0
      %1511 = vmatpush.xpose.msra.mxu0 0.0
      %1512 = vmatpush.xpose.msra.mxu0 0.0
      %1513 = vmatpush.xpose.msra.mxu0 0.0
      %1514 = vmatpush.xpose.msra.mxu0 0.0
      %1515 = vmatpush.xpose.msra.mxu0 0.0
      %1516 = vmatpush.xpose.msra.mxu0 0.0
      %1517 = vmatpush.xpose.msra.mxu0 0.0
      %1518 = vmatpush.xpose.msra.mxu0 0.0
      %1519 = vmatpush.xpose.msra.mxu0 0.0
      %1520 = vmatpush.xpose.msra.mxu0 0.0
      %1521 = vmatpush.xpose.msra.mxu0 0.0
      %1522 = vmatpush.xpose.msra.mxu0 0.0
      %1523 = vmatpush.xpose.msra.mxu0 0.0
      %1524 = vmatpush.xpose.msra.mxu0 %v1507
      %1525 = vmatmul.f32.gmra.mxu0 %v1505
      %v1526 = vpop.f32.mrf.mxu0
      %v1527 = vadd.f32 0.0, %v1526
      %1528 = vdwg.mxu0
      %1529 = vrot.lane.b32.xlu0 %v132, 120
      %v1530 = vpop.permute.xlu0 %1529
      %1531 = vrot.lane.b32.xlu0 %v132, 88
      %v1532 = vpop.permute.xlu0 %1531
      %v1533 = vsel %vm139, %v1530, 0
      %v1535 = vsel %vm139, %v1532, 0
      %1537 = vmatpush.xpose.msra.mxu0 0.0
      %1538 = vmatpush.xpose.msra.mxu0 0.0
      %1539 = vmatpush.xpose.msra.mxu0 0.0
      %1540 = vmatpush.xpose.msra.mxu0 0.0
      %1541 = vmatpush.xpose.msra.mxu0 0.0
      %1542 = vmatpush.xpose.msra.mxu0 0.0
      %1543 = vmatpush.xpose.msra.mxu0 0.0
      %1544 = vmatpush.xpose.msra.mxu0 0.0
      %1545 = vmatpush.xpose.msra.mxu0 0.0
      %1546 = vmatpush.xpose.msra.mxu0 0.0
      %1547 = vmatpush.xpose.msra.mxu0 0.0
      %1548 = vmatpush.xpose.msra.mxu0 0.0
      %1549 = vmatpush.xpose.msra.mxu0 0.0
      %1550 = vmatpush.xpose.msra.mxu0 0.0
      %1551 = vmatpush.xpose.msra.mxu0 0.0
      %1552 = vmatpush.xpose.msra.mxu0 %v1535
      %1553 = vmatmul.f32.gmra.mxu0 %v1533
      %v1554 = vpop.f32.mrf.mxu0
      %v1555 = vadd.f32 0.0, %v1554
      %1556 = vdwg.mxu0
      %1557 = vrot.lane.b32.xlu0 %v133, 120
      %v1558 = vpop.permute.xlu0 %1557
      %1559 = vrot.lane.b32.xlu0 %v133, 88
      %v1560 = vpop.permute.xlu0 %1559
      %v1561 = vsel %vm139, %v1558, 0
      %v1563 = vsel %vm139, %v1560, 0
      %1565 = vmatpush.xpose.msra.mxu0 0.0
      %1566 = vmatpush.xpose.msra.mxu0 0.0
      %1567 = vmatpush.xpose.msra.mxu0 0.0
      %1568 = vmatpush.xpose.msra.mxu0 0.0
      %1569 = vmatpush.xpose.msra.mxu0 0.0
      %1570 = vmatpush.xpose.msra.mxu0 0.0
      %1571 = vmatpush.xpose.msra.mxu0 0.0
      %1572 = vmatpush.xpose.msra.mxu0 0.0
      %1573 = vmatpush.xpose.msra.mxu0 0.0
      %1574 = vmatpush.xpose.msra.mxu0 0.0
      %1575 = vmatpush.xpose.msra.mxu0 0.0
      %1576 = vmatpush.xpose.msra.mxu0 0.0
      %1577 = vmatpush.xpose.msra.mxu0 0.0
      %1578 = vmatpush.xpose.msra.mxu0 0.0
      %1579 = vmatpush.xpose.msra.mxu0 0.0
      %1580 = vmatpush.xpose.msra.mxu0 %v1563
      %1581 = vmatmul.f32.gmra.mxu0 %v1561
      %v1582 = vpop.f32.mrf.mxu0
      %v1583 = vadd.f32 0.0, %v1582
      %1584 = vdwg.mxu0
      %1585 = vrot.lane.b32.xlu0 %v134, 120
      %v1586 = vpop.permute.xlu0 %1585
      %1587 = vrot.lane.b32.xlu0 %v134, 88
      %v1588 = vpop.permute.xlu0 %1587
      %v1589 = vsel %vm139, %v1586, 0
      %v1591 = vsel %vm139, %v1588, 0
      %1593 = vmatpush.xpose.msra.mxu0 0.0
      %1594 = vmatpush.xpose.msra.mxu0 0.0
      %1595 = vmatpush.xpose.msra.mxu0 0.0
      %1596 = vmatpush.xpose.msra.mxu0 0.0
      %1597 = vmatpush.xpose.msra.mxu0 0.0
      %1598 = vmatpush.xpose.msra.mxu0 0.0
      %1599 = vmatpush.xpose.msra.mxu0 0.0
      %1600 = vmatpush.xpose.msra.mxu0 0.0
      %1601 = vmatpush.xpose.msra.mxu0 0.0
      %1602 = vmatpush.xpose.msra.mxu0 0.0
      %1603 = vmatpush.xpose.msra.mxu0 0.0
      %1604 = vmatpush.xpose.msra.mxu0 0.0
      %1605 = vmatpush.xpose.msra.mxu0 0.0
      %1606 = vmatpush.xpose.msra.mxu0 0.0
      %1607 = vmatpush.xpose.msra.mxu0 0.0
      %1608 = vmatpush.xpose.msra.mxu0 %v1591
      %1609 = vmatmul.f32.gmra.mxu0 %v1589
      %v1610 = vpop.f32.mrf.mxu0
      %v1611 = vadd.f32 0.0, %v1610
      %1612 = vdwg.mxu0
      %1613 = vrot.lane.b32.xlu0 %v135, 120
      %v1614 = vpop.permute.xlu0 %1613
      %1615 = vrot.lane.b32.xlu0 %v135, 88
      %v1616 = vpop.permute.xlu0 %1615
      %v1617 = vsel %vm139, %v1614, 0
      %v1619 = vsel %vm139, %v1616, 0
      %1621 = vmatpush.xpose.msra.mxu0 0.0
      %1622 = vmatpush.xpose.msra.mxu0 0.0
      %1623 = vmatpush.xpose.msra.mxu0 0.0
      %1624 = vmatpush.xpose.msra.mxu0 0.0
      %1625 = vmatpush.xpose.msra.mxu0 0.0
      %1626 = vmatpush.xpose.msra.mxu0 0.0
      %1627 = vmatpush.xpose.msra.mxu0 0.0
      %1628 = vmatpush.xpose.msra.mxu0 0.0
      %1629 = vmatpush.xpose.msra.mxu0 0.0
      %1630 = vmatpush.xpose.msra.mxu0 0.0
      %1631 = vmatpush.xpose.msra.mxu0 0.0
      %1632 = vmatpush.xpose.msra.mxu0 0.0
      %1633 = vmatpush.xpose.msra.mxu0 0.0
      %1634 = vmatpush.xpose.msra.mxu0 0.0
      %1635 = vmatpush.xpose.msra.mxu0 0.0
      %1636 = vmatpush.xpose.msra.mxu0 %v1619
      %1637 = vmatmul.f32.gmra.mxu0 %v1617
      %v1638 = vpop.f32.mrf.mxu0
      %v1639 = vadd.f32 0.0, %v1638
      %1640 = vdwg.mxu0
      %v1641 = vmul.f32 %v1219, 0.35355338
      %v1642 = vmul.f32 %v1247, 0.35355338
      %v1643 = vmul.f32 %v1275, 0.35355338
      %v1644 = vmul.f32 %v1303, 0.35355338
      %v1645 = vmul.f32 %v1331, 0.35355338
      %v1646 = vmul.f32 %v1359, 0.35355338
      %v1647 = vmul.f32 %v1387, 0.35355338
      %v1648 = vmul.f32 %v1415, 0.35355338
      %v1649 = vmul.f32 %v1443, 0.35355338
      %v1650 = vmul.f32 %v1471, 0.35355338
      %v1651 = vmul.f32 %v1499, 0.35355338
      %v1652 = vmul.f32 %v1527, 0.35355338
      %v1653 = vmul.f32 %v1555, 0.35355338
      %v1654 = vmul.f32 %v1583, 0.35355338
      %v1655 = vmul.f32 %v1611, 0.35355338
      %v1656 = vmul.f32 %v1639, 0.35355338
      %v1657 = vsel %vm139, %v1641, -inf
      %1658 = vmax.xlane.f32.xlu0 %v1657
      %v1659 = vpop.xlane.xlu0 %1658
      %v1660 = vsel %vm139, %v1642, -inf
      %1661 = vmax.xlane.f32.xlu0 %v1660
      %v1662 = vpop.xlane.xlu0 %1661
      %v1663 = vsel %vm139, %v1643, -inf
      %1664 = vmax.xlane.f32.xlu0 %v1663
      %v1665 = vpop.xlane.xlu0 %1664
      %v1666 = vsel %vm139, %v1644, -inf
      %1667 = vmax.xlane.f32.xlu0 %v1666
      %v1668 = vpop.xlane.xlu0 %1667
      %v1669 = vsel %vm139, %v1645, -inf
      %1670 = vmax.xlane.f32.xlu0 %v1669
      %v1671 = vpop.xlane.xlu0 %1670
      %v1672 = vsel %vm139, %v1646, -inf
      %1673 = vmax.xlane.f32.xlu0 %v1672
      %v1674 = vpop.xlane.xlu0 %1673
      %v1675 = vsel %vm139, %v1647, -inf
      %1676 = vmax.xlane.f32.xlu0 %v1675
      %v1677 = vpop.xlane.xlu0 %1676
      %v1678 = vsel %vm139, %v1648, -inf
      %1679 = vmax.xlane.f32.xlu0 %v1678
      %v1680 = vpop.xlane.xlu0 %1679
      %v1681 = vsel %vm139, %v1649, -inf
      %1682 = vmax.xlane.f32.xlu0 %v1681
      %v1683 = vpop.xlane.xlu0 %1682
      %v1684 = vsel %vm139, %v1650, -inf
      %1685 = vmax.xlane.f32.xlu0 %v1684
      %v1686 = vpop.xlane.xlu0 %1685
      %v1687 = vsel %vm139, %v1651, -inf
      %1688 = vmax.xlane.f32.xlu0 %v1687
      %v1689 = vpop.xlane.xlu0 %1688
      %v1690 = vsel %vm139, %v1652, -inf
      %1691 = vmax.xlane.f32.xlu0 %v1690
      %v1692 = vpop.xlane.xlu0 %1691
      %v1693 = vsel %vm139, %v1653, -inf
      %1694 = vmax.xlane.f32.xlu0 %v1693
      %v1695 = vpop.xlane.xlu0 %1694
      %v1696 = vsel %vm139, %v1654, -inf
      %1697 = vmax.xlane.f32.xlu0 %v1696
      %v1698 = vpop.xlane.xlu0 %1697
      %v1699 = vsel %vm139, %v1655, -inf
      %1700 = vmax.xlane.f32.xlu0 %v1699
      %v1701 = vpop.xlane.xlu0 %1700
      %v1702 = vsel %vm139, %v1656, -inf
      %1703 = vmax.xlane.f32.xlu0 %v1702
      %v1704 = vpop.xlane.xlu0 %1703
      %v1705 = vsub.f32 %v1641, %v1659
      %v1706 = vsub.f32 %v1642, %v1662
      %v1707 = vsub.f32 %v1643, %v1665
      %v1708 = vsub.f32 %v1644, %v1668
      %v1709 = vsub.f32 %v1645, %v1671
      %v1710 = vsub.f32 %v1646, %v1674
      %v1711 = vsub.f32 %v1647, %v1677
      %v1712 = vsub.f32 %v1648, %v1680
      %v1713 = vsub.f32 %v1649, %v1683
      %v1714 = vsub.f32 %v1650, %v1686
      %v1715 = vsub.f32 %v1651, %v1689
      %v1716 = vsub.f32 %v1652, %v1692
      %v1717 = vsub.f32 %v1653, %v1695
      %v1718 = vsub.f32 %v1654, %v1698
      %v1719 = vsub.f32 %v1655, %v1701
      %v1720 = vsub.f32 %v1656, %v1704
      %v1721 = vmul.f32 %v1705, 1.442695
      %v1722 = vpow.pop %v1721
      %v1723 = vmul.f32 %v1706, 1.442695
      %v1724 = vpow.pop %v1723
      %v1725 = vmul.f32 %v1707, 1.442695
      %v1726 = vpow.pop %v1725
      %v1727 = vmul.f32 %v1708, 1.442695
      %v1728 = vpow.pop %v1727
      %v1729 = vmul.f32 %v1709, 1.442695
      %v1730 = vpow.pop %v1729
      %v1731 = vmul.f32 %v1710, 1.442695
      %v1732 = vpow.pop %v1731
      %v1733 = vmul.f32 %v1711, 1.442695
      %v1734 = vpow.pop %v1733
      %v1735 = vmul.f32 %v1712, 1.442695
      %v1736 = vpow.pop %v1735
      %v1737 = vmul.f32 %v1713, 1.442695
      %v1738 = vpow.pop %v1737
      %v1739 = vmul.f32 %v1714, 1.442695
      %v1740 = vpow.pop %v1739
      %v1741 = vmul.f32 %v1715, 1.442695
      %v1742 = vpow.pop %v1741
      %v1743 = vmul.f32 %v1716, 1.442695
      %v1744 = vpow.pop %v1743
      %v1745 = vmul.f32 %v1717, 1.442695
      %v1746 = vpow.pop %v1745
      %v1747 = vmul.f32 %v1718, 1.442695
      %v1748 = vpow.pop %v1747
      %v1749 = vmul.f32 %v1719, 1.442695
      %v1750 = vpow.pop %v1749
      %v1751 = vmul.f32 %v1720, 1.442695
      %v1752 = vpow.pop %v1751
      %v1753 = vsel %vm139, %v1722, 0.0
      %1754 = vadd.xlane.f32.xlu0 %v1753
      %v1755 = vpop.xlane.xlu0 %1754
      %v1756 = vsel %vm139, %v1724, 0.0
      %1757 = vadd.xlane.f32.xlu0 %v1756
      %v1758 = vpop.xlane.xlu0 %1757
      %v1759 = vsel %vm139, %v1726, 0.0
      %1760 = vadd.xlane.f32.xlu0 %v1759
      %v1761 = vpop.xlane.xlu0 %1760
      %v1762 = vsel %vm139, %v1728, 0.0
      %1763 = vadd.xlane.f32.xlu0 %v1762
      %v1764 = vpop.xlane.xlu0 %1763
      %v1765 = vsel %vm139, %v1730, 0.0
      %1766 = vadd.xlane.f32.xlu0 %v1765
      %v1767 = vpop.xlane.xlu0 %1766
      %v1768 = vsel %vm139, %v1732, 0.0
      %1769 = vadd.xlane.f32.xlu0 %v1768
      %v1770 = vpop.xlane.xlu0 %1769
      %v1771 = vsel %vm139, %v1734, 0.0
      %1772 = vadd.xlane.f32.xlu0 %v1771
      %v1773 = vpop.xlane.xlu0 %1772
      %v1774 = vsel %vm139, %v1736, 0.0
      %1775 = vadd.xlane.f32.xlu0 %v1774
      %v1776 = vpop.xlane.xlu0 %1775
      %v1777 = vsel %vm139, %v1738, 0.0
      %1778 = vadd.xlane.f32.xlu0 %v1777
      %v1779 = vpop.xlane.xlu0 %1778
      %v1780 = vsel %vm139, %v1740, 0.0
      %1781 = vadd.xlane.f32.xlu0 %v1780
      %v1782 = vpop.xlane.xlu0 %1781
      %v1783 = vsel %vm139, %v1742, 0.0
      %1784 = vadd.xlane.f32.xlu0 %v1783
      %v1785 = vpop.xlane.xlu0 %1784
      %v1786 = vsel %vm139, %v1744, 0.0
      %1787 = vadd.xlane.f32.xlu0 %v1786
      %v1788 = vpop.xlane.xlu0 %1787
      %v1789 = vsel %vm139, %v1746, 0.0
      %1790 = vadd.xlane.f32.xlu0 %v1789
      %v1791 = vpop.xlane.xlu0 %1790
      %v1792 = vsel %vm139, %v1748, 0.0
      %1793 = vadd.xlane.f32.xlu0 %v1792
      %v1794 = vpop.xlane.xlu0 %1793
      %v1795 = vsel %vm139, %v1750, 0.0
      %1796 = vadd.xlane.f32.xlu0 %v1795
      %v1797 = vpop.xlane.xlu0 %1796
      %v1798 = vsel %vm139, %v1752, 0.0
      %1799 = vadd.xlane.f32.xlu0 %v1798
      %v1800 = vpop.xlane.xlu0 %1799
      %v1801 = vrcp.pop %v1755
      %v1802 = vrcp.pop %v1758
      %v1803 = vrcp.pop %v1761
      %v1804 = vrcp.pop %v1764
      %v1805 = vrcp.pop %v1767
      %v1806 = vrcp.pop %v1770
      %v1807 = vrcp.pop %v1773
      %v1808 = vrcp.pop %v1776
      %v1809 = vrcp.pop %v1779
      %v1810 = vrcp.pop %v1782
      %v1811 = vrcp.pop %v1785
      %v1812 = vrcp.pop %v1788
      %v1813 = vrcp.pop %v1791
      %v1814 = vrcp.pop %v1794
      %v1815 = vrcp.pop %v1797
      %v1816 = vrcp.pop %v1800
      %v1817 = vmul.f32 %v1722, %v1801
      %v1818 = vmul.f32 %v1724, %v1802
      %v1819 = vmul.f32 %v1726, %v1803
      %v1820 = vmul.f32 %v1728, %v1804
      %v1821 = vmul.f32 %v1730, %v1805
      %v1822 = vmul.f32 %v1732, %v1806
      %v1823 = vmul.f32 %v1734, %v1807
      %v1824 = vmul.f32 %v1736, %v1808
      %v1825 = vmul.f32 %v1738, %v1809
      %v1826 = vmul.f32 %v1740, %v1810
      %v1827 = vmul.f32 %v1742, %v1811
      %v1828 = vmul.f32 %v1744, %v1812
      %v1829 = vmul.f32 %v1746, %v1813
      %v1830 = vmul.f32 %v1748, %v1814
      %v1831 = vmul.f32 %v1750, %v1815
      %v1832 = vmul.f32 %v1752, %v1816
      %1833 = vrot.lane.b32.xlu0 %v120, 56
      %v1834 = vpop.permute.xlu0 %1833
      %v1837 = vsel %vm139, %v1817, 0
      %1839 = vmatpush.msra.mxu0 0.0
      %1840 = vmatpush.msra.mxu0 0.0
      %1841 = vmatpush.msra.mxu0 0.0
      %1842 = vmatpush.msra.mxu0 0.0
      %1843 = vmatpush.msra.mxu0 0.0
      %1844 = vmatpush.msra.mxu0 0.0
      %1845 = vmatpush.msra.mxu0 0.0
      %1846 = vmatpush.msra.mxu0 0.0
      %1847 = vmatpush.msra.mxu0 0.0
      %1848 = vmatpush.msra.mxu0 0.0
      %1849 = vmatpush.msra.mxu0 0.0
      %1850 = vmatpush.msra.mxu0 0.0
      %1851 = vmatpush.msra.mxu0 0.0
      %1852 = vmatpush.msra.mxu0 0.0
      %1853 = vmatpush.msra.mxu0 0.0
      %1854 = vmatpush.msra.mxu0 %v1834
      %1855 = vmatmul.f32.gmra.mxu0 %v1837
      %v1856 = vpop.f32.mrf.mxu0
      %v1857 = vadd.f32 0.0, %v1856
      %1858 = vdwg.mxu0
      %1859 = vrot.lane.b32.xlu0 %v121, 56
      %v1860 = vpop.permute.xlu0 %1859
      %v1863 = vsel %vm139, %v1818, 0
      %1865 = vmatpush.msra.mxu0 0.0
      %1866 = vmatpush.msra.mxu0 0.0
      %1867 = vmatpush.msra.mxu0 0.0
      %1868 = vmatpush.msra.mxu0 0.0
      %1869 = vmatpush.msra.mxu0 0.0
      %1870 = vmatpush.msra.mxu0 0.0
      %1871 = vmatpush.msra.mxu0 0.0
      %1872 = vmatpush.msra.mxu0 0.0
      %1873 = vmatpush.msra.mxu0 0.0
      %1874 = vmatpush.msra.mxu0 0.0
      %1875 = vmatpush.msra.mxu0 0.0
      %1876 = vmatpush.msra.mxu0 0.0
      %1877 = vmatpush.msra.mxu0 0.0
      %1878 = vmatpush.msra.mxu0 0.0
      %1879 = vmatpush.msra.mxu0 0.0
      %1880 = vmatpush.msra.mxu0 %v1860
      %1881 = vmatmul.f32.gmra.mxu0 %v1863
      %v1882 = vpop.f32.mrf.mxu0
      %v1883 = vadd.f32 0.0, %v1882
      %1884 = vdwg.mxu0
      %1885 = vrot.lane.b32.xlu0 %v122, 56
      %v1886 = vpop.permute.xlu0 %1885
      %v1889 = vsel %vm139, %v1819, 0
      %1891 = vmatpush.msra.mxu0 0.0
      %1892 = vmatpush.msra.mxu0 0.0
      %1893 = vmatpush.msra.mxu0 0.0
      %1894 = vmatpush.msra.mxu0 0.0
      %1895 = vmatpush.msra.mxu0 0.0
      %1896 = vmatpush.msra.mxu0 0.0
      %1897 = vmatpush.msra.mxu0 0.0
      %1898 = vmatpush.msra.mxu0 0.0
      %1899 = vmatpush.msra.mxu0 0.0
      %1900 = vmatpush.msra.mxu0 0.0
      %1901 = vmatpush.msra.mxu0 0.0
      %1902 = vmatpush.msra.mxu0 0.0
      %1903 = vmatpush.msra.mxu0 0.0
      %1904 = vmatpush.msra.mxu0 0.0
      %1905 = vmatpush.msra.mxu0 0.0
      %1906 = vmatpush.msra.mxu0 %v1886
      %1907 = vmatmul.f32.gmra.mxu0 %v1889
      %v1908 = vpop.f32.mrf.mxu0
      %v1909 = vadd.f32 0.0, %v1908
      %1910 = vdwg.mxu0
      %1911 = vrot.lane.b32.xlu0 %v123, 56
      %v1912 = vpop.permute.xlu0 %1911
      %v1915 = vsel %vm139, %v1820, 0
      %1917 = vmatpush.msra.mxu0 0.0
      %1918 = vmatpush.msra.mxu0 0.0
      %1919 = vmatpush.msra.mxu0 0.0
      %1920 = vmatpush.msra.mxu0 0.0
      %1921 = vmatpush.msra.mxu0 0.0
      %1922 = vmatpush.msra.mxu0 0.0
      %1923 = vmatpush.msra.mxu0 0.0
      %1924 = vmatpush.msra.mxu0 0.0
      %1925 = vmatpush.msra.mxu0 0.0
      %1926 = vmatpush.msra.mxu0 0.0
      %1927 = vmatpush.msra.mxu0 0.0
      %1928 = vmatpush.msra.mxu0 0.0
      %1929 = vmatpush.msra.mxu0 0.0
      %1930 = vmatpush.msra.mxu0 0.0
      %1931 = vmatpush.msra.mxu0 0.0
      %1932 = vmatpush.msra.mxu0 %v1912
      %1933 = vmatmul.f32.gmra.mxu0 %v1915
      %v1934 = vpop.f32.mrf.mxu0
      %v1935 = vadd.f32 0.0, %v1934
      %1936 = vdwg.mxu0
      %1937 = vrot.lane.b32.xlu0 %v124, 56
      %v1938 = vpop.permute.xlu0 %1937
      %v1941 = vsel %vm139, %v1821, 0
      %1943 = vmatpush.msra.mxu0 0.0
      %1944 = vmatpush.msra.mxu0 0.0
      %1945 = vmatpush.msra.mxu0 0.0
      %1946 = vmatpush.msra.mxu0 0.0
      %1947 = vmatpush.msra.mxu0 0.0
      %1948 = vmatpush.msra.mxu0 0.0
      %1949 = vmatpush.msra.mxu0 0.0
      %1950 = vmatpush.msra.mxu0 0.0
      %1951 = vmatpush.msra.mxu0 0.0
      %1952 = vmatpush.msra.mxu0 0.0
      %1953 = vmatpush.msra.mxu0 0.0
      %1954 = vmatpush.msra.mxu0 0.0
      %1955 = vmatpush.msra.mxu0 0.0
      %1956 = vmatpush.msra.mxu0 0.0
      %1957 = vmatpush.msra.mxu0 0.0
      %1958 = vmatpush.msra.mxu0 %v1938
      %1959 = vmatmul.f32.gmra.mxu0 %v1941
      %v1960 = vpop.f32.mrf.mxu0
      %v1961 = vadd.f32 0.0, %v1960
      %1962 = vdwg.mxu0
      %1963 = vrot.lane.b32.xlu0 %v125, 56
      %v1964 = vpop.permute.xlu0 %1963
      %v1967 = vsel %vm139, %v1822, 0
      %1969 = vmatpush.msra.mxu0 0.0
      %1970 = vmatpush.msra.mxu0 0.0
      %1971 = vmatpush.msra.mxu0 0.0
      %1972 = vmatpush.msra.mxu0 0.0
      %1973 = vmatpush.msra.mxu0 0.0
      %1974 = vmatpush.msra.mxu0 0.0
      %1975 = vmatpush.msra.mxu0 0.0
      %1976 = vmatpush.msra.mxu0 0.0
      %1977 = vmatpush.msra.mxu0 0.0
      %1978 = vmatpush.msra.mxu0 0.0
      %1979 = vmatpush.msra.mxu0 0.0
      %1980 = vmatpush.msra.mxu0 0.0
      %1981 = vmatpush.msra.mxu0 0.0
      %1982 = vmatpush.msra.mxu0 0.0
      %1983 = vmatpush.msra.mxu0 0.0
      %1984 = vmatpush.msra.mxu0 %v1964
      %1985 = vmatmul.f32.gmra.mxu0 %v1967
      %v1986 = vpop.f32.mrf.mxu0
      %v1987 = vadd.f32 0.0, %v1986
      %1988 = vdwg.mxu0
      %1989 = vrot.lane.b32.xlu0 %v126, 56
      %v1990 = vpop.permute.xlu0 %1989
      %v1993 = vsel %vm139, %v1823, 0
      %1995 = vmatpush.msra.mxu0 0.0
      %1996 = vmatpush.msra.mxu0 0.0
      %1997 = vmatpush.msra.mxu0 0.0
      %1998 = vmatpush.msra.mxu0 0.0
      %1999 = vmatpush.msra.mxu0 0.0
      %2000 = vmatpush.msra.mxu0 0.0
      %2001 = vmatpush.msra.mxu0 0.0
      %2002 = vmatpush.msra.mxu0 0.0
      %2003 = vmatpush.msra.mxu0 0.0
      %2004 = vmatpush.msra.mxu0 0.0
      %2005 = vmatpush.msra.mxu0 0.0
      %2006 = vmatpush.msra.mxu0 0.0
      %2007 = vmatpush.msra.mxu0 0.0
      %2008 = vmatpush.msra.mxu0 0.0
      %2009 = vmatpush.msra.mxu0 0.0
      %2010 = vmatpush.msra.mxu0 %v1990
      %2011 = vmatmul.f32.gmra.mxu0 %v1993
      %v2012 = vpop.f32.mrf.mxu0
      %v2013 = vadd.f32 0.0, %v2012
      %2014 = vdwg.mxu0
      %2015 = vrot.lane.b32.xlu0 %v127, 56
      %v2016 = vpop.permute.xlu0 %2015
      %v2019 = vsel %vm139, %v1824, 0
      %2021 = vmatpush.msra.mxu0 0.0
      %2022 = vmatpush.msra.mxu0 0.0
      %2023 = vmatpush.msra.mxu0 0.0
      %2024 = vmatpush.msra.mxu0 0.0
      %2025 = vmatpush.msra.mxu0 0.0
      %2026 = vmatpush.msra.mxu0 0.0
      %2027 = vmatpush.msra.mxu0 0.0
      %2028 = vmatpush.msra.mxu0 0.0
      %2029 = vmatpush.msra.mxu0 0.0
      %2030 = vmatpush.msra.mxu0 0.0
      %2031 = vmatpush.msra.mxu0 0.0
      %2032 = vmatpush.msra.mxu0 0.0
      %2033 = vmatpush.msra.mxu0 0.0
      %2034 = vmatpush.msra.mxu0 0.0
      %2035 = vmatpush.msra.mxu0 0.0
      %2036 = vmatpush.msra.mxu0 %v2016
      %2037 = vmatmul.f32.gmra.mxu0 %v2019
      %v2038 = vpop.f32.mrf.mxu0
      %v2039 = vadd.f32 0.0, %v2038
      %2040 = vdwg.mxu0
      %2041 = vrot.lane.b32.xlu0 %v128, 56
      %v2042 = vpop.permute.xlu0 %2041
      %v2045 = vsel %vm139, %v1825, 0
      %2047 = vmatpush.msra.mxu0 0.0
      %2048 = vmatpush.msra.mxu0 0.0
      %2049 = vmatpush.msra.mxu0 0.0
      %2050 = vmatpush.msra.mxu0 0.0
      %2051 = vmatpush.msra.mxu0 0.0
      %2052 = vmatpush.msra.mxu0 0.0
      %2053 = vmatpush.msra.mxu0 0.0
      %2054 = vmatpush.msra.mxu0 0.0
      %2055 = vmatpush.msra.mxu0 0.0
      %2056 = vmatpush.msra.mxu0 0.0
      %2057 = vmatpush.msra.mxu0 0.0
      %2058 = vmatpush.msra.mxu0 0.0
      %2059 = vmatpush.msra.mxu0 0.0
      %2060 = vmatpush.msra.mxu0 0.0
      %2061 = vmatpush.msra.mxu0 0.0
      %2062 = vmatpush.msra.mxu0 %v2042
      %2063 = vmatmul.f32.gmra.mxu0 %v2045
      %v2064 = vpop.f32.mrf.mxu0
      %v2065 = vadd.f32 0.0, %v2064
      %2066 = vdwg.mxu0
      %2067 = vrot.lane.b32.xlu0 %v129, 56
      %v2068 = vpop.permute.xlu0 %2067
      %v2071 = vsel %vm139, %v1826, 0
      %2073 = vmatpush.msra.mxu0 0.0
      %2074 = vmatpush.msra.mxu0 0.0
      %2075 = vmatpush.msra.mxu0 0.0
      %2076 = vmatpush.msra.mxu0 0.0
      %2077 = vmatpush.msra.mxu0 0.0
      %2078 = vmatpush.msra.mxu0 0.0
      %2079 = vmatpush.msra.mxu0 0.0
      %2080 = vmatpush.msra.mxu0 0.0
      %2081 = vmatpush.msra.mxu0 0.0
      %2082 = vmatpush.msra.mxu0 0.0
      %2083 = vmatpush.msra.mxu0 0.0
      %2084 = vmatpush.msra.mxu0 0.0
      %2085 = vmatpush.msra.mxu0 0.0
      %2086 = vmatpush.msra.mxu0 0.0
      %2087 = vmatpush.msra.mxu0 0.0
      %2088 = vmatpush.msra.mxu0 %v2068
      %2089 = vmatmul.f32.gmra.mxu0 %v2071
      %v2090 = vpop.f32.mrf.mxu0
      %v2091 = vadd.f32 0.0, %v2090
      %2092 = vdwg.mxu0
      %2093 = vrot.lane.b32.xlu0 %v130, 56
      %v2094 = vpop.permute.xlu0 %2093
      %v2097 = vsel %vm139, %v1827, 0
      %2099 = vmatpush.msra.mxu0 0.0
      %2100 = vmatpush.msra.mxu0 0.0
      %2101 = vmatpush.msra.mxu0 0.0
      %2102 = vmatpush.msra.mxu0 0.0
      %2103 = vmatpush.msra.mxu0 0.0
      %2104 = vmatpush.msra.mxu0 0.0
      %2105 = vmatpush.msra.mxu0 0.0
      %2106 = vmatpush.msra.mxu0 0.0
      %2107 = vmatpush.msra.mxu0 0.0
      %2108 = vmatpush.msra.mxu0 0.0
      %2109 = vmatpush.msra.mxu0 0.0
      %2110 = vmatpush.msra.mxu0 0.0
      %2111 = vmatpush.msra.mxu0 0.0
      %2112 = vmatpush.msra.mxu0 0.0
      %2113 = vmatpush.msra.mxu0 0.0
      %2114 = vmatpush.msra.mxu0 %v2094
      %2115 = vmatmul.f32.gmra.mxu0 %v2097
      %v2116 = vpop.f32.mrf.mxu0
      %v2117 = vadd.f32 0.0, %v2116
      %2118 = vdwg.mxu0
      %2119 = vrot.lane.b32.xlu0 %v131, 56
      %v2120 = vpop.permute.xlu0 %2119
      %v2123 = vsel %vm139, %v1828, 0
      %2125 = vmatpush.msra.mxu0 0.0
      %2126 = vmatpush.msra.mxu0 0.0
      %2127 = vmatpush.msra.mxu0 0.0
      %2128 = vmatpush.msra.mxu0 0.0
      %2129 = vmatpush.msra.mxu0 0.0
      %2130 = vmatpush.msra.mxu0 0.0
      %2131 = vmatpush.msra.mxu0 0.0
      %2132 = vmatpush.msra.mxu0 0.0
      %2133 = vmatpush.msra.mxu0 0.0
      %2134 = vmatpush.msra.mxu0 0.0
      %2135 = vmatpush.msra.mxu0 0.0
      %2136 = vmatpush.msra.mxu0 0.0
      %2137 = vmatpush.msra.mxu0 0.0
      %2138 = vmatpush.msra.mxu0 0.0
      %2139 = vmatpush.msra.mxu0 0.0
      %2140 = vmatpush.msra.mxu0 %v2120
      %2141 = vmatmul.f32.gmra.mxu0 %v2123
      %v2142 = vpop.f32.mrf.mxu0
      %v2143 = vadd.f32 0.0, %v2142
      %2144 = vdwg.mxu0
      %2145 = vrot.lane.b32.xlu0 %v132, 56
      %v2146 = vpop.permute.xlu0 %2145
      %v2149 = vsel %vm139, %v1829, 0
      %2151 = vmatpush.msra.mxu0 0.0
      %2152 = vmatpush.msra.mxu0 0.0
      %2153 = vmatpush.msra.mxu0 0.0
      %2154 = vmatpush.msra.mxu0 0.0
      %2155 = vmatpush.msra.mxu0 0.0
      %2156 = vmatpush.msra.mxu0 0.0
      %2157 = vmatpush.msra.mxu0 0.0
      %2158 = vmatpush.msra.mxu0 0.0
      %2159 = vmatpush.msra.mxu0 0.0
      %2160 = vmatpush.msra.mxu0 0.0
      %2161 = vmatpush.msra.mxu0 0.0
      %2162 = vmatpush.msra.mxu0 0.0
      %2163 = vmatpush.msra.mxu0 0.0
      %2164 = vmatpush.msra.mxu0 0.0
      %2165 = vmatpush.msra.mxu0 0.0
      %2166 = vmatpush.msra.mxu0 %v2146
      %2167 = vmatmul.f32.gmra.mxu0 %v2149
      %v2168 = vpop.f32.mrf.mxu0
      %v2169 = vadd.f32 0.0, %v2168
      %2170 = vdwg.mxu0
      %2171 = vrot.lane.b32.xlu0 %v133, 56
      %v2172 = vpop.permute.xlu0 %2171
      %v2175 = vsel %vm139, %v1830, 0
      %2177 = vmatpush.msra.mxu0 0.0
      %2178 = vmatpush.msra.mxu0 0.0
      %2179 = vmatpush.msra.mxu0 0.0
      %2180 = vmatpush.msra.mxu0 0.0
      %2181 = vmatpush.msra.mxu0 0.0
      %2182 = vmatpush.msra.mxu0 0.0
      %2183 = vmatpush.msra.mxu0 0.0
      %2184 = vmatpush.msra.mxu0 0.0
      %2185 = vmatpush.msra.mxu0 0.0
      %2186 = vmatpush.msra.mxu0 0.0
      %2187 = vmatpush.msra.mxu0 0.0
      %2188 = vmatpush.msra.mxu0 0.0
      %2189 = vmatpush.msra.mxu0 0.0
      %2190 = vmatpush.msra.mxu0 0.0
      %2191 = vmatpush.msra.mxu0 0.0
      %2192 = vmatpush.msra.mxu0 %v2172
      %2193 = vmatmul.f32.gmra.mxu0 %v2175
      %v2194 = vpop.f32.mrf.mxu0
      %v2195 = vadd.f32 0.0, %v2194
      %2196 = vdwg.mxu0
      %2197 = vrot.lane.b32.xlu0 %v134, 56
      %v2198 = vpop.permute.xlu0 %2197
      %v2201 = vsel %vm139, %v1831, 0
      %2203 = vmatpush.msra.mxu0 0.0
      %2204 = vmatpush.msra.mxu0 0.0
      %2205 = vmatpush.msra.mxu0 0.0
      %2206 = vmatpush.msra.mxu0 0.0
      %2207 = vmatpush.msra.mxu0 0.0
      %2208 = vmatpush.msra.mxu0 0.0
      %2209 = vmatpush.msra.mxu0 0.0
      %2210 = vmatpush.msra.mxu0 0.0
      %2211 = vmatpush.msra.mxu0 0.0
      %2212 = vmatpush.msra.mxu0 0.0
      %2213 = vmatpush.msra.mxu0 0.0
      %2214 = vmatpush.msra.mxu0 0.0
      %2215 = vmatpush.msra.mxu0 0.0
      %2216 = vmatpush.msra.mxu0 0.0
      %2217 = vmatpush.msra.mxu0 0.0
      %2218 = vmatpush.msra.mxu0 %v2198
      %2219 = vmatmul.f32.gmra.mxu0 %v2201
      %v2220 = vpop.f32.mrf.mxu0
      %v2221 = vadd.f32 0.0, %v2220
      %2222 = vdwg.mxu0
      %2223 = vrot.lane.b32.xlu0 %v135, 56
      %v2224 = vpop.permute.xlu0 %2223
      %v2227 = vsel %vm139, %v1832, 0
      %2229 = vmatpush.msra.mxu0 0.0
      %2230 = vmatpush.msra.mxu0 0.0
      %2231 = vmatpush.msra.mxu0 0.0
      %2232 = vmatpush.msra.mxu0 0.0
      %2233 = vmatpush.msra.mxu0 0.0
      %2234 = vmatpush.msra.mxu0 0.0
      %2235 = vmatpush.msra.mxu0 0.0
      %2236 = vmatpush.msra.mxu0 0.0
      %2237 = vmatpush.msra.mxu0 0.0
      %2238 = vmatpush.msra.mxu0 0.0
      %2239 = vmatpush.msra.mxu0 0.0
      %2240 = vmatpush.msra.mxu0 0.0
      %2241 = vmatpush.msra.mxu0 0.0
      %2242 = vmatpush.msra.mxu0 0.0
      %2243 = vmatpush.msra.mxu0 0.0
      %2244 = vmatpush.msra.mxu0 %v2224
      %2245 = vmatmul.f32.gmra.mxu0 %v2227
      %v2246 = vpop.f32.mrf.mxu0
      %v2247 = vadd.f32 0.0, %v2246
      %2248 = vdwg.mxu0
      %2265 = vrot.lane.b32.xlu0 %v1857, 8
      %v2266 = vpop.permute.xlu0 %2265
      %2267 = vrot.lane.b32.xlu0 %v1883, 8
      %v2268 = vpop.permute.xlu0 %2267
      %2269 = vrot.lane.b32.xlu0 %v1909, 8
      %v2270 = vpop.permute.xlu0 %2269
      %2271 = vrot.lane.b32.xlu0 %v1935, 8
      %v2272 = vpop.permute.xlu0 %2271
      %2273 = vrot.lane.b32.xlu0 %v1961, 8
      %v2274 = vpop.permute.xlu0 %2273
      %2275 = vrot.lane.b32.xlu0 %v1987, 8
      %v2276 = vpop.permute.xlu0 %2275
      %2277 = vrot.lane.b32.xlu0 %v2013, 8
      %v2278 = vpop.permute.xlu0 %2277
      %2279 = vrot.lane.b32.xlu0 %v2039, 8
      %v2280 = vpop.permute.xlu0 %2279
      %2281 = vrot.lane.b32.xlu0 %v2065, 8
      %v2282 = vpop.permute.xlu0 %2281
      %2283 = vrot.lane.b32.xlu0 %v2091, 8
      %v2284 = vpop.permute.xlu0 %2283
      %2285 = vrot.lane.b32.xlu0 %v2117, 8
      %v2286 = vpop.permute.xlu0 %2285
      %2287 = vrot.lane.b32.xlu0 %v2143, 8
      %v2288 = vpop.permute.xlu0 %2287
      %2289 = vrot.lane.b32.xlu0 %v2169, 8
      %v2290 = vpop.permute.xlu0 %2289
      %2291 = vrot.lane.b32.xlu0 %v2195, 8
      %v2292 = vpop.permute.xlu0 %2291
      %2293 = vrot.lane.b32.xlu0 %v2221, 8
      %v2294 = vpop.permute.xlu0 %2293
      %2295 = vrot.lane.b32.xlu0 %v2247, 8
      %v2296 = vpop.permute.xlu0 %2295
      %vm2313 = vcmask 130112
      %2314 = vst.msk [vmem:[%s118] sm:$0xff] %vm2313, %v2266
      %2315 = vst.msk [vmem:[%s118 + $0x8] sm:$0xff] %vm2313, %v2268
      %2316 = vst.msk [vmem:[%s118 + $0x10] sm:$0xff] %vm2313, %v2270
      %2317 = vst.msk [vmem:[%s118 + $0x18] sm:$0xff] %vm2313, %v2272
      %2318 = vst.msk [vmem:[%s118 + $0x20] sm:$0xff] %vm2313, %v2274
      %2319 = vst.msk [vmem:[%s118 + $0x28] sm:$0xff] %vm2313, %v2276
      %2320 = vst.msk [vmem:[%s118 + $0x30] sm:$0xff] %vm2313, %v2278
      %2321 = vst.msk [vmem:[%s118 + $0x38] sm:$0xff] %vm2313, %v2280
      %2322 = vst.msk [vmem:[%s118 + $0x40] sm:$0xff] %vm2313, %v2282
      %2323 = vst.msk [vmem:[%s118 + $0x48] sm:$0xff] %vm2313, %v2284
      %2324 = vst.msk [vmem:[%s118 + $0x50] sm:$0xff] %vm2313, %v2286
      %2325 = vst.msk [vmem:[%s118 + $0x58] sm:$0xff] %vm2313, %v2288
      %2326 = vst.msk [vmem:[%s118 + $0x60] sm:$0xff] %vm2313, %v2290
      %2327 = vst.msk [vmem:[%s118 + $0x68] sm:$0xff] %vm2313, %v2292
      %2328 = vst.msk [vmem:[%s118 + $0x70] sm:$0xff] %vm2313, %v2294
      %2329 = vst.msk [vmem:[%s118 + $0x78] sm:$0xff] %vm2313, %v2296
      %2330 = vrot.lane.b32.xlu0 %v120, 112
      %v2331 = vpop.permute.xlu0 %2330
      %2332 = vrot.lane.b32.xlu0 %v120, 80
      %v2333 = vpop.permute.xlu0 %2332
      %v2334 = vsel %vm139, %v2331, 0
      %v2336 = vsel %vm139, %v2333, 0
      %2338 = vmatpush.xpose.msra.mxu0 0.0
      %2339 = vmatpush.xpose.msra.mxu0 0.0
      %2340 = vmatpush.xpose.msra.mxu0 0.0
      %2341 = vmatpush.xpose.msra.mxu0 0.0
      %2342 = vmatpush.xpose.msra.mxu0 0.0
      %2343 = vmatpush.xpose.msra.mxu0 0.0
      %2344 = vmatpush.xpose.msra.mxu0 0.0
      %2345 = vmatpush.xpose.msra.mxu0 0.0
      %2346 = vmatpush.xpose.msra.mxu0 0.0
      %2347 = vmatpush.xpose.msra.mxu0 0.0
      %2348 = vmatpush.xpose.msra.mxu0 0.0
      %2349 = vmatpush.xpose.msra.mxu0 0.0
      %2350 = vmatpush.xpose.msra.mxu0 0.0
      %2351 = vmatpush.xpose.msra.mxu0 0.0
      %2352 = vmatpush.xpose.msra.mxu0 0.0
      %2353 = vmatpush.xpose.msra.mxu0 %v2336
      %2354 = vmatmul.f32.gmra.mxu0 %v2334
      %v2355 = vpop.f32.mrf.mxu0
      %v2356 = vadd.f32 0.0, %v2355
      %2357 = vdwg.mxu0
      %2358 = vrot.lane.b32.xlu0 %v121, 112
      %v2359 = vpop.permute.xlu0 %2358
      %2360 = vrot.lane.b32.xlu0 %v121, 80
      %v2361 = vpop.permute.xlu0 %2360
      %v2362 = vsel %vm139, %v2359, 0
      %v2364 = vsel %vm139, %v2361, 0
      %2366 = vmatpush.xpose.msra.mxu0 0.0
      %2367 = vmatpush.xpose.msra.mxu0 0.0
      %2368 = vmatpush.xpose.msra.mxu0 0.0
      %2369 = vmatpush.xpose.msra.mxu0 0.0
      %2370 = vmatpush.xpose.msra.mxu0 0.0
      %2371 = vmatpush.xpose.msra.mxu0 0.0
      %2372 = vmatpush.xpose.msra.mxu0 0.0
      %2373 = vmatpush.xpose.msra.mxu0 0.0
      %2374 = vmatpush.xpose.msra.mxu0 0.0
      %2375 = vmatpush.xpose.msra.mxu0 0.0
      %2376 = vmatpush.xpose.msra.mxu0 0.0
      %2377 = vmatpush.xpose.msra.mxu0 0.0
      %2378 = vmatpush.xpose.msra.mxu0 0.0
      %2379 = vmatpush.xpose.msra.mxu0 0.0
      %2380 = vmatpush.xpose.msra.mxu0 0.0
      %2381 = vmatpush.xpose.msra.mxu0 %v2364
      %2382 = vmatmul.f32.gmra.mxu0 %v2362
      %v2383 = vpop.f32.mrf.mxu0
      %v2384 = vadd.f32 0.0, %v2383
      %2385 = vdwg.mxu0
      %2386 = vrot.lane.b32.xlu0 %v122, 112
      %v2387 = vpop.permute.xlu0 %2386
      %2388 = vrot.lane.b32.xlu0 %v122, 80
      %v2389 = vpop.permute.xlu0 %2388
      %v2390 = vsel %vm139, %v2387, 0
      %v2392 = vsel %vm139, %v2389, 0
      %2394 = vmatpush.xpose.msra.mxu0 0.0
      %2395 = vmatpush.xpose.msra.mxu0 0.0
      %2396 = vmatpush.xpose.msra.mxu0 0.0
      %2397 = vmatpush.xpose.msra.mxu0 0.0
      %2398 = vmatpush.xpose.msra.mxu0 0.0
      %2399 = vmatpush.xpose.msra.mxu0 0.0
      %2400 = vmatpush.xpose.msra.mxu0 0.0
      %2401 = vmatpush.xpose.msra.mxu0 0.0
      %2402 = vmatpush.xpose.msra.mxu0 0.0
      %2403 = vmatpush.xpose.msra.mxu0 0.0
      %2404 = vmatpush.xpose.msra.mxu0 0.0
      %2405 = vmatpush.xpose.msra.mxu0 0.0
      %2406 = vmatpush.xpose.msra.mxu0 0.0
      %2407 = vmatpush.xpose.msra.mxu0 0.0
      %2408 = vmatpush.xpose.msra.mxu0 0.0
      %2409 = vmatpush.xpose.msra.mxu0 %v2392
      %2410 = vmatmul.f32.gmra.mxu0 %v2390
      %v2411 = vpop.f32.mrf.mxu0
      %v2412 = vadd.f32 0.0, %v2411
      %2413 = vdwg.mxu0
      %2414 = vrot.lane.b32.xlu0 %v123, 112
      %v2415 = vpop.permute.xlu0 %2414
      %2416 = vrot.lane.b32.xlu0 %v123, 80
      %v2417 = vpop.permute.xlu0 %2416
      %v2418 = vsel %vm139, %v2415, 0
      %v2420 = vsel %vm139, %v2417, 0
      %2422 = vmatpush.xpose.msra.mxu0 0.0
      %2423 = vmatpush.xpose.msra.mxu0 0.0
      %2424 = vmatpush.xpose.msra.mxu0 0.0
      %2425 = vmatpush.xpose.msra.mxu0 0.0
      %2426 = vmatpush.xpose.msra.mxu0 0.0
      %2427 = vmatpush.xpose.msra.mxu0 0.0
      %2428 = vmatpush.xpose.msra.mxu0 0.0
      %2429 = vmatpush.xpose.msra.mxu0 0.0
      %2430 = vmatpush.xpose.msra.mxu0 0.0
      %2431 = vmatpush.xpose.msra.mxu0 0.0
      %2432 = vmatpush.xpose.msra.mxu0 0.0
      %2433 = vmatpush.xpose.msra.mxu0 0.0
      %2434 = vmatpush.xpose.msra.mxu0 0.0
      %2435 = vmatpush.xpose.msra.mxu0 0.0
      %2436 = vmatpush.xpose.msra.mxu0 0.0
      %2437 = vmatpush.xpose.msra.mxu0 %v2420
      %2438 = vmatmul.f32.gmra.mxu0 %v2418
      %v2439 = vpop.f32.mrf.mxu0
      %v2440 = vadd.f32 0.0, %v2439
      %2441 = vdwg.mxu0
      %2442 = vrot.lane.b32.xlu0 %v124, 112
      %v2443 = vpop.permute.xlu0 %2442
      %2444 = vrot.lane.b32.xlu0 %v124, 80
      %v2445 = vpop.permute.xlu0 %2444
      %v2446 = vsel %vm139, %v2443, 0
      %v2448 = vsel %vm139, %v2445, 0
      %2450 = vmatpush.xpose.msra.mxu0 0.0
      %2451 = vmatpush.xpose.msra.mxu0 0.0
      %2452 = vmatpush.xpose.msra.mxu0 0.0
      %2453 = vmatpush.xpose.msra.mxu0 0.0
      %2454 = vmatpush.xpose.msra.mxu0 0.0
      %2455 = vmatpush.xpose.msra.mxu0 0.0
      %2456 = vmatpush.xpose.msra.mxu0 0.0
      %2457 = vmatpush.xpose.msra.mxu0 0.0
      %2458 = vmatpush.xpose.msra.mxu0 0.0
      %2459 = vmatpush.xpose.msra.mxu0 0.0
      %2460 = vmatpush.xpose.msra.mxu0 0.0
      %2461 = vmatpush.xpose.msra.mxu0 0.0
      %2462 = vmatpush.xpose.msra.mxu0 0.0
      %2463 = vmatpush.xpose.msra.mxu0 0.0
      %2464 = vmatpush.xpose.msra.mxu0 0.0
      %2465 = vmatpush.xpose.msra.mxu0 %v2448
      %2466 = vmatmul.f32.gmra.mxu0 %v2446
      %v2467 = vpop.f32.mrf.mxu0
      %v2468 = vadd.f32 0.0, %v2467
      %2469 = vdwg.mxu0
      %2470 = vrot.lane.b32.xlu0 %v125, 112
      %v2471 = vpop.permute.xlu0 %2470
      %2472 = vrot.lane.b32.xlu0 %v125, 80
      %v2473 = vpop.permute.xlu0 %2472
      %v2474 = vsel %vm139, %v2471, 0
      %v2476 = vsel %vm139, %v2473, 0
      %2478 = vmatpush.xpose.msra.mxu0 0.0
      %2479 = vmatpush.xpose.msra.mxu0 0.0
      %2480 = vmatpush.xpose.msra.mxu0 0.0
      %2481 = vmatpush.xpose.msra.mxu0 0.0
      %2482 = vmatpush.xpose.msra.mxu0 0.0
      %2483 = vmatpush.xpose.msra.mxu0 0.0
      %2484 = vmatpush.xpose.msra.mxu0 0.0
      %2485 = vmatpush.xpose.msra.mxu0 0.0
      %2486 = vmatpush.xpose.msra.mxu0 0.0
      %2487 = vmatpush.xpose.msra.mxu0 0.0
      %2488 = vmatpush.xpose.msra.mxu0 0.0
      %2489 = vmatpush.xpose.msra.mxu0 0.0
      %2490 = vmatpush.xpose.msra.mxu0 0.0
      %2491 = vmatpush.xpose.msra.mxu0 0.0
      %2492 = vmatpush.xpose.msra.mxu0 0.0
      %2493 = vmatpush.xpose.msra.mxu0 %v2476
      %2494 = vmatmul.f32.gmra.mxu0 %v2474
      %v2495 = vpop.f32.mrf.mxu0
      %v2496 = vadd.f32 0.0, %v2495
      %2497 = vdwg.mxu0
      %2498 = vrot.lane.b32.xlu0 %v126, 112
      %v2499 = vpop.permute.xlu0 %2498
      %2500 = vrot.lane.b32.xlu0 %v126, 80
      %v2501 = vpop.permute.xlu0 %2500
      %v2502 = vsel %vm139, %v2499, 0
      %v2504 = vsel %vm139, %v2501, 0
      %2506 = vmatpush.xpose.msra.mxu0 0.0
      %2507 = vmatpush.xpose.msra.mxu0 0.0
      %2508 = vmatpush.xpose.msra.mxu0 0.0
      %2509 = vmatpush.xpose.msra.mxu0 0.0
      %2510 = vmatpush.xpose.msra.mxu0 0.0
      %2511 = vmatpush.xpose.msra.mxu0 0.0
      %2512 = vmatpush.xpose.msra.mxu0 0.0
      %2513 = vmatpush.xpose.msra.mxu0 0.0
      %2514 = vmatpush.xpose.msra.mxu0 0.0
      %2515 = vmatpush.xpose.msra.mxu0 0.0
      %2516 = vmatpush.xpose.msra.mxu0 0.0
      %2517 = vmatpush.xpose.msra.mxu0 0.0
      %2518 = vmatpush.xpose.msra.mxu0 0.0
      %2519 = vmatpush.xpose.msra.mxu0 0.0
      %2520 = vmatpush.xpose.msra.mxu0 0.0
      %2521 = vmatpush.xpose.msra.mxu0 %v2504
      %2522 = vmatmul.f32.gmra.mxu0 %v2502
      %v2523 = vpop.f32.mrf.mxu0
      %v2524 = vadd.f32 0.0, %v2523
      %2525 = vdwg.mxu0
      %2526 = vrot.lane.b32.xlu0 %v127, 112
      %v2527 = vpop.permute.xlu0 %2526
      %2528 = vrot.lane.b32.xlu0 %v127, 80
      %v2529 = vpop.permute.xlu0 %2528
      %v2530 = vsel %vm139, %v2527, 0
      %v2532 = vsel %vm139, %v2529, 0
      %2534 = vmatpush.xpose.msra.mxu0 0.0
      %2535 = vmatpush.xpose.msra.mxu0 0.0
      %2536 = vmatpush.xpose.msra.mxu0 0.0
      %2537 = vmatpush.xpose.msra.mxu0 0.0
      %2538 = vmatpush.xpose.msra.mxu0 0.0
      %2539 = vmatpush.xpose.msra.mxu0 0.0
      %2540 = vmatpush.xpose.msra.mxu0 0.0
      %2541 = vmatpush.xpose.msra.mxu0 0.0
      %2542 = vmatpush.xpose.msra.mxu0 0.0
      %2543 = vmatpush.xpose.msra.mxu0 0.0
      %2544 = vmatpush.xpose.msra.mxu0 0.0
      %2545 = vmatpush.xpose.msra.mxu0 0.0
      %2546 = vmatpush.xpose.msra.mxu0 0.0
      %2547 = vmatpush.xpose.msra.mxu0 0.0
      %2548 = vmatpush.xpose.msra.mxu0 0.0
      %2549 = vmatpush.xpose.msra.mxu0 %v2532
      %2550 = vmatmul.f32.gmra.mxu0 %v2530
      %v2551 = vpop.f32.mrf.mxu0
      %v2552 = vadd.f32 0.0, %v2551
      %2553 = vdwg.mxu0
      %2554 = vrot.lane.b32.xlu0 %v128, 112
      %v2555 = vpop.permute.xlu0 %2554
      %2556 = vrot.lane.b32.xlu0 %v128, 80
      %v2557 = vpop.permute.xlu0 %2556
      %v2558 = vsel %vm139, %v2555, 0
      %v2560 = vsel %vm139, %v2557, 0
      %2562 = vmatpush.xpose.msra.mxu0 0.0
      %2563 = vmatpush.xpose.msra.mxu0 0.0
      %2564 = vmatpush.xpose.msra.mxu0 0.0
      %2565 = vmatpush.xpose.msra.mxu0 0.0
      %2566 = vmatpush.xpose.msra.mxu0 0.0
      %2567 = vmatpush.xpose.msra.mxu0 0.0
      %2568 = vmatpush.xpose.msra.mxu0 0.0
      %2569 = vmatpush.xpose.msra.mxu0 0.0
      %2570 = vmatpush.xpose.msra.mxu0 0.0
      %2571 = vmatpush.xpose.msra.mxu0 0.0
      %2572 = vmatpush.xpose.msra.mxu0 0.0
      %2573 = vmatpush.xpose.msra.mxu0 0.0
      %2574 = vmatpush.xpose.msra.mxu0 0.0
      %2575 = vmatpush.xpose.msra.mxu0 0.0
      %2576 = vmatpush.xpose.msra.mxu0 0.0
      %2577 = vmatpush.xpose.msra.mxu0 %v2560
      %2578 = vmatmul.f32.gmra.mxu0 %v2558
      %v2579 = vpop.f32.mrf.mxu0
      %v2580 = vadd.f32 0.0, %v2579
      %2581 = vdwg.mxu0
      %2582 = vrot.lane.b32.xlu0 %v129, 112
      %v2583 = vpop.permute.xlu0 %2582
      %2584 = vrot.lane.b32.xlu0 %v129, 80
      %v2585 = vpop.permute.xlu0 %2584
      %v2586 = vsel %vm139, %v2583, 0
      %v2588 = vsel %vm139, %v2585, 0
      %2590 = vmatpush.xpose.msra.mxu0 0.0
      %2591 = vmatpush.xpose.msra.mxu0 0.0
      %2592 = vmatpush.xpose.msra.mxu0 0.0
      %2593 = vmatpush.xpose.msra.mxu0 0.0
      %2594 = vmatpush.xpose.msra.mxu0 0.0
      %2595 = vmatpush.xpose.msra.mxu0 0.0
      %2596 = vmatpush.xpose.msra.mxu0 0.0
      %2597 = vmatpush.xpose.msra.mxu0 0.0
      %2598 = vmatpush.xpose.msra.mxu0 0.0
      %2599 = vmatpush.xpose.msra.mxu0 0.0
      %2600 = vmatpush.xpose.msra.mxu0 0.0
      %2601 = vmatpush.xpose.msra.mxu0 0.0
      %2602 = vmatpush.xpose.msra.mxu0 0.0
      %2603 = vmatpush.xpose.msra.mxu0 0.0
      %2604 = vmatpush.xpose.msra.mxu0 0.0
      %2605 = vmatpush.xpose.msra.mxu0 %v2588
      %2606 = vmatmul.f32.gmra.mxu0 %v2586
      %v2607 = vpop.f32.mrf.mxu0
      %v2608 = vadd.f32 0.0, %v2607
      %2609 = vdwg.mxu0
      %2610 = vrot.lane.b32.xlu0 %v130, 112
      %v2611 = vpop.permute.xlu0 %2610
      %2612 = vrot.lane.b32.xlu0 %v130, 80
      %v2613 = vpop.permute.xlu0 %2612
      %v2614 = vsel %vm139, %v2611, 0
      %v2616 = vsel %vm139, %v2613, 0
      %2618 = vmatpush.xpose.msra.mxu0 0.0
      %2619 = vmatpush.xpose.msra.mxu0 0.0
      %2620 = vmatpush.xpose.msra.mxu0 0.0
      %2621 = vmatpush.xpose.msra.mxu0 0.0
      %2622 = vmatpush.xpose.msra.mxu0 0.0
      %2623 = vmatpush.xpose.msra.mxu0 0.0
      %2624 = vmatpush.xpose.msra.mxu0 0.0
      %2625 = vmatpush.xpose.msra.mxu0 0.0
      %2626 = vmatpush.xpose.msra.mxu0 0.0
      %2627 = vmatpush.xpose.msra.mxu0 0.0
      %2628 = vmatpush.xpose.msra.mxu0 0.0
      %2629 = vmatpush.xpose.msra.mxu0 0.0
      %2630 = vmatpush.xpose.msra.mxu0 0.0
      %2631 = vmatpush.xpose.msra.mxu0 0.0
      %2632 = vmatpush.xpose.msra.mxu0 0.0
      %2633 = vmatpush.xpose.msra.mxu0 %v2616
      %2634 = vmatmul.f32.gmra.mxu0 %v2614
      %v2635 = vpop.f32.mrf.mxu0
      %v2636 = vadd.f32 0.0, %v2635
      %2637 = vdwg.mxu0
      %2638 = vrot.lane.b32.xlu0 %v131, 112
      %v2639 = vpop.permute.xlu0 %2638
      %2640 = vrot.lane.b32.xlu0 %v131, 80
      %v2641 = vpop.permute.xlu0 %2640
      %v2642 = vsel %vm139, %v2639, 0
      %v2644 = vsel %vm139, %v2641, 0
      %2646 = vmatpush.xpose.msra.mxu0 0.0
      %2647 = vmatpush.xpose.msra.mxu0 0.0
      %2648 = vmatpush.xpose.msra.mxu0 0.0
      %2649 = vmatpush.xpose.msra.mxu0 0.0
      %2650 = vmatpush.xpose.msra.mxu0 0.0
      %2651 = vmatpush.xpose.msra.mxu0 0.0
      %2652 = vmatpush.xpose.msra.mxu0 0.0
      %2653 = vmatpush.xpose.msra.mxu0 0.0
      %2654 = vmatpush.xpose.msra.mxu0 0.0
      %2655 = vmatpush.xpose.msra.mxu0 0.0
      %2656 = vmatpush.xpose.msra.mxu0 0.0
      %2657 = vmatpush.xpose.msra.mxu0 0.0
      %2658 = vmatpush.xpose.msra.mxu0 0.0
      %2659 = vmatpush.xpose.msra.mxu0 0.0
      %2660 = vmatpush.xpose.msra.mxu0 0.0
      %2661 = vmatpush.xpose.msra.mxu0 %v2644
      %2662 = vmatmul.f32.gmra.mxu0 %v2642
      %v2663 = vpop.f32.mrf.mxu0
      %v2664 = vadd.f32 0.0, %v2663
      %2665 = vdwg.mxu0
      %2666 = vrot.lane.b32.xlu0 %v132, 112
      %v2667 = vpop.permute.xlu0 %2666
      %2668 = vrot.lane.b32.xlu0 %v132, 80
      %v2669 = vpop.permute.xlu0 %2668
      %v2670 = vsel %vm139, %v2667, 0
      %v2672 = vsel %vm139, %v2669, 0
      %2674 = vmatpush.xpose.msra.mxu0 0.0
      %2675 = vmatpush.xpose.msra.mxu0 0.0
      %2676 = vmatpush.xpose.msra.mxu0 0.0
      %2677 = vmatpush.xpose.msra.mxu0 0.0
      %2678 = vmatpush.xpose.msra.mxu0 0.0
      %2679 = vmatpush.xpose.msra.mxu0 0.0
      %2680 = vmatpush.xpose.msra.mxu0 0.0
      %2681 = vmatpush.xpose.msra.mxu0 0.0
      %2682 = vmatpush.xpose.msra.mxu0 0.0
      %2683 = vmatpush.xpose.msra.mxu0 0.0
      %2684 = vmatpush.xpose.msra.mxu0 0.0
      %2685 = vmatpush.xpose.msra.mxu0 0.0
      %2686 = vmatpush.xpose.msra.mxu0 0.0
      %2687 = vmatpush.xpose.msra.mxu0 0.0
      %2688 = vmatpush.xpose.msra.mxu0 0.0
      %2689 = vmatpush.xpose.msra.mxu0 %v2672
      %2690 = vmatmul.f32.gmra.mxu0 %v2670
      %v2691 = vpop.f32.mrf.mxu0
      %v2692 = vadd.f32 0.0, %v2691
      %2693 = vdwg.mxu0
      %2694 = vrot.lane.b32.xlu0 %v133, 112
      %v2695 = vpop.permute.xlu0 %2694
      %2696 = vrot.lane.b32.xlu0 %v133, 80
      %v2697 = vpop.permute.xlu0 %2696
      %v2698 = vsel %vm139, %v2695, 0
      %v2700 = vsel %vm139, %v2697, 0
      %2702 = vmatpush.xpose.msra.mxu0 0.0
      %2703 = vmatpush.xpose.msra.mxu0 0.0
      %2704 = vmatpush.xpose.msra.mxu0 0.0
      %2705 = vmatpush.xpose.msra.mxu0 0.0
      %2706 = vmatpush.xpose.msra.mxu0 0.0
      %2707 = vmatpush.xpose.msra.mxu0 0.0
      %2708 = vmatpush.xpose.msra.mxu0 0.0
      %2709 = vmatpush.xpose.msra.mxu0 0.0
      %2710 = vmatpush.xpose.msra.mxu0 0.0
      %2711 = vmatpush.xpose.msra.mxu0 0.0
      %2712 = vmatpush.xpose.msra.mxu0 0.0
      %2713 = vmatpush.xpose.msra.mxu0 0.0
      %2714 = vmatpush.xpose.msra.mxu0 0.0
      %2715 = vmatpush.xpose.msra.mxu0 0.0
      %2716 = vmatpush.xpose.msra.mxu0 0.0
      %2717 = vmatpush.xpose.msra.mxu0 %v2700
      %2718 = vmatmul.f32.gmra.mxu0 %v2698
      %v2719 = vpop.f32.mrf.mxu0
      %v2720 = vadd.f32 0.0, %v2719
      %2721 = vdwg.mxu0
      %2722 = vrot.lane.b32.xlu0 %v134, 112
      %v2723 = vpop.permute.xlu0 %2722
      %2724 = vrot.lane.b32.xlu0 %v134, 80
      %v2725 = vpop.permute.xlu0 %2724
      %v2726 = vsel %vm139, %v2723, 0
      %v2728 = vsel %vm139, %v2725, 0
      %2730 = vmatpush.xpose.msra.mxu0 0.0
      %2731 = vmatpush.xpose.msra.mxu0 0.0
      %2732 = vmatpush.xpose.msra.mxu0 0.0
      %2733 = vmatpush.xpose.msra.mxu0 0.0
      %2734 = vmatpush.xpose.msra.mxu0 0.0
      %2735 = vmatpush.xpose.msra.mxu0 0.0
      %2736 = vmatpush.xpose.msra.mxu0 0.0
      %2737 = vmatpush.xpose.msra.mxu0 0.0
      %2738 = vmatpush.xpose.msra.mxu0 0.0
      %2739 = vmatpush.xpose.msra.mxu0 0.0
      %2740 = vmatpush.xpose.msra.mxu0 0.0
      %2741 = vmatpush.xpose.msra.mxu0 0.0
      %2742 = vmatpush.xpose.msra.mxu0 0.0
      %2743 = vmatpush.xpose.msra.mxu0 0.0
      %2744 = vmatpush.xpose.msra.mxu0 0.0
      %2745 = vmatpush.xpose.msra.mxu0 %v2728
      %2746 = vmatmul.f32.gmra.mxu0 %v2726
      %v2747 = vpop.f32.mrf.mxu0
      %v2748 = vadd.f32 0.0, %v2747
      %2749 = vdwg.mxu0
      %2750 = vrot.lane.b32.xlu0 %v135, 112
      %v2751 = vpop.permute.xlu0 %2750
      %2752 = vrot.lane.b32.xlu0 %v135, 80
      %v2753 = vpop.permute.xlu0 %2752
      %v2754 = vsel %vm139, %v2751, 0
      %v2756 = vsel %vm139, %v2753, 0
      %2758 = vmatpush.xpose.msra.mxu0 0.0
      %2759 = vmatpush.xpose.msra.mxu0 0.0
      %2760 = vmatpush.xpose.msra.mxu0 0.0
      %2761 = vmatpush.xpose.msra.mxu0 0.0
      %2762 = vmatpush.xpose.msra.mxu0 0.0
      %2763 = vmatpush.xpose.msra.mxu0 0.0
      %2764 = vmatpush.xpose.msra.mxu0 0.0
      %2765 = vmatpush.xpose.msra.mxu0 0.0
      %2766 = vmatpush.xpose.msra.mxu0 0.0
      %2767 = vmatpush.xpose.msra.mxu0 0.0
      %2768 = vmatpush.xpose.msra.mxu0 0.0
      %2769 = vmatpush.xpose.msra.mxu0 0.0
      %2770 = vmatpush.xpose.msra.mxu0 0.0
      %2771 = vmatpush.xpose.msra.mxu0 0.0
      %2772 = vmatpush.xpose.msra.mxu0 0.0
      %2773 = vmatpush.xpose.msra.mxu0 %v2756
      %2774 = vmatmul.f32.gmra.mxu0 %v2754
      %v2775 = vpop.f32.mrf.mxu0
      %v2776 = vadd.f32 0.0, %v2775
      %2777 = vdwg.mxu0
      %v2778 = vmul.f32 %v2356, 0.35355338
      %v2779 = vmul.f32 %v2384, 0.35355338
      %v2780 = vmul.f32 %v2412, 0.35355338
      %v2781 = vmul.f32 %v2440, 0.35355338
      %v2782 = vmul.f32 %v2468, 0.35355338
      %v2783 = vmul.f32 %v2496, 0.35355338
      %v2784 = vmul.f32 %v2524, 0.35355338
      %v2785 = vmul.f32 %v2552, 0.35355338
      %v2786 = vmul.f32 %v2580, 0.35355338
      %v2787 = vmul.f32 %v2608, 0.35355338
      %v2788 = vmul.f32 %v2636, 0.35355338
      %v2789 = vmul.f32 %v2664, 0.35355338
      %v2790 = vmul.f32 %v2692, 0.35355338
      %v2791 = vmul.f32 %v2720, 0.35355338
      %v2792 = vmul.f32 %v2748, 0.35355338
      %v2793 = vmul.f32 %v2776, 0.35355338
      %v2794 = vsel %vm139, %v2778, -inf
      %2795 = vmax.xlane.f32.xlu0 %v2794
      %v2796 = vpop.xlane.xlu0 %2795
      %v2797 = vsel %vm139, %v2779, -inf
      %2798 = vmax.xlane.f32.xlu0 %v2797
      %v2799 = vpop.xlane.xlu0 %2798
      %v2800 = vsel %vm139, %v2780, -inf
      %2801 = vmax.xlane.f32.xlu0 %v2800
      %v2802 = vpop.xlane.xlu0 %2801
      %v2803 = vsel %vm139, %v2781, -inf
      %2804 = vmax.xlane.f32.xlu0 %v2803
      %v2805 = vpop.xlane.xlu0 %2804
      %v2806 = vsel %vm139, %v2782, -inf
      %2807 = vmax.xlane.f32.xlu0 %v2806
      %v2808 = vpop.xlane.xlu0 %2807
      %v2809 = vsel %vm139, %v2783, -inf
      %2810 = vmax.xlane.f32.xlu0 %v2809
      %v2811 = vpop.xlane.xlu0 %2810
      %v2812 = vsel %vm139, %v2784, -inf
      %2813 = vmax.xlane.f32.xlu0 %v2812
      %v2814 = vpop.xlane.xlu0 %2813
      %v2815 = vsel %vm139, %v2785, -inf
      %2816 = vmax.xlane.f32.xlu0 %v2815
      %v2817 = vpop.xlane.xlu0 %2816
      %v2818 = vsel %vm139, %v2786, -inf
      %2819 = vmax.xlane.f32.xlu0 %v2818
      %v2820 = vpop.xlane.xlu0 %2819
      %v2821 = vsel %vm139, %v2787, -inf
      %2822 = vmax.xlane.f32.xlu0 %v2821
      %v2823 = vpop.xlane.xlu0 %2822
      %v2824 = vsel %vm139, %v2788, -inf
      %2825 = vmax.xlane.f32.xlu0 %v2824
      %v2826 = vpop.xlane.xlu0 %2825
      %v2827 = vsel %vm139, %v2789, -inf
      %2828 = vmax.xlane.f32.xlu0 %v2827
      %v2829 = vpop.xlane.xlu0 %2828
      %v2830 = vsel %vm139, %v2790, -inf
      %2831 = vmax.xlane.f32.xlu0 %v2830
      %v2832 = vpop.xlane.xlu0 %2831
      %v2833 = vsel %vm139, %v2791, -inf
      %2834 = vmax.xlane.f32.xlu0 %v2833
      %v2835 = vpop.xlane.xlu0 %2834
      %v2836 = vsel %vm139, %v2792, -inf
      %2837 = vmax.xlane.f32.xlu0 %v2836
      %v2838 = vpop.xlane.xlu0 %2837
      %v2839 = vsel %vm139, %v2793, -inf
      %2840 = vmax.xlane.f32.xlu0 %v2839
      %v2841 = vpop.xlane.xlu0 %2840
      %v2842 = vsub.f32 %v2778, %v2796
      %v2843 = vsub.f32 %v2779, %v2799
      %v2844 = vsub.f32 %v2780, %v2802
      %v2845 = vsub.f32 %v2781, %v2805
      %v2846 = vsub.f32 %v2782, %v2808
      %v2847 = vsub.f32 %v2783, %v2811
      %v2848 = vsub.f32 %v2784, %v2814
      %v2849 = vsub.f32 %v2785, %v2817
      %v2850 = vsub.f32 %v2786, %v2820
      %v2851 = vsub.f32 %v2787, %v2823
      %v2852 = vsub.f32 %v2788, %v2826
      %v2853 = vsub.f32 %v2789, %v2829
      %v2854 = vsub.f32 %v2790, %v2832
      %v2855 = vsub.f32 %v2791, %v2835
      %v2856 = vsub.f32 %v2792, %v2838
      %v2857 = vsub.f32 %v2793, %v2841
      %v2858 = vmul.f32 %v2842, 1.442695
      %v2859 = vpow.pop %v2858
      %v2860 = vmul.f32 %v2843, 1.442695
      %v2861 = vpow.pop %v2860
      %v2862 = vmul.f32 %v2844, 1.442695
      %v2863 = vpow.pop %v2862
      %v2864 = vmul.f32 %v2845, 1.442695
      %v2865 = vpow.pop %v2864
      %v2866 = vmul.f32 %v2846, 1.442695
      %v2867 = vpow.pop %v2866
      %v2868 = vmul.f32 %v2847, 1.442695
      %v2869 = vpow.pop %v2868
      %v2870 = vmul.f32 %v2848, 1.442695
      %v2871 = vpow.pop %v2870
      %v2872 = vmul.f32 %v2849, 1.442695
      %v2873 = vpow.pop %v2872
      %v2874 = vmul.f32 %v2850, 1.442695
      %v2875 = vpow.pop %v2874
      %v2876 = vmul.f32 %v2851, 1.442695
      %v2877 = vpow.pop %v2876
      %v2878 = vmul.f32 %v2852, 1.442695
      %v2879 = vpow.pop %v2878
      %v2880 = vmul.f32 %v2853, 1.442695
      %v2881 = vpow.pop %v2880
      %v2882 = vmul.f32 %v2854, 1.442695
      %v2883 = vpow.pop %v2882
      %v2884 = vmul.f32 %v2855, 1.442695
      %v2885 = vpow.pop %v2884
      %v2886 = vmul.f32 %v2856, 1.442695
      %v2887 = vpow.pop %v2886
      %v2888 = vmul.f32 %v2857, 1.442695
      %v2889 = vpow.pop %v2888
      %v2890 = vsel %vm139, %v2859, 0.0
      %2891 = vadd.xlane.f32.xlu0 %v2890
      %v2892 = vpop.xlane.xlu0 %2891
      %v2893 = vsel %vm139, %v2861, 0.0
      %2894 = vadd.xlane.f32.xlu0 %v2893
      %v2895 = vpop.xlane.xlu0 %2894
      %v2896 = vsel %vm139, %v2863, 0.0
      %2897 = vadd.xlane.f32.xlu0 %v2896
      %v2898 = vpop.xlane.xlu0 %2897
      %v2899 = vsel %vm139, %v2865, 0.0
      %2900 = vadd.xlane.f32.xlu0 %v2899
      %v2901 = vpop.xlane.xlu0 %2900
      %v2902 = vsel %vm139, %v2867, 0.0
      %2903 = vadd.xlane.f32.xlu0 %v2902
      %v2904 = vpop.xlane.xlu0 %2903
      %v2905 = vsel %vm139, %v2869, 0.0
      %2906 = vadd.xlane.f32.xlu0 %v2905
      %v2907 = vpop.xlane.xlu0 %2906
      %v2908 = vsel %vm139, %v2871, 0.0
      %2909 = vadd.xlane.f32.xlu0 %v2908
      %v2910 = vpop.xlane.xlu0 %2909
      %v2911 = vsel %vm139, %v2873, 0.0
      %2912 = vadd.xlane.f32.xlu0 %v2911
      %v2913 = vpop.xlane.xlu0 %2912
      %v2914 = vsel %vm139, %v2875, 0.0
      %2915 = vadd.xlane.f32.xlu0 %v2914
      %v2916 = vpop.xlane.xlu0 %2915
      %v2917 = vsel %vm139, %v2877, 0.0
      %2918 = vadd.xlane.f32.xlu0 %v2917
      %v2919 = vpop.xlane.xlu0 %2918
      %v2920 = vsel %vm139, %v2879, 0.0
      %2921 = vadd.xlane.f32.xlu0 %v2920
      %v2922 = vpop.xlane.xlu0 %2921
      %v2923 = vsel %vm139, %v2881, 0.0
      %2924 = vadd.xlane.f32.xlu0 %v2923
      %v2925 = vpop.xlane.xlu0 %2924
      %v2926 = vsel %vm139, %v2883, 0.0
      %2927 = vadd.xlane.f32.xlu0 %v2926
      %v2928 = vpop.xlane.xlu0 %2927
      %v2929 = vsel %vm139, %v2885, 0.0
      %2930 = vadd.xlane.f32.xlu0 %v2929
      %v2931 = vpop.xlane.xlu0 %2930
      %v2932 = vsel %vm139, %v2887, 0.0
      %2933 = vadd.xlane.f32.xlu0 %v2932
      %v2934 = vpop.xlane.xlu0 %2933
      %v2935 = vsel %vm139, %v2889, 0.0
      %2936 = vadd.xlane.f32.xlu0 %v2935
      %v2937 = vpop.xlane.xlu0 %2936
      %v2938 = vrcp.pop %v2892
      %v2939 = vrcp.pop %v2895
      %v2940 = vrcp.pop %v2898
      %v2941 = vrcp.pop %v2901
      %v2942 = vrcp.pop %v2904
      %v2943 = vrcp.pop %v2907
      %v2944 = vrcp.pop %v2910
      %v2945 = vrcp.pop %v2913
      %v2946 = vrcp.pop %v2916
      %v2947 = vrcp.pop %v2919
      %v2948 = vrcp.pop %v2922
      %v2949 = vrcp.pop %v2925
      %v2950 = vrcp.pop %v2928
      %v2951 = vrcp.pop %v2931
      %v2952 = vrcp.pop %v2934
      %v2953 = vrcp.pop %v2937
      %v2954 = vmul.f32 %v2859, %v2938
      %v2955 = vmul.f32 %v2861, %v2939
      %v2956 = vmul.f32 %v2863, %v2940
      %v2957 = vmul.f32 %v2865, %v2941
      %v2958 = vmul.f32 %v2867, %v2942
      %v2959 = vmul.f32 %v2869, %v2943
      %v2960 = vmul.f32 %v2871, %v2944
      %v2961 = vmul.f32 %v2873, %v2945
      %v2962 = vmul.f32 %v2875, %v2946
      %v2963 = vmul.f32 %v2877, %v2947
      %v2964 = vmul.f32 %v2879, %v2948
      %v2965 = vmul.f32 %v2881, %v2949
      %v2966 = vmul.f32 %v2883, %v2950
      %v2967 = vmul.f32 %v2885, %v2951
      %v2968 = vmul.f32 %v2887, %v2952
      %v2969 = vmul.f32 %v2889, %v2953
      %2970 = vrot.lane.b32.xlu0 %v120, 48
      %v2971 = vpop.permute.xlu0 %2970
      %v2974 = vsel %vm139, %v2954, 0
      %2976 = vmatpush.msra.mxu0 0.0
      %2977 = vmatpush.msra.mxu0 0.0
      %2978 = vmatpush.msra.mxu0 0.0
      %2979 = vmatpush.msra.mxu0 0.0
      %2980 = vmatpush.msra.mxu0 0.0
      %2981 = vmatpush.msra.mxu0 0.0
      %2982 = vmatpush.msra.mxu0 0.0
      %2983 = vmatpush.msra.mxu0 0.0
      %2984 = vmatpush.msra.mxu0 0.0
      %2985 = vmatpush.msra.mxu0 0.0
      %2986 = vmatpush.msra.mxu0 0.0
      %2987 = vmatpush.msra.mxu0 0.0
      %2988 = vmatpush.msra.mxu0 0.0
      %2989 = vmatpush.msra.mxu0 0.0
      %2990 = vmatpush.msra.mxu0 0.0
      %2991 = vmatpush.msra.mxu0 %v2971
      %2992 = vmatmul.f32.gmra.mxu0 %v2974
      %v2993 = vpop.f32.mrf.mxu0
      %v2994 = vadd.f32 0.0, %v2993
      %2995 = vdwg.mxu0
      %2996 = vrot.lane.b32.xlu0 %v121, 48
      %v2997 = vpop.permute.xlu0 %2996
      %v3000 = vsel %vm139, %v2955, 0
      %3002 = vmatpush.msra.mxu0 0.0
      %3003 = vmatpush.msra.mxu0 0.0
      %3004 = vmatpush.msra.mxu0 0.0
      %3005 = vmatpush.msra.mxu0 0.0
      %3006 = vmatpush.msra.mxu0 0.0
      %3007 = vmatpush.msra.mxu0 0.0
      %3008 = vmatpush.msra.mxu0 0.0
      %3009 = vmatpush.msra.mxu0 0.0
      %3010 = vmatpush.msra.mxu0 0.0
      %3011 = vmatpush.msra.mxu0 0.0
      %3012 = vmatpush.msra.mxu0 0.0
      %3013 = vmatpush.msra.mxu0 0.0
      %3014 = vmatpush.msra.mxu0 0.0
      %3015 = vmatpush.msra.mxu0 0.0
      %3016 = vmatpush.msra.mxu0 0.0
      %3017 = vmatpush.msra.mxu0 %v2997
      %3018 = vmatmul.f32.gmra.mxu0 %v3000
      %v3019 = vpop.f32.mrf.mxu0
      %v3020 = vadd.f32 0.0, %v3019
      %3021 = vdwg.mxu0
      %3022 = vrot.lane.b32.xlu0 %v122, 48
      %v3023 = vpop.permute.xlu0 %3022
      %v3026 = vsel %vm139, %v2956, 0
      %3028 = vmatpush.msra.mxu0 0.0
      %3029 = vmatpush.msra.mxu0 0.0
      %3030 = vmatpush.msra.mxu0 0.0
      %3031 = vmatpush.msra.mxu0 0.0
      %3032 = vmatpush.msra.mxu0 0.0
      %3033 = vmatpush.msra.mxu0 0.0
      %3034 = vmatpush.msra.mxu0 0.0
      %3035 = vmatpush.msra.mxu0 0.0
      %3036 = vmatpush.msra.mxu0 0.0
      %3037 = vmatpush.msra.mxu0 0.0
      %3038 = vmatpush.msra.mxu0 0.0
      %3039 = vmatpush.msra.mxu0 0.0
      %3040 = vmatpush.msra.mxu0 0.0
      %3041 = vmatpush.msra.mxu0 0.0
      %3042 = vmatpush.msra.mxu0 0.0
      %3043 = vmatpush.msra.mxu0 %v3023
      %3044 = vmatmul.f32.gmra.mxu0 %v3026
      %v3045 = vpop.f32.mrf.mxu0
      %v3046 = vadd.f32 0.0, %v3045
      %3047 = vdwg.mxu0
      %3048 = vrot.lane.b32.xlu0 %v123, 48
      %v3049 = vpop.permute.xlu0 %3048
      %v3052 = vsel %vm139, %v2957, 0
      %3054 = vmatpush.msra.mxu0 0.0
      %3055 = vmatpush.msra.mxu0 0.0
      %3056 = vmatpush.msra.mxu0 0.0
      %3057 = vmatpush.msra.mxu0 0.0
      %3058 = vmatpush.msra.mxu0 0.0
      %3059 = vmatpush.msra.mxu0 0.0
      %3060 = vmatpush.msra.mxu0 0.0
      %3061 = vmatpush.msra.mxu0 0.0
      %3062 = vmatpush.msra.mxu0 0.0
      %3063 = vmatpush.msra.mxu0 0.0
      %3064 = vmatpush.msra.mxu0 0.0
      %3065 = vmatpush.msra.mxu0 0.0
      %3066 = vmatpush.msra.mxu0 0.0
      %3067 = vmatpush.msra.mxu0 0.0
      %3068 = vmatpush.msra.mxu0 0.0
      %3069 = vmatpush.msra.mxu0 %v3049
      %3070 = vmatmul.f32.gmra.mxu0 %v3052
      %v3071 = vpop.f32.mrf.mxu0
      %v3072 = vadd.f32 0.0, %v3071
      %3073 = vdwg.mxu0
      %3074 = vrot.lane.b32.xlu0 %v124, 48
      %v3075 = vpop.permute.xlu0 %3074
      %v3078 = vsel %vm139, %v2958, 0
      %3080 = vmatpush.msra.mxu0 0.0
      %3081 = vmatpush.msra.mxu0 0.0
      %3082 = vmatpush.msra.mxu0 0.0
      %3083 = vmatpush.msra.mxu0 0.0
      %3084 = vmatpush.msra.mxu0 0.0
      %3085 = vmatpush.msra.mxu0 0.0
      %3086 = vmatpush.msra.mxu0 0.0
      %3087 = vmatpush.msra.mxu0 0.0
      %3088 = vmatpush.msra.mxu0 0.0
      %3089 = vmatpush.msra.mxu0 0.0
      %3090 = vmatpush.msra.mxu0 0.0
      %3091 = vmatpush.msra.mxu0 0.0
      %3092 = vmatpush.msra.mxu0 0.0
      %3093 = vmatpush.msra.mxu0 0.0
      %3094 = vmatpush.msra.mxu0 0.0
      %3095 = vmatpush.msra.mxu0 %v3075
      %3096 = vmatmul.f32.gmra.mxu0 %v3078
      %v3097 = vpop.f32.mrf.mxu0
      %v3098 = vadd.f32 0.0, %v3097
      %3099 = vdwg.mxu0
      %3100 = vrot.lane.b32.xlu0 %v125, 48
      %v3101 = vpop.permute.xlu0 %3100
      %v3104 = vsel %vm139, %v2959, 0
      %3106 = vmatpush.msra.mxu0 0.0
      %3107 = vmatpush.msra.mxu0 0.0
      %3108 = vmatpush.msra.mxu0 0.0
      %3109 = vmatpush.msra.mxu0 0.0
      %3110 = vmatpush.msra.mxu0 0.0
      %3111 = vmatpush.msra.mxu0 0.0
      %3112 = vmatpush.msra.mxu0 0.0
      %3113 = vmatpush.msra.mxu0 0.0
      %3114 = vmatpush.msra.mxu0 0.0
      %3115 = vmatpush.msra.mxu0 0.0
      %3116 = vmatpush.msra.mxu0 0.0
      %3117 = vmatpush.msra.mxu0 0.0
      %3118 = vmatpush.msra.mxu0 0.0
      %3119 = vmatpush.msra.mxu0 0.0
      %3120 = vmatpush.msra.mxu0 0.0
      %3121 = vmatpush.msra.mxu0 %v3101
      %3122 = vmatmul.f32.gmra.mxu0 %v3104
      %v3123 = vpop.f32.mrf.mxu0
      %v3124 = vadd.f32 0.0, %v3123
      %3125 = vdwg.mxu0
      %3126 = vrot.lane.b32.xlu0 %v126, 48
      %v3127 = vpop.permute.xlu0 %3126
      %v3130 = vsel %vm139, %v2960, 0
      %3132 = vmatpush.msra.mxu0 0.0
      %3133 = vmatpush.msra.mxu0 0.0
      %3134 = vmatpush.msra.mxu0 0.0
      %3135 = vmatpush.msra.mxu0 0.0
      %3136 = vmatpush.msra.mxu0 0.0
      %3137 = vmatpush.msra.mxu0 0.0
      %3138 = vmatpush.msra.mxu0 0.0
      %3139 = vmatpush.msra.mxu0 0.0
      %3140 = vmatpush.msra.mxu0 0.0
      %3141 = vmatpush.msra.mxu0 0.0
      %3142 = vmatpush.msra.mxu0 0.0
      %3143 = vmatpush.msra.mxu0 0.0
      %3144 = vmatpush.msra.mxu0 0.0
      %3145 = vmatpush.msra.mxu0 0.0
      %3146 = vmatpush.msra.mxu0 0.0
      %3147 = vmatpush.msra.mxu0 %v3127
      %3148 = vmatmul.f32.gmra.mxu0 %v3130
      %v3149 = vpop.f32.mrf.mxu0
      %v3150 = vadd.f32 0.0, %v3149
      %3151 = vdwg.mxu0
      %3152 = vrot.lane.b32.xlu0 %v127, 48
      %v3153 = vpop.permute.xlu0 %3152
      %v3156 = vsel %vm139, %v2961, 0
      %3158 = vmatpush.msra.mxu0 0.0
      %3159 = vmatpush.msra.mxu0 0.0
      %3160 = vmatpush.msra.mxu0 0.0
      %3161 = vmatpush.msra.mxu0 0.0
      %3162 = vmatpush.msra.mxu0 0.0
      %3163 = vmatpush.msra.mxu0 0.0
      %3164 = vmatpush.msra.mxu0 0.0
      %3165 = vmatpush.msra.mxu0 0.0
      %3166 = vmatpush.msra.mxu0 0.0
      %3167 = vmatpush.msra.mxu0 0.0
      %3168 = vmatpush.msra.mxu0 0.0
      %3169 = vmatpush.msra.mxu0 0.0
      %3170 = vmatpush.msra.mxu0 0.0
      %3171 = vmatpush.msra.mxu0 0.0
      %3172 = vmatpush.msra.mxu0 0.0
      %3173 = vmatpush.msra.mxu0 %v3153
      %3174 = vmatmul.f32.gmra.mxu0 %v3156
      %v3175 = vpop.f32.mrf.mxu0
      %v3176 = vadd.f32 0.0, %v3175
      %3177 = vdwg.mxu0
      %3178 = vrot.lane.b32.xlu0 %v128, 48
      %v3179 = vpop.permute.xlu0 %3178
      %v3182 = vsel %vm139, %v2962, 0
      %3184 = vmatpush.msra.mxu0 0.0
      %3185 = vmatpush.msra.mxu0 0.0
      %3186 = vmatpush.msra.mxu0 0.0
      %3187 = vmatpush.msra.mxu0 0.0
      %3188 = vmatpush.msra.mxu0 0.0
      %3189 = vmatpush.msra.mxu0 0.0
      %3190 = vmatpush.msra.mxu0 0.0
      %3191 = vmatpush.msra.mxu0 0.0
      %3192 = vmatpush.msra.mxu0 0.0
      %3193 = vmatpush.msra.mxu0 0.0
      %3194 = vmatpush.msra.mxu0 0.0
      %3195 = vmatpush.msra.mxu0 0.0
      %3196 = vmatpush.msra.mxu0 0.0
      %3197 = vmatpush.msra.mxu0 0.0
      %3198 = vmatpush.msra.mxu0 0.0
      %3199 = vmatpush.msra.mxu0 %v3179
      %3200 = vmatmul.f32.gmra.mxu0 %v3182
      %v3201 = vpop.f32.mrf.mxu0
      %v3202 = vadd.f32 0.0, %v3201
      %3203 = vdwg.mxu0
      %3204 = vrot.lane.b32.xlu0 %v129, 48
      %v3205 = vpop.permute.xlu0 %3204
      %v3208 = vsel %vm139, %v2963, 0
      %3210 = vmatpush.msra.mxu0 0.0
      %3211 = vmatpush.msra.mxu0 0.0
      %3212 = vmatpush.msra.mxu0 0.0
      %3213 = vmatpush.msra.mxu0 0.0
      %3214 = vmatpush.msra.mxu0 0.0
      %3215 = vmatpush.msra.mxu0 0.0
      %3216 = vmatpush.msra.mxu0 0.0
      %3217 = vmatpush.msra.mxu0 0.0
      %3218 = vmatpush.msra.mxu0 0.0
      %3219 = vmatpush.msra.mxu0 0.0
      %3220 = vmatpush.msra.mxu0 0.0
      %3221 = vmatpush.msra.mxu0 0.0
      %3222 = vmatpush.msra.mxu0 0.0
      %3223 = vmatpush.msra.mxu0 0.0
      %3224 = vmatpush.msra.mxu0 0.0
      %3225 = vmatpush.msra.mxu0 %v3205
      %3226 = vmatmul.f32.gmra.mxu0 %v3208
      %v3227 = vpop.f32.mrf.mxu0
      %v3228 = vadd.f32 0.0, %v3227
      %3229 = vdwg.mxu0
      %3230 = vrot.lane.b32.xlu0 %v130, 48
      %v3231 = vpop.permute.xlu0 %3230
      %v3234 = vsel %vm139, %v2964, 0
      %3236 = vmatpush.msra.mxu0 0.0
      %3237 = vmatpush.msra.mxu0 0.0
      %3238 = vmatpush.msra.mxu0 0.0
      %3239 = vmatpush.msra.mxu0 0.0
      %3240 = vmatpush.msra.mxu0 0.0
      %3241 = vmatpush.msra.mxu0 0.0
      %3242 = vmatpush.msra.mxu0 0.0
      %3243 = vmatpush.msra.mxu0 0.0
      %3244 = vmatpush.msra.mxu0 0.0
      %3245 = vmatpush.msra.mxu0 0.0
      %3246 = vmatpush.msra.mxu0 0.0
      %3247 = vmatpush.msra.mxu0 0.0
      %3248 = vmatpush.msra.mxu0 0.0
      %3249 = vmatpush.msra.mxu0 0.0
      %3250 = vmatpush.msra.mxu0 0.0
      %3251 = vmatpush.msra.mxu0 %v3231
      %3252 = vmatmul.f32.gmra.mxu0 %v3234
      %v3253 = vpop.f32.mrf.mxu0
      %v3254 = vadd.f32 0.0, %v3253
      %3255 = vdwg.mxu0
      %3256 = vrot.lane.b32.xlu0 %v131, 48
      %v3257 = vpop.permute.xlu0 %3256
      %v3260 = vsel %vm139, %v2965, 0
      %3262 = vmatpush.msra.mxu0 0.0
      %3263 = vmatpush.msra.mxu0 0.0
      %3264 = vmatpush.msra.mxu0 0.0
      %3265 = vmatpush.msra.mxu0 0.0
      %3266 = vmatpush.msra.mxu0 0.0
      %3267 = vmatpush.msra.mxu0 0.0
      %3268 = vmatpush.msra.mxu0 0.0
      %3269 = vmatpush.msra.mxu0 0.0
      %3270 = vmatpush.msra.mxu0 0.0
      %3271 = vmatpush.msra.mxu0 0.0
      %3272 = vmatpush.msra.mxu0 0.0
      %3273 = vmatpush.msra.mxu0 0.0
      %3274 = vmatpush.msra.mxu0 0.0
      %3275 = vmatpush.msra.mxu0 0.0
      %3276 = vmatpush.msra.mxu0 0.0
      %3277 = vmatpush.msra.mxu0 %v3257
      %3278 = vmatmul.f32.gmra.mxu0 %v3260
      %v3279 = vpop.f32.mrf.mxu0
      %v3280 = vadd.f32 0.0, %v3279
      %3281 = vdwg.mxu0
      %3282 = vrot.lane.b32.xlu0 %v132, 48
      %v3283 = vpop.permute.xlu0 %3282
      %v3286 = vsel %vm139, %v2966, 0
      %3288 = vmatpush.msra.mxu0 0.0
      %3289 = vmatpush.msra.mxu0 0.0
      %3290 = vmatpush.msra.mxu0 0.0
      %3291 = vmatpush.msra.mxu0 0.0
      %3292 = vmatpush.msra.mxu0 0.0
      %3293 = vmatpush.msra.mxu0 0.0
      %3294 = vmatpush.msra.mxu0 0.0
      %3295 = vmatpush.msra.mxu0 0.0
      %3296 = vmatpush.msra.mxu0 0.0
      %3297 = vmatpush.msra.mxu0 0.0
      %3298 = vmatpush.msra.mxu0 0.0
      %3299 = vmatpush.msra.mxu0 0.0
      %3300 = vmatpush.msra.mxu0 0.0
      %3301 = vmatpush.msra.mxu0 0.0
      %3302 = vmatpush.msra.mxu0 0.0
      %3303 = vmatpush.msra.mxu0 %v3283
      %3304 = vmatmul.f32.gmra.mxu0 %v3286
      %v3305 = vpop.f32.mrf.mxu0
      %v3306 = vadd.f32 0.0, %v3305
      %3307 = vdwg.mxu0
      %3308 = vrot.lane.b32.xlu0 %v133, 48
      %v3309 = vpop.permute.xlu0 %3308
      %v3312 = vsel %vm139, %v2967, 0
      %3314 = vmatpush.msra.mxu0 0.0
      %3315 = vmatpush.msra.mxu0 0.0
      %3316 = vmatpush.msra.mxu0 0.0
      %3317 = vmatpush.msra.mxu0 0.0
      %3318 = vmatpush.msra.mxu0 0.0
      %3319 = vmatpush.msra.mxu0 0.0
      %3320 = vmatpush.msra.mxu0 0.0
      %3321 = vmatpush.msra.mxu0 0.0
      %3322 = vmatpush.msra.mxu0 0.0
      %3323 = vmatpush.msra.mxu0 0.0
      %3324 = vmatpush.msra.mxu0 0.0
      %3325 = vmatpush.msra.mxu0 0.0
      %3326 = vmatpush.msra.mxu0 0.0
      %3327 = vmatpush.msra.mxu0 0.0
      %3328 = vmatpush.msra.mxu0 0.0
      %3329 = vmatpush.msra.mxu0 %v3309
      %3330 = vmatmul.f32.gmra.mxu0 %v3312
      %v3331 = vpop.f32.mrf.mxu0
      %v3332 = vadd.f32 0.0, %v3331
      %3333 = vdwg.mxu0
      %3334 = vrot.lane.b32.xlu0 %v134, 48
      %v3335 = vpop.permute.xlu0 %3334
      %v3338 = vsel %vm139, %v2968, 0
      %3340 = vmatpush.msra.mxu0 0.0
      %3341 = vmatpush.msra.mxu0 0.0
      %3342 = vmatpush.msra.mxu0 0.0
      %3343 = vmatpush.msra.mxu0 0.0
      %3344 = vmatpush.msra.mxu0 0.0
      %3345 = vmatpush.msra.mxu0 0.0
      %3346 = vmatpush.msra.mxu0 0.0
      %3347 = vmatpush.msra.mxu0 0.0
      %3348 = vmatpush.msra.mxu0 0.0
      %3349 = vmatpush.msra.mxu0 0.0
      %3350 = vmatpush.msra.mxu0 0.0
      %3351 = vmatpush.msra.mxu0 0.0
      %3352 = vmatpush.msra.mxu0 0.0
      %3353 = vmatpush.msra.mxu0 0.0
      %3354 = vmatpush.msra.mxu0 0.0
      %3355 = vmatpush.msra.mxu0 %v3335
      %3356 = vmatmul.f32.gmra.mxu0 %v3338
      %v3357 = vpop.f32.mrf.mxu0
      %v3358 = vadd.f32 0.0, %v3357
      %3359 = vdwg.mxu0
      %3360 = vrot.lane.b32.xlu0 %v135, 48
      %v3361 = vpop.permute.xlu0 %3360
      %v3364 = vsel %vm139, %v2969, 0
      %3366 = vmatpush.msra.mxu0 0.0
      %3367 = vmatpush.msra.mxu0 0.0
      %3368 = vmatpush.msra.mxu0 0.0
      %3369 = vmatpush.msra.mxu0 0.0
      %3370 = vmatpush.msra.mxu0 0.0
      %3371 = vmatpush.msra.mxu0 0.0
      %3372 = vmatpush.msra.mxu0 0.0
      %3373 = vmatpush.msra.mxu0 0.0
      %3374 = vmatpush.msra.mxu0 0.0
      %3375 = vmatpush.msra.mxu0 0.0
      %3376 = vmatpush.msra.mxu0 0.0
      %3377 = vmatpush.msra.mxu0 0.0
      %3378 = vmatpush.msra.mxu0 0.0
      %3379 = vmatpush.msra.mxu0 0.0
      %3380 = vmatpush.msra.mxu0 0.0
      %3381 = vmatpush.msra.mxu0 %v3361
      %3382 = vmatmul.f32.gmra.mxu0 %v3364
      %v3383 = vpop.f32.mrf.mxu0
      %v3384 = vadd.f32 0.0, %v3383
      %3385 = vdwg.mxu0
      %3402 = vrot.lane.b32.xlu0 %v2994, 16
      %v3403 = vpop.permute.xlu0 %3402
      %3404 = vrot.lane.b32.xlu0 %v3020, 16
      %v3405 = vpop.permute.xlu0 %3404
      %3406 = vrot.lane.b32.xlu0 %v3046, 16
      %v3407 = vpop.permute.xlu0 %3406
      %3408 = vrot.lane.b32.xlu0 %v3072, 16
      %v3409 = vpop.permute.xlu0 %3408
      %3410 = vrot.lane.b32.xlu0 %v3098, 16
      %v3411 = vpop.permute.xlu0 %3410
      %3412 = vrot.lane.b32.xlu0 %v3124, 16
      %v3413 = vpop.permute.xlu0 %3412
      %3414 = vrot.lane.b32.xlu0 %v3150, 16
      %v3415 = vpop.permute.xlu0 %3414
      %3416 = vrot.lane.b32.xlu0 %v3176, 16
      %v3417 = vpop.permute.xlu0 %3416
      %3418 = vrot.lane.b32.xlu0 %v3202, 16
      %v3419 = vpop.permute.xlu0 %3418
      %3420 = vrot.lane.b32.xlu0 %v3228, 16
      %v3421 = vpop.permute.xlu0 %3420
      %3422 = vrot.lane.b32.xlu0 %v3254, 16
      %v3423 = vpop.permute.xlu0 %3422
      %3424 = vrot.lane.b32.xlu0 %v3280, 16
      %v3425 = vpop.permute.xlu0 %3424
      %3426 = vrot.lane.b32.xlu0 %v3306, 16
      %v3427 = vpop.permute.xlu0 %3426
      %3428 = vrot.lane.b32.xlu0 %v3332, 16
      %v3429 = vpop.permute.xlu0 %3428
      %3430 = vrot.lane.b32.xlu0 %v3358, 16
      %v3431 = vpop.permute.xlu0 %3430
      %3432 = vrot.lane.b32.xlu0 %v3384, 16
      %v3433 = vpop.permute.xlu0 %3432
      %vm3450 = vcmask 195712
      %3451 = vst.msk [vmem:[%s118] sm:$0xff] %vm3450, %v3403
      %3452 = vst.msk [vmem:[%s118 + $0x8] sm:$0xff] %vm3450, %v3405
      %3453 = vst.msk [vmem:[%s118 + $0x10] sm:$0xff] %vm3450, %v3407
      %3454 = vst.msk [vmem:[%s118 + $0x18] sm:$0xff] %vm3450, %v3409
      %3455 = vst.msk [vmem:[%s118 + $0x20] sm:$0xff] %vm3450, %v3411
      %3456 = vst.msk [vmem:[%s118 + $0x28] sm:$0xff] %vm3450, %v3413
      %3457 = vst.msk [vmem:[%s118 + $0x30] sm:$0xff] %vm3450, %v3415
      %3458 = vst.msk [vmem:[%s118 + $0x38] sm:$0xff] %vm3450, %v3417
      %3459 = vst.msk [vmem:[%s118 + $0x40] sm:$0xff] %vm3450, %v3419
      %3460 = vst.msk [vmem:[%s118 + $0x48] sm:$0xff] %vm3450, %v3421
      %3461 = vst.msk [vmem:[%s118 + $0x50] sm:$0xff] %vm3450, %v3423
      %3462 = vst.msk [vmem:[%s118 + $0x58] sm:$0xff] %vm3450, %v3425
      %3463 = vst.msk [vmem:[%s118 + $0x60] sm:$0xff] %vm3450, %v3427
      %3464 = vst.msk [vmem:[%s118 + $0x68] sm:$0xff] %vm3450, %v3429
      %3465 = vst.msk [vmem:[%s118 + $0x70] sm:$0xff] %vm3450, %v3431
      %3466 = vst.msk [vmem:[%s118 + $0x78] sm:$0xff] %vm3450, %v3433
      %3467 = vrot.lane.b32.xlu0 %v120, 104
      %v3468 = vpop.permute.xlu0 %3467
      %3469 = vrot.lane.b32.xlu0 %v120, 72
      %v3470 = vpop.permute.xlu0 %3469
      %v3471 = vsel %vm139, %v3468, 0
      %v3473 = vsel %vm139, %v3470, 0
      %3475 = vmatpush.xpose.msra.mxu0 0.0
      %3476 = vmatpush.xpose.msra.mxu0 0.0
      %3477 = vmatpush.xpose.msra.mxu0 0.0
      %3478 = vmatpush.xpose.msra.mxu0 0.0
      %3479 = vmatpush.xpose.msra.mxu0 0.0
      %3480 = vmatpush.xpose.msra.mxu0 0.0
      %3481 = vmatpush.xpose.msra.mxu0 0.0
      %3482 = vmatpush.xpose.msra.mxu0 0.0
      %3483 = vmatpush.xpose.msra.mxu0 0.0
      %3484 = vmatpush.xpose.msra.mxu0 0.0
      %3485 = vmatpush.xpose.msra.mxu0 0.0
      %3486 = vmatpush.xpose.msra.mxu0 0.0
      %3487 = vmatpush.xpose.msra.mxu0 0.0
      %3488 = vmatpush.xpose.msra.mxu0 0.0
      %3489 = vmatpush.xpose.msra.mxu0 0.0
      %3490 = vmatpush.xpose.msra.mxu0 %v3473
      %3491 = vmatmul.f32.gmra.mxu0 %v3471
      %v3492 = vpop.f32.mrf.mxu0
      %v3493 = vadd.f32 0.0, %v3492
      %3494 = vdwg.mxu0
      %3495 = vrot.lane.b32.xlu0 %v121, 104
      %v3496 = vpop.permute.xlu0 %3495
      %3497 = vrot.lane.b32.xlu0 %v121, 72
      %v3498 = vpop.permute.xlu0 %3497
      %v3499 = vsel %vm139, %v3496, 0
      %v3501 = vsel %vm139, %v3498, 0
      %3503 = vmatpush.xpose.msra.mxu0 0.0
      %3504 = vmatpush.xpose.msra.mxu0 0.0
      %3505 = vmatpush.xpose.msra.mxu0 0.0
      %3506 = vmatpush.xpose.msra.mxu0 0.0
      %3507 = vmatpush.xpose.msra.mxu0 0.0
      %3508 = vmatpush.xpose.msra.mxu0 0.0
      %3509 = vmatpush.xpose.msra.mxu0 0.0
      %3510 = vmatpush.xpose.msra.mxu0 0.0
      %3511 = vmatpush.xpose.msra.mxu0 0.0
      %3512 = vmatpush.xpose.msra.mxu0 0.0
      %3513 = vmatpush.xpose.msra.mxu0 0.0
      %3514 = vmatpush.xpose.msra.mxu0 0.0
      %3515 = vmatpush.xpose.msra.mxu0 0.0
      %3516 = vmatpush.xpose.msra.mxu0 0.0
      %3517 = vmatpush.xpose.msra.mxu0 0.0
      %3518 = vmatpush.xpose.msra.mxu0 %v3501
      %3519 = vmatmul.f32.gmra.mxu0 %v3499
      %v3520 = vpop.f32.mrf.mxu0
      %v3521 = vadd.f32 0.0, %v3520
      %3522 = vdwg.mxu0
      %3523 = vrot.lane.b32.xlu0 %v122, 104
      %v3524 = vpop.permute.xlu0 %3523
      %3525 = vrot.lane.b32.xlu0 %v122, 72
      %v3526 = vpop.permute.xlu0 %3525
      %v3527 = vsel %vm139, %v3524, 0
      %v3529 = vsel %vm139, %v3526, 0
      %3531 = vmatpush.xpose.msra.mxu0 0.0
      %3532 = vmatpush.xpose.msra.mxu0 0.0
      %3533 = vmatpush.xpose.msra.mxu0 0.0
      %3534 = vmatpush.xpose.msra.mxu0 0.0
      %3535 = vmatpush.xpose.msra.mxu0 0.0
      %3536 = vmatpush.xpose.msra.mxu0 0.0
      %3537 = vmatpush.xpose.msra.mxu0 0.0
      %3538 = vmatpush.xpose.msra.mxu0 0.0
      %3539 = vmatpush.xpose.msra.mxu0 0.0
      %3540 = vmatpush.xpose.msra.mxu0 0.0
      %3541 = vmatpush.xpose.msra.mxu0 0.0
      %3542 = vmatpush.xpose.msra.mxu0 0.0
      %3543 = vmatpush.xpose.msra.mxu0 0.0
      %3544 = vmatpush.xpose.msra.mxu0 0.0
      %3545 = vmatpush.xpose.msra.mxu0 0.0
      %3546 = vmatpush.xpose.msra.mxu0 %v3529
      %3547 = vmatmul.f32.gmra.mxu0 %v3527
      %v3548 = vpop.f32.mrf.mxu0
      %v3549 = vadd.f32 0.0, %v3548
      %3550 = vdwg.mxu0
      %3551 = vrot.lane.b32.xlu0 %v123, 104
      %v3552 = vpop.permute.xlu0 %3551
      %3553 = vrot.lane.b32.xlu0 %v123, 72
      %v3554 = vpop.permute.xlu0 %3553
      %v3555 = vsel %vm139, %v3552, 0
      %v3557 = vsel %vm139, %v3554, 0
      %3559 = vmatpush.xpose.msra.mxu0 0.0
      %3560 = vmatpush.xpose.msra.mxu0 0.0
      %3561 = vmatpush.xpose.msra.mxu0 0.0
      %3562 = vmatpush.xpose.msra.mxu0 0.0
      %3563 = vmatpush.xpose.msra.mxu0 0.0
      %3564 = vmatpush.xpose.msra.mxu0 0.0
      %3565 = vmatpush.xpose.msra.mxu0 0.0
      %3566 = vmatpush.xpose.msra.mxu0 0.0
      %3567 = vmatpush.xpose.msra.mxu0 0.0
      %3568 = vmatpush.xpose.msra.mxu0 0.0
      %3569 = vmatpush.xpose.msra.mxu0 0.0
      %3570 = vmatpush.xpose.msra.mxu0 0.0
      %3571 = vmatpush.xpose.msra.mxu0 0.0
      %3572 = vmatpush.xpose.msra.mxu0 0.0
      %3573 = vmatpush.xpose.msra.mxu0 0.0
      %3574 = vmatpush.xpose.msra.mxu0 %v3557
      %3575 = vmatmul.f32.gmra.mxu0 %v3555
      %v3576 = vpop.f32.mrf.mxu0
      %v3577 = vadd.f32 0.0, %v3576
      %3578 = vdwg.mxu0
      %3579 = vrot.lane.b32.xlu0 %v124, 104
      %v3580 = vpop.permute.xlu0 %3579
      %3581 = vrot.lane.b32.xlu0 %v124, 72
      %v3582 = vpop.permute.xlu0 %3581
      %v3583 = vsel %vm139, %v3580, 0
      %v3585 = vsel %vm139, %v3582, 0
      %3587 = vmatpush.xpose.msra.mxu0 0.0
      %3588 = vmatpush.xpose.msra.mxu0 0.0
      %3589 = vmatpush.xpose.msra.mxu0 0.0
      %3590 = vmatpush.xpose.msra.mxu0 0.0
      %3591 = vmatpush.xpose.msra.mxu0 0.0
      %3592 = vmatpush.xpose.msra.mxu0 0.0
      %3593 = vmatpush.xpose.msra.mxu0 0.0
      %3594 = vmatpush.xpose.msra.mxu0 0.0
      %3595 = vmatpush.xpose.msra.mxu0 0.0
      %3596 = vmatpush.xpose.msra.mxu0 0.0
      %3597 = vmatpush.xpose.msra.mxu0 0.0
      %3598 = vmatpush.xpose.msra.mxu0 0.0
      %3599 = vmatpush.xpose.msra.mxu0 0.0
      %3600 = vmatpush.xpose.msra.mxu0 0.0
      %3601 = vmatpush.xpose.msra.mxu0 0.0
      %3602 = vmatpush.xpose.msra.mxu0 %v3585
      %3603 = vmatmul.f32.gmra.mxu0 %v3583
      %v3604 = vpop.f32.mrf.mxu0
      %v3605 = vadd.f32 0.0, %v3604
      %3606 = vdwg.mxu0
      %3607 = vrot.lane.b32.xlu0 %v125, 104
      %v3608 = vpop.permute.xlu0 %3607
      %3609 = vrot.lane.b32.xlu0 %v125, 72
      %v3610 = vpop.permute.xlu0 %3609
      %v3611 = vsel %vm139, %v3608, 0
      %v3613 = vsel %vm139, %v3610, 0
      %3615 = vmatpush.xpose.msra.mxu0 0.0
      %3616 = vmatpush.xpose.msra.mxu0 0.0
      %3617 = vmatpush.xpose.msra.mxu0 0.0
      %3618 = vmatpush.xpose.msra.mxu0 0.0
      %3619 = vmatpush.xpose.msra.mxu0 0.0
      %3620 = vmatpush.xpose.msra.mxu0 0.0
      %3621 = vmatpush.xpose.msra.mxu0 0.0
      %3622 = vmatpush.xpose.msra.mxu0 0.0
      %3623 = vmatpush.xpose.msra.mxu0 0.0
      %3624 = vmatpush.xpose.msra.mxu0 0.0
      %3625 = vmatpush.xpose.msra.mxu0 0.0
      %3626 = vmatpush.xpose.msra.mxu0 0.0
      %3627 = vmatpush.xpose.msra.mxu0 0.0
      %3628 = vmatpush.xpose.msra.mxu0 0.0
      %3629 = vmatpush.xpose.msra.mxu0 0.0
      %3630 = vmatpush.xpose.msra.mxu0 %v3613
      %3631 = vmatmul.f32.gmra.mxu0 %v3611
      %v3632 = vpop.f32.mrf.mxu0
      %v3633 = vadd.f32 0.0, %v3632
      %3634 = vdwg.mxu0
      %3635 = vrot.lane.b32.xlu0 %v126, 104
      %v3636 = vpop.permute.xlu0 %3635
      %3637 = vrot.lane.b32.xlu0 %v126, 72
      %v3638 = vpop.permute.xlu0 %3637
      %v3639 = vsel %vm139, %v3636, 0
      %v3641 = vsel %vm139, %v3638, 0
      %3643 = vmatpush.xpose.msra.mxu0 0.0
      %3644 = vmatpush.xpose.msra.mxu0 0.0
      %3645 = vmatpush.xpose.msra.mxu0 0.0
      %3646 = vmatpush.xpose.msra.mxu0 0.0
      %3647 = vmatpush.xpose.msra.mxu0 0.0
      %3648 = vmatpush.xpose.msra.mxu0 0.0
      %3649 = vmatpush.xpose.msra.mxu0 0.0
      %3650 = vmatpush.xpose.msra.mxu0 0.0
      %3651 = vmatpush.xpose.msra.mxu0 0.0
      %3652 = vmatpush.xpose.msra.mxu0 0.0
      %3653 = vmatpush.xpose.msra.mxu0 0.0
      %3654 = vmatpush.xpose.msra.mxu0 0.0
      %3655 = vmatpush.xpose.msra.mxu0 0.0
      %3656 = vmatpush.xpose.msra.mxu0 0.0
      %3657 = vmatpush.xpose.msra.mxu0 0.0
      %3658 = vmatpush.xpose.msra.mxu0 %v3641
      %3659 = vmatmul.f32.gmra.mxu0 %v3639
      %v3660 = vpop.f32.mrf.mxu0
      %v3661 = vadd.f32 0.0, %v3660
      %3662 = vdwg.mxu0
      %3663 = vrot.lane.b32.xlu0 %v127, 104
      %v3664 = vpop.permute.xlu0 %3663
      %3665 = vrot.lane.b32.xlu0 %v127, 72
      %v3666 = vpop.permute.xlu0 %3665
      %v3667 = vsel %vm139, %v3664, 0
      %v3669 = vsel %vm139, %v3666, 0
      %3671 = vmatpush.xpose.msra.mxu0 0.0
      %3672 = vmatpush.xpose.msra.mxu0 0.0
      %3673 = vmatpush.xpose.msra.mxu0 0.0
      %3674 = vmatpush.xpose.msra.mxu0 0.0
      %3675 = vmatpush.xpose.msra.mxu0 0.0
      %3676 = vmatpush.xpose.msra.mxu0 0.0
      %3677 = vmatpush.xpose.msra.mxu0 0.0
      %3678 = vmatpush.xpose.msra.mxu0 0.0
      %3679 = vmatpush.xpose.msra.mxu0 0.0
      %3680 = vmatpush.xpose.msra.mxu0 0.0
      %3681 = vmatpush.xpose.msra.mxu0 0.0
      %3682 = vmatpush.xpose.msra.mxu0 0.0
      %3683 = vmatpush.xpose.msra.mxu0 0.0
      %3684 = vmatpush.xpose.msra.mxu0 0.0
      %3685 = vmatpush.xpose.msra.mxu0 0.0
      %3686 = vmatpush.xpose.msra.mxu0 %v3669
      %3687 = vmatmul.f32.gmra.mxu0 %v3667
      %v3688 = vpop.f32.mrf.mxu0
      %v3689 = vadd.f32 0.0, %v3688
      %3690 = vdwg.mxu0
      %3691 = vrot.lane.b32.xlu0 %v128, 104
      %v3692 = vpop.permute.xlu0 %3691
      %3693 = vrot.lane.b32.xlu0 %v128, 72
      %v3694 = vpop.permute.xlu0 %3693
      %v3695 = vsel %vm139, %v3692, 0
      %v3697 = vsel %vm139, %v3694, 0
      %3699 = vmatpush.xpose.msra.mxu0 0.0
      %3700 = vmatpush.xpose.msra.mxu0 0.0
      %3701 = vmatpush.xpose.msra.mxu0 0.0
      %3702 = vmatpush.xpose.msra.mxu0 0.0
      %3703 = vmatpush.xpose.msra.mxu0 0.0
      %3704 = vmatpush.xpose.msra.mxu0 0.0
      %3705 = vmatpush.xpose.msra.mxu0 0.0
      %3706 = vmatpush.xpose.msra.mxu0 0.0
      %3707 = vmatpush.xpose.msra.mxu0 0.0
      %3708 = vmatpush.xpose.msra.mxu0 0.0
      %3709 = vmatpush.xpose.msra.mxu0 0.0
      %3710 = vmatpush.xpose.msra.mxu0 0.0
      %3711 = vmatpush.xpose.msra.mxu0 0.0
      %3712 = vmatpush.xpose.msra.mxu0 0.0
      %3713 = vmatpush.xpose.msra.mxu0 0.0
      %3714 = vmatpush.xpose.msra.mxu0 %v3697
      %3715 = vmatmul.f32.gmra.mxu0 %v3695
      %v3716 = vpop.f32.mrf.mxu0
      %v3717 = vadd.f32 0.0, %v3716
      %3718 = vdwg.mxu0
      %3719 = vrot.lane.b32.xlu0 %v129, 104
      %v3720 = vpop.permute.xlu0 %3719
      %3721 = vrot.lane.b32.xlu0 %v129, 72
      %v3722 = vpop.permute.xlu0 %3721
      %v3723 = vsel %vm139, %v3720, 0
      %v3725 = vsel %vm139, %v3722, 0
      %3727 = vmatpush.xpose.msra.mxu0 0.0
      %3728 = vmatpush.xpose.msra.mxu0 0.0
      %3729 = vmatpush.xpose.msra.mxu0 0.0
      %3730 = vmatpush.xpose.msra.mxu0 0.0
      %3731 = vmatpush.xpose.msra.mxu0 0.0
      %3732 = vmatpush.xpose.msra.mxu0 0.0
      %3733 = vmatpush.xpose.msra.mxu0 0.0
      %3734 = vmatpush.xpose.msra.mxu0 0.0
      %3735 = vmatpush.xpose.msra.mxu0 0.0
      %3736 = vmatpush.xpose.msra.mxu0 0.0
      %3737 = vmatpush.xpose.msra.mxu0 0.0
      %3738 = vmatpush.xpose.msra.mxu0 0.0
      %3739 = vmatpush.xpose.msra.mxu0 0.0
      %3740 = vmatpush.xpose.msra.mxu0 0.0
      %3741 = vmatpush.xpose.msra.mxu0 0.0
      %3742 = vmatpush.xpose.msra.mxu0 %v3725
      %3743 = vmatmul.f32.gmra.mxu0 %v3723
      %v3744 = vpop.f32.mrf.mxu0
      %v3745 = vadd.f32 0.0, %v3744
      %3746 = vdwg.mxu0
      %3747 = vrot.lane.b32.xlu0 %v130, 104
      %v3748 = vpop.permute.xlu0 %3747
      %3749 = vrot.lane.b32.xlu0 %v130, 72
      %v3750 = vpop.permute.xlu0 %3749
      %v3751 = vsel %vm139, %v3748, 0
      %v3753 = vsel %vm139, %v3750, 0
      %3755 = vmatpush.xpose.msra.mxu0 0.0
      %3756 = vmatpush.xpose.msra.mxu0 0.0
      %3757 = vmatpush.xpose.msra.mxu0 0.0
      %3758 = vmatpush.xpose.msra.mxu0 0.0
      %3759 = vmatpush.xpose.msra.mxu0 0.0
      %3760 = vmatpush.xpose.msra.mxu0 0.0
      %3761 = vmatpush.xpose.msra.mxu0 0.0
      %3762 = vmatpush.xpose.msra.mxu0 0.0
      %3763 = vmatpush.xpose.msra.mxu0 0.0
      %3764 = vmatpush.xpose.msra.mxu0 0.0
      %3765 = vmatpush.xpose.msra.mxu0 0.0
      %3766 = vmatpush.xpose.msra.mxu0 0.0
      %3767 = vmatpush.xpose.msra.mxu0 0.0
      %3768 = vmatpush.xpose.msra.mxu0 0.0
      %3769 = vmatpush.xpose.msra.mxu0 0.0
      %3770 = vmatpush.xpose.msra.mxu0 %v3753
      %3771 = vmatmul.f32.gmra.mxu0 %v3751
      %v3772 = vpop.f32.mrf.mxu0
      %v3773 = vadd.f32 0.0, %v3772
      %3774 = vdwg.mxu0
      %3775 = vrot.lane.b32.xlu0 %v131, 104
      %v3776 = vpop.permute.xlu0 %3775
      %3777 = vrot.lane.b32.xlu0 %v131, 72
      %v3778 = vpop.permute.xlu0 %3777
      %v3779 = vsel %vm139, %v3776, 0
      %v3781 = vsel %vm139, %v3778, 0
      %3783 = vmatpush.xpose.msra.mxu0 0.0
      %3784 = vmatpush.xpose.msra.mxu0 0.0
      %3785 = vmatpush.xpose.msra.mxu0 0.0
      %3786 = vmatpush.xpose.msra.mxu0 0.0
      %3787 = vmatpush.xpose.msra.mxu0 0.0
      %3788 = vmatpush.xpose.msra.mxu0 0.0
      %3789 = vmatpush.xpose.msra.mxu0 0.0
      %3790 = vmatpush.xpose.msra.mxu0 0.0
      %3791 = vmatpush.xpose.msra.mxu0 0.0
      %3792 = vmatpush.xpose.msra.mxu0 0.0
      %3793 = vmatpush.xpose.msra.mxu0 0.0
      %3794 = vmatpush.xpose.msra.mxu0 0.0
      %3795 = vmatpush.xpose.msra.mxu0 0.0
      %3796 = vmatpush.xpose.msra.mxu0 0.0
      %3797 = vmatpush.xpose.msra.mxu0 0.0
      %3798 = vmatpush.xpose.msra.mxu0 %v3781
      %3799 = vmatmul.f32.gmra.mxu0 %v3779
      %v3800 = vpop.f32.mrf.mxu0
      %v3801 = vadd.f32 0.0, %v3800
      %3802 = vdwg.mxu0
      %3803 = vrot.lane.b32.xlu0 %v132, 104
      %v3804 = vpop.permute.xlu0 %3803
      %3805 = vrot.lane.b32.xlu0 %v132, 72
      %v3806 = vpop.permute.xlu0 %3805
      %v3807 = vsel %vm139, %v3804, 0
      %v3809 = vsel %vm139, %v3806, 0
      %3811 = vmatpush.xpose.msra.mxu0 0.0
      %3812 = vmatpush.xpose.msra.mxu0 0.0
      %3813 = vmatpush.xpose.msra.mxu0 0.0
      %3814 = vmatpush.xpose.msra.mxu0 0.0
      %3815 = vmatpush.xpose.msra.mxu0 0.0
      %3816 = vmatpush.xpose.msra.mxu0 0.0
      %3817 = vmatpush.xpose.msra.mxu0 0.0
      %3818 = vmatpush.xpose.msra.mxu0 0.0
      %3819 = vmatpush.xpose.msra.mxu0 0.0
      %3820 = vmatpush.xpose.msra.mxu0 0.0
      %3821 = vmatpush.xpose.msra.mxu0 0.0
      %3822 = vmatpush.xpose.msra.mxu0 0.0
      %3823 = vmatpush.xpose.msra.mxu0 0.0
      %3824 = vmatpush.xpose.msra.mxu0 0.0
      %3825 = vmatpush.xpose.msra.mxu0 0.0
      %3826 = vmatpush.xpose.msra.mxu0 %v3809
      %3827 = vmatmul.f32.gmra.mxu0 %v3807
      %v3828 = vpop.f32.mrf.mxu0
      %v3829 = vadd.f32 0.0, %v3828
      %3830 = vdwg.mxu0
      %3831 = vrot.lane.b32.xlu0 %v133, 104
      %v3832 = vpop.permute.xlu0 %3831
      %3833 = vrot.lane.b32.xlu0 %v133, 72
      %v3834 = vpop.permute.xlu0 %3833
      %v3835 = vsel %vm139, %v3832, 0
      %v3837 = vsel %vm139, %v3834, 0
      %3839 = vmatpush.xpose.msra.mxu0 0.0
      %3840 = vmatpush.xpose.msra.mxu0 0.0
      %3841 = vmatpush.xpose.msra.mxu0 0.0
      %3842 = vmatpush.xpose.msra.mxu0 0.0
      %3843 = vmatpush.xpose.msra.mxu0 0.0
      %3844 = vmatpush.xpose.msra.mxu0 0.0
      %3845 = vmatpush.xpose.msra.mxu0 0.0
      %3846 = vmatpush.xpose.msra.mxu0 0.0
      %3847 = vmatpush.xpose.msra.mxu0 0.0
      %3848 = vmatpush.xpose.msra.mxu0 0.0
      %3849 = vmatpush.xpose.msra.mxu0 0.0
      %3850 = vmatpush.xpose.msra.mxu0 0.0
      %3851 = vmatpush.xpose.msra.mxu0 0.0
      %3852 = vmatpush.xpose.msra.mxu0 0.0
      %3853 = vmatpush.xpose.msra.mxu0 0.0
      %3854 = vmatpush.xpose.msra.mxu0 %v3837
      %3855 = vmatmul.f32.gmra.mxu0 %v3835
      %v3856 = vpop.f32.mrf.mxu0
      %v3857 = vadd.f32 0.0, %v3856
      %3858 = vdwg.mxu0
      %3859 = vrot.lane.b32.xlu0 %v134, 104
      %v3860 = vpop.permute.xlu0 %3859
      %3861 = vrot.lane.b32.xlu0 %v134, 72
      %v3862 = vpop.permute.xlu0 %3861
      %v3863 = vsel %vm139, %v3860, 0
      %v3865 = vsel %vm139, %v3862, 0
      %3867 = vmatpush.xpose.msra.mxu0 0.0
      %3868 = vmatpush.xpose.msra.mxu0 0.0
      %3869 = vmatpush.xpose.msra.mxu0 0.0
      %3870 = vmatpush.xpose.msra.mxu0 0.0
      %3871 = vmatpush.xpose.msra.mxu0 0.0
      %3872 = vmatpush.xpose.msra.mxu0 0.0
      %3873 = vmatpush.xpose.msra.mxu0 0.0
      %3874 = vmatpush.xpose.msra.mxu0 0.0
      %3875 = vmatpush.xpose.msra.mxu0 0.0
      %3876 = vmatpush.xpose.msra.mxu0 0.0
      %3877 = vmatpush.xpose.msra.mxu0 0.0
      %3878 = vmatpush.xpose.msra.mxu0 0.0
      %3879 = vmatpush.xpose.msra.mxu0 0.0
      %3880 = vmatpush.xpose.msra.mxu0 0.0
      %3881 = vmatpush.xpose.msra.mxu0 0.0
      %3882 = vmatpush.xpose.msra.mxu0 %v3865
      %3883 = vmatmul.f32.gmra.mxu0 %v3863
      %v3884 = vpop.f32.mrf.mxu0
      %v3885 = vadd.f32 0.0, %v3884
      %3886 = vdwg.mxu0
      %3887 = vrot.lane.b32.xlu0 %v135, 104
      %v3888 = vpop.permute.xlu0 %3887
      %3889 = vrot.lane.b32.xlu0 %v135, 72
      %v3890 = vpop.permute.xlu0 %3889
      %v3891 = vsel %vm139, %v3888, 0
      %v3893 = vsel %vm139, %v3890, 0
      %3895 = vmatpush.xpose.msra.mxu0 0.0
      %3896 = vmatpush.xpose.msra.mxu0 0.0
      %3897 = vmatpush.xpose.msra.mxu0 0.0
      %3898 = vmatpush.xpose.msra.mxu0 0.0
      %3899 = vmatpush.xpose.msra.mxu0 0.0
      %3900 = vmatpush.xpose.msra.mxu0 0.0
      %3901 = vmatpush.xpose.msra.mxu0 0.0
      %3902 = vmatpush.xpose.msra.mxu0 0.0
      %3903 = vmatpush.xpose.msra.mxu0 0.0
      %3904 = vmatpush.xpose.msra.mxu0 0.0
      %3905 = vmatpush.xpose.msra.mxu0 0.0
      %3906 = vmatpush.xpose.msra.mxu0 0.0
      %3907 = vmatpush.xpose.msra.mxu0 0.0
      %3908 = vmatpush.xpose.msra.mxu0 0.0
      %3909 = vmatpush.xpose.msra.mxu0 0.0
      %3910 = vmatpush.xpose.msra.mxu0 %v3893
      %3911 = vmatmul.f32.gmra.mxu0 %v3891
      %v3912 = vpop.f32.mrf.mxu0
      %v3913 = vadd.f32 0.0, %v3912
      %3914 = vdwg.mxu0
      %v3915 = vmul.f32 %v3493, 0.35355338
      %v3916 = vmul.f32 %v3521, 0.35355338
      %v3917 = vmul.f32 %v3549, 0.35355338
      %v3918 = vmul.f32 %v3577, 0.35355338
      %v3919 = vmul.f32 %v3605, 0.35355338
      %v3920 = vmul.f32 %v3633, 0.35355338
      %v3921 = vmul.f32 %v3661, 0.35355338
      %v3922 = vmul.f32 %v3689, 0.35355338
      %v3923 = vmul.f32 %v3717, 0.35355338
      %v3924 = vmul.f32 %v3745, 0.35355338
      %v3925 = vmul.f32 %v3773, 0.35355338
      %v3926 = vmul.f32 %v3801, 0.35355338
      %v3927 = vmul.f32 %v3829, 0.35355338
      %v3928 = vmul.f32 %v3857, 0.35355338
      %v3929 = vmul.f32 %v3885, 0.35355338
      %v3930 = vmul.f32 %v3913, 0.35355338
      %v3931 = vsel %vm139, %v3915, -inf
      %3932 = vmax.xlane.f32.xlu0 %v3931
      %v3933 = vpop.xlane.xlu0 %3932
      %v3934 = vsel %vm139, %v3916, -inf
      %3935 = vmax.xlane.f32.xlu0 %v3934
      %v3936 = vpop.xlane.xlu0 %3935
      %v3937 = vsel %vm139, %v3917, -inf
      %3938 = vmax.xlane.f32.xlu0 %v3937
      %v3939 = vpop.xlane.xlu0 %3938
      %v3940 = vsel %vm139, %v3918, -inf
      %3941 = vmax.xlane.f32.xlu0 %v3940
      %v3942 = vpop.xlane.xlu0 %3941
      %v3943 = vsel %vm139, %v3919, -inf
      %3944 = vmax.xlane.f32.xlu0 %v3943
      %v3945 = vpop.xlane.xlu0 %3944
      %v3946 = vsel %vm139, %v3920, -inf
      %3947 = vmax.xlane.f32.xlu0 %v3946
      %v3948 = vpop.xlane.xlu0 %3947
      %v3949 = vsel %vm139, %v3921, -inf
      %3950 = vmax.xlane.f32.xlu0 %v3949
      %v3951 = vpop.xlane.xlu0 %3950
      %v3952 = vsel %vm139, %v3922, -inf
      %3953 = vmax.xlane.f32.xlu0 %v3952
      %v3954 = vpop.xlane.xlu0 %3953
      %v3955 = vsel %vm139, %v3923, -inf
      %3956 = vmax.xlane.f32.xlu0 %v3955
      %v3957 = vpop.xlane.xlu0 %3956
      %v3958 = vsel %vm139, %v3924, -inf
      %3959 = vmax.xlane.f32.xlu0 %v3958
      %v3960 = vpop.xlane.xlu0 %3959
      %v3961 = vsel %vm139, %v3925, -inf
      %3962 = vmax.xlane.f32.xlu0 %v3961
      %v3963 = vpop.xlane.xlu0 %3962
      %v3964 = vsel %vm139, %v3926, -inf
      %3965 = vmax.xlane.f32.xlu0 %v3964
      %v3966 = vpop.xlane.xlu0 %3965
      %v3967 = vsel %vm139, %v3927, -inf
      %3968 = vmax.xlane.f32.xlu0 %v3967
      %v3969 = vpop.xlane.xlu0 %3968
      %v3970 = vsel %vm139, %v3928, -inf
      %3971 = vmax.xlane.f32.xlu0 %v3970
      %v3972 = vpop.xlane.xlu0 %3971
      %v3973 = vsel %vm139, %v3929, -inf
      %3974 = vmax.xlane.f32.xlu0 %v3973
      %v3975 = vpop.xlane.xlu0 %3974
      %v3976 = vsel %vm139, %v3930, -inf
      %3977 = vmax.xlane.f32.xlu0 %v3976
      %v3978 = vpop.xlane.xlu0 %3977
      %v3979 = vsub.f32 %v3915, %v3933
      %v3980 = vsub.f32 %v3916, %v3936
      %v3981 = vsub.f32 %v3917, %v3939
      %v3982 = vsub.f32 %v3918, %v3942
      %v3983 = vsub.f32 %v3919, %v3945
      %v3984 = vsub.f32 %v3920, %v3948
      %v3985 = vsub.f32 %v3921, %v3951
      %v3986 = vsub.f32 %v3922, %v3954
      %v3987 = vsub.f32 %v3923, %v3957
      %v3988 = vsub.f32 %v3924, %v3960
      %v3989 = vsub.f32 %v3925, %v3963
      %v3990 = vsub.f32 %v3926, %v3966
      %v3991 = vsub.f32 %v3927, %v3969
      %v3992 = vsub.f32 %v3928, %v3972
      %v3993 = vsub.f32 %v3929, %v3975
      %v3994 = vsub.f32 %v3930, %v3978
      %v3995 = vmul.f32 %v3979, 1.442695
      %v3996 = vpow.pop %v3995
      %v3997 = vmul.f32 %v3980, 1.442695
      %v3998 = vpow.pop %v3997
      %v3999 = vmul.f32 %v3981, 1.442695
      %v4000 = vpow.pop %v3999
      %v4001 = vmul.f32 %v3982, 1.442695
      %v4002 = vpow.pop %v4001
      %v4003 = vmul.f32 %v3983, 1.442695
      %v4004 = vpow.pop %v4003
      %v4005 = vmul.f32 %v3984, 1.442695
      %v4006 = vpow.pop %v4005
      %v4007 = vmul.f32 %v3985, 1.442695
      %v4008 = vpow.pop %v4007
      %v4009 = vmul.f32 %v3986, 1.442695
      %v4010 = vpow.pop %v4009
      %v4011 = vmul.f32 %v3987, 1.442695
      %v4012 = vpow.pop %v4011
      %v4013 = vmul.f32 %v3988, 1.442695
      %v4014 = vpow.pop %v4013
      %v4015 = vmul.f32 %v3989, 1.442695
      %v4016 = vpow.pop %v4015
      %v4017 = vmul.f32 %v3990, 1.442695
      %v4018 = vpow.pop %v4017
      %v4019 = vmul.f32 %v3991, 1.442695
      %v4020 = vpow.pop %v4019
      %v4021 = vmul.f32 %v3992, 1.442695
      %v4022 = vpow.pop %v4021
      %v4023 = vmul.f32 %v3993, 1.442695
      %v4024 = vpow.pop %v4023
      %v4025 = vmul.f32 %v3994, 1.442695
      %v4026 = vpow.pop %v4025
      %v4027 = vsel %vm139, %v3996, 0.0
      %4028 = vadd.xlane.f32.xlu0 %v4027
      %v4029 = vpop.xlane.xlu0 %4028
      %v4030 = vsel %vm139, %v3998, 0.0
      %4031 = vadd.xlane.f32.xlu0 %v4030
      %v4032 = vpop.xlane.xlu0 %4031
      %v4033 = vsel %vm139, %v4000, 0.0
      %4034 = vadd.xlane.f32.xlu0 %v4033
      %v4035 = vpop.xlane.xlu0 %4034
      %v4036 = vsel %vm139, %v4002, 0.0
      %4037 = vadd.xlane.f32.xlu0 %v4036
      %v4038 = vpop.xlane.xlu0 %4037
      %v4039 = vsel %vm139, %v4004, 0.0
      %4040 = vadd.xlane.f32.xlu0 %v4039
      %v4041 = vpop.xlane.xlu0 %4040
      %v4042 = vsel %vm139, %v4006, 0.0
      %4043 = vadd.xlane.f32.xlu0 %v4042
      %v4044 = vpop.xlane.xlu0 %4043
      %v4045 = vsel %vm139, %v4008, 0.0
      %4046 = vadd.xlane.f32.xlu0 %v4045
      %v4047 = vpop.xlane.xlu0 %4046
      %v4048 = vsel %vm139, %v4010, 0.0
      %4049 = vadd.xlane.f32.xlu0 %v4048
      %v4050 = vpop.xlane.xlu0 %4049
      %v4051 = vsel %vm139, %v4012, 0.0
      %4052 = vadd.xlane.f32.xlu0 %v4051
      %v4053 = vpop.xlane.xlu0 %4052
      %v4054 = vsel %vm139, %v4014, 0.0
      %4055 = vadd.xlane.f32.xlu0 %v4054
      %v4056 = vpop.xlane.xlu0 %4055
      %v4057 = vsel %vm139, %v4016, 0.0
      %4058 = vadd.xlane.f32.xlu0 %v4057
      %v4059 = vpop.xlane.xlu0 %4058
      %v4060 = vsel %vm139, %v4018, 0.0
      %4061 = vadd.xlane.f32.xlu0 %v4060
      %v4062 = vpop.xlane.xlu0 %4061
      %v4063 = vsel %vm139, %v4020, 0.0
      %4064 = vadd.xlane.f32.xlu0 %v4063
      %v4065 = vpop.xlane.xlu0 %4064
      %v4066 = vsel %vm139, %v4022, 0.0
      %4067 = vadd.xlane.f32.xlu0 %v4066
      %v4068 = vpop.xlane.xlu0 %4067
      %v4069 = vsel %vm139, %v4024, 0.0
      %4070 = vadd.xlane.f32.xlu0 %v4069
      %v4071 = vpop.xlane.xlu0 %4070
      %v4072 = vsel %vm139, %v4026, 0.0
      %4073 = vadd.xlane.f32.xlu0 %v4072
      %v4074 = vpop.xlane.xlu0 %4073
      %v4075 = vrcp.pop %v4029
      %v4076 = vrcp.pop %v4032
      %v4077 = vrcp.pop %v4035
      %v4078 = vrcp.pop %v4038
      %v4079 = vrcp.pop %v4041
      %v4080 = vrcp.pop %v4044
      %v4081 = vrcp.pop %v4047
      %v4082 = vrcp.pop %v4050
      %v4083 = vrcp.pop %v4053
      %v4084 = vrcp.pop %v4056
      %v4085 = vrcp.pop %v4059
      %v4086 = vrcp.pop %v4062
      %v4087 = vrcp.pop %v4065
      %v4088 = vrcp.pop %v4068
      %v4089 = vrcp.pop %v4071
      %v4090 = vrcp.pop %v4074
      %v4091 = vmul.f32 %v3996, %v4075
      %v4092 = vmul.f32 %v3998, %v4076
      %v4093 = vmul.f32 %v4000, %v4077
      %v4094 = vmul.f32 %v4002, %v4078
      %v4095 = vmul.f32 %v4004, %v4079
      %v4096 = vmul.f32 %v4006, %v4080
      %v4097 = vmul.f32 %v4008, %v4081
      %v4098 = vmul.f32 %v4010, %v4082
      %v4099 = vmul.f32 %v4012, %v4083
      %v4100 = vmul.f32 %v4014, %v4084
      %v4101 = vmul.f32 %v4016, %v4085
      %v4102 = vmul.f32 %v4018, %v4086
      %v4103 = vmul.f32 %v4020, %v4087
      %v4104 = vmul.f32 %v4022, %v4088
      %v4105 = vmul.f32 %v4024, %v4089
      %v4106 = vmul.f32 %v4026, %v4090
      %4107 = vrot.lane.b32.xlu0 %v120, 40
      %v4108 = vpop.permute.xlu0 %4107
      %v4111 = vsel %vm139, %v4091, 0
      %4113 = vmatpush.msra.mxu0 0.0
      %4114 = vmatpush.msra.mxu0 0.0
      %4115 = vmatpush.msra.mxu0 0.0
      %4116 = vmatpush.msra.mxu0 0.0
      %4117 = vmatpush.msra.mxu0 0.0
      %4118 = vmatpush.msra.mxu0 0.0
      %4119 = vmatpush.msra.mxu0 0.0
      %4120 = vmatpush.msra.mxu0 0.0
      %4121 = vmatpush.msra.mxu0 0.0
      %4122 = vmatpush.msra.mxu0 0.0
      %4123 = vmatpush.msra.mxu0 0.0
      %4124 = vmatpush.msra.mxu0 0.0
      %4125 = vmatpush.msra.mxu0 0.0
      %4126 = vmatpush.msra.mxu0 0.0
      %4127 = vmatpush.msra.mxu0 0.0
      %4128 = vmatpush.msra.mxu0 %v4108
      %4129 = vmatmul.f32.gmra.mxu0 %v4111
      %v4130 = vpop.f32.mrf.mxu0
      %v4131 = vadd.f32 0.0, %v4130
      %4132 = vdwg.mxu0
      %4133 = vrot.lane.b32.xlu0 %v121, 40
      %v4134 = vpop.permute.xlu0 %4133
      %v4137 = vsel %vm139, %v4092, 0
      %4139 = vmatpush.msra.mxu0 0.0
      %4140 = vmatpush.msra.mxu0 0.0
      %4141 = vmatpush.msra.mxu0 0.0
      %4142 = vmatpush.msra.mxu0 0.0
      %4143 = vmatpush.msra.mxu0 0.0
      %4144 = vmatpush.msra.mxu0 0.0
      %4145 = vmatpush.msra.mxu0 0.0
      %4146 = vmatpush.msra.mxu0 0.0
      %4147 = vmatpush.msra.mxu0 0.0
      %4148 = vmatpush.msra.mxu0 0.0
      %4149 = vmatpush.msra.mxu0 0.0
      %4150 = vmatpush.msra.mxu0 0.0
      %4151 = vmatpush.msra.mxu0 0.0
      %4152 = vmatpush.msra.mxu0 0.0
      %4153 = vmatpush.msra.mxu0 0.0
      %4154 = vmatpush.msra.mxu0 %v4134
      %4155 = vmatmul.f32.gmra.mxu0 %v4137
      %v4156 = vpop.f32.mrf.mxu0
      %v4157 = vadd.f32 0.0, %v4156
      %4158 = vdwg.mxu0
      %4159 = vrot.lane.b32.xlu0 %v122, 40
      %v4160 = vpop.permute.xlu0 %4159
      %v4163 = vsel %vm139, %v4093, 0
      %4165 = vmatpush.msra.mxu0 0.0
      %4166 = vmatpush.msra.mxu0 0.0
      %4167 = vmatpush.msra.mxu0 0.0
      %4168 = vmatpush.msra.mxu0 0.0
      %4169 = vmatpush.msra.mxu0 0.0
      %4170 = vmatpush.msra.mxu0 0.0
      %4171 = vmatpush.msra.mxu0 0.0
      %4172 = vmatpush.msra.mxu0 0.0
      %4173 = vmatpush.msra.mxu0 0.0
      %4174 = vmatpush.msra.mxu0 0.0
      %4175 = vmatpush.msra.mxu0 0.0
      %4176 = vmatpush.msra.mxu0 0.0
      %4177 = vmatpush.msra.mxu0 0.0
      %4178 = vmatpush.msra.mxu0 0.0
      %4179 = vmatpush.msra.mxu0 0.0
      %4180 = vmatpush.msra.mxu0 %v4160
      %4181 = vmatmul.f32.gmra.mxu0 %v4163
      %v4182 = vpop.f32.mrf.mxu0
      %v4183 = vadd.f32 0.0, %v4182
      %4184 = vdwg.mxu0
      %4185 = vrot.lane.b32.xlu0 %v123, 40
      %v4186 = vpop.permute.xlu0 %4185
      %v4189 = vsel %vm139, %v4094, 0
      %4191 = vmatpush.msra.mxu0 0.0
      %4192 = vmatpush.msra.mxu0 0.0
      %4193 = vmatpush.msra.mxu0 0.0
      %4194 = vmatpush.msra.mxu0 0.0
      %4195 = vmatpush.msra.mxu0 0.0
      %4196 = vmatpush.msra.mxu0 0.0
      %4197 = vmatpush.msra.mxu0 0.0
      %4198 = vmatpush.msra.mxu0 0.0
      %4199 = vmatpush.msra.mxu0 0.0
      %4200 = vmatpush.msra.mxu0 0.0
      %4201 = vmatpush.msra.mxu0 0.0
      %4202 = vmatpush.msra.mxu0 0.0
      %4203 = vmatpush.msra.mxu0 0.0
      %4204 = vmatpush.msra.mxu0 0.0
      %4205 = vmatpush.msra.mxu0 0.0
      %4206 = vmatpush.msra.mxu0 %v4186
      %4207 = vmatmul.f32.gmra.mxu0 %v4189
      %v4208 = vpop.f32.mrf.mxu0
      %v4209 = vadd.f32 0.0, %v4208
      %4210 = vdwg.mxu0
      %4211 = vrot.lane.b32.xlu0 %v124, 40
      %v4212 = vpop.permute.xlu0 %4211
      %v4215 = vsel %vm139, %v4095, 0
      %4217 = vmatpush.msra.mxu0 0.0
      %4218 = vmatpush.msra.mxu0 0.0
      %4219 = vmatpush.msra.mxu0 0.0
      %4220 = vmatpush.msra.mxu0 0.0
      %4221 = vmatpush.msra.mxu0 0.0
      %4222 = vmatpush.msra.mxu0 0.0
      %4223 = vmatpush.msra.mxu0 0.0
      %4224 = vmatpush.msra.mxu0 0.0
      %4225 = vmatpush.msra.mxu0 0.0
      %4226 = vmatpush.msra.mxu0 0.0
      %4227 = vmatpush.msra.mxu0 0.0
      %4228 = vmatpush.msra.mxu0 0.0
      %4229 = vmatpush.msra.mxu0 0.0
      %4230 = vmatpush.msra.mxu0 0.0
      %4231 = vmatpush.msra.mxu0 0.0
      %4232 = vmatpush.msra.mxu0 %v4212
      %4233 = vmatmul.f32.gmra.mxu0 %v4215
      %v4234 = vpop.f32.mrf.mxu0
      %v4235 = vadd.f32 0.0, %v4234
      %4236 = vdwg.mxu0
      %4237 = vrot.lane.b32.xlu0 %v125, 40
      %v4238 = vpop.permute.xlu0 %4237
      %v4241 = vsel %vm139, %v4096, 0
      %4243 = vmatpush.msra.mxu0 0.0
      %4244 = vmatpush.msra.mxu0 0.0
      %4245 = vmatpush.msra.mxu0 0.0
      %4246 = vmatpush.msra.mxu0 0.0
      %4247 = vmatpush.msra.mxu0 0.0
      %4248 = vmatpush.msra.mxu0 0.0
      %4249 = vmatpush.msra.mxu0 0.0
      %4250 = vmatpush.msra.mxu0 0.0
      %4251 = vmatpush.msra.mxu0 0.0
      %4252 = vmatpush.msra.mxu0 0.0
      %4253 = vmatpush.msra.mxu0 0.0
      %4254 = vmatpush.msra.mxu0 0.0
      %4255 = vmatpush.msra.mxu0 0.0
      %4256 = vmatpush.msra.mxu0 0.0
      %4257 = vmatpush.msra.mxu0 0.0
      %4258 = vmatpush.msra.mxu0 %v4238
      %4259 = vmatmul.f32.gmra.mxu0 %v4241
      %v4260 = vpop.f32.mrf.mxu0
      %v4261 = vadd.f32 0.0, %v4260
      %4262 = vdwg.mxu0
      %4263 = vrot.lane.b32.xlu0 %v126, 40
      %v4264 = vpop.permute.xlu0 %4263
      %v4267 = vsel %vm139, %v4097, 0
      %4269 = vmatpush.msra.mxu0 0.0
      %4270 = vmatpush.msra.mxu0 0.0
      %4271 = vmatpush.msra.mxu0 0.0
      %4272 = vmatpush.msra.mxu0 0.0
      %4273 = vmatpush.msra.mxu0 0.0
      %4274 = vmatpush.msra.mxu0 0.0
      %4275 = vmatpush.msra.mxu0 0.0
      %4276 = vmatpush.msra.mxu0 0.0
      %4277 = vmatpush.msra.mxu0 0.0
      %4278 = vmatpush.msra.mxu0 0.0
      %4279 = vmatpush.msra.mxu0 0.0
      %4280 = vmatpush.msra.mxu0 0.0
      %4281 = vmatpush.msra.mxu0 0.0
      %4282 = vmatpush.msra.mxu0 0.0
      %4283 = vmatpush.msra.mxu0 0.0
      %4284 = vmatpush.msra.mxu0 %v4264
      %4285 = vmatmul.f32.gmra.mxu0 %v4267
      %v4286 = vpop.f32.mrf.mxu0
      %v4287 = vadd.f32 0.0, %v4286
      %4288 = vdwg.mxu0
      %4289 = vrot.lane.b32.xlu0 %v127, 40
      %v4290 = vpop.permute.xlu0 %4289
      %v4293 = vsel %vm139, %v4098, 0
      %4295 = vmatpush.msra.mxu0 0.0
      %4296 = vmatpush.msra.mxu0 0.0
      %4297 = vmatpush.msra.mxu0 0.0
      %4298 = vmatpush.msra.mxu0 0.0
      %4299 = vmatpush.msra.mxu0 0.0
      %4300 = vmatpush.msra.mxu0 0.0
      %4301 = vmatpush.msra.mxu0 0.0
      %4302 = vmatpush.msra.mxu0 0.0
      %4303 = vmatpush.msra.mxu0 0.0
      %4304 = vmatpush.msra.mxu0 0.0
      %4305 = vmatpush.msra.mxu0 0.0
      %4306 = vmatpush.msra.mxu0 0.0
      %4307 = vmatpush.msra.mxu0 0.0
      %4308 = vmatpush.msra.mxu0 0.0
      %4309 = vmatpush.msra.mxu0 0.0
      %4310 = vmatpush.msra.mxu0 %v4290
      %4311 = vmatmul.f32.gmra.mxu0 %v4293
      %v4312 = vpop.f32.mrf.mxu0
      %v4313 = vadd.f32 0.0, %v4312
      %4314 = vdwg.mxu0
      %4315 = vrot.lane.b32.xlu0 %v128, 40
      %v4316 = vpop.permute.xlu0 %4315
      %v4319 = vsel %vm139, %v4099, 0
      %4321 = vmatpush.msra.mxu0 0.0
      %4322 = vmatpush.msra.mxu0 0.0
      %4323 = vmatpush.msra.mxu0 0.0
      %4324 = vmatpush.msra.mxu0 0.0
      %4325 = vmatpush.msra.mxu0 0.0
      %4326 = vmatpush.msra.mxu0 0.0
      %4327 = vmatpush.msra.mxu0 0.0
      %4328 = vmatpush.msra.mxu0 0.0
      %4329 = vmatpush.msra.mxu0 0.0
      %4330 = vmatpush.msra.mxu0 0.0
      %4331 = vmatpush.msra.mxu0 0.0
      %4332 = vmatpush.msra.mxu0 0.0
      %4333 = vmatpush.msra.mxu0 0.0
      %4334 = vmatpush.msra.mxu0 0.0
      %4335 = vmatpush.msra.mxu0 0.0
      %4336 = vmatpush.msra.mxu0 %v4316
      %4337 = vmatmul.f32.gmra.mxu0 %v4319
      %v4338 = vpop.f32.mrf.mxu0
      %v4339 = vadd.f32 0.0, %v4338
      %4340 = vdwg.mxu0
      %4341 = vrot.lane.b32.xlu0 %v129, 40
      %v4342 = vpop.permute.xlu0 %4341
      %v4345 = vsel %vm139, %v4100, 0
      %4347 = vmatpush.msra.mxu0 0.0
      %4348 = vmatpush.msra.mxu0 0.0
      %4349 = vmatpush.msra.mxu0 0.0
      %4350 = vmatpush.msra.mxu0 0.0
      %4351 = vmatpush.msra.mxu0 0.0
      %4352 = vmatpush.msra.mxu0 0.0
      %4353 = vmatpush.msra.mxu0 0.0
      %4354 = vmatpush.msra.mxu0 0.0
      %4355 = vmatpush.msra.mxu0 0.0
      %4356 = vmatpush.msra.mxu0 0.0
      %4357 = vmatpush.msra.mxu0 0.0
      %4358 = vmatpush.msra.mxu0 0.0
      %4359 = vmatpush.msra.mxu0 0.0
      %4360 = vmatpush.msra.mxu0 0.0
      %4361 = vmatpush.msra.mxu0 0.0
      %4362 = vmatpush.msra.mxu0 %v4342
      %4363 = vmatmul.f32.gmra.mxu0 %v4345
      %v4364 = vpop.f32.mrf.mxu0
      %v4365 = vadd.f32 0.0, %v4364
      %4366 = vdwg.mxu0
      %4367 = vrot.lane.b32.xlu0 %v130, 40
      %v4368 = vpop.permute.xlu0 %4367
      %v4371 = vsel %vm139, %v4101, 0
      %4373 = vmatpush.msra.mxu0 0.0
      %4374 = vmatpush.msra.mxu0 0.0
      %4375 = vmatpush.msra.mxu0 0.0
      %4376 = vmatpush.msra.mxu0 0.0
      %4377 = vmatpush.msra.mxu0 0.0
      %4378 = vmatpush.msra.mxu0 0.0
      %4379 = vmatpush.msra.mxu0 0.0
      %4380 = vmatpush.msra.mxu0 0.0
      %4381 = vmatpush.msra.mxu0 0.0
      %4382 = vmatpush.msra.mxu0 0.0
      %4383 = vmatpush.msra.mxu0 0.0
      %4384 = vmatpush.msra.mxu0 0.0
      %4385 = vmatpush.msra.mxu0 0.0
      %4386 = vmatpush.msra.mxu0 0.0
      %4387 = vmatpush.msra.mxu0 0.0
      %4388 = vmatpush.msra.mxu0 %v4368
      %4389 = vmatmul.f32.gmra.mxu0 %v4371
      %v4390 = vpop.f32.mrf.mxu0
      %v4391 = vadd.f32 0.0, %v4390
      %4392 = vdwg.mxu0
      %4393 = vrot.lane.b32.xlu0 %v131, 40
      %v4394 = vpop.permute.xlu0 %4393
      %v4397 = vsel %vm139, %v4102, 0
      %4399 = vmatpush.msra.mxu0 0.0
      %4400 = vmatpush.msra.mxu0 0.0
      %4401 = vmatpush.msra.mxu0 0.0
      %4402 = vmatpush.msra.mxu0 0.0
      %4403 = vmatpush.msra.mxu0 0.0
      %4404 = vmatpush.msra.mxu0 0.0
      %4405 = vmatpush.msra.mxu0 0.0
      %4406 = vmatpush.msra.mxu0 0.0
      %4407 = vmatpush.msra.mxu0 0.0
      %4408 = vmatpush.msra.mxu0 0.0
      %4409 = vmatpush.msra.mxu0 0.0
      %4410 = vmatpush.msra.mxu0 0.0
      %4411 = vmatpush.msra.mxu0 0.0
      %4412 = vmatpush.msra.mxu0 0.0
      %4413 = vmatpush.msra.mxu0 0.0
      %4414 = vmatpush.msra.mxu0 %v4394
      %4415 = vmatmul.f32.gmra.mxu0 %v4397
      %v4416 = vpop.f32.mrf.mxu0
      %v4417 = vadd.f32 0.0, %v4416
      %4418 = vdwg.mxu0
      %4419 = vrot.lane.b32.xlu0 %v132, 40
      %v4420 = vpop.permute.xlu0 %4419
      %v4423 = vsel %vm139, %v4103, 0
      %4425 = vmatpush.msra.mxu0 0.0
      %4426 = vmatpush.msra.mxu0 0.0
      %4427 = vmatpush.msra.mxu0 0.0
      %4428 = vmatpush.msra.mxu0 0.0
      %4429 = vmatpush.msra.mxu0 0.0
      %4430 = vmatpush.msra.mxu0 0.0
      %4431 = vmatpush.msra.mxu0 0.0
      %4432 = vmatpush.msra.mxu0 0.0
      %4433 = vmatpush.msra.mxu0 0.0
      %4434 = vmatpush.msra.mxu0 0.0
      %4435 = vmatpush.msra.mxu0 0.0
      %4436 = vmatpush.msra.mxu0 0.0
      %4437 = vmatpush.msra.mxu0 0.0
      %4438 = vmatpush.msra.mxu0 0.0
      %4439 = vmatpush.msra.mxu0 0.0
      %4440 = vmatpush.msra.mxu0 %v4420
      %4441 = vmatmul.f32.gmra.mxu0 %v4423
      %v4442 = vpop.f32.mrf.mxu0
      %v4443 = vadd.f32 0.0, %v4442
      %4444 = vdwg.mxu0
      %4445 = vrot.lane.b32.xlu0 %v133, 40
      %v4446 = vpop.permute.xlu0 %4445
      %v4449 = vsel %vm139, %v4104, 0
      %4451 = vmatpush.msra.mxu0 0.0
      %4452 = vmatpush.msra.mxu0 0.0
      %4453 = vmatpush.msra.mxu0 0.0
      %4454 = vmatpush.msra.mxu0 0.0
      %4455 = vmatpush.msra.mxu0 0.0
      %4456 = vmatpush.msra.mxu0 0.0
      %4457 = vmatpush.msra.mxu0 0.0
      %4458 = vmatpush.msra.mxu0 0.0
      %4459 = vmatpush.msra.mxu0 0.0
      %4460 = vmatpush.msra.mxu0 0.0
      %4461 = vmatpush.msra.mxu0 0.0
      %4462 = vmatpush.msra.mxu0 0.0
      %4463 = vmatpush.msra.mxu0 0.0
      %4464 = vmatpush.msra.mxu0 0.0
      %4465 = vmatpush.msra.mxu0 0.0
      %4466 = vmatpush.msra.mxu0 %v4446
      %4467 = vmatmul.f32.gmra.mxu0 %v4449
      %v4468 = vpop.f32.mrf.mxu0
      %v4469 = vadd.f32 0.0, %v4468
      %4470 = vdwg.mxu0
      %4471 = vrot.lane.b32.xlu0 %v134, 40
      %v4472 = vpop.permute.xlu0 %4471
      %v4475 = vsel %vm139, %v4105, 0
      %4477 = vmatpush.msra.mxu0 0.0
      %4478 = vmatpush.msra.mxu0 0.0
      %4479 = vmatpush.msra.mxu0 0.0
      %4480 = vmatpush.msra.mxu0 0.0
      %4481 = vmatpush.msra.mxu0 0.0
      %4482 = vmatpush.msra.mxu0 0.0
      %4483 = vmatpush.msra.mxu0 0.0
      %4484 = vmatpush.msra.mxu0 0.0
      %4485 = vmatpush.msra.mxu0 0.0
      %4486 = vmatpush.msra.mxu0 0.0
      %4487 = vmatpush.msra.mxu0 0.0
      %4488 = vmatpush.msra.mxu0 0.0
      %4489 = vmatpush.msra.mxu0 0.0
      %4490 = vmatpush.msra.mxu0 0.0
      %4491 = vmatpush.msra.mxu0 0.0
      %4492 = vmatpush.msra.mxu0 %v4472
      %4493 = vmatmul.f32.gmra.mxu0 %v4475
      %v4494 = vpop.f32.mrf.mxu0
      %v4495 = vadd.f32 0.0, %v4494
      %4496 = vdwg.mxu0
      %4497 = vrot.lane.b32.xlu0 %v135, 40
      %v4498 = vpop.permute.xlu0 %4497
      %v4501 = vsel %vm139, %v4106, 0
      %4503 = vmatpush.msra.mxu0 0.0
      %4504 = vmatpush.msra.mxu0 0.0
      %4505 = vmatpush.msra.mxu0 0.0
      %4506 = vmatpush.msra.mxu0 0.0
      %4507 = vmatpush.msra.mxu0 0.0
      %4508 = vmatpush.msra.mxu0 0.0
      %4509 = vmatpush.msra.mxu0 0.0
      %4510 = vmatpush.msra.mxu0 0.0
      %4511 = vmatpush.msra.mxu0 0.0
      %4512 = vmatpush.msra.mxu0 0.0
      %4513 = vmatpush.msra.mxu0 0.0
      %4514 = vmatpush.msra.mxu0 0.0
      %4515 = vmatpush.msra.mxu0 0.0
      %4516 = vmatpush.msra.mxu0 0.0
      %4517 = vmatpush.msra.mxu0 0.0
      %4518 = vmatpush.msra.mxu0 %v4498
      %4519 = vmatmul.f32.gmra.mxu0 %v4501
      %v4520 = vpop.f32.mrf.mxu0
      %v4521 = vadd.f32 0.0, %v4520
      %4522 = vdwg.mxu0
      %4539 = vrot.lane.b32.xlu0 %v4131, 24
      %v4540 = vpop.permute.xlu0 %4539
      %4541 = vrot.lane.b32.xlu0 %v4157, 24
      %v4542 = vpop.permute.xlu0 %4541
      %4543 = vrot.lane.b32.xlu0 %v4183, 24
      %v4544 = vpop.permute.xlu0 %4543
      %4545 = vrot.lane.b32.xlu0 %v4209, 24
      %v4546 = vpop.permute.xlu0 %4545
      %4547 = vrot.lane.b32.xlu0 %v4235, 24
      %v4548 = vpop.permute.xlu0 %4547
      %4549 = vrot.lane.b32.xlu0 %v4261, 24
      %v4550 = vpop.permute.xlu0 %4549
      %4551 = vrot.lane.b32.xlu0 %v4287, 24
      %v4552 = vpop.permute.xlu0 %4551
      %4553 = vrot.lane.b32.xlu0 %v4313, 24
      %v4554 = vpop.permute.xlu0 %4553
      %4555 = vrot.lane.b32.xlu0 %v4339, 24
      %v4556 = vpop.permute.xlu0 %4555
      %4557 = vrot.lane.b32.xlu0 %v4365, 24
      %v4558 = vpop.permute.xlu0 %4557
      %4559 = vrot.lane.b32.xlu0 %v4391, 24
      %v4560 = vpop.permute.xlu0 %4559
      %4561 = vrot.lane.b32.xlu0 %v4417, 24
      %v4562 = vpop.permute.xlu0 %4561
      %4563 = vrot.lane.b32.xlu0 %v4443, 24
      %v4564 = vpop.permute.xlu0 %4563
      %4565 = vrot.lane.b32.xlu0 %v4469, 24
      %v4566 = vpop.permute.xlu0 %4565
      %4567 = vrot.lane.b32.xlu0 %v4495, 24
      %v4568 = vpop.permute.xlu0 %4567
      %4569 = vrot.lane.b32.xlu0 %v4521, 24
      %v4570 = vpop.permute.xlu0 %4569
      %vm4587 = vcmask 261312
      %4588 = vst.msk [vmem:[%s118] sm:$0xff] %vm4587, %v4540
      %4589 = vst.msk [vmem:[%s118 + $0x8] sm:$0xff] %vm4587, %v4542
      %4590 = vst.msk [vmem:[%s118 + $0x10] sm:$0xff] %vm4587, %v4544
      %4591 = vst.msk [vmem:[%s118 + $0x18] sm:$0xff] %vm4587, %v4546
      %4592 = vst.msk [vmem:[%s118 + $0x20] sm:$0xff] %vm4587, %v4548
      %4593 = vst.msk [vmem:[%s118 + $0x28] sm:$0xff] %vm4587, %v4550
      %4594 = vst.msk [vmem:[%s118 + $0x30] sm:$0xff] %vm4587, %v4552
      %4595 = vst.msk [vmem:[%s118 + $0x38] sm:$0xff] %vm4587, %v4554
      %4596 = vst.msk [vmem:[%s118 + $0x40] sm:$0xff] %vm4587, %v4556
      %4597 = vst.msk [vmem:[%s118 + $0x48] sm:$0xff] %vm4587, %v4558
      %4598 = vst.msk [vmem:[%s118 + $0x50] sm:$0xff] %vm4587, %v4560
      %4599 = vst.msk [vmem:[%s118 + $0x58] sm:$0xff] %vm4587, %v4562
      %4600 = vst.msk [vmem:[%s118 + $0x60] sm:$0xff] %vm4587, %v4564
      %4601 = vst.msk [vmem:[%s118 + $0x68] sm:$0xff] %vm4587, %v4566
      %4602 = vst.msk [vmem:[%s118 + $0x70] sm:$0xff] %vm4587, %v4568
      %4603 = vst.msk [vmem:[%s118 + $0x78] sm:$0xff] %vm4587, %v4570
      %s4604 = smul.u32 16, %s12
      %p4605 = scmp.lt.s32.totalorder %s4604, 31
      %s4606 = scalar_select %p4605, %s4604, 31
      %s4607 = smul.addr %s4606, 8
      %s4608 = scalar_lea.vmem %s1, %s4607
      // Predicated region
      $region25: #{stgnn_layer_pallas.8} parent=23 // pred_check
        %p4609 = pneg %p56
      $region26: #{stgnn_layer_pallas.8} parent=23 // pred_check_branch
        %4611 = sbr.rel (%p4609) target = $region28
      $region27: #{stgnn_layer_pallas.8} parent=23 // pred_region
        %s4612 = smul.u32 16, %s12
      $region28: #{stgnn_layer_pallas.8} parent=23 // pred_fallthru
        _
    $region24: #{stgnn_layer_pallas.8} parent=5 // pred_fallthru
      _
    %p4613 = scmp.le.s32.totalorder 2, %s7
    // Predicated region
    $region29: #{stgnn_layer_pallas.8} parent=5 // pred_check
      %p4614 = pneg %p4613
    $region30: #{stgnn_layer_pallas.8} parent=5 // pred_check_branch
      %4616 = sbr.rel (%p4614) target = $region32
    $region31: #{stgnn_layer_pallas.8} parent=5 // pred_region
      %s4617 = ssub.s32 %s7, 2
      // Predicated region
      $region33: #{stgnn_layer_pallas.8} parent=31 // pred_check
        %p4618 = pneg %p62
      $region34: #{stgnn_layer_pallas.8} parent=31 // pred_check_branch
        %4620 = sbr.rel (%p4618) target = $region36
      $region35: #{stgnn_layer_pallas.8} parent=31 // pred_region
        %s4621 = smul.u32 16, %s13
        %p4622 = scmp.lt.s32.totalorder %s4621, 31
        %s4623 = scalar_select %p4622, %s4621, 31
        %s4624 = smul.addr %s4623, 8
        %s4625 = scalar_lea.vmem %s1, %s4624
      $region36: #{stgnn_layer_pallas.8} parent=31 // pred_fallthru
        _
    $region32: #{stgnn_layer_pallas.8} parent=5 // pred_fallthru
      _
  $region6: #{stgnn_layer_pallas.8} parent=0 // loop_footer
    %s11 = sadd.s32 1, %s7
  $region7: #{stgnn_layer_pallas.8} parent=0 // loop_footer_branch
    %6 = sbr.rel target = $region3
  $region8: #{stgnn_layer_pallas.8} parent=0 // loop_exit
    _

</llo_original>
